<compile_context>
chip_gen: v7x
topology: tpu7x:2x2x1
jax: 0.10.0
libtpu: 0.0.40
codegen_flags: <defaults>
</compile_context>

<pallas_src>
import functools

import jax
import jax.numpy as jnp
from jax.experimental import pallas as pl
from jax.experimental.pallas import tpu as pltpu


# ----------------------------------------------------------------------------
# Kernel 1: ROI max-pool.  grid = (C // TC, R); channels on the lane axis.
# ----------------------------------------------------------------------------
def roi_pool_kernel(inds_ref, hs_ref, he_ref, ws_ref, we_ref, x_ref, out_ref):
    # inds_ref:            (R,)    int32  (used only by the index_maps)
    # hs/he/ws/we_ref:     (R*P,)  int32  bin boundaries in SMEM
    # x_ref:               (1, H, W, TC)  bf16 features of this ROI's image
    # out_ref:             (1, P, P, TC)  bf16 pooled output, laid out [pw, ph, c]
    del inds_ref
    r = pl.program_id(1)                       # ROI index (axis 0 = channel tile)
    P = out_ref.shape[1]
    xf = x_ref[0].astype(jnp.float32)          # (H, W, TC): H leading, W sublane, C lane
    H, W, TC = xf.shape
    neg = jnp.float32(-jnp.inf)

    # ---- Stage A: P h-bin maxes over the leading H axis.
    # Across-vreg reduction => pure VALU (no XLU); scalar per-row predicates
    # instead of (H, W, C)-wide iota masks.
    rows = []
    for ph in range(P):                         # static unroll (P == 7)
        h0 = hs_ref[r * P + ph]
        h1 = he_ref[r * P + ph]
        acc = jnp.full((W, TC), neg, jnp.float32)
        for h in range(H):                      # static unroll over rows
            inb = jnp.logical_and(h >= h0, h < h1)          # scalar bool
            acc = jnp.maximum(acc, jnp.where(inb, xf[h], neg))
        rows.append(acc)                        # (W, TC)
    row_max = jnp.stack(rows, axis=0)           # (P_h, W, TC)

    # ---- Stage B: P w-bin maxes over the sublane W axis of the (much smaller)
    # (P_h, W, TC) tensor -- the only XLU reductions left in the kernel.
    wio = jax.lax.broadcasted_iota(jnp.int32, (W, TC), 0)[None]   # (1, W, TC)
    outs = []
    for pw in range(P):                         # static unroll
        w0 = ws_ref[r * P + pw]
        w1 = we_ref[r * P + pw]
        wm = (wio >= w0) & (wio < w1)           # (1, W, TC)
        outs.append(jnp.max(jnp.where(wm, row_max, neg), axis=1))  # (P_h, TC)
    pooled = jnp.stack(outs, axis=0)            # (P_w, P_h, TC)

    # torchvision roi_pool: empty bins produce 0 (masked max left them at -inf)
    pooled = jnp.where(pooled == neg, jnp.float32(0.0), pooled)
    out_ref[0] = pooled.astype(out_ref.dtype)   # bf16 store


# ----------------------------------------------------------------------------
# Kernel 2: fused head.  grid = (R // TR, nk)
#   acc  += feat_k @ w1_k                      (bf16 x bf16 -> f32, K-tiled)
#   last: fc6 = relu(acc + b1)
#         out = fc6 @ [w_reg | w_cls | pad] + [b_reg | b_cls | pad]
# ----------------------------------------------------------------------------
def head_kernel(feat_ref, w1_ref, b1_ref, w2_ref, b2_ref, out_ref, acc_ref):
    k = pl.program_id(1)

    @pl.when(k == 0)
    def _():
        acc_ref[...] = jnp.zeros_like(acc_ref)

    acc_ref[...] += jnp.dot(feat_ref[...], w1_ref[...],
                            preferred_element_type=jnp.float32)

    @pl.when(k == pl.num_programs(1) - 1)
    def _():
        fc6 = jnp.maximum(acc_ref[...] + b1_ref[...], 0.0)
        out_ref[...] = (jnp.dot(fc6.astype(jnp.bfloat16), w2_ref[...],
                                preferred_element_type=jnp.float32)
                        + b2_ref[...])


# ----------------------------------------------------------------------------
# Plain-JAX glue: per-ROI integer bin boundaries (scalar work, not hot path).
# ----------------------------------------------------------------------------
def compute_roi_bins(rois, img_h, img_w, H, W, P, spatial_scale):
    rois = rois.astype(jnp.float32)
    # Reproduce the module's coordinate composition exactly:
    #   feature_rois[:, [0, 2]] = rois[:, [0, 2]] / img_h * H
    #   feature_rois[:, [1, 3]] = rois[:, [1, 3]] / img_w * W
    # then torchvision roi_pool reads box columns as (x1, y1, x2, y2).
    c0 = rois[:, 0] / img_h * H
    c1 = rois[:, 1] / img_w * W
    c2 = rois[:, 2] / img_h * H
    c3 = rois[:, 3] / img_w * W

    def round_half_away(v):        # match std::round (half away from zero)
        return jnp.sign(v) * jnp.floor(jnp.abs(v) + 0.5)

    roi_start_w = round_half_away(c0 * spatial_scale)
    roi_start_h = round_half_away(c1 * spatial_scale)
    roi_end_w = round_half_away(c2 * spatial_scale)
    roi_end_h = round_half_away(c3 * spatial_scale)
    roi_w = jnp.maximum(roi_end_w - roi_start_w + 1.0, 1.0)
    roi_h = jnp.maximum(roi_end_h - roi_start_h + 1.0, 1.0)
    bin_w = roi_w / P
    bin_h = roi_h / P

    pidx = jnp.arange(P, dtype=jnp.float32)                      # (P,)
    hstart = jnp.clip(jnp.floor(pidx[None, :] * bin_h[:, None])
                      + roi_start_h[:, None], 0.0, float(H))     # (R, P)
    hend = jnp.clip(jnp.ceil((pidx[None, :] + 1.0) * bin_h[:, None])
                    + roi_start_h[:, None], 0.0, float(H))
    wstart = jnp.clip(jnp.floor(pidx[None, :] * bin_w[:, None])
                      + roi_start_w[:, None], 0.0, float(W))
    wend = jnp.clip(jnp.ceil((pidx[None, :] + 1.0) * bin_w[:, None])
                    + roi_start_w[:, None], 0.0, float(W))

    to_i32 = lambda a: a.astype(jnp.int32).reshape(-1)           # (R*P,)
    return to_i32(hstart), to_i32(hend), to_i32(wstart), to_i32(wend)


# ----------------------------------------------------------------------------
# Static tiling / VMEM helpers (pure Python on static shapes).
# ----------------------------------------------------------------------------
def _pick_tk(K):
    # K-tile for the head: one block when small, otherwise 2048 (2 MiB bf16
    # per buffer, 4 MiB double-buffered) so the K pipeline has few, deep steps.
    return K if K <= 2048 else 2048


def _pick_tc(C):
    # Channel tile for the ROI pool: keeps the per-image block comfortably
    # inside v7x's 64 MiB VMEM and gives v7x extra parallel grid work.
    return 512 if (C > 512 and C % 512 == 0) else C


def _vmem_limit(estimate_bytes):
    # Explicit scoped-VMEM budget: 2x headroom over the estimated live blocks,
    # clamped to [16 MiB, 64 MiB] so it is valid on v5e/v6e/v7x alike.
    return int(min(max(2 * estimate_bytes, 16 * 2 ** 20), 64 * 2 ** 20))


# ----------------------------------------------------------------------------
# One-time weight preparation (outside the per-call hot path).
# ----------------------------------------------------------------------------
def prepare_params(raw, C, P=7, n_classes=21):
    """Permute / pad / cast weights once.

    `raw["w1"]` rows are expected in PyTorch's flatten order of the pooled
    (C, P, P) features, i.e. row index = c*P*P + ph*P + pw (what you get from
    a real checkpoint).  The kernel flattens pooled features in (pw, ph, c)
    order, so the rows are permuted here exactly once.
    """
    K = C * P * P
    TK = _pick_tk(K)
    Kp = pl.cdiv(K, TK) * TK

    w1 = raw["w1"].reshape(C, P, P, -1)            # (c, ph, pw, 512)
    w1 = jnp.transpose(w1, (2, 1, 0, 3))           # (pw, ph, c, 512)
    w1 = w1.reshape(K, -1)
    w1 = jnp.pad(w1, ((0, Kp - K), (0, 0))).astype(jnp.bfloat16)

    n_out = n_classes * 5
    n_out_p = ((n_out + 127) // 128) * 128
    w2 = jnp.concatenate([raw["w_reg"], raw["w_cls"]], axis=1)
    w2 = jnp.pad(w2, ((0, 0), (0, n_out_p - n_out))).astype(jnp.bfloat16)
    b2 = jnp.concatenate([raw["b_reg"], raw["b_cls"]], axis=1)
    b2 = jnp.pad(b2, ((0, 0), (0, n_out_p - n_out))).astype(jnp.float32)

    return {"w1": w1, "b1": raw["b1"].astype(jnp.float32), "w2": w2, "b2": b2}


# ----------------------------------------------------------------------------
# Full forward
# ----------------------------------------------------------------------------
@functools.partial(jax.jit, static_argnames=("roi_size", "spatial_scale",
                                             "n_classes"))
def resnet_head_forward(prepped, x, rois, roi_inds, img_h, img_w,
                        roi_size=7, spatial_scale=1.0, n_classes=21):
    N, C, H, W = x.shape
    R = rois.shape[0]
    P = roi_size

    # NCHW -> NHWC, bf16: channels on lanes, half the HBM->VMEM stream.
    x_nhwc = jnp.transpose(x, (0, 2, 3, 1)).astype(jnp.bfloat16)

    hs, he, ws, we = compute_roi_bins(rois, img_h, img_w, H, W, P,
                                      spatial_scale)

    # ---- Kernel 1: ROI max pool (scalar-prefetch batch gather + bin bounds).
    # NOTE: ROIs must be sorted by roi_inds (asserted by the caller) so each
    # per-image (H, W, TC) feature tile is DMA'd only once per channel tile.
    TC = _pick_tc(C)
    nc = C // TC
    roi_vmem = _vmem_limit(
        2 * H * W * TC * 2          # bf16 feature block, double-buffered
        + 2 * P * P * TC * 2        # bf16 output block, double-buffered
        + H * W * TC * 4            # f32 upcast working copy
        + P * W * TC * 4            # stage-A partial maxes
        + 2 * P * P * TC * 4)       # pooled f32 temporaries

    pooled = pl.pallas_call(
        roi_pool_kernel,
        out_shape=jax.ShapeDtypeStruct((R, P, P, C), jnp.bfloat16),
        grid_spec=pltpu.PrefetchScalarGridSpec(
            num_scalar_prefetch=5,
            grid=(nc, R),           # ROI axis innermost -> per-image block reuse
            in_specs=[
                pl.BlockSpec((1, H, W, TC),
                             lambda c, r, ii, a, b, d, e: (ii[r], 0, 0, c)),
            ],
            out_specs=pl.BlockSpec((1, P, P, TC),
                                   lambda c, r, ii, a, b, d, e: (r, 0, 0, c)),
        ),
        compiler_params=pltpu.CompilerParams(
            dimension_semantics=("parallel", "parallel"),
            vmem_limit_bytes=roi_vmem),
    )(roi_inds.astype(jnp.int32), hs, he, ws, we, x_nhwc)

    # fc6 input: pooled map flattened in (pw, ph, c) order (w1 rows were
    # permuted to match in prepare_params).  Already bf16 -- no extra cast pass.
    K = P * P * C
    feat = pooled.reshape(R, K)

    # ---- Kernel 2: fused head, R-tiled x K-tiled.
    TK = _pick_tk(K)
    nk = pl.cdiv(K, TK)
    Kp = nk * TK
    if Kp != K:
        feat = jnp.pad(feat, ((0, 0), (0, Kp - K)))   # tiny activation pad only

    w1, b1 = prepped["w1"], prepped["b1"]
    w2, b2 = prepped["w2"], prepped["b2"]
    assert w1.shape[0] == Kp, "prepare_params / forward K-tiling mismatch"
    D1 = w1.shape[1]
    n_out_p = w2.shape[1]

    # Row tiles only pay off when R is large (each tile re-streams w1); on
    # v7x with R>=256 this feeds the second TensorCore.
    TR = 128 if (R >= 256 and R % 128 == 0) else R
    nr = R // TR
    head_vmem = _vmem_limit(
        2 * TR * TK * 2             # bf16 feat K-blocks, double-buffered
        + 2 * TK * D1 * 2           # bf16 w1 K-blocks, double-buffered
        + 2 * D1 * n_out_p * 2      # fused bf16 w2
        + 2 * TR * n_out_p * 4      # f32 output block
        + TR * D1 * 4               # f32 accumulator scratch
        + 2 * (D1 + n_out_p) * 4)   # biases

    out = pl.pallas_call(
        head_kernel,
        out_shape=jax.ShapeDtypeStruct((R, n_out_p), jnp.float32),
        grid_spec=pltpu.PrefetchScalarGridSpec(
            num_scalar_prefetch=0,
            grid=(nr, nk),
            in_specs=[
                pl.BlockSpec((TR, TK), lambda i, k: (i, k)),      # feat block
                pl.BlockSpec((TK, D1), lambda i, k: (k, 0)),      # w1 K-block
                pl.BlockSpec((1, D1), lambda i, k: (0, 0)),       # b1 (resident)
                pl.BlockSpec((D1, n_out_p), lambda i, k: (0, 0)),  # fused w2
                pl.BlockSpec((1, n_out_p), lambda i, k: (0, 0)),   # fused b2
            ],
            out_specs=pl.BlockSpec((TR, n_out_p), lambda i, k: (i, 0)),
            scratch_shapes=[pltpu.VMEM((TR, D1), jnp.float32)],   # fc6 acc
        ),
        compiler_params=pltpu.CompilerParams(
            dimension_semantics=("parallel", "arbitrary"),        # K = reduction
            vmem_limit_bytes=head_vmem),
    )(feat, w1, b1, w2, b2)

    reg = out[:, : n_classes * 4]
    cls = out[:, n_classes * 4: n_classes * 5]

    n_sample = R // N
    reg = reg.reshape(N, n_sample, n_classes * 4)    # [N, n_sample, 4*n_cls]
    cls = cls.reshape(N, n_sample, n_classes)
    cls = jnp.transpose(cls, (0, 2, 1))              # [N, n_classes, n_sample]
    return cls, reg


def init_params(key, in_features, n_classes=21):
    # TODO(synk): the real resnet `classifier` (layer4 blocks + pooling) is not
    # translated; a synthetic Linear(in_features -> 512) + ReLU stands in so
    # that reg/cls (in_features=512) match the module.  Rows are in PyTorch's
    # flatten order of the (C, P, P) pooled features (prepare_params permutes).
    k1, k2, k3 = jax.random.split(key, 3)
    return {
        "w1": 0.02 * jax.random.normal(k1, (in_features, 512), jnp.float32),
        "b1": jnp.zeros((1, 512), jnp.float32),
        "w_reg": 0.02 * jax.random.normal(k2, (512, n_classes * 4),
                                          jnp.float32),
        "b_reg": jnp.zeros((1, n_classes * 4), jnp.float32),
        "w_cls": 0.02 * jax.random.normal(k3, (512, n_classes), jnp.float32),
        "b_cls": jnp.zeros((1, n_classes), jnp.float32),
    }


if __name__ == "__main__":
    key = jax.random.PRNGKey(0)
    kx, kr1, kr2, kp = jax.random.split(key, 4)

    N, C, H, W = 2, 32, 16, 16       # small backbone feature map (NCHW)
    n_sample = 4                     # ROIs per image
    R = N * n_sample
    roi_size = 7
    n_classes = 21
    img_h = img_w = 64.0             # original image size

    x = jax.random.normal(kx, (N, C, H, W), jnp.float32)

    # deterministic ROIs in image coordinates
    tl = jax.random.uniform(kr1, (R, 2), jnp.float32, 0.0, img_h / 2)
    sz = jax.random.uniform(kr2, (R, 2), jnp.float32, 4.0, img_h / 2)
    br = jnp.minimum(tl + sz, img_h - 1.0)
    rois = jnp.concatenate([tl, br], axis=-1)                         # (R, 4)
    roi_inds = jnp.repeat(jnp.arange(N, dtype=jnp.int32), n_sample)   # sorted

    # Perf contract (not a correctness requirement): sorted ROIs keep the
    # per-image feature DMA count at N instead of up to R.
    assert bool(jnp.all(roi_inds[:-1] <= roi_inds[1:])), \
        "ROIs must be sorted by roi_inds"

    raw_params = init_params(kp, in_features=C * roi_size * roi_size,
                             n_classes=n_classes)
    prepped = prepare_params(raw_params, C=C, P=roi_size, n_classes=n_classes)

    cls, reg = resnet_head_forward(prepped, x, rois, roi_inds, img_h, img_w,
                                   roi_size=roi_size, spatial_scale=1.0,
                                   n_classes=n_classes)
    jax.block_until_ready((cls, reg))

    assert cls.shape == (N, n_classes, n_sample), cls.shape
    assert reg.shape == (N, n_sample, n_classes * 4), reg.shape
    assert bool(jnp.all(jnp.isfinite(cls))) and bool(jnp.all(jnp.isfinite(reg)))
    print("KERNEL_OK")
</pallas_src>

<mosaic_0001>
module attributes {stable_mosaic.version = 11 : i64} {
  func.func @head_kernel(%arg0: i32, %arg1: i32, %arg2: memref<8x1568xbf16, #tpu.memory_space<vmem>>, %arg3: memref<1568x512xbf16, #tpu.memory_space<vmem>>, %arg4: memref<1x512xf32, #tpu.memory_space<vmem>>, %arg5: memref<512x128xbf16, #tpu.memory_space<vmem>>, %arg6: memref<1x128xf32, #tpu.memory_space<vmem>>, %arg7: memref<8x128xf32, #tpu.memory_space<vmem>>, %arg8: memref<8x512xf32, #tpu.memory_space<vmem>>) attributes {dimension_semantics = [#tpu.dimension_semantics<parallel>, #tpu.dimension_semantics<arbitrary>], iteration_bounds = array<i64: 1, 1>, scalar_prefetch = 0 : i64, scratch_operands = 1 : i64, tpu.core_type = #tpu.core_type<tc>, window_params = [{transform_indices = @transform_0, window_bounds = array<i64: 8, 1568>}, {transform_indices = @transform_1, window_bounds = array<i64: 1568, 512>}, {pipeline_mode = #tpu.pipeline_mode<synchronous>, transform_indices = @transform_2, window_bounds = array<i64: 1, 512>}, {pipeline_mode = #tpu.pipeline_mode<synchronous>, transform_indices = @transform_3, window_bounds = array<i64: 512, 128>}, {pipeline_mode = #tpu.pipeline_mode<synchronous>, transform_indices = @transform_4, window_bounds = array<i64: 1, 128>}, {transform_indices = @transform_5, window_bounds = array<i64: 8, 128>}]} {
    %c0_i32 = arith.constant 0 : i32
    %0 = arith.cmpi eq, %arg1, %c0_i32 : i32
    %1 = arith.extui %0 : i1 to i32
    %c0_i32_0 = arith.constant 0 : i32
    %2 = arith.cmpi ne, %1, %c0_i32_0 : i32
    scf.if %2 {
      %cst_10 = arith.constant 0.000000e+00 : f32
      %12 = vector.broadcast %cst_10 : f32 to vector<8x512xf32>
      %c0_11 = arith.constant 0 : index
      %c0_12 = arith.constant 0 : index
      %13 = vector.load %arg8[%c0_11, %c0_12] : memref<8x512xf32, #tpu.memory_space<vmem>>, vector<8x512xf32>
      tpu.vector_store %arg8[%c0_11, %c0_12], %12 {strides = array<i32>} : memref<8x512xf32, #tpu.memory_space<vmem>>, vector<8x512xf32>,
    } else {
    }
    %c0 = arith.constant 0 : index
    %c0_1 = arith.constant 0 : index
    %3 = vector.load %arg8[%c0, %c0_1] : memref<8x512xf32, #tpu.memory_space<vmem>>, vector<8x512xf32>
    %c0_2 = arith.constant 0 : index
    %c0_3 = arith.constant 0 : index
    %4 = vector.load %arg2[%c0_2, %c0_3] : memref<8x1568xbf16, #tpu.memory_space<vmem>>, vector<8x1568xbf16>
    %c0_4 = arith.constant 0 : index
    %c0_5 = arith.constant 0 : index
    %5 = vector.load %arg3[%c0_4, %c0_5] : memref<1568x512xbf16, #tpu.memory_space<vmem>>, vector<1568x512xbf16>
    %cst = arith.constant dense<0.000000e+00> : vector<8x512xf32>
    %6 = tpu.matmul %4, %5, %cst {dimension_numbers = #tpu.dot_dimension_numbers<[1], [0], [0], [1], [0, 0, 1, 1], [], []>} : vector<8x1568xbf16>, vector<1568x512xbf16>, vector<8x512xf32> -> vector<8x512xf32>
    %7 = arith.addf %3, %6 : vector<8x512xf32>
    %c0_6 = arith.constant 0 : index
    %c0_7 = arith.constant 0 : index
    %8 = vector.load %arg8[%c0_6, %c0_7] : memref<8x512xf32, #tpu.memory_space<vmem>>, vector<8x512xf32>
    tpu.vector_store %arg8[%c0_6, %c0_7], %7 {strides = array<i32>} : memref<8x512xf32, #tpu.memory_space<vmem>>, vector<8x512xf32>,
    %c0_i32_8 = arith.constant 0 : i32
    %9 = arith.cmpi eq, %arg1, %c0_i32_8 : i32
    %10 = arith.extui %9 : i1 to i32
    %c0_i32_9 = arith.constant 0 : i32
    %11 = arith.cmpi ne, %10, %c0_i32_9 : i32
    scf.if %11 {
      %c0_10 = arith.constant 0 : index
      %c0_11 = arith.constant 0 : index
      %12 = vector.load %arg8[%c0_10, %c0_11] : memref<8x512xf32, #tpu.memory_space<vmem>>, vector<8x512xf32>
      %c0_12 = arith.constant 0 : index
      %c0_13 = arith.constant 0 : index
      %13 = vector.load %arg4[%c0_12, %c0_13] : memref<1x512xf32, #tpu.memory_space<vmem>>, vector<1x512xf32>
      %14 = vector.broadcast %13 : vector<1x512xf32> to vector<8x512xf32>
      %15 = arith.addf %12, %14 : vector<8x512xf32>
      %cst_14 = arith.constant 0.000000e+00 : f32
      %16 = vector.broadcast %cst_14 : f32 to vector<8x512xf32>
      %17 = arith.maximumf %15, %16 : vector<8x512xf32>
      %18 = arith.truncf %17 : vector<8x512xf32> to vector<8x512xbf16>
      %c0_15 = arith.constant 0 : index
      %c0_16 = arith.constant 0 : index
      %19 = vector.load %arg5[%c0_15, %c0_16] : memref<512x128xbf16, #tpu.memory_space<vmem>>, vector<512x128xbf16>
      %cst_17 = arith.constant dense<0.000000e+00> : vector<8x128xf32>
      %20 = tpu.matmul %18, %19, %cst_17 {dimension_numbers = #tpu.dot_dimension_numbers<[1], [0], [0], [1], [0, 0, 1, 1], [], []>} : vector<8x512xbf16>, vector<512x128xbf16>, vector<8x128xf32> -> vector<8x128xf32>
      %c0_18 = arith.constant 0 : index
      %c0_19 = arith.constant 0 : index
      %21 = vector.load %arg6[%c0_18, %c0_19] : memref<1x128xf32, #tpu.memory_space<vmem>>, vector<1x128xf32>
      %22 = vector.broadcast %21 : vector<1x128xf32> to vector<8x128xf32>
      %23 = arith.addf %20, %22 : vector<8x128xf32>
      %c0_20 = arith.constant 0 : index
      %c0_21 = arith.constant 0 : index
      %24 = vector.load %arg7[%c0_20, %c0_21] : memref<8x128xf32, #tpu.memory_space<vmem>>, vector<8x128xf32>
      tpu.vector_store %arg7[%c0_20, %c0_21], %23 {strides = array<i32>} : memref<8x128xf32, #tpu.memory_space<vmem>>, vector<8x128xf32>,
    } else {
    }
    return
  }
  func.func @transform_0(%arg0: i32, %arg1: i32) -> (i32, i32) {
    %c0_i32 = arith.constant 0 : i32
    return %arg0, %arg1 : i32, i32
  }
  func.func @transform_1(%arg0: i32, %arg1: i32) -> (i32, i32) {
    %c0_i32 = arith.constant 0 : i32
    %c0_i32_0 = arith.constant 0 : i32
    return %arg1, %c0_i32 : i32, i32
  }
  func.func @transform_2(%arg0: i32, %arg1: i32) -> (i32, i32) {
    %c0_i32 = arith.constant 0 : i32
    %c0_i32_0 = arith.constant 0 : i32
    %c0_i32_1 = arith.constant 0 : i32
    return %c0_i32, %c0_i32_0 : i32, i32
  }
  func.func @transform_3(%arg0: i32, %arg1: i32) -> (i32, i32) {
    %c0_i32 = arith.constant 0 : i32
    %c0_i32_0 = arith.constant 0 : i32
    %c0_i32_1 = arith.constant 0 : i32
    return %c0_i32, %c0_i32_0 : i32, i32
  }
  func.func @transform_4(%arg0: i32, %arg1: i32) -> (i32, i32) {
    %c0_i32 = arith.constant 0 : i32
    %c0_i32_0 = arith.constant 0 : i32
    %c0_i32_1 = arith.constant 0 : i32
    return %c0_i32, %c0_i32_0 : i32, i32
  }
  func.func @transform_5(%arg0: i32, %arg1: i32) -> (i32, i32) {
    %c0_i32 = arith.constant 0 : i32
    %c0_i32_0 = arith.constant 0 : i32
    return %arg0, %c0_i32 : i32, i32
  }
}

module attributes {stable_mosaic.version = 11 : i64} {
  func.func @roi_pool_kernel(%arg0: i32, %arg1: i32, %arg2: memref<8xi32, #tpu.memory_space<smem>>, %arg3: memref<56xi32, #tpu.memory_space<smem>>, %arg4: memref<56xi32, #tpu.memory_space<smem>>, %arg5: memref<56xi32, #tpu.memory_space<smem>>, %arg6: memref<56xi32, #tpu.memory_space<smem>>, %arg7: memref<1x16x16x32xbf16, #tpu.memory_space<vmem>>, %arg8: memref<1x7x7x32xbf16, #tpu.memory_space<vmem>>) attributes {dimension_semantics = [#tpu.dimension_semantics<parallel>, #tpu.dimension_semantics<parallel>], iteration_bounds = array<i64: 1, 8>, scalar_prefetch = 5 : i64, scratch_operands = 0 : i64, tpu.core_type = #tpu.core_type<tc>, window_params = [{transform_indices = @transform_0, window_bounds = array<i64: 1, 16, 16, 32>}, {transform_indices = @transform_1, window_bounds = array<i64: 1, 7, 7, 32>}]} {
    %c0 = arith.constant 0 : index
    %c0_0 = arith.constant 0 : index
    %c0_1 = arith.constant 0 : index
    %c0_2 = arith.constant 0 : index
    %0 = vector.load %arg7[%c0, %c0_0, %c0_1, %c0_2] : memref<1x16x16x32xbf16, #tpu.memory_space<vmem>>, vector<1x16x16x32xbf16>
    %1 = vector.shape_cast %0 : vector<1x16x16x32xbf16> to vector<16x16x32xbf16>
    %2 = arith.extf %1 : vector<16x16x32xbf16> to vector<16x16x32xf32>
    %c7_i32 = arith.constant 7 : i32
    %3 = arith.muli %arg1, %c7_i32 : i32
    %c0_i32 = arith.constant 0 : i32
    %4 = arith.addi %3, %c0_i32 : i32
    %5 = arith.index_cast %4 : i32 to index
    %6 = memref.load %arg3[%5] : memref<56xi32, #tpu.memory_space<smem>>
    %c7_i32_3 = arith.constant 7 : i32
    %7 = arith.muli %arg1, %c7_i32_3 : i32
    %c0_i32_4 = arith.constant 0 : i32
    %8 = arith.addi %7, %c0_i32_4 : i32
    %9 = arith.index_cast %8 : i32 to index
    %10 = memref.load %arg4[%9] : memref<56xi32, #tpu.memory_space<smem>>
    %cst = arith.constant 0xFF800000 : f32
    %11 = vector.broadcast %cst : f32 to vector<16x32xf32>
    %c0_i32_5 = arith.constant 0 : i32
    %12 = arith.cmpi sle, %6, %c0_i32_5 : i32
    %c0_i32_6 = arith.constant 0 : i32
    %13 = arith.cmpi sgt, %10, %c0_i32_6 : i32
    %14 = arith.andi %12, %13 : i1
    %15 = vector.extract_strided_slice %2 {offsets = [0, 0, 0], sizes = [1, 16, 32], strides = [1, 1, 1]} : vector<16x16x32xf32> to vector<1x16x32xf32>
    %16 = vector.shape_cast %15 : vector<1x16x32xf32> to vector<16x32xf32>
    %cst_7 = arith.constant 0xFF800000 : f32
    %17 = vector.broadcast %cst_7 : f32 to vector<16x32xf32>
    %18 = arith.select %14, %16, %17 : vector<16x32xf32>
    %19 = arith.maximumf %11, %18 : vector<16x32xf32>
    %c1_i32 = arith.constant 1 : i32
    %20 = arith.cmpi sle, %6, %c1_i32 : i32
    %c1_i32_8 = arith.constant 1 : i32
    %21 = arith.cmpi sgt, %10, %c1_i32_8 : i32
    %22 = arith.andi %20, %21 : i1
    %23 = vector.extract_strided_slice %2 {offsets = [1, 0, 0], sizes = [1, 16, 32], strides = [1, 1, 1]} : vector<16x16x32xf32> to vector<1x16x32xf32>
    %24 = vector.shape_cast %23 : vector<1x16x32xf32> to vector<16x32xf32>
    %cst_9 = arith.constant 0xFF800000 : f32
    %25 = vector.broadcast %cst_9 : f32 to vector<16x32xf32>
    %26 = arith.select %22, %24, %25 : vector<16x32xf32>
    %27 = arith.maximumf %19, %26 : vector<16x32xf32>
    %c2_i32 = arith.constant 2 : i32
    %28 = arith.cmpi sle, %6, %c2_i32 : i32
    %c2_i32_10 = arith.constant 2 : i32
    %29 = arith.cmpi sgt, %10, %c2_i32_10 : i32
    %30 = arith.andi %28, %29 : i1
    %31 = vector.extract_strided_slice %2 {offsets = [2, 0, 0], sizes = [1, 16, 32], strides = [1, 1, 1]} : vector<16x16x32xf32> to vector<1x16x32xf32>
    %32 = vector.shape_cast %31 : vector<1x16x32xf32> to vector<16x32xf32>
    %cst_11 = arith.constant 0xFF800000 : f32
    %33 = vector.broadcast %cst_11 : f32 to vector<16x32xf32>
    %34 = arith.select %30, %32, %33 : vector<16x32xf32>
    %35 = arith.maximumf %27, %34 : vector<16x32xf32>
    %c3_i32 = arith.constant 3 : i32
    %36 = arith.cmpi sle, %6, %c3_i32 : i32
    %c3_i32_12 = arith.constant 3 : i32
    %37 = arith.cmpi sgt, %10, %c3_i32_12 : i32
    %38 = arith.andi %36, %37 : i1
    %39 = vector.extract_strided_slice %2 {offsets = [3, 0, 0], sizes = [1, 16, 32], strides = [1, 1, 1]} : vector<16x16x32xf32> to vector<1x16x32xf32>
    %40 = vector.shape_cast %39 : vector<1x16x32xf32> to vector<16x32xf32>
    %cst_13 = arith.constant 0xFF800000 : f32
    %41 = vector.broadcast %cst_13 : f32 to vector<16x32xf32>
    %42 = arith.select %38, %40, %41 : vector<16x32xf32>
    %43 = arith.maximumf %35, %42 : vector<16x32xf32>
    %c4_i32 = arith.constant 4 : i32
    %44 = arith.cmpi sle, %6, %c4_i32 : i32
    %c4_i32_14 = arith.constant 4 : i32
    %45 = arith.cmpi sgt, %10, %c4_i32_14 : i32
    %46 = arith.andi %44, %45 : i1
    %47 = vector.extract_strided_slice %2 {offsets = [4, 0, 0], sizes = [1, 16, 32], strides = [1, 1, 1]} : vector<16x16x32xf32> to vector<1x16x32xf32>
    %48 = vector.shape_cast %47 : vector<1x16x32xf32> to vector<16x32xf32>
    %cst_15 = arith.constant 0xFF800000 : f32
    %49 = vector.broadcast %cst_15 : f32 to vector<16x32xf32>
    %50 = arith.select %46, %48, %49 : vector<16x32xf32>
    %51 = arith.maximumf %43, %50 : vector<16x32xf32>
    %c5_i32 = arith.constant 5 : i32
    %52 = arith.cmpi sle, %6, %c5_i32 : i32
    %c5_i32_16 = arith.constant 5 : i32
    %53 = arith.cmpi sgt, %10, %c5_i32_16 : i32
    %54 = arith.andi %52, %53 : i1
    %55 = vector.extract_strided_slice %2 {offsets = [5, 0, 0], sizes = [1, 16, 32], strides = [1, 1, 1]} : vector<16x16x32xf32> to vector<1x16x32xf32>
    %56 = vector.shape_cast %55 : vector<1x16x32xf32> to vector<16x32xf32>
    %cst_17 = arith.constant 0xFF800000 : f32
    %57 = vector.broadcast %cst_17 : f32 to vector<16x32xf32>
    %58 = arith.select %54, %56, %57 : vector<16x32xf32>
    %59 = arith.maximumf %51, %58 : vector<16x32xf32>
    %c6_i32 = arith.constant 6 : i32
    %60 = arith.cmpi sle, %6, %c6_i32 : i32
    %c6_i32_18 = arith.constant 6 : i32
    %61 = arith.cmpi sgt, %10, %c6_i32_18 : i32
    %62 = arith.andi %60, %61 : i1
    %63 = vector.extract_strided_slice %2 {offsets = [6, 0, 0], sizes = [1, 16, 32], strides = [1, 1, 1]} : vector<16x16x32xf32> to vector<1x16x32xf32>
    %64 = vector.shape_cast %63 : vector<1x16x32xf32> to vector<16x32xf32>
    %cst_19 = arith.constant 0xFF800000 : f32
    %65 = vector.broadcast %cst_19 : f32 to vector<16x32xf32>
    %66 = arith.select %62, %64, %65 : vector<16x32xf32>
    %67 = arith.maximumf %59, %66 : vector<16x32xf32>
    %c7_i32_20 = arith.constant 7 : i32
    %68 = arith.cmpi sle, %6, %c7_i32_20 : i32
    %c7_i32_21 = arith.constant 7 : i32
    %69 = arith.cmpi sgt, %10, %c7_i32_21 : i32
    %70 = arith.andi %68, %69 : i1
    %71 = vector.extract_strided_slice %2 {offsets = [7, 0, 0], sizes = [1, 16, 32], strides = [1, 1, 1]} : vector<16x16x32xf32> to vector<1x16x32xf32>
    %72 = vector.shape_cast %71 : vector<1x16x32xf32> to vector<16x32xf32>
    %cst_22 = arith.constant 0xFF800000 : f32
    %73 = vector.broadcast %cst_22 : f32 to vector<16x32xf32>
    %74 = arith.select %70, %72, %73 : vector<16x32xf32>
    %75 = arith.maximumf %67, %74 : vector<16x32xf32>
    %c8_i32 = arith.constant 8 : i32
    %76 = arith.cmpi sle, %6, %c8_i32 : i32
    %c8_i32_23 = arith.constant 8 : i32
    %77 = arith.cmpi sgt, %10, %c8_i32_23 : i32
    %78 = arith.andi %76, %77 : i1
    %79 = vector.extract_strided_slice %2 {offsets = [8, 0, 0], sizes = [1, 16, 32], strides = [1, 1, 1]} : vector<16x16x32xf32> to vector<1x16x32xf32>
    %80 = vector.shape_cast %79 : vector<1x16x32xf32> to vector<16x32xf32>
    %cst_24 = arith.constant 0xFF800000 : f32
    %81 = vector.broadcast %cst_24 : f32 to vector<16x32xf32>
    %82 = arith.select %78, %80, %81 : vector<16x32xf32>
    %83 = arith.maximumf %75, %82 : vector<16x32xf32>
    %c9_i32 = arith.constant 9 : i32
    %84 = arith.cmpi sle, %6, %c9_i32 : i32
    %c9_i32_25 = arith.constant 9 : i32
    %85 = arith.cmpi sgt, %10, %c9_i32_25 : i32
    %86 = arith.andi %84, %85 : i1
    %87 = vector.extract_strided_slice %2 {offsets = [9, 0, 0], sizes = [1, 16, 32], strides = [1, 1, 1]} : vector<16x16x32xf32> to vector<1x16x32xf32>
    %88 = vector.shape_cast %87 : vector<1x16x32xf32> to vector<16x32xf32>
    %cst_26 = arith.constant 0xFF800000 : f32
    %89 = vector.broadcast %cst_26 : f32 to vector<16x32xf32>
    %90 = arith.select %86, %88, %89 : vector<16x32xf32>
    %91 = arith.maximumf %83, %90 : vector<16x32xf32>
    %c10_i32 = arith.constant 10 : i32
    %92 = arith.cmpi sle, %6, %c10_i32 : i32
    %c10_i32_27 = arith.constant 10 : i32
    %93 = arith.cmpi sgt, %10, %c10_i32_27 : i32
    %94 = arith.andi %92, %93 : i1
    %95 = vector.extract_strided_slice %2 {offsets = [10, 0, 0], sizes = [1, 16, 32], strides = [1, 1, 1]} : vector<16x16x32xf32> to vector<1x16x32xf32>
    %96 = vector.shape_cast %95 : vector<1x16x32xf32> to vector<16x32xf32>
    %cst_28 = arith.constant 0xFF800000 : f32
    %97 = vector.broadcast %cst_28 : f32 to vector<16x32xf32>
    %98 = arith.select %94, %96, %97 : vector<16x32xf32>
    %99 = arith.maximumf %91, %98 : vector<16x32xf32>
    %c11_i32 = arith.constant 11 : i32
    %100 = arith.cmpi sle, %6, %c11_i32 : i32
    %c11_i32_29 = arith.constant 11 : i32
    %101 = arith.cmpi sgt, %10, %c11_i32_29 : i32
    %102 = arith.andi %100, %101 : i1
    %103 = vector.extract_strided_slice %2 {offsets = [11, 0, 0], sizes = [1, 16, 32], strides = [1, 1, 1]} : vector<16x16x32xf32> to vector<1x16x32xf32>
    %104 = vector.shape_cast %103 : vector<1x16x32xf32> to vector<16x32xf32>
    %cst_30 = arith.constant 0xFF800000 : f32
    %105 = vector.broadcast %cst_30 : f32 to vector<16x32xf32>
    %106 = arith.select %102, %104, %105 : vector<16x32xf32>
    %107 = arith.maximumf %99, %106 : vector<16x32xf32>
    %c12_i32 = arith.constant 12 : i32
    %108 = arith.cmpi sle, %6, %c12_i32 : i32
    %c12_i32_31 = arith.constant 12 : i32
    %109 = arith.cmpi sgt, %10, %c12_i32_31 : i32
    %110 = arith.andi %108, %109 : i1
    %111 = vector.extract_strided_slice %2 {offsets = [12, 0, 0], sizes = [1, 16, 32], strides = [1, 1, 1]} : vector<16x16x32xf32> to vector<1x16x32xf32>
    %112 = vector.shape_cast %111 : vector<1x16x32xf32> to vector<16x32xf32>
    %cst_32 = arith.constant 0xFF800000 : f32
    %113 = vector.broadcast %cst_32 : f32 to vector<16x32xf32>
    %114 = arith.select %110, %112, %113 : vector<16x32xf32>
    %115 = arith.maximumf %107, %114 : vector<16x32xf32>
    %c13_i32 = arith.constant 13 : i32
    %116 = arith.cmpi sle, %6, %c13_i32 : i32
    %c13_i32_33 = arith.constant 13 : i32
    %117 = arith.cmpi sgt, %10, %c13_i32_33 : i32
    %118 = arith.andi %116, %117 : i1
    %119 = vector.extract_strided_slice %2 {offsets = [13, 0, 0], sizes = [1, 16, 32], strides = [1, 1, 1]} : vector<16x16x32xf32> to vector<1x16x32xf32>
    %120 = vector.shape_cast %119 : vector<1x16x32xf32> to vector<16x32xf32>
    %cst_34 = arith.constant 0xFF800000 : f32
    %121 = vector.broadcast %cst_34 : f32 to vector<16x32xf32>
    %122 = arith.select %118, %120, %121 : vector<16x32xf32>
    %123 = arith.maximumf %115, %122 : vector<16x32xf32>
    %c14_i32 = arith.constant 14 : i32
    %124 = arith.cmpi sle, %6, %c14_i32 : i32
    %c14_i32_35 = arith.constant 14 : i32
    %125 = arith.cmpi sgt, %10, %c14_i32_35 : i32
    %126 = arith.andi %124, %125 : i1
    %127 = vector.extract_strided_slice %2 {offsets = [14, 0, 0], sizes = [1, 16, 32], strides = [1, 1, 1]} : vector<16x16x32xf32> to vector<1x16x32xf32>
    %128 = vector.shape_cast %127 : vector<1x16x32xf32> to vector<16x32xf32>
    %cst_36 = arith.constant 0xFF800000 : f32
    %129 = vector.broadcast %cst_36 : f32 to vector<16x32xf32>
    %130 = arith.select %126, %128, %129 : vector<16x32xf32>
    %131 = arith.maximumf %123, %130 : vector<16x32xf32>
    %c15_i32 = arith.constant 15 : i32
    %132 = arith.cmpi sle, %6, %c15_i32 : i32
    %c15_i32_37 = arith.constant 15 : i32
    %133 = arith.cmpi sgt, %10, %c15_i32_37 : i32
    %134 = arith.andi %132, %133 : i1
    %135 = vector.extract_strided_slice %2 {offsets = [15, 0, 0], sizes = [1, 16, 32], strides = [1, 1, 1]} : vector<16x16x32xf32> to vector<1x16x32xf32>
    %136 = vector.shape_cast %135 : vector<1x16x32xf32> to vector<16x32xf32>
    %cst_38 = arith.constant 0xFF800000 : f32
    %137 = vector.broadcast %cst_38 : f32 to vector<16x32xf32>
    %138 = arith.select %134, %136, %137 : vector<16x32xf32>
    %139 = arith.maximumf %131, %138 : vector<16x32xf32>
    %c7_i32_39 = arith.constant 7 : i32
    %140 = arith.muli %arg1, %c7_i32_39 : i32
    %c1_i32_40 = arith.constant 1 : i32
    %141 = arith.addi %140, %c1_i32_40 : i32
    %142 = arith.index_cast %141 : i32 to index
    %143 = memref.load %arg3[%142] : memref<56xi32, #tpu.memory_space<smem>>
    %c7_i32_41 = arith.constant 7 : i32
    %144 = arith.muli %arg1, %c7_i32_41 : i32
    %c1_i32_42 = arith.constant 1 : i32
    %145 = arith.addi %144, %c1_i32_42 : i32
    %146 = arith.index_cast %145 : i32 to index
    %147 = memref.load %arg4[%146] : memref<56xi32, #tpu.memory_space<smem>>
    %cst_43 = arith.constant 0xFF800000 : f32
    %148 = vector.broadcast %cst_43 : f32 to vector<16x32xf32>
    %c0_i32_44 = arith.constant 0 : i32
    %149 = arith.cmpi sle, %143, %c0_i32_44 : i32
    %c0_i32_45 = arith.constant 0 : i32
    %150 = arith.cmpi sgt, %147, %c0_i32_45 : i32
    %151 = arith.andi %149, %150 : i1
    %152 = vector.extract_strided_slice %2 {offsets = [0, 0, 0], sizes = [1, 16, 32], strides = [1, 1, 1]} : vector<16x16x32xf32> to vector<1x16x32xf32>
    %153 = vector.shape_cast %152 : vector<1x16x32xf32> to vector<16x32xf32>
    %cst_46 = arith.constant 0xFF800000 : f32
    %154 = vector.broadcast %cst_46 : f32 to vector<16x32xf32>
    %155 = arith.select %151, %153, %154 : vector<16x32xf32>
    %156 = arith.maximumf %148, %155 : vector<16x32xf32>
    %c1_i32_47 = arith.constant 1 : i32
    %157 = arith.cmpi sle, %143, %c1_i32_47 : i32
    %c1_i32_48 = arith.constant 1 : i32
    %158 = arith.cmpi sgt, %147, %c1_i32_48 : i32
    %159 = arith.andi %157, %158 : i1
    %160 = vector.extract_strided_slice %2 {offsets = [1, 0, 0], sizes = [1, 16, 32], strides = [1, 1, 1]} : vector<16x16x32xf32> to vector<1x16x32xf32>
    %161 = vector.shape_cast %160 : vector<1x16x32xf32> to vector<16x32xf32>
    %cst_49 = arith.constant 0xFF800000 : f32
    %162 = vector.broadcast %cst_49 : f32 to vector<16x32xf32>
    %163 = arith.select %159, %161, %162 : vector<16x32xf32>
    %164 = arith.maximumf %156, %163 : vector<16x32xf32>
    %c2_i32_50 = arith.constant 2 : i32
    %165 = arith.cmpi sle, %143, %c2_i32_50 : i32
    %c2_i32_51 = arith.constant 2 : i32
    %166 = arith.cmpi sgt, %147, %c2_i32_51 : i32
    %167 = arith.andi %165, %166 : i1
    %168 = vector.extract_strided_slice %2 {offsets = [2, 0, 0], sizes = [1, 16, 32], strides = [1, 1, 1]} : vector<16x16x32xf32> to vector<1x16x32xf32>
    %169 = vector.shape_cast %168 : vector<1x16x32xf32> to vector<16x32xf32>
    %cst_52 = arith.constant 0xFF800000 : f32
    %170 = vector.broadcast %cst_52 : f32 to vector<16x32xf32>
    %171 = arith.select %167, %169, %170 : vector<16x32xf32>
    %172 = arith.maximumf %164, %171 : vector<16x32xf32>
    %c3_i32_53 = arith.constant 3 : i32
    %173 = arith.cmpi sle, %143, %c3_i32_53 : i32
    %c3_i32_54 = arith.constant 3 : i32
    %174 = arith.cmpi sgt, %147, %c3_i32_54 : i32
    %175 = arith.andi %173, %174 : i1
    %176 = vector.extract_strided_slice %2 {offsets = [3, 0, 0], sizes = [1, 16, 32], strides = [1, 1, 1]} : vector<16x16x32xf32> to vector<1x16x32xf32>
    %177 = vector.shape_cast %176 : vector<1x16x32xf32> to vector<16x32xf32>
    %cst_55 = arith.constant 0xFF800000 : f32
    %178 = vector.broadcast %cst_55 : f32 to vector<16x32xf32>
    %179 = arith.select %175, %177, %178 : vector<16x32xf32>
    %180 = arith.maximumf %172, %179 : vector<16x32xf32>
    %c4_i32_56 = arith.constant 4 : i32
    %181 = arith.cmpi sle, %143, %c4_i32_56 : i32
    %c4_i32_57 = arith.constant 4 : i32
    %182 = arith.cmpi sgt, %147, %c4_i32_57 : i32
    %183 = arith.andi %181, %182 : i1
    %184 = vector.extract_strided_slice %2 {offsets = [4, 0, 0], sizes = [1, 16, 32], strides = [1, 1, 1]} : vector<16x16x32xf32> to vector<1x16x32xf32>
    %185 = vector.shape_cast %184 : vector<1x16x32xf32> to vector<16x32xf32>
    %cst_58 = arith.constant 0xFF800000 : f32
    %186 = vector.broadcast %cst_58 : f32 to vector<16x32xf32>
    %187 = arith.select %183, %185, %186 : vector<16x32xf32>
    %188 = arith.maximumf %180, %187 : vector<16x32xf32>
    %c5_i32_59 = arith.constant 5 : i32
    %189 = arith.cmpi sle, %143, %c5_i32_59 : i32
    %c5_i32_60 = arith.constant 5 : i32
    %190 = arith.cmpi sgt, %147, %c5_i32_60 : i32
    %191 = arith.andi %189, %190 : i1
    %192 = vector.extract_strided_slice %2 {offsets = [5, 0, 0], sizes = [1, 16, 32], strides = [1, 1, 1]} : vector<16x16x32xf32> to vector<1x16x32xf32>
    %193 = vector.shape_cast %192 : vector<1x16x32xf32> to vector<16x32xf32>
    %cst_61 = arith.constant 0xFF800000 : f32
    %194 = vector.broadcast %cst_61 : f32 to vector<16x32xf32>
    %195 = arith.select %191, %193, %194 : vector<16x32xf32>
    %196 = arith.maximumf %188, %195 : vector<16x32xf32>
    %c6_i32_62 = arith.constant 6 : i32
    %197 = arith.cmpi sle, %143, %c6_i32_62 : i32
    %c6_i32_63 = arith.constant 6 : i32
    %198 = arith.cmpi sgt, %147, %c6_i32_63 : i32
    %199 = arith.andi %197, %198 : i1
    %200 = vector.extract_strided_slice %2 {offsets = [6, 0, 0], sizes = [1, 16, 32], strides = [1, 1, 1]} : vector<16x16x32xf32> to vector<1x16x32xf32>
    %201 = vector.shape_cast %200 : vector<1x16x32xf32> to vector<16x32xf32>
    %cst_64 = arith.constant 0xFF800000 : f32
    %202 = vector.broadcast %cst_64 : f32 to vector<16x32xf32>
    %203 = arith.select %199, %201, %202 : vector<16x32xf32>
    %204 = arith.maximumf %196, %203 : vector<16x32xf32>
    %c7_i32_65 = arith.constant 7 : i32
    %205 = arith.cmpi sle, %143, %c7_i32_65 : i32
    %c7_i32_66 = arith.constant 7 : i32
    %206 = arith.cmpi sgt, %147, %c7_i32_66 : i32
    %207 = arith.andi %205, %206 : i1
    %208 = vector.extract_strided_slice %2 {offsets = [7, 0, 0], sizes = [1, 16, 32], strides = [1, 1, 1]} : vector<16x16x32xf32> to vector<1x16x32xf32>
    %209 = vector.shape_cast %208 : vector<1x16x32xf32> to vector<16x32xf32>
    %cst_67 = arith.constant 0xFF800000 : f32
    %210 = vector.broadcast %cst_67 : f32 to vector<16x32xf32>
    %211 = arith.select %207, %209, %210 : vector<16x32xf32>
    %212 = arith.maximumf %204, %211 : vector<16x32xf32>
    %c8_i32_68 = arith.constant 8 : i32
    %213 = arith.cmpi sle, %143, %c8_i32_68 : i32
    %c8_i32_69 = arith.constant 8 : i32
    %214 = arith.cmpi sgt, %147, %c8_i32_69 : i32
    %215 = arith.andi %213, %214 : i1
    %216 = vector.extract_strided_slice %2 {offsets = [8, 0, 0], sizes = [1, 16, 32], strides = [1, 1, 1]} : vector<16x16x32xf32> to vector<1x16x32xf32>
    %217 = vector.shape_cast %216 : vector<1x16x32xf32> to vector<16x32xf32>
    %cst_70 = arith.constant 0xFF800000 : f32
    %218 = vector.broadcast %cst_70 : f32 to vector<16x32xf32>
    %219 = arith.select %215, %217, %218 : vector<16x32xf32>
    %220 = arith.maximumf %212, %219 : vector<16x32xf32>
    %c9_i32_71 = arith.constant 9 : i32
    %221 = arith.cmpi sle, %143, %c9_i32_71 : i32
    %c9_i32_72 = arith.constant 9 : i32
    %222 = arith.cmpi sgt, %147, %c9_i32_72 : i32
    %223 = arith.andi %221, %222 : i1
    %224 = vector.extract_strided_slice %2 {offsets = [9, 0, 0], sizes = [1, 16, 32], strides = [1, 1, 1]} : vector<16x16x32xf32> to vector<1x16x32xf32>
    %225 = vector.shape_cast %224 : vector<1x16x32xf32> to vector<16x32xf32>
    %cst_73 = arith.constant 0xFF800000 : f32
    %226 = vector.broadcast %cst_73 : f32 to vector<16x32xf32>
    %227 = arith.select %223, %225, %226 : vector<16x32xf32>
    %228 = arith.maximumf %220, %227 : vector<16x32xf32>
    %c10_i32_74 = arith.constant 10 : i32
    %229 = arith.cmpi sle, %143, %c10_i32_74 : i32
    %c10_i32_75 = arith.constant 10 : i32
    %230 = arith.cmpi sgt, %147, %c10_i32_75 : i32
    %231 = arith.andi %229, %230 : i1
    %232 = vector.extract_strided_slice %2 {offsets = [10, 0, 0], sizes = [1, 16, 32], strides = [1, 1, 1]} : vector<16x16x32xf32> to vector<1x16x32xf32>
    %233 = vector.shape_cast %232 : vector<1x16x32xf32> to vector<16x32xf32>
    %cst_76 = arith.constant 0xFF800000 : f32
    %234 = vector.broadcast %cst_76 : f32 to vector<16x32xf32>
    %235 = arith.select %231, %233, %234 : vector<16x32xf32>
    %236 = arith.maximumf %228, %235 : vector<16x32xf32>
    %c11_i32_77 = arith.constant 11 : i32
    %237 = arith.cmpi sle, %143, %c11_i32_77 : i32
    %c11_i32_78 = arith.constant 11 : i32
    %238 = arith.cmpi sgt, %147, %c11_i32_78 : i32
    %239 = arith.andi %237, %238 : i1
    %240 = vector.extract_strided_slice %2 {offsets = [11, 0, 0], sizes = [1, 16, 32], strides = [1, 1, 1]} : vector<16x16x32xf32> to vector<1x16x32xf32>
    %241 = vector.shape_cast %240 : vector<1x16x32xf32> to vector<16x32xf32>
    %cst_79 = arith.constant 0xFF800000 : f32
    %242 = vector.broadcast %cst_79 : f32 to vector<16x32xf32>
    %243 = arith.select %239, %241, %242 : vector<16x32xf32>
    %244 = arith.maximumf %236, %243 : vector<16x32xf32>
    %c12_i32_80 = arith.constant 12 : i32
    %245 = arith.cmpi sle, %143, %c12_i32_80 : i32
    %c12_i32_81 = arith.constant 12 : i32
    %246 = arith.cmpi sgt, %147, %c12_i32_81 : i32
    %247 = arith.andi %245, %246 : i1
    %248 = vector.extract_strided_slice %2 {offsets = [12, 0, 0], sizes = [1, 16, 32], strides = [1, 1, 1]} : vector<16x16x32xf32> to vector<1x16x32xf32>
    %249 = vector.shape_cast %248 : vector<1x16x32xf32> to vector<16x32xf32>
    %cst_82 = arith.constant 0xFF800000 : f32
    %250 = vector.broadcast %cst_82 : f32 to vector<16x32xf32>
    %251 = arith.select %247, %249, %250 : vector<16x32xf32>
    %252 = arith.maximumf %244, %251 : vector<16x32xf32>
    %c13_i32_83 = arith.constant 13 : i32
    %253 = arith.cmpi sle, %143, %c13_i32_83 : i32
    %c13_i32_84 = arith.constant 13 : i32
    %254 = arith.cmpi sgt, %147, %c13_i32_84 : i32
    %255 = arith.andi %253, %254 : i1
    %256 = vector.extract_strided_slice %2 {offsets = [13, 0, 0], sizes = [1, 16, 32], strides = [1, 1, 1]} : vector<16x16x32xf32> to vector<1x16x32xf32>
    %257 = vector.shape_cast %256 : vector<1x16x32xf32> to vector<16x32xf32>
    %cst_85 = arith.constant 0xFF800000 : f32
    %258 = vector.broadcast %cst_85 : f32 to vector<16x32xf32>
    %259 = arith.select %255, %257, %258 : vector<16x32xf32>
    %260 = arith.maximumf %252, %259 : vector<16x32xf32>
    %c14_i32_86 = arith.constant 14 : i32
    %261 = arith.cmpi sle, %143, %c14_i32_86 : i32
    %c14_i32_87 = arith.constant 14 : i32
    %262 = arith.cmpi sgt, %147, %c14_i32_87 : i32
    %263 = arith.andi %261, %262 : i1
    %264 = vector.extract_strided_slice %2 {offsets = [14, 0, 0], sizes = [1, 16, 32], strides = [1, 1, 1]} : vector<16x16x32xf32> to vector<1x16x32xf32>
    %265 = vector.shape_cast %264 : vector<1x16x32xf32> to vector<16x32xf32>
    %cst_88 = arith.constant 0xFF800000 : f32
    %266 = vector.broadcast %cst_88 : f32 to vector<16x32xf32>
    %267 = arith.select %263, %265, %266 : vector<16x32xf32>
    %268 = arith.maximumf %260, %267 : vector<16x32xf32>
    %c15_i32_89 = arith.constant 15 : i32
    %269 = arith.cmpi sle, %143, %c15_i32_89 : i32
    %c15_i32_90 = arith.constant 15 : i32
    %270 = arith.cmpi sgt, %147, %c15_i32_90 : i32
    %271 = arith.andi %269, %270 : i1
    %272 = vector.extract_strided_slice %2 {offsets = [15, 0, 0], sizes = [1, 16, 32], strides = [1, 1, 1]} : vector<16x16x32xf32> to vector<1x16x32xf32>
    %273 = vector.shape_cast %272 : vector<1x16x32xf32> to vector<16x32xf32>
    %cst_91 = arith.constant 0xFF800000 : f32
    %274 = vector.broadcast %cst_91 : f32 to vector<16x32xf32>
    %275 = arith.select %271, %273, %274 : vector<16x32xf32>
    %276 = arith.maximumf %268, %275 : vector<16x32xf32>
    %c7_i32_92 = arith.constant 7 : i32
    %277 = arith.muli %arg1, %c7_i32_92 : i32
    %c2_i32_93 = arith.constant 2 : i32
    %278 = arith.addi %277, %c2_i32_93 : i32
    %279 = arith.index_cast %278 : i32 to index
    %280 = memref.load %arg3[%279] : memref<56xi32, #tpu.memory_space<smem>>
    %c7_i32_94 = arith.constant 7 : i32
    %281 = arith.muli %arg1, %c7_i32_94 : i32
    %c2_i32_95 = arith.constant 2 : i32
    %282 = arith.addi %281, %c2_i32_95 : i32
    %283 = arith.index_cast %282 : i32 to index
    %284 = memref.load %arg4[%283] : memref<56xi32, #tpu.memory_space<smem>>
    %cst_96 = arith.constant 0xFF800000 : f32
    %285 = vector.broadcast %cst_96 : f32 to vector<16x32xf32>
    %c0_i32_97 = arith.constant 0 : i32
    %286 = arith.cmpi sle, %280, %c0_i32_97 : i32
    %c0_i32_98 = arith.constant 0 : i32
    %287 = arith.cmpi sgt, %284, %c0_i32_98 : i32
    %288 = arith.andi %286, %287 : i1
    %289 = vector.extract_strided_slice %2 {offsets = [0, 0, 0], sizes = [1, 16, 32], strides = [1, 1, 1]} : vector<16x16x32xf32> to vector<1x16x32xf32>
    %290 = vector.shape_cast %289 : vector<1x16x32xf32> to vector<16x32xf32>
    %cst_99 = arith.constant 0xFF800000 : f32
    %291 = vector.broadcast %cst_99 : f32 to vector<16x32xf32>
    %292 = arith.select %288, %290, %291 : vector<16x32xf32>
    %293 = arith.maximumf %285, %292 : vector<16x32xf32>
    %c1_i32_100 = arith.constant 1 : i32
    %294 = arith.cmpi sle, %280, %c1_i32_100 : i32
    %c1_i32_101 = arith.constant 1 : i32
    %295 = arith.cmpi sgt, %284, %c1_i32_101 : i32
    %296 = arith.andi %294, %295 : i1
    %297 = vector.extract_strided_slice %2 {offsets = [1, 0, 0], sizes = [1, 16, 32], strides = [1, 1, 1]} : vector<16x16x32xf32> to vector<1x16x32xf32>
    %298 = vector.shape_cast %297 : vector<1x16x32xf32> to vector<16x32xf32>
    %cst_102 = arith.constant 0xFF800000 : f32
    %299 = vector.broadcast %cst_102 : f32 to vector<16x32xf32>
    %300 = arith.select %296, %298, %299 : vector<16x32xf32>
    %301 = arith.maximumf %293, %300 : vector<16x32xf32>
    %c2_i32_103 = arith.constant 2 : i32
    %302 = arith.cmpi sle, %280, %c2_i32_103 : i32
    %c2_i32_104 = arith.constant 2 : i32
    %303 = arith.cmpi sgt, %284, %c2_i32_104 : i32
    %304 = arith.andi %302, %303 : i1
    %305 = vector.extract_strided_slice %2 {offsets = [2, 0, 0], sizes = [1, 16, 32], strides = [1, 1, 1]} : vector<16x16x32xf32> to vector<1x16x32xf32>
    %306 = vector.shape_cast %305 : vector<1x16x32xf32> to vector<16x32xf32>
    %cst_105 = arith.constant 0xFF800000 : f32
    %307 = vector.broadcast %cst_105 : f32 to vector<16x32xf32>
    %308 = arith.select %304, %306, %307 : vector<16x32xf32>
    %309 = arith.maximumf %301, %308 : vector<16x32xf32>
    %c3_i32_106 = arith.constant 3 : i32
    %310 = arith.cmpi sle, %280, %c3_i32_106 : i32
    %c3_i32_107 = arith.constant 3 : i32
    %311 = arith.cmpi sgt, %284, %c3_i32_107 : i32
    %312 = arith.andi %310, %311 : i1
    %313 = vector.extract_strided_slice %2 {offsets = [3, 0, 0], sizes = [1, 16, 32], strides = [1, 1, 1]} : vector<16x16x32xf32> to vector<1x16x32xf32>
    %314 = vector.shape_cast %313 : vector<1x16x32xf32> to vector<16x32xf32>
    %cst_108 = arith.constant 0xFF800000 : f32
    %315 = vector.broadcast %cst_108 : f32 to vector<16x32xf32>
    %316 = arith.select %312, %314, %315 : vector<16x32xf32>
    %317 = arith.maximumf %309, %316 : vector<16x32xf32>
    %c4_i32_109 = arith.constant 4 : i32
    %318 = arith.cmpi sle, %280, %c4_i32_109 : i32
    %c4_i32_110 = arith.constant 4 : i32
    %319 = arith.cmpi sgt, %284, %c4_i32_110 : i32
    %320 = arith.andi %318, %319 : i1
    %321 = vector.extract_strided_slice %2 {offsets = [4, 0, 0], sizes = [1, 16, 32], strides = [1, 1, 1]} : vector<16x16x32xf32> to vector<1x16x32xf32>
    %322 = vector.shape_cast %321 : vector<1x16x32xf32> to vector<16x32xf32>
    %cst_111 = arith.constant 0xFF800000 : f32
    %323 = vector.broadcast %cst_111 : f32 to vector<16x32xf32>
    %324 = arith.select %320, %322, %323 : vector<16x32xf32>
    %325 = arith.maximumf %317, %324 : vector<16x32xf32>
    %c5_i32_112 = arith.constant 5 : i32
    %326 = arith.cmpi sle, %280, %c5_i32_112 : i32
    %c5_i32_113 = arith.constant 5 : i32
    %327 = arith.cmpi sgt, %284, %c5_i32_113 : i32
    %328 = arith.andi %326, %327 : i1
    %329 = vector.extract_strided_slice %2 {offsets = [5, 0, 0], sizes = [1, 16, 32], strides = [1, 1, 1]} : vector<16x16x32xf32> to vector<1x16x32xf32>
    %330 = vector.shape_cast %329 : vector<1x16x32xf32> to vector<16x32xf32>
    %cst_114 = arith.constant 0xFF800000 : f32
    %331 = vector.broadcast %cst_114 : f32 to vector<16x32xf32>
    %332 = arith.select %328, %330, %331 : vector<16x32xf32>
    %333 = arith.maximumf %325, %332 : vector<16x32xf32>
    %c6_i32_115 = arith.constant 6 : i32
    %334 = arith.cmpi sle, %280, %c6_i32_115 : i32
    %c6_i32_116 = arith.constant 6 : i32
    %335 = arith.cmpi sgt, %284, %c6_i32_116 : i32
    %336 = arith.andi %334, %335 : i1
    %337 = vector.extract_strided_slice %2 {offsets = [6, 0, 0], sizes = [1, 16, 32], strides = [1, 1, 1]} : vector<16x16x32xf32> to vector<1x16x32xf32>
    %338 = vector.shape_cast %337 : vector<1x16x32xf32> to vector<16x32xf32>
    %cst_117 = arith.constant 0xFF800000 : f32
    %339 = vector.broadcast %cst_117 : f32 to vector<16x32xf32>
    %340 = arith.select %336, %338, %339 : vector<16x32xf32>
    %341 = arith.maximumf %333, %340 : vector<16x32xf32>
    %c7_i32_118 = arith.constant 7 : i32
    %342 = arith.cmpi sle, %280, %c7_i32_118 : i32
    %c7_i32_119 = arith.constant 7 : i32
    %343 = arith.cmpi sgt, %284, %c7_i32_119 : i32
    %344 = arith.andi %342, %343 : i1
    %345 = vector.extract_strided_slice %2 {offsets = [7, 0, 0], sizes = [1, 16, 32], strides = [1, 1, 1]} : vector<16x16x32xf32> to vector<1x16x32xf32>
    %346 = vector.shape_cast %345 : vector<1x16x32xf32> to vector<16x32xf32>
    %cst_120 = arith.constant 0xFF800000 : f32
    %347 = vector.broadcast %cst_120 : f32 to vector<16x32xf32>
    %348 = arith.select %344, %346, %347 : vector<16x32xf32>
    %349 = arith.maximumf %341, %348 : vector<16x32xf32>
    %c8_i32_121 = arith.constant 8 : i32
    %350 = arith.cmpi sle, %280, %c8_i32_121 : i32
    %c8_i32_122 = arith.constant 8 : i32
    %351 = arith.cmpi sgt, %284, %c8_i32_122 : i32
    %352 = arith.andi %350, %351 : i1
    %353 = vector.extract_strided_slice %2 {offsets = [8, 0, 0], sizes = [1, 16, 32], strides = [1, 1, 1]} : vector<16x16x32xf32> to vector<1x16x32xf32>
    %354 = vector.shape_cast %353 : vector<1x16x32xf32> to vector<16x32xf32>
    %cst_123 = arith.constant 0xFF800000 : f32
    %355 = vector.broadcast %cst_123 : f32 to vector<16x32xf32>
    %356 = arith.select %352, %354, %355 : vector<16x32xf32>
    %357 = arith.maximumf %349, %356 : vector<16x32xf32>
    %c9_i32_124 = arith.constant 9 : i32
    %358 = arith.cmpi sle, %280, %c9_i32_124 : i32
    %c9_i32_125 = arith.constant 9 : i32
    %359 = arith.cmpi sgt, %284, %c9_i32_125 : i32
    %360 = arith.andi %358, %359 : i1
    %361 = vector.extract_strided_slice %2 {offsets = [9, 0, 0], sizes = [1, 16, 32], strides = [1, 1, 1]} : vector<16x16x32xf32> to vector<1x16x32xf32>
    %362 = vector.shape_cast %361 : vector<1x16x32xf32> to vector<16x32xf32>
    %cst_126 = arith.constant 0xFF800000 : f32
    %363 = vector.broadcast %cst_126 : f32 to vector<16x32xf32>
    %364 = arith.select %360, %362, %363 : vector<16x32xf32>
    %365 = arith.maximumf %357, %364 : vector<16x32xf32>
    %c10_i32_127 = arith.constant 10 : i32
    %366 = arith.cmpi sle, %280, %c10_i32_127 : i32
    %c10_i32_128 = arith.constant 10 : i32
    %367 = arith.cmpi sgt, %284, %c10_i32_128 : i32
    %368 = arith.andi %366, %367 : i1
    %369 = vector.extract_strided_slice %2 {offsets = [10, 0, 0], sizes = [1, 16, 32], strides = [1, 1, 1]} : vector<16x16x32xf32> to vector<1x16x32xf32>
    %370 = vector.shape_cast %369 : vector<1x16x32xf32> to vector<16x32xf32>
    %cst_129 = arith.constant 0xFF800000 : f32
    %371 = vector.broadcast %cst_129 : f32 to vector<16x32xf32>
    %372 = arith.select %368, %370, %371 : vector<16x32xf32>
    %373 = arith.maximumf %365, %372 : vector<16x32xf32>
    %c11_i32_130 = arith.constant 11 : i32
    %374 = arith.cmpi sle, %280, %c11_i32_130 : i32
    %c11_i32_131 = arith.constant 11 : i32
    %375 = arith.cmpi sgt, %284, %c11_i32_131 : i32
    %376 = arith.andi %374, %375 : i1
    %377 = vector.extract_strided_slice %2 {offsets = [11, 0, 0], sizes = [1, 16, 32], strides = [1, 1, 1]} : vector<16x16x32xf32> to vector<1x16x32xf32>
    %378 = vector.shape_cast %377 : vector<1x16x32xf32> to vector<16x32xf32>
    %cst_132 = arith.constant 0xFF800000 : f32
    %379 = vector.broadcast %cst_132 : f32 to vector<16x32xf32>
    %380 = arith.select %376, %378, %379 : vector<16x32xf32>
    %381 = arith.maximumf %373, %380 : vector<16x32xf32>
    %c12_i32_133 = arith.constant 12 : i32
    %382 = arith.cmpi sle, %280, %c12_i32_133 : i32
    %c12_i32_134 = arith.constant 12 : i32
    %383 = arith.cmpi sgt, %284, %c12_i32_134 : i32
    %384 = arith.andi %382, %383 : i1
    %385 = vector.extract_strided_slice %2 {offsets = [12, 0, 0], sizes = [1, 16, 32], strides = [1, 1, 1]} : vector<16x16x32xf32> to vector<1x16x32xf32>
    %386 = vector.shape_cast %385 : vector<1x16x32xf32> to vector<16x32xf32>
    %cst_135 = arith.constant 0xFF800000 : f32
    %387 = vector.broadcast %cst_135 : f32 to vector<16x32xf32>
    %388 = arith.select %384, %386, %387 : vector<16x32xf32>
    %389 = arith.maximumf %381, %388 : vector<16x32xf32>
    %c13_i32_136 = arith.constant 13 : i32
    %390 = arith.cmpi sle, %280, %c13_i32_136 : i32
    %c13_i32_137 = arith.constant 13 : i32
    %391 = arith.cmpi sgt, %284, %c13_i32_137 : i32
    %392 = arith.andi %390, %391 : i1
    %393 = vector.extract_strided_slice %2 {offsets = [13, 0, 0], sizes = [1, 16, 32], strides = [1, 1, 1]} : vector<16x16x32xf32> to vector<1x16x32xf32>
    %394 = vector.shape_cast %393 : vector<1x16x32xf32> to vector<16x32xf32>
    %cst_138 = arith.constant 0xFF800000 : f32
    %395 = vector.broadcast %cst_138 : f32 to vector<16x32xf32>
    %396 = arith.select %392, %394, %395 : vector<16x32xf32>
    %397 = arith.maximumf %389, %396 : vector<16x32xf32>
    %c14_i32_139 = arith.constant 14 : i32
    %398 = arith.cmpi sle, %280, %c14_i32_139 : i32
    %c14_i32_140 = arith.constant 14 : i32
    %399 = arith.cmpi sgt, %284, %c14_i32_140 : i32
    %400 = arith.andi %398, %399 : i1
    %401 = vector.extract_strided_slice %2 {offsets = [14, 0, 0], sizes = [1, 16, 32], strides = [1, 1, 1]} : vector<16x16x32xf32> to vector<1x16x32xf32>
    %402 = vector.shape_cast %401 : vector<1x16x32xf32> to vector<16x32xf32>
    %cst_141 = arith.constant 0xFF800000 : f32
    %403 = vector.broadcast %cst_141 : f32 to vector<16x32xf32>
    %404 = arith.select %400, %402, %403 : vector<16x32xf32>
    %405 = arith.maximumf %397, %404 : vector<16x32xf32>
    %c15_i32_142 = arith.constant 15 : i32
    %406 = arith.cmpi sle, %280, %c15_i32_142 : i32
    %c15_i32_143 = arith.constant 15 : i32
    %407 = arith.cmpi sgt, %284, %c15_i32_143 : i32
    %408 = arith.andi %406, %407 : i1
    %409 = vector.extract_strided_slice %2 {offsets = [15, 0, 0], sizes = [1, 16, 32], strides = [1, 1, 1]} : vector<16x16x32xf32> to vector<1x16x32xf32>
    %410 = vector.shape_cast %409 : vector<1x16x32xf32> to vector<16x32xf32>
    %cst_144 = arith.constant 0xFF800000 : f32
    %411 = vector.broadcast %cst_144 : f32 to vector<16x32xf32>
    %412 = arith.select %408, %410, %411 : vector<16x32xf32>
    %413 = arith.maximumf %405, %412 : vector<16x32xf32>
    %c7_i32_145 = arith.constant 7 : i32
    %414 = arith.muli %arg1, %c7_i32_145 : i32
    %c3_i32_146 = arith.constant 3 : i32
    %415 = arith.addi %414, %c3_i32_146 : i32
    %416 = arith.index_cast %415 : i32 to index
    %417 = memref.load %arg3[%416] : memref<56xi32, #tpu.memory_space<smem>>
    %c7_i32_147 = arith.constant 7 : i32
    %418 = arith.muli %arg1, %c7_i32_147 : i32
    %c3_i32_148 = arith.constant 3 : i32
    %419 = arith.addi %418, %c3_i32_148 : i32
    %420 = arith.index_cast %419 : i32 to index
    %421 = memref.load %arg4[%420] : memref<56xi32, #tpu.memory_space<smem>>
    %cst_149 = arith.constant 0xFF800000 : f32
    %422 = vector.broadcast %cst_149 : f32 to vector<16x32xf32>
    %c0_i32_150 = arith.constant 0 : i32
    %423 = arith.cmpi sle, %417, %c0_i32_150 : i32
    %c0_i32_151 = arith.constant 0 : i32
    %424 = arith.cmpi sgt, %421, %c0_i32_151 : i32
    %425 = arith.andi %423, %424 : i1
    %426 = vector.extract_strided_slice %2 {offsets = [0, 0, 0], sizes = [1, 16, 32], strides = [1, 1, 1]} : vector<16x16x32xf32> to vector<1x16x32xf32>
    %427 = vector.shape_cast %426 : vector<1x16x32xf32> to vector<16x32xf32>
    %cst_152 = arith.constant 0xFF800000 : f32
    %428 = vector.broadcast %cst_152 : f32 to vector<16x32xf32>
    %429 = arith.select %425, %427, %428 : vector<16x32xf32>
    %430 = arith.maximumf %422, %429 : vector<16x32xf32>
    %c1_i32_153 = arith.constant 1 : i32
    %431 = arith.cmpi sle, %417, %c1_i32_153 : i32
    %c1_i32_154 = arith.constant 1 : i32
    %432 = arith.cmpi sgt, %421, %c1_i32_154 : i32
    %433 = arith.andi %431, %432 : i1
    %434 = vector.extract_strided_slice %2 {offsets = [1, 0, 0], sizes = [1, 16, 32], strides = [1, 1, 1]} : vector<16x16x32xf32> to vector<1x16x32xf32>
    %435 = vector.shape_cast %434 : vector<1x16x32xf32> to vector<16x32xf32>
    %cst_155 = arith.constant 0xFF800000 : f32
    %436 = vector.broadcast %cst_155 : f32 to vector<16x32xf32>
    %437 = arith.select %433, %435, %436 : vector<16x32xf32>
    %438 = arith.maximumf %430, %437 : vector<16x32xf32>
    %c2_i32_156 = arith.constant 2 : i32
    %439 = arith.cmpi sle, %417, %c2_i32_156 : i32
    %c2_i32_157 = arith.constant 2 : i32
    %440 = arith.cmpi sgt, %421, %c2_i32_157 : i32
    %441 = arith.andi %439, %440 : i1
    %442 = vector.extract_strided_slice %2 {offsets = [2, 0, 0], sizes = [1, 16, 32], strides = [1, 1, 1]} : vector<16x16x32xf32> to vector<1x16x32xf32>
    %443 = vector.shape_cast %442 : vector<1x16x32xf32> to vector<16x32xf32>
    %cst_158 = arith.constant 0xFF800000 : f32
    %444 = vector.broadcast %cst_158 : f32 to vector<16x32xf32>
    %445 = arith.select %441, %443, %444 : vector<16x32xf32>
    %446 = arith.maximumf %438, %445 : vector<16x32xf32>
    %c3_i32_159 = arith.constant 3 : i32
    %447 = arith.cmpi sle, %417, %c3_i32_159 : i32
    %c3_i32_160 = arith.constant 3 : i32
    %448 = arith.cmpi sgt, %421, %c3_i32_160 : i32
    %449 = arith.andi %447, %448 : i1
    %450 = vector.extract_strided_slice %2 {offsets = [3, 0, 0], sizes = [1, 16, 32], strides = [1, 1, 1]} : vector<16x16x32xf32> to vector<1x16x32xf32>
    %451 = vector.shape_cast %450 : vector<1x16x32xf32> to vector<16x32xf32>
    %cst_161 = arith.constant 0xFF800000 : f32
    %452 = vector.broadcast %cst_161 : f32 to vector<16x32xf32>
    %453 = arith.select %449, %451, %452 : vector<16x32xf32>
    %454 = arith.maximumf %446, %453 : vector<16x32xf32>
    %c4_i32_162 = arith.constant 4 : i32
    %455 = arith.cmpi sle, %417, %c4_i32_162 : i32
    %c4_i32_163 = arith.constant 4 : i32
    %456 = arith.cmpi sgt, %421, %c4_i32_163 : i32
    %457 = arith.andi %455, %456 : i1
    %458 = vector.extract_strided_slice %2 {offsets = [4, 0, 0], sizes = [1, 16, 32], strides = [1, 1, 1]} : vector<16x16x32xf32> to vector<1x16x32xf32>
    %459 = vector.shape_cast %458 : vector<1x16x32xf32> to vector<16x32xf32>
    %cst_164 = arith.constant 0xFF800000 : f32
    %460 = vector.broadcast %cst_164 : f32 to vector<16x32xf32>
    %461 = arith.select %457, %459, %460 : vector<16x32xf32>
    %462 = arith.maximumf %454, %461 : vector<16x32xf32>
    %c5_i32_165 = arith.constant 5 : i32
    %463 = arith.cmpi sle, %417, %c5_i32_165 : i32
    %c5_i32_166 = arith.constant 5 : i32
    %464 = arith.cmpi sgt, %421, %c5_i32_166 : i32
    %465 = arith.andi %463, %464 : i1
    %466 = vector.extract_strided_slice %2 {offsets = [5, 0, 0], sizes = [1, 16, 32], strides = [1, 1, 1]} : vector<16x16x32xf32> to vector<1x16x32xf32>
    %467 = vector.shape_cast %466 : vector<1x16x32xf32> to vector<16x32xf32>
    %cst_167 = arith.constant 0xFF800000 : f32
    %468 = vector.broadcast %cst_167 : f32 to vector<16x32xf32>
    %469 = arith.select %465, %467, %468 : vector<16x32xf32>
    %470 = arith.maximumf %462, %469 : vector<16x32xf32>
    %c6_i32_168 = arith.constant 6 : i32
    %471 = arith.cmpi sle, %417, %c6_i32_168 : i32
    %c6_i32_169 = arith.constant 6 : i32
    %472 = arith.cmpi sgt, %421, %c6_i32_169 : i32
    %473 = arith.andi %471, %472 : i1
    %474 = vector.extract_strided_slice %2 {offsets = [6, 0, 0], sizes = [1, 16, 32], strides = [1, 1, 1]} : vector<16x16x32xf32> to vector<1x16x32xf32>
    %475 = vector.shape_cast %474 : vector<1x16x32xf32> to vector<16x32xf32>
    %cst_170 = arith.constant 0xFF800000 : f32
    %476 = vector.broadcast %cst_170 : f32 to vector<16x32xf32>
    %477 = arith.select %473, %475, %476 : vector<16x32xf32>
    %478 = arith.maximumf %470, %477 : vector<16x32xf32>
    %c7_i32_171 = arith.constant 7 : i32
    %479 = arith.cmpi sle, %417, %c7_i32_171 : i32
    %c7_i32_172 = arith.constant 7 : i32
    %480 = arith.cmpi sgt, %421, %c7_i32_172 : i32
    %481 = arith.andi %479, %480 : i1
    %482 = vector.extract_strided_slice %2 {offsets = [7, 0, 0], sizes = [1, 16, 32], strides = [1, 1, 1]} : vector<16x16x32xf32> to vector<1x16x32xf32>
    %483 = vector.shape_cast %482 : vector<1x16x32xf32> to vector<16x32xf32>
    %cst_173 = arith.constant 0xFF800000 : f32
    %484 = vector.broadcast %cst_173 : f32 to vector<16x32xf32>
    %485 = arith.select %481, %483, %484 : vector<16x32xf32>
    %486 = arith.maximumf %478, %485 : vector<16x32xf32>
    %c8_i32_174 = arith.constant 8 : i32
    %487 = arith.cmpi sle, %417, %c8_i32_174 : i32
    %c8_i32_175 = arith.constant 8 : i32
    %488 = arith.cmpi sgt, %421, %c8_i32_175 : i32
    %489 = arith.andi %487, %488 : i1
    %490 = vector.extract_strided_slice %2 {offsets = [8, 0, 0], sizes = [1, 16, 32], strides = [1, 1, 1]} : vector<16x16x32xf32> to vector<1x16x32xf32>
    %491 = vector.shape_cast %490 : vector<1x16x32xf32> to vector<16x32xf32>
    %cst_176 = arith.constant 0xFF800000 : f32
    %492 = vector.broadcast %cst_176 : f32 to vector<16x32xf32>
    %493 = arith.select %489, %491, %492 : vector<16x32xf32>
    %494 = arith.maximumf %486, %493 : vector<16x32xf32>
    %c9_i32_177 = arith.constant 9 : i32
    %495 = arith.cmpi sle, %417, %c9_i32_177 : i32
    %c9_i32_178 = arith.constant 9 : i32
    %496 = arith.cmpi sgt, %421, %c9_i32_178 : i32
    %497 = arith.andi %495, %496 : i1
    %498 = vector.extract_strided_slice %2 {offsets = [9, 0, 0], sizes = [1, 16, 32], strides = [1, 1, 1]} : vector<16x16x32xf32> to vector<1x16x32xf32>
    %499 = vector.shape_cast %498 : vector<1x16x32xf32> to vector<16x32xf32>
    %cst_179 = arith.constant 0xFF800000 : f32
    %500 = vector.broadcast %cst_179 : f32 to vector<16x32xf32>
    %501 = arith.select %497, %499, %500 : vector<16x32xf32>
    %502 = arith.maximumf %494, %501 : vector<16x32xf32>
    %c10_i32_180 = arith.constant 10 : i32
    %503 = arith.cmpi sle, %417, %c10_i32_180 : i32
    %c10_i32_181 = arith.constant 10 : i32
    %504 = arith.cmpi sgt, %421, %c10_i32_181 : i32
    %505 = arith.andi %503, %504 : i1
    %506 = vector.extract_strided_slice %2 {offsets = [10, 0, 0], sizes = [1, 16, 32], strides = [1, 1, 1]} : vector<16x16x32xf32> to vector<1x16x32xf32>
    %507 = vector.shape_cast %506 : vector<1x16x32xf32> to vector<16x32xf32>
    %cst_182 = arith.constant 0xFF800000 : f32
    %508 = vector.broadcast %cst_182 : f32 to vector<16x32xf32>
    %509 = arith.select %505, %507, %508 : vector<16x32xf32>
    %510 = arith.maximumf %502, %509 : vector<16x32xf32>
    %c11_i32_183 = arith.constant 11 : i32
    %511 = arith.cmpi sle, %417, %c11_i32_183 : i32
    %c11_i32_184 = arith.constant 11 : i32
    %512 = arith.cmpi sgt, %421, %c11_i32_184 : i32
    %513 = arith.andi %511, %512 : i1
    %514 = vector.extract_strided_slice %2 {offsets = [11, 0, 0], sizes = [1, 16, 32], strides = [1, 1, 1]} : vector<16x16x32xf32> to vector<1x16x32xf32>
    %515 = vector.shape_cast %514 : vector<1x16x32xf32> to vector<16x32xf32>
    %cst_185 = arith.constant 0xFF800000 : f32
    %516 = vector.broadcast %cst_185 : f32 to vector<16x32xf32>
    %517 = arith.select %513, %515, %516 : vector<16x32xf32>
    %518 = arith.maximumf %510, %517 : vector<16x32xf32>
    %c12_i32_186 = arith.constant 12 : i32
    %519 = arith.cmpi sle, %417, %c12_i32_186 : i32
    %c12_i32_187 = arith.constant 12 : i32
    %520 = arith.cmpi sgt, %421, %c12_i32_187 : i32
    %521 = arith.andi %519, %520 : i1
    %522 = vector.extract_strided_slice %2 {offsets = [12, 0, 0], sizes = [1, 16, 32], strides = [1, 1, 1]} : vector<16x16x32xf32> to vector<1x16x32xf32>
    %523 = vector.shape_cast %522 : vector<1x16x32xf32> to vector<16x32xf32>
    %cst_188 = arith.constant 0xFF800000 : f32
    %524 = vector.broadcast %cst_188 : f32 to vector<16x32xf32>
    %525 = arith.select %521, %523, %524 : vector<16x32xf32>
    %526 = arith.maximumf %518, %525 : vector<16x32xf32>
    %c13_i32_189 = arith.constant 13 : i32
    %527 = arith.cmpi sle, %417, %c13_i32_189 : i32
    %c13_i32_190 = arith.constant 13 : i32
    %528 = arith.cmpi sgt, %421, %c13_i32_190 : i32
    %529 = arith.andi %527, %528 : i1
    %530 = vector.extract_strided_slice %2 {offsets = [13, 0, 0], sizes = [1, 16, 32], strides = [1, 1, 1]} : vector<16x16x32xf32> to vector<1x16x32xf32>
    %531 = vector.shape_cast %530 : vector<1x16x32xf32> to vector<16x32xf32>
    %cst_191 = arith.constant 0xFF800000 : f32
    %532 = vector.broadcast %cst_191 : f32 to vector<16x32xf32>
    %533 = arith.select %529, %531, %532 : vector<16x32xf32>
    %534 = arith.maximumf %526, %533 : vector<16x32xf32>
    %c14_i32_192 = arith.constant 14 : i32
    %535 = arith.cmpi sle, %417, %c14_i32_192 : i32
    %c14_i32_193 = arith.constant 14 : i32
    %536 = arith.cmpi sgt, %421, %c14_i32_193 : i32
    %537 = arith.andi %535, %536 : i1
    %538 = vector.extract_strided_slice %2 {offsets = [14, 0, 0], sizes = [1, 16, 32], strides = [1, 1, 1]} : vector<16x16x32xf32> to vector<1x16x32xf32>
    %539 = vector.shape_cast %538 : vector<1x16x32xf32> to vector<16x32xf32>
    %cst_194 = arith.constant 0xFF800000 : f32
    %540 = vector.broadcast %cst_194 : f32 to vector<16x32xf32>
    %541 = arith.select %537, %539, %540 : vector<16x32xf32>
    %542 = arith.maximumf %534, %541 : vector<16x32xf32>
    %c15_i32_195 = arith.constant 15 : i32
    %543 = arith.cmpi sle, %417, %c15_i32_195 : i32
    %c15_i32_196 = arith.constant 15 : i32
    %544 = arith.cmpi sgt, %421, %c15_i32_196 : i32
    %545 = arith.andi %543, %544 : i1
    %546 = vector.extract_strided_slice %2 {offsets = [15, 0, 0], sizes = [1, 16, 32], strides = [1, 1, 1]} : vector<16x16x32xf32> to vector<1x16x32xf32>
    %547 = vector.shape_cast %546 : vector<1x16x32xf32> to vector<16x32xf32>
    %cst_197 = arith.constant 0xFF800000 : f32
    %548 = vector.broadcast %cst_197 : f32 to vector<16x32xf32>
    %549 = arith.select %545, %547, %548 : vector<16x32xf32>
    %550 = arith.maximumf %542, %549 : vector<16x32xf32>
    %c7_i32_198 = arith.constant 7 : i32
    %551 = arith.muli %arg1, %c7_i32_198 : i32
    %c4_i32_199 = arith.constant 4 : i32
    %552 = arith.addi %551, %c4_i32_199 : i32
    %553 = arith.index_cast %552 : i32 to index
    %554 = memref.load %arg3[%553] : memref<56xi32, #tpu.memory_space<smem>>
    %c7_i32_200 = arith.constant 7 : i32
    %555 = arith.muli %arg1, %c7_i32_200 : i32
    %c4_i32_201 = arith.constant 4 : i32
    %556 = arith.addi %555, %c4_i32_201 : i32
    %557 = arith.index_cast %556 : i32 to index
    %558 = memref.load %arg4[%557] : memref<56xi32, #tpu.memory_space<smem>>
    %cst_202 = arith.constant 0xFF800000 : f32
    %559 = vector.broadcast %cst_202 : f32 to vector<16x32xf32>
    %c0_i32_203 = arith.constant 0 : i32
    %560 = arith.cmpi sle, %554, %c0_i32_203 : i32
    %c0_i32_204 = arith.constant 0 : i32
    %561 = arith.cmpi sgt, %558, %c0_i32_204 : i32
    %562 = arith.andi %560, %561 : i1
    %563 = vector.extract_strided_slice %2 {offsets = [0, 0, 0], sizes = [1, 16, 32], strides = [1, 1, 1]} : vector<16x16x32xf32> to vector<1x16x32xf32>
    %564 = vector.shape_cast %563 : vector<1x16x32xf32> to vector<16x32xf32>
    %cst_205 = arith.constant 0xFF800000 : f32
    %565 = vector.broadcast %cst_205 : f32 to vector<16x32xf32>
    %566 = arith.select %562, %564, %565 : vector<16x32xf32>
    %567 = arith.maximumf %559, %566 : vector<16x32xf32>
    %c1_i32_206 = arith.constant 1 : i32
    %568 = arith.cmpi sle, %554, %c1_i32_206 : i32
    %c1_i32_207 = arith.constant 1 : i32
    %569 = arith.cmpi sgt, %558, %c1_i32_207 : i32
    %570 = arith.andi %568, %569 : i1
    %571 = vector.extract_strided_slice %2 {offsets = [1, 0, 0], sizes = [1, 16, 32], strides = [1, 1, 1]} : vector<16x16x32xf32> to vector<1x16x32xf32>
    %572 = vector.shape_cast %571 : vector<1x16x32xf32> to vector<16x32xf32>
    %cst_208 = arith.constant 0xFF800000 : f32
    %573 = vector.broadcast %cst_208 : f32 to vector<16x32xf32>
    %574 = arith.select %570, %572, %573 : vector<16x32xf32>
    %575 = arith.maximumf %567, %574 : vector<16x32xf32>
    %c2_i32_209 = arith.constant 2 : i32
    %576 = arith.cmpi sle, %554, %c2_i32_209 : i32
    %c2_i32_210 = arith.constant 2 : i32
    %577 = arith.cmpi sgt, %558, %c2_i32_210 : i32
    %578 = arith.andi %576, %577 : i1
    %579 = vector.extract_strided_slice %2 {offsets = [2, 0, 0], sizes = [1, 16, 32], strides = [1, 1, 1]} : vector<16x16x32xf32> to vector<1x16x32xf32>
    %580 = vector.shape_cast %579 : vector<1x16x32xf32> to vector<16x32xf32>
    %cst_211 = arith.constant 0xFF800000 : f32
    %581 = vector.broadcast %cst_211 : f32 to vector<16x32xf32>
    %582 = arith.select %578, %580, %581 : vector<16x32xf32>
    %583 = arith.maximumf %575, %582 : vector<16x32xf32>
    %c3_i32_212 = arith.constant 3 : i32
    %584 = arith.cmpi sle, %554, %c3_i32_212 : i32
    %c3_i32_213 = arith.constant 3 : i32
    %585 = arith.cmpi sgt, %558, %c3_i32_213 : i32
    %586 = arith.andi %584, %585 : i1
    %587 = vector.extract_strided_slice %2 {offsets = [3, 0, 0], sizes = [1, 16, 32], strides = [1, 1, 1]} : vector<16x16x32xf32> to vector<1x16x32xf32>
    %588 = vector.shape_cast %587 : vector<1x16x32xf32> to vector<16x32xf32>
    %cst_214 = arith.constant 0xFF800000 : f32
    %589 = vector.broadcast %cst_214 : f32 to vector<16x32xf32>
    %590 = arith.select %586, %588, %589 : vector<16x32xf32>
    %591 = arith.maximumf %583, %590 : vector<16x32xf32>
    %c4_i32_215 = arith.constant 4 : i32
    %592 = arith.cmpi sle, %554, %c4_i32_215 : i32
    %c4_i32_216 = arith.constant 4 : i32
    %593 = arith.cmpi sgt, %558, %c4_i32_216 : i32
    %594 = arith.andi %592, %593 : i1
    %595 = vector.extract_strided_slice %2 {offsets = [4, 0, 0], sizes = [1, 16, 32], strides = [1, 1, 1]} : vector<16x16x32xf32> to vector<1x16x32xf32>
    %596 = vector.shape_cast %595 : vector<1x16x32xf32> to vector<16x32xf32>
    %cst_217 = arith.constant 0xFF800000 : f32
    %597 = vector.broadcast %cst_217 : f32 to vector<16x32xf32>
    %598 = arith.select %594, %596, %597 : vector<16x32xf32>
    %599 = arith.maximumf %591, %598 : vector<16x32xf32>
    %c5_i32_218 = arith.constant 5 : i32
    %600 = arith.cmpi sle, %554, %c5_i32_218 : i32
    %c5_i32_219 = arith.constant 5 : i32
    %601 = arith.cmpi sgt, %558, %c5_i32_219 : i32
    %602 = arith.andi %600, %601 : i1
    %603 = vector.extract_strided_slice %2 {offsets = [5, 0, 0], sizes = [1, 16, 32], strides = [1, 1, 1]} : vector<16x16x32xf32> to vector<1x16x32xf32>
    %604 = vector.shape_cast %603 : vector<1x16x32xf32> to vector<16x32xf32>
    %cst_220 = arith.constant 0xFF800000 : f32
    %605 = vector.broadcast %cst_220 : f32 to vector<16x32xf32>
    %606 = arith.select %602, %604, %605 : vector<16x32xf32>
    %607 = arith.maximumf %599, %606 : vector<16x32xf32>
    %c6_i32_221 = arith.constant 6 : i32
    %608 = arith.cmpi sle, %554, %c6_i32_221 : i32
    %c6_i32_222 = arith.constant 6 : i32
    %609 = arith.cmpi sgt, %558, %c6_i32_222 : i32
    %610 = arith.andi %608, %609 : i1
    %611 = vector.extract_strided_slice %2 {offsets = [6, 0, 0], sizes = [1, 16, 32], strides = [1, 1, 1]} : vector<16x16x32xf32> to vector<1x16x32xf32>
    %612 = vector.shape_cast %611 : vector<1x16x32xf32> to vector<16x32xf32>
    %cst_223 = arith.constant 0xFF800000 : f32
    %613 = vector.broadcast %cst_223 : f32 to vector<16x32xf32>
    %614 = arith.select %610, %612, %613 : vector<16x32xf32>
    %615 = arith.maximumf %607, %614 : vector<16x32xf32>
    %c7_i32_224 = arith.constant 7 : i32
    %616 = arith.cmpi sle, %554, %c7_i32_224 : i32
    %c7_i32_225 = arith.constant 7 : i32
    %617 = arith.cmpi sgt, %558, %c7_i32_225 : i32
    %618 = arith.andi %616, %617 : i1
    %619 = vector.extract_strided_slice %2 {offsets = [7, 0, 0], sizes = [1, 16, 32], strides = [1, 1, 1]} : vector<16x16x32xf32> to vector<1x16x32xf32>
    %620 = vector.shape_cast %619 : vector<1x16x32xf32> to vector<16x32xf32>
    %cst_226 = arith.constant 0xFF800000 : f32
    %621 = vector.broadcast %cst_226 : f32 to vector<16x32xf32>
    %622 = arith.select %618, %620, %621 : vector<16x32xf32>
    %623 = arith.maximumf %615, %622 : vector<16x32xf32>
    %c8_i32_227 = arith.constant 8 : i32
    %624 = arith.cmpi sle, %554, %c8_i32_227 : i32
    %c8_i32_228 = arith.constant 8 : i32
    %625 = arith.cmpi sgt, %558, %c8_i32_228 : i32
    %626 = arith.andi %624, %625 : i1
    %627 = vector.extract_strided_slice %2 {offsets = [8, 0, 0], sizes = [1, 16, 32], strides = [1, 1, 1]} : vector<16x16x32xf32> to vector<1x16x32xf32>
    %628 = vector.shape_cast %627 : vector<1x16x32xf32> to vector<16x32xf32>
    %cst_229 = arith.constant 0xFF800000 : f32
    %629 = vector.broadcast %cst_229 : f32 to vector<16x32xf32>
    %630 = arith.select %626, %628, %629 : vector<16x32xf32>
    %631 = arith.maximumf %623, %630 : vector<16x32xf32>
    %c9_i32_230 = arith.constant 9 : i32
    %632 = arith.cmpi sle, %554, %c9_i32_230 : i32
    %c9_i32_231 = arith.constant 9 : i32
    %633 = arith.cmpi sgt, %558, %c9_i32_231 : i32
    %634 = arith.andi %632, %633 : i1
    %635 = vector.extract_strided_slice %2 {offsets = [9, 0, 0], sizes = [1, 16, 32], strides = [1, 1, 1]} : vector<16x16x32xf32> to vector<1x16x32xf32>
    %636 = vector.shape_cast %635 : vector<1x16x32xf32> to vector<16x32xf32>
    %cst_232 = arith.constant 0xFF800000 : f32
    %637 = vector.broadcast %cst_232 : f32 to vector<16x32xf32>
    %638 = arith.select %634, %636, %637 : vector<16x32xf32>
    %639 = arith.maximumf %631, %638 : vector<16x32xf32>
    %c10_i32_233 = arith.constant 10 : i32
    %640 = arith.cmpi sle, %554, %c10_i32_233 : i32
    %c10_i32_234 = arith.constant 10 : i32
    %641 = arith.cmpi sgt, %558, %c10_i32_234 : i32
    %642 = arith.andi %640, %641 : i1
    %643 = vector.extract_strided_slice %2 {offsets = [10, 0, 0], sizes = [1, 16, 32], strides = [1, 1, 1]} : vector<16x16x32xf32> to vector<1x16x32xf32>
    %644 = vector.shape_cast %643 : vector<1x16x32xf32> to vector<16x32xf32>
    %cst_235 = arith.constant 0xFF800000 : f32
    %645 = vector.broadcast %cst_235 : f32 to vector<16x32xf32>
    %646 = arith.select %642, %644, %645 : vector<16x32xf32>
    %647 = arith.maximumf %639, %646 : vector<16x32xf32>
    %c11_i32_236 = arith.constant 11 : i32
    %648 = arith.cmpi sle, %554, %c11_i32_236 : i32
    %c11_i32_237 = arith.constant 11 : i32
    %649 = arith.cmpi sgt, %558, %c11_i32_237 : i32
    %650 = arith.andi %648, %649 : i1
    %651 = vector.extract_strided_slice %2 {offsets = [11, 0, 0], sizes = [1, 16, 32], strides = [1, 1, 1]} : vector<16x16x32xf32> to vector<1x16x32xf32>
    %652 = vector.shape_cast %651 : vector<1x16x32xf32> to vector<16x32xf32>
    %cst_238 = arith.constant 0xFF800000 : f32
    %653 = vector.broadcast %cst_238 : f32 to vector<16x32xf32>
    %654 = arith.select %650, %652, %653 : vector<16x32xf32>
    %655 = arith.maximumf %647, %654 : vector<16x32xf32>
    %c12_i32_239 = arith.constant 12 : i32
    %656 = arith.cmpi sle, %554, %c12_i32_239 : i32
    %c12_i32_240 = arith.constant 12 : i32
    %657 = arith.cmpi sgt, %558, %c12_i32_240 : i32
    %658 = arith.andi %656, %657 : i1
    %659 = vector.extract_strided_slice %2 {offsets = [12, 0, 0], sizes = [1, 16, 32], strides = [1, 1, 1]} : vector<16x16x32xf32> to vector<1x16x32xf32>
    %660 = vector.shape_cast %659 : vector<1x16x32xf32> to vector<16x32xf32>
    %cst_241 = arith.constant 0xFF800000 : f32
    %661 = vector.broadcast %cst_241 : f32 to vector<16x32xf32>
    %662 = arith.select %658, %660, %661 : vector<16x32xf32>
    %663 = arith.maximumf %655, %662 : vector<16x32xf32>
    %c13_i32_242 = arith.constant 13 : i32
    %664 = arith.cmpi sle, %554, %c13_i32_242 : i32
    %c13_i32_243 = arith.constant 13 : i32
    %665 = arith.cmpi sgt, %558, %c13_i32_243 : i32
    %666 = arith.andi %664, %665 : i1
    %667 = vector.extract_strided_slice %2 {offsets = [13, 0, 0], sizes = [1, 16, 32], strides = [1, 1, 1]} : vector<16x16x32xf32> to vector<1x16x32xf32>
    %668 = vector.shape_cast %667 : vector<1x16x32xf32> to vector<16x32xf32>
    %cst_244 = arith.constant 0xFF800000 : f32
    %669 = vector.broadcast %cst_244 : f32 to vector<16x32xf32>
    %670 = arith.select %666, %668, %669 : vector<16x32xf32>
    %671 = arith.maximumf %663, %670 : vector<16x32xf32>
    %c14_i32_245 = arith.constant 14 : i32
    %672 = arith.cmpi sle, %554, %c14_i32_245 : i32
    %c14_i32_246 = arith.constant 14 : i32
    %673 = arith.cmpi sgt, %558, %c14_i32_246 : i32
    %674 = arith.andi %672, %673 : i1
    %675 = vector.extract_strided_slice %2 {offsets = [14, 0, 0], sizes = [1, 16, 32], strides = [1, 1, 1]} : vector<16x16x32xf32> to vector<1x16x32xf32>
    %676 = vector.shape_cast %675 : vector<1x16x32xf32> to vector<16x32xf32>
    %cst_247 = arith.constant 0xFF800000 : f32
    %677 = vector.broadcast %cst_247 : f32 to vector<16x32xf32>
    %678 = arith.select %674, %676, %677 : vector<16x32xf32>
    %679 = arith.maximumf %671, %678 : vector<16x32xf32>
    %c15_i32_248 = arith.constant 15 : i32
    %680 = arith.cmpi sle, %554, %c15_i32_248 : i32
    %c15_i32_249 = arith.constant 15 : i32
    %681 = arith.cmpi sgt, %558, %c15_i32_249 : i32
    %682 = arith.andi %680, %681 : i1
    %683 = vector.extract_strided_slice %2 {offsets = [15, 0, 0], sizes = [1, 16, 32], strides = [1, 1, 1]} : vector<16x16x32xf32> to vector<1x16x32xf32>
    %684 = vector.shape_cast %683 : vector<1x16x32xf32> to vector<16x32xf32>
    %cst_250 = arith.constant 0xFF800000 : f32
    %685 = vector.broadcast %cst_250 : f32 to vector<16x32xf32>
    %686 = arith.select %682, %684, %685 : vector<16x32xf32>
    %687 = arith.maximumf %679, %686 : vector<16x32xf32>
    %c7_i32_251 = arith.constant 7 : i32
    %688 = arith.muli %arg1, %c7_i32_251 : i32
    %c5_i32_252 = arith.constant 5 : i32
    %689 = arith.addi %688, %c5_i32_252 : i32
    %690 = arith.index_cast %689 : i32 to index
    %691 = memref.load %arg3[%690] : memref<56xi32, #tpu.memory_space<smem>>
    %c7_i32_253 = arith.constant 7 : i32
    %692 = arith.muli %arg1, %c7_i32_253 : i32
    %c5_i32_254 = arith.constant 5 : i32
    %693 = arith.addi %692, %c5_i32_254 : i32
    %694 = arith.index_cast %693 : i32 to index
    %695 = memref.load %arg4[%694] : memref<56xi32, #tpu.memory_space<smem>>
    %cst_255 = arith.constant 0xFF800000 : f32
    %696 = vector.broadcast %cst_255 : f32 to vector<16x32xf32>
    %c0_i32_256 = arith.constant 0 : i32
    %697 = arith.cmpi sle, %691, %c0_i32_256 : i32
    %c0_i32_257 = arith.constant 0 : i32
    %698 = arith.cmpi sgt, %695, %c0_i32_257 : i32
    %699 = arith.andi %697, %698 : i1
    %700 = vector.extract_strided_slice %2 {offsets = [0, 0, 0], sizes = [1, 16, 32], strides = [1, 1, 1]} : vector<16x16x32xf32> to vector<1x16x32xf32>
    %701 = vector.shape_cast %700 : vector<1x16x32xf32> to vector<16x32xf32>
    %cst_258 = arith.constant 0xFF800000 : f32
    %702 = vector.broadcast %cst_258 : f32 to vector<16x32xf32>
    %703 = arith.select %699, %701, %702 : vector<16x32xf32>
    %704 = arith.maximumf %696, %703 : vector<16x32xf32>
    %c1_i32_259 = arith.constant 1 : i32
    %705 = arith.cmpi sle, %691, %c1_i32_259 : i32
    %c1_i32_260 = arith.constant 1 : i32
    %706 = arith.cmpi sgt, %695, %c1_i32_260 : i32
    %707 = arith.andi %705, %706 : i1
    %708 = vector.extract_strided_slice %2 {offsets = [1, 0, 0], sizes = [1, 16, 32], strides = [1, 1, 1]} : vector<16x16x32xf32> to vector<1x16x32xf32>
    %709 = vector.shape_cast %708 : vector<1x16x32xf32> to vector<16x32xf32>
    %cst_261 = arith.constant 0xFF800000 : f32
    %710 = vector.broadcast %cst_261 : f32 to vector<16x32xf32>
    %711 = arith.select %707, %709, %710 : vector<16x32xf32>
    %712 = arith.maximumf %704, %711 : vector<16x32xf32>
    %c2_i32_262 = arith.constant 2 : i32
    %713 = arith.cmpi sle, %691, %c2_i32_262 : i32
    %c2_i32_263 = arith.constant 2 : i32
    %714 = arith.cmpi sgt, %695, %c2_i32_263 : i32
    %715 = arith.andi %713, %714 : i1
    %716 = vector.extract_strided_slice %2 {offsets = [2, 0, 0], sizes = [1, 16, 32], strides = [1, 1, 1]} : vector<16x16x32xf32> to vector<1x16x32xf32>
    %717 = vector.shape_cast %716 : vector<1x16x32xf32> to vector<16x32xf32>
    %cst_264 = arith.constant 0xFF800000 : f32
    %718 = vector.broadcast %cst_264 : f32 to vector<16x32xf32>
    %719 = arith.select %715, %717, %718 : vector<16x32xf32>
    %720 = arith.maximumf %712, %719 : vector<16x32xf32>
    %c3_i32_265 = arith.constant 3 : i32
    %721 = arith.cmpi sle, %691, %c3_i32_265 : i32
    %c3_i32_266 = arith.constant 3 : i32
    %722 = arith.cmpi sgt, %695, %c3_i32_266 : i32
    %723 = arith.andi %721, %722 : i1
    %724 = vector.extract_strided_slice %2 {offsets = [3, 0, 0], sizes = [1, 16, 32], strides = [1, 1, 1]} : vector<16x16x32xf32> to vector<1x16x32xf32>
    %725 = vector.shape_cast %724 : vector<1x16x32xf32> to vector<16x32xf32>
    %cst_267 = arith.constant 0xFF800000 : f32
    %726 = vector.broadcast %cst_267 : f32 to vector<16x32xf32>
    %727 = arith.select %723, %725, %726 : vector<16x32xf32>
    %728 = arith.maximumf %720, %727 : vector<16x32xf32>
    %c4_i32_268 = arith.constant 4 : i32
    %729 = arith.cmpi sle, %691, %c4_i32_268 : i32
    %c4_i32_269 = arith.constant 4 : i32
    %730 = arith.cmpi sgt, %695, %c4_i32_269 : i32
    %731 = arith.andi %729, %730 : i1
    %732 = vector.extract_strided_slice %2 {offsets = [4, 0, 0], sizes = [1, 16, 32], strides = [1, 1, 1]} : vector<16x16x32xf32> to vector<1x16x32xf32>
    %733 = vector.shape_cast %732 : vector<1x16x32xf32> to vector<16x32xf32>
    %cst_270 = arith.constant 0xFF800000 : f32
    %734 = vector.broadcast %cst_270 : f32 to vector<16x32xf32>
    %735 = arith.select %731, %733, %734 : vector<16x32xf32>
    %736 = arith.maximumf %728, %735 : vector<16x32xf32>
    %c5_i32_271 = arith.constant 5 : i32
    %737 = arith.cmpi sle, %691, %c5_i32_271 : i32
    %c5_i32_272 = arith.constant 5 : i32
    %738 = arith.cmpi sgt, %695, %c5_i32_272 : i32
    %739 = arith.andi %737, %738 : i1
    %740 = vector.extract_strided_slice %2 {offsets = [5, 0, 0], sizes = [1, 16, 32], strides = [1, 1, 1]} : vector<16x16x32xf32> to vector<1x16x32xf32>
    %741 = vector.shape_cast %740 : vector<1x16x32xf32> to vector<16x32xf32>
    %cst_273 = arith.constant 0xFF800000 : f32
    %742 = vector.broadcast %cst_273 : f32 to vector<16x32xf32>
    %743 = arith.select %739, %741, %742 : vector<16x32xf32>
    %744 = arith.maximumf %736, %743 : vector<16x32xf32>
    %c6_i32_274 = arith.constant 6 : i32
    %745 = arith.cmpi sle, %691, %c6_i32_274 : i32
    %c6_i32_275 = arith.constant 6 : i32
    %746 = arith.cmpi sgt, %695, %c6_i32_275 : i32
    %747 = arith.andi %745, %746 : i1
    %748 = vector.extract_strided_slice %2 {offsets = [6, 0, 0], sizes = [1, 16, 32], strides = [1, 1, 1]} : vector<16x16x32xf32> to vector<1x16x32xf32>
    %749 = vector.shape_cast %748 : vector<1x16x32xf32> to vector<16x32xf32>
    %cst_276 = arith.constant 0xFF800000 : f32
    %750 = vector.broadcast %cst_276 : f32 to vector<16x32xf32>
    %751 = arith.select %747, %749, %750 : vector<16x32xf32>
    %752 = arith.maximumf %744, %751 : vector<16x32xf32>
    %c7_i32_277 = arith.constant 7 : i32
    %753 = arith.cmpi sle, %691, %c7_i32_277 : i32
    %c7_i32_278 = arith.constant 7 : i32
    %754 = arith.cmpi sgt, %695, %c7_i32_278 : i32
    %755 = arith.andi %753, %754 : i1
    %756 = vector.extract_strided_slice %2 {offsets = [7, 0, 0], sizes = [1, 16, 32], strides = [1, 1, 1]} : vector<16x16x32xf32> to vector<1x16x32xf32>
    %757 = vector.shape_cast %756 : vector<1x16x32xf32> to vector<16x32xf32>
    %cst_279 = arith.constant 0xFF800000 : f32
    %758 = vector.broadcast %cst_279 : f32 to vector<16x32xf32>
    %759 = arith.select %755, %757, %758 : vector<16x32xf32>
    %760 = arith.maximumf %752, %759 : vector<16x32xf32>
    %c8_i32_280 = arith.constant 8 : i32
    %761 = arith.cmpi sle, %691, %c8_i32_280 : i32
    %c8_i32_281 = arith.constant 8 : i32
    %762 = arith.cmpi sgt, %695, %c8_i32_281 : i32
    %763 = arith.andi %761, %762 : i1
    %764 = vector.extract_strided_slice %2 {offsets = [8, 0, 0], sizes = [1, 16, 32], strides = [1, 1, 1]} : vector<16x16x32xf32> to vector<1x16x32xf32>
    %765 = vector.shape_cast %764 : vector<1x16x32xf32> to vector<16x32xf32>
    %cst_282 = arith.constant 0xFF800000 : f32
    %766 = vector.broadcast %cst_282 : f32 to vector<16x32xf32>
    %767 = arith.select %763, %765, %766 : vector<16x32xf32>
    %768 = arith.maximumf %760, %767 : vector<16x32xf32>
    %c9_i32_283 = arith.constant 9 : i32
    %769 = arith.cmpi sle, %691, %c9_i32_283 : i32
    %c9_i32_284 = arith.constant 9 : i32
    %770 = arith.cmpi sgt, %695, %c9_i32_284 : i32
    %771 = arith.andi %769, %770 : i1
    %772 = vector.extract_strided_slice %2 {offsets = [9, 0, 0], sizes = [1, 16, 32], strides = [1, 1, 1]} : vector<16x16x32xf32> to vector<1x16x32xf32>
    %773 = vector.shape_cast %772 : vector<1x16x32xf32> to vector<16x32xf32>
    %cst_285 = arith.constant 0xFF800000 : f32
    %774 = vector.broadcast %cst_285 : f32 to vector<16x32xf32>
    %775 = arith.select %771, %773, %774 : vector<16x32xf32>
    %776 = arith.maximumf %768, %775 : vector<16x32xf32>
    %c10_i32_286 = arith.constant 10 : i32
    %777 = arith.cmpi sle, %691, %c10_i32_286 : i32
    %c10_i32_287 = arith.constant 10 : i32
    %778 = arith.cmpi sgt, %695, %c10_i32_287 : i32
    %779 = arith.andi %777, %778 : i1
    %780 = vector.extract_strided_slice %2 {offsets = [10, 0, 0], sizes = [1, 16, 32], strides = [1, 1, 1]} : vector<16x16x32xf32> to vector<1x16x32xf32>
    %781 = vector.shape_cast %780 : vector<1x16x32xf32> to vector<16x32xf32>
    %cst_288 = arith.constant 0xFF800000 : f32
    %782 = vector.broadcast %cst_288 : f32 to vector<16x32xf32>
    %783 = arith.select %779, %781, %782 : vector<16x32xf32>
    %784 = arith.maximumf %776, %783 : vector<16x32xf32>
    %c11_i32_289 = arith.constant 11 : i32
    %785 = arith.cmpi sle, %691, %c11_i32_289 : i32
    %c11_i32_290 = arith.constant 11 : i32
    %786 = arith.cmpi sgt, %695, %c11_i32_290 : i32
    %787 = arith.andi %785, %786 : i1
    %788 = vector.extract_strided_slice %2 {offsets = [11, 0, 0], sizes = [1, 16, 32], strides = [1, 1, 1]} : vector<16x16x32xf32> to vector<1x16x32xf32>
    %789 = vector.shape_cast %788 : vector<1x16x32xf32> to vector<16x32xf32>
    %cst_291 = arith.constant 0xFF800000 : f32
    %790 = vector.broadcast %cst_291 : f32 to vector<16x32xf32>
    %791 = arith.select %787, %789, %790 : vector<16x32xf32>
    %792 = arith.maximumf %784, %791 : vector<16x32xf32>
    %c12_i32_292 = arith.constant 12 : i32
    %793 = arith.cmpi sle, %691, %c12_i32_292 : i32
    %c12_i32_293 = arith.constant 12 : i32
    %794 = arith.cmpi sgt, %695, %c12_i32_293 : i32
    %795 = arith.andi %793, %794 : i1
    %796 = vector.extract_strided_slice %2 {offsets = [12, 0, 0], sizes = [1, 16, 32], strides = [1, 1, 1]} : vector<16x16x32xf32> to vector<1x16x32xf32>
    %797 = vector.shape_cast %796 : vector<1x16x32xf32> to vector<16x32xf32>
    %cst_294 = arith.constant 0xFF800000 : f32
    %798 = vector.broadcast %cst_294 : f32 to vector<16x32xf32>
    %799 = arith.select %795, %797, %798 : vector<16x32xf32>
    %800 = arith.maximumf %792, %799 : vector<16x32xf32>
    %c13_i32_295 = arith.constant 13 : i32
    %801 = arith.cmpi sle, %691, %c13_i32_295 : i32
    %c13_i32_296 = arith.constant 13 : i32
    %802 = arith.cmpi sgt, %695, %c13_i32_296 : i32
    %803 = arith.andi %801, %802 : i1
    %804 = vector.extract_strided_slice %2 {offsets = [13, 0, 0], sizes = [1, 16, 32], strides = [1, 1, 1]} : vector<16x16x32xf32> to vector<1x16x32xf32>
    %805 = vector.shape_cast %804 : vector<1x16x32xf32> to vector<16x32xf32>
    %cst_297 = arith.constant 0xFF800000 : f32
    %806 = vector.broadcast %cst_297 : f32 to vector<16x32xf32>
    %807 = arith.select %803, %805, %806 : vector<16x32xf32>
    %808 = arith.maximumf %800, %807 : vector<16x32xf32>
    %c14_i32_298 = arith.constant 14 : i32
    %809 = arith.cmpi sle, %691, %c14_i32_298 : i32
    %c14_i32_299 = arith.constant 14 : i32
    %810 = arith.cmpi sgt, %695, %c14_i32_299 : i32
    %811 = arith.andi %809, %810 : i1
    %812 = vector.extract_strided_slice %2 {offsets = [14, 0, 0], sizes = [1, 16, 32], strides = [1, 1, 1]} : vector<16x16x32xf32> to vector<1x16x32xf32>
    %813 = vector.shape_cast %812 : vector<1x16x32xf32> to vector<16x32xf32>
    %cst_300 = arith.constant 0xFF800000 : f32
    %814 = vector.broadcast %cst_300 : f32 to vector<16x32xf32>
    %815 = arith.select %811, %813, %814 : vector<16x32xf32>
    %816 = arith.maximumf %808, %815 : vector<16x32xf32>
    %c15_i32_301 = arith.constant 15 : i32
    %817 = arith.cmpi sle, %691, %c15_i32_301 : i32
    %c15_i32_302 = arith.constant 15 : i32
    %818 = arith.cmpi sgt, %695, %c15_i32_302 : i32
    %819 = arith.andi %817, %818 : i1
    %820 = vector.extract_strided_slice %2 {offsets = [15, 0, 0], sizes = [1, 16, 32], strides = [1, 1, 1]} : vector<16x16x32xf32> to vector<1x16x32xf32>
    %821 = vector.shape_cast %820 : vector<1x16x32xf32> to vector<16x32xf32>
    %cst_303 = arith.constant 0xFF800000 : f32
    %822 = vector.broadcast %cst_303 : f32 to vector<16x32xf32>
    %823 = arith.select %819, %821, %822 : vector<16x32xf32>
    %824 = arith.maximumf %816, %823 : vector<16x32xf32>
    %c7_i32_304 = arith.constant 7 : i32
    %825 = arith.muli %arg1, %c7_i32_304 : i32
    %c6_i32_305 = arith.constant 6 : i32
    %826 = arith.addi %825, %c6_i32_305 : i32
    %827 = arith.index_cast %826 : i32 to index
    %828 = memref.load %arg3[%827] : memref<56xi32, #tpu.memory_space<smem>>
    %c7_i32_306 = arith.constant 7 : i32
    %829 = arith.muli %arg1, %c7_i32_306 : i32
    %c6_i32_307 = arith.constant 6 : i32
    %830 = arith.addi %829, %c6_i32_307 : i32
    %831 = arith.index_cast %830 : i32 to index
    %832 = memref.load %arg4[%831] : memref<56xi32, #tpu.memory_space<smem>>
    %cst_308 = arith.constant 0xFF800000 : f32
    %833 = vector.broadcast %cst_308 : f32 to vector<16x32xf32>
    %c0_i32_309 = arith.constant 0 : i32
    %834 = arith.cmpi sle, %828, %c0_i32_309 : i32
    %c0_i32_310 = arith.constant 0 : i32
    %835 = arith.cmpi sgt, %832, %c0_i32_310 : i32
    %836 = arith.andi %834, %835 : i1
    %837 = vector.extract_strided_slice %2 {offsets = [0, 0, 0], sizes = [1, 16, 32], strides = [1, 1, 1]} : vector<16x16x32xf32> to vector<1x16x32xf32>
    %838 = vector.shape_cast %837 : vector<1x16x32xf32> to vector<16x32xf32>
    %cst_311 = arith.constant 0xFF800000 : f32
    %839 = vector.broadcast %cst_311 : f32 to vector<16x32xf32>
    %840 = arith.select %836, %838, %839 : vector<16x32xf32>
    %841 = arith.maximumf %833, %840 : vector<16x32xf32>
    %c1_i32_312 = arith.constant 1 : i32
    %842 = arith.cmpi sle, %828, %c1_i32_312 : i32
    %c1_i32_313 = arith.constant 1 : i32
    %843 = arith.cmpi sgt, %832, %c1_i32_313 : i32
    %844 = arith.andi %842, %843 : i1
    %845 = vector.extract_strided_slice %2 {offsets = [1, 0, 0], sizes = [1, 16, 32], strides = [1, 1, 1]} : vector<16x16x32xf32> to vector<1x16x32xf32>
    %846 = vector.shape_cast %845 : vector<1x16x32xf32> to vector<16x32xf32>
    %cst_314 = arith.constant 0xFF800000 : f32
    %847 = vector.broadcast %cst_314 : f32 to vector<16x32xf32>
    %848 = arith.select %844, %846, %847 : vector<16x32xf32>
    %849 = arith.maximumf %841, %848 : vector<16x32xf32>
    %c2_i32_315 = arith.constant 2 : i32
    %850 = arith.cmpi sle, %828, %c2_i32_315 : i32
    %c2_i32_316 = arith.constant 2 : i32
    %851 = arith.cmpi sgt, %832, %c2_i32_316 : i32
    %852 = arith.andi %850, %851 : i1
    %853 = vector.extract_strided_slice %2 {offsets = [2, 0, 0], sizes = [1, 16, 32], strides = [1, 1, 1]} : vector<16x16x32xf32> to vector<1x16x32xf32>
    %854 = vector.shape_cast %853 : vector<1x16x32xf32> to vector<16x32xf32>
    %cst_317 = arith.constant 0xFF800000 : f32
    %855 = vector.broadcast %cst_317 : f32 to vector<16x32xf32>
    %856 = arith.select %852, %854, %855 : vector<16x32xf32>
    %857 = arith.maximumf %849, %856 : vector<16x32xf32>
    %c3_i32_318 = arith.constant 3 : i32
    %858 = arith.cmpi sle, %828, %c3_i32_318 : i32
    %c3_i32_319 = arith.constant 3 : i32
    %859 = arith.cmpi sgt, %832, %c3_i32_319 : i32
    %860 = arith.andi %858, %859 : i1
    %861 = vector.extract_strided_slice %2 {offsets = [3, 0, 0], sizes = [1, 16, 32], strides = [1, 1, 1]} : vector<16x16x32xf32> to vector<1x16x32xf32>
    %862 = vector.shape_cast %861 : vector<1x16x32xf32> to vector<16x32xf32>
    %cst_320 = arith.constant 0xFF800000 : f32
    %863 = vector.broadcast %cst_320 : f32 to vector<16x32xf32>
    %864 = arith.select %860, %862, %863 : vector<16x32xf32>
    %865 = arith.maximumf %857, %864 : vector<16x32xf32>
    %c4_i32_321 = arith.constant 4 : i32
    %866 = arith.cmpi sle, %828, %c4_i32_321 : i32
    %c4_i32_322 = arith.constant 4 : i32
    %867 = arith.cmpi sgt, %832, %c4_i32_322 : i32
    %868 = arith.andi %866, %867 : i1
    %869 = vector.extract_strided_slice %2 {offsets = [4, 0, 0], sizes = [1, 16, 32], strides = [1, 1, 1]} : vector<16x16x32xf32> to vector<1x16x32xf32>
    %870 = vector.shape_cast %869 : vector<1x16x32xf32> to vector<16x32xf32>
    %cst_323 = arith.constant 0xFF800000 : f32
    %871 = vector.broadcast %cst_323 : f32 to vector<16x32xf32>
    %872 = arith.select %868, %870, %871 : vector<16x32xf32>
    %873 = arith.maximumf %865, %872 : vector<16x32xf32>
    %c5_i32_324 = arith.constant 5 : i32
    %874 = arith.cmpi sle, %828, %c5_i32_324 : i32
    %c5_i32_325 = arith.constant 5 : i32
    %875 = arith.cmpi sgt, %832, %c5_i32_325 : i32
    %876 = arith.andi %874, %875 : i1
    %877 = vector.extract_strided_slice %2 {offsets = [5, 0, 0], sizes = [1, 16, 32], strides = [1, 1, 1]} : vector<16x16x32xf32> to vector<1x16x32xf32>
    %878 = vector.shape_cast %877 : vector<1x16x32xf32> to vector<16x32xf32>
    %cst_326 = arith.constant 0xFF800000 : f32
    %879 = vector.broadcast %cst_326 : f32 to vector<16x32xf32>
    %880 = arith.select %876, %878, %879 : vector<16x32xf32>
    %881 = arith.maximumf %873, %880 : vector<16x32xf32>
    %c6_i32_327 = arith.constant 6 : i32
    %882 = arith.cmpi sle, %828, %c6_i32_327 : i32
    %c6_i32_328 = arith.constant 6 : i32
    %883 = arith.cmpi sgt, %832, %c6_i32_328 : i32
    %884 = arith.andi %882, %883 : i1
    %885 = vector.extract_strided_slice %2 {offsets = [6, 0, 0], sizes = [1, 16, 32], strides = [1, 1, 1]} : vector<16x16x32xf32> to vector<1x16x32xf32>
    %886 = vector.shape_cast %885 : vector<1x16x32xf32> to vector<16x32xf32>
    %cst_329 = arith.constant 0xFF800000 : f32
    %887 = vector.broadcast %cst_329 : f32 to vector<16x32xf32>
    %888 = arith.select %884, %886, %887 : vector<16x32xf32>
    %889 = arith.maximumf %881, %888 : vector<16x32xf32>
    %c7_i32_330 = arith.constant 7 : i32
    %890 = arith.cmpi sle, %828, %c7_i32_330 : i32
    %c7_i32_331 = arith.constant 7 : i32
    %891 = arith.cmpi sgt, %832, %c7_i32_331 : i32
    %892 = arith.andi %890, %891 : i1
    %893 = vector.extract_strided_slice %2 {offsets = [7, 0, 0], sizes = [1, 16, 32], strides = [1, 1, 1]} : vector<16x16x32xf32> to vector<1x16x32xf32>
    %894 = vector.shape_cast %893 : vector<1x16x32xf32> to vector<16x32xf32>
    %cst_332 = arith.constant 0xFF800000 : f32
    %895 = vector.broadcast %cst_332 : f32 to vector<16x32xf32>
    %896 = arith.select %892, %894, %895 : vector<16x32xf32>
    %897 = arith.maximumf %889, %896 : vector<16x32xf32>
    %c8_i32_333 = arith.constant 8 : i32
    %898 = arith.cmpi sle, %828, %c8_i32_333 : i32
    %c8_i32_334 = arith.constant 8 : i32
    %899 = arith.cmpi sgt, %832, %c8_i32_334 : i32
    %900 = arith.andi %898, %899 : i1
    %901 = vector.extract_strided_slice %2 {offsets = [8, 0, 0], sizes = [1, 16, 32], strides = [1, 1, 1]} : vector<16x16x32xf32> to vector<1x16x32xf32>
    %902 = vector.shape_cast %901 : vector<1x16x32xf32> to vector<16x32xf32>
    %cst_335 = arith.constant 0xFF800000 : f32
    %903 = vector.broadcast %cst_335 : f32 to vector<16x32xf32>
    %904 = arith.select %900, %902, %903 : vector<16x32xf32>
    %905 = arith.maximumf %897, %904 : vector<16x32xf32>
    %c9_i32_336 = arith.constant 9 : i32
    %906 = arith.cmpi sle, %828, %c9_i32_336 : i32
    %c9_i32_337 = arith.constant 9 : i32
    %907 = arith.cmpi sgt, %832, %c9_i32_337 : i32
    %908 = arith.andi %906, %907 : i1
    %909 = vector.extract_strided_slice %2 {offsets = [9, 0, 0], sizes = [1, 16, 32], strides = [1, 1, 1]} : vector<16x16x32xf32> to vector<1x16x32xf32>
    %910 = vector.shape_cast %909 : vector<1x16x32xf32> to vector<16x32xf32>
    %cst_338 = arith.constant 0xFF800000 : f32
    %911 = vector.broadcast %cst_338 : f32 to vector<16x32xf32>
    %912 = arith.select %908, %910, %911 : vector<16x32xf32>
    %913 = arith.maximumf %905, %912 : vector<16x32xf32>
    %c10_i32_339 = arith.constant 10 : i32
    %914 = arith.cmpi sle, %828, %c10_i32_339 : i32
    %c10_i32_340 = arith.constant 10 : i32
    %915 = arith.cmpi sgt, %832, %c10_i32_340 : i32
    %916 = arith.andi %914, %915 : i1
    %917 = vector.extract_strided_slice %2 {offsets = [10, 0, 0], sizes = [1, 16, 32], strides = [1, 1, 1]} : vector<16x16x32xf32> to vector<1x16x32xf32>
    %918 = vector.shape_cast %917 : vector<1x16x32xf32> to vector<16x32xf32>
    %cst_341 = arith.constant 0xFF800000 : f32
    %919 = vector.broadcast %cst_341 : f32 to vector<16x32xf32>
    %920 = arith.select %916, %918, %919 : vector<16x32xf32>
    %921 = arith.maximumf %913, %920 : vector<16x32xf32>
    %c11_i32_342 = arith.constant 11 : i32
    %922 = arith.cmpi sle, %828, %c11_i32_342 : i32
    %c11_i32_343 = arith.constant 11 : i32
    %923 = arith.cmpi sgt, %832, %c11_i32_343 : i32
    %924 = arith.andi %922, %923 : i1
    %925 = vector.extract_strided_slice %2 {offsets = [11, 0, 0], sizes = [1, 16, 32], strides = [1, 1, 1]} : vector<16x16x32xf32> to vector<1x16x32xf32>
    %926 = vector.shape_cast %925 : vector<1x16x32xf32> to vector<16x32xf32>
    %cst_344 = arith.constant 0xFF800000 : f32
    %927 = vector.broadcast %cst_344 : f32 to vector<16x32xf32>
    %928 = arith.select %924, %926, %927 : vector<16x32xf32>
    %929 = arith.maximumf %921, %928 : vector<16x32xf32>
    %c12_i32_345 = arith.constant 12 : i32
    %930 = arith.cmpi sle, %828, %c12_i32_345 : i32
    %c12_i32_346 = arith.constant 12 : i32
    %931 = arith.cmpi sgt, %832, %c12_i32_346 : i32
    %932 = arith.andi %930, %931 : i1
    %933 = vector.extract_strided_slice %2 {offsets = [12, 0, 0], sizes = [1, 16, 32], strides = [1, 1, 1]} : vector<16x16x32xf32> to vector<1x16x32xf32>
    %934 = vector.shape_cast %933 : vector<1x16x32xf32> to vector<16x32xf32>
    %cst_347 = arith.constant 0xFF800000 : f32
    %935 = vector.broadcast %cst_347 : f32 to vector<16x32xf32>
    %936 = arith.select %932, %934, %935 : vector<16x32xf32>
    %937 = arith.maximumf %929, %936 : vector<16x32xf32>
    %c13_i32_348 = arith.constant 13 : i32
    %938 = arith.cmpi sle, %828, %c13_i32_348 : i32
    %c13_i32_349 = arith.constant 13 : i32
    %939 = arith.cmpi sgt, %832, %c13_i32_349 : i32
    %940 = arith.andi %938, %939 : i1
    %941 = vector.extract_strided_slice %2 {offsets = [13, 0, 0], sizes = [1, 16, 32], strides = [1, 1, 1]} : vector<16x16x32xf32> to vector<1x16x32xf32>
    %942 = vector.shape_cast %941 : vector<1x16x32xf32> to vector<16x32xf32>
    %cst_350 = arith.constant 0xFF800000 : f32
    %943 = vector.broadcast %cst_350 : f32 to vector<16x32xf32>
    %944 = arith.select %940, %942, %943 : vector<16x32xf32>
    %945 = arith.maximumf %937, %944 : vector<16x32xf32>
    %c14_i32_351 = arith.constant 14 : i32
    %946 = arith.cmpi sle, %828, %c14_i32_351 : i32
    %c14_i32_352 = arith.constant 14 : i32
    %947 = arith.cmpi sgt, %832, %c14_i32_352 : i32
    %948 = arith.andi %946, %947 : i1
    %949 = vector.extract_strided_slice %2 {offsets = [14, 0, 0], sizes = [1, 16, 32], strides = [1, 1, 1]} : vector<16x16x32xf32> to vector<1x16x32xf32>
    %950 = vector.shape_cast %949 : vector<1x16x32xf32> to vector<16x32xf32>
    %cst_353 = arith.constant 0xFF800000 : f32
    %951 = vector.broadcast %cst_353 : f32 to vector<16x32xf32>
    %952 = arith.select %948, %950, %951 : vector<16x32xf32>
    %953 = arith.maximumf %945, %952 : vector<16x32xf32>
    %c15_i32_354 = arith.constant 15 : i32
    %954 = arith.cmpi sle, %828, %c15_i32_354 : i32
    %c15_i32_355 = arith.constant 15 : i32
    %955 = arith.cmpi sgt, %832, %c15_i32_355 : i32
    %956 = arith.andi %954, %955 : i1
    %957 = vector.extract_strided_slice %2 {offsets = [15, 0, 0], sizes = [1, 16, 32], strides = [1, 1, 1]} : vector<16x16x32xf32> to vector<1x16x32xf32>
    %958 = vector.shape_cast %957 : vector<1x16x32xf32> to vector<16x32xf32>
    %cst_356 = arith.constant 0xFF800000 : f32
    %959 = vector.broadcast %cst_356 : f32 to vector<16x32xf32>
    %960 = arith.select %956, %958, %959 : vector<16x32xf32>
    %961 = arith.maximumf %953, %960 : vector<16x32xf32>
    %962 = vector.shape_cast %139 : vector<16x32xf32> to vector<1x16x32xf32>
    %963 = vector.shape_cast %276 : vector<16x32xf32> to vector<1x16x32xf32>
    %964 = vector.shape_cast %413 : vector<16x32xf32> to vector<1x16x32xf32>
    %965 = vector.shape_cast %550 : vector<16x32xf32> to vector<1x16x32xf32>
    %966 = vector.shape_cast %687 : vector<16x32xf32> to vector<1x16x32xf32>
    %967 = vector.shape_cast %824 : vector<16x32xf32> to vector<1x16x32xf32>
    %968 = vector.shape_cast %961 : vector<16x32xf32> to vector<1x16x32xf32>
    %969 = tpu.concatenate %962, %963, %964, %965, %966, %967, %968 in 0 : vector<1x16x32xf32>, vector<1x16x32xf32>, vector<1x16x32xf32>, vector<1x16x32xf32>, vector<1x16x32xf32>, vector<1x16x32xf32>, vector<1x16x32xf32> -> vector<7x16x32xf32>
    %970 = tpu.iota {dimensions = array<i32: 0>} : vector<16x32xi32>
    %971 = vector.shape_cast %970 : vector<16x32xi32> to vector<1x16x32xi32>
    %c7_i32_357 = arith.constant 7 : i32
    %972 = arith.muli %arg1, %c7_i32_357 : i32
    %c0_i32_358 = arith.constant 0 : i32
    %973 = arith.addi %972, %c0_i32_358 : i32
    %974 = arith.index_cast %973 : i32 to index
    %975 = memref.load %arg5[%974] : memref<56xi32, #tpu.memory_space<smem>>
    %c7_i32_359 = arith.constant 7 : i32
    %976 = arith.muli %arg1, %c7_i32_359 : i32
    %c0_i32_360 = arith.constant 0 : i32
    %977 = arith.addi %976, %c0_i32_360 : i32
    %978 = arith.index_cast %977 : i32 to index
    %979 = memref.load %arg6[%978] : memref<56xi32, #tpu.memory_space<smem>>
    %980 = vector.broadcast %975 : i32 to vector<1x16x32xi32>
    %981 = arith.cmpi sge, %971, %980 : vector<1x16x32xi32>
    %982 = vector.broadcast %979 : i32 to vector<1x16x32xi32>
    %983 = arith.cmpi slt, %971, %982 : vector<1x16x32xi32>
    %984 = arith.andi %981, %983 : vector<1x16x32xi1>
    %cst_361 = arith.constant 0xFF800000 : f32
    %985 = vector.shape_cast %984 : vector<1x16x32xi1> to vector<1x16x32xi1>
    %986 = vector.broadcast %985 : vector<1x16x32xi1> to vector<7x16x32xi1>
    %987 = vector.broadcast %cst_361 : f32 to vector<7x16x32xf32>
    %988 = arith.select %986, %969, %987 : vector<7x16x32xi1>, vector<7x16x32xf32>
    %cst_362 = arith.constant dense<0xFF800000> : vector<7x32xf32>
    %989 = vector.multi_reduction <maximumf>, %988, %cst_362 [1] : vector<7x16x32xf32> to vector<7x32xf32>
    %c7_i32_363 = arith.constant 7 : i32
    %990 = arith.muli %arg1, %c7_i32_363 : i32
    %c1_i32_364 = arith.constant 1 : i32
    %991 = arith.addi %990, %c1_i32_364 : i32
    %992 = arith.index_cast %991 : i32 to index
    %993 = memref.load %arg5[%992] : memref<56xi32, #tpu.memory_space<smem>>
    %c7_i32_365 = arith.constant 7 : i32
    %994 = arith.muli %arg1, %c7_i32_365 : i32
    %c1_i32_366 = arith.constant 1 : i32
    %995 = arith.addi %994, %c1_i32_366 : i32
    %996 = arith.index_cast %995 : i32 to index
    %997 = memref.load %arg6[%996] : memref<56xi32, #tpu.memory_space<smem>>
    %998 = vector.broadcast %993 : i32 to vector<1x16x32xi32>
    %999 = arith.cmpi sge, %971, %998 : vector<1x16x32xi32>
    %1000 = vector.broadcast %997 : i32 to vector<1x16x32xi32>
    %1001 = arith.cmpi slt, %971, %1000 : vector<1x16x32xi32>
    %1002 = arith.andi %999, %1001 : vector<1x16x32xi1>
    %cst_367 = arith.constant 0xFF800000 : f32
    %1003 = vector.shape_cast %1002 : vector<1x16x32xi1> to vector<1x16x32xi1>
    %1004 = vector.broadcast %1003 : vector<1x16x32xi1> to vector<7x16x32xi1>
    %1005 = vector.broadcast %cst_367 : f32 to vector<7x16x32xf32>
    %1006 = arith.select %1004, %969, %1005 : vector<7x16x32xi1>, vector<7x16x32xf32>
    %cst_368 = arith.constant dense<0xFF800000> : vector<7x32xf32>
    %1007 = vector.multi_reduction <maximumf>, %1006, %cst_368 [1] : vector<7x16x32xf32> to vector<7x32xf32>
    %c7_i32_369 = arith.constant 7 : i32
    %1008 = arith.muli %arg1, %c7_i32_369 : i32
    %c2_i32_370 = arith.constant 2 : i32
    %1009 = arith.addi %1008, %c2_i32_370 : i32
    %1010 = arith.index_cast %1009 : i32 to index
    %1011 = memref.load %arg5[%1010] : memref<56xi32, #tpu.memory_space<smem>>
    %c7_i32_371 = arith.constant 7 : i32
    %1012 = arith.muli %arg1, %c7_i32_371 : i32
    %c2_i32_372 = arith.constant 2 : i32
    %1013 = arith.addi %1012, %c2_i32_372 : i32
    %1014 = arith.index_cast %1013 : i32 to index
    %1015 = memref.load %arg6[%1014] : memref<56xi32, #tpu.memory_space<smem>>
    %1016 = vector.broadcast %1011 : i32 to vector<1x16x32xi32>
    %1017 = arith.cmpi sge, %971, %1016 : vector<1x16x32xi32>
    %1018 = vector.broadcast %1015 : i32 to vector<1x16x32xi32>
    %1019 = arith.cmpi slt, %971, %1018 : vector<1x16x32xi32>
    %1020 = arith.andi %1017, %1019 : vector<1x16x32xi1>
    %cst_373 = arith.constant 0xFF800000 : f32
    %1021 = vector.shape_cast %1020 : vector<1x16x32xi1> to vector<1x16x32xi1>
    %1022 = vector.broadcast %1021 : vector<1x16x32xi1> to vector<7x16x32xi1>
    %1023 = vector.broadcast %cst_373 : f32 to vector<7x16x32xf32>
    %1024 = arith.select %1022, %969, %1023 : vector<7x16x32xi1>, vector<7x16x32xf32>
    %cst_374 = arith.constant dense<0xFF800000> : vector<7x32xf32>
    %1025 = vector.multi_reduction <maximumf>, %1024, %cst_374 [1] : vector<7x16x32xf32> to vector<7x32xf32>
    %c7_i32_375 = arith.constant 7 : i32
    %1026 = arith.muli %arg1, %c7_i32_375 : i32
    %c3_i32_376 = arith.constant 3 : i32
    %1027 = arith.addi %1026, %c3_i32_376 : i32
    %1028 = arith.index_cast %1027 : i32 to index
    %1029 = memref.load %arg5[%1028] : memref<56xi32, #tpu.memory_space<smem>>
    %c7_i32_377 = arith.constant 7 : i32
    %1030 = arith.muli %arg1, %c7_i32_377 : i32
    %c3_i32_378 = arith.constant 3 : i32
    %1031 = arith.addi %1030, %c3_i32_378 : i32
    %1032 = arith.index_cast %1031 : i32 to index
    %1033 = memref.load %arg6[%1032] : memref<56xi32, #tpu.memory_space<smem>>
    %1034 = vector.broadcast %1029 : i32 to vector<1x16x32xi32>
    %1035 = arith.cmpi sge, %971, %1034 : vector<1x16x32xi32>
    %1036 = vector.broadcast %1033 : i32 to vector<1x16x32xi32>
    %1037 = arith.cmpi slt, %971, %1036 : vector<1x16x32xi32>
    %1038 = arith.andi %1035, %1037 : vector<1x16x32xi1>
    %cst_379 = arith.constant 0xFF800000 : f32
    %1039 = vector.shape_cast %1038 : vector<1x16x32xi1> to vector<1x16x32xi1>
    %1040 = vector.broadcast %1039 : vector<1x16x32xi1> to vector<7x16x32xi1>
    %1041 = vector.broadcast %cst_379 : f32 to vector<7x16x32xf32>
    %1042 = arith.select %1040, %969, %1041 : vector<7x16x32xi1>, vector<7x16x32xf32>
    %cst_380 = arith.constant dense<0xFF800000> : vector<7x32xf32>
    %1043 = vector.multi_reduction <maximumf>, %1042, %cst_380 [1] : vector<7x16x32xf32> to vector<7x32xf32>
    %c7_i32_381 = arith.constant 7 : i32
    %1044 = arith.muli %arg1, %c7_i32_381 : i32
    %c4_i32_382 = arith.constant 4 : i32
    %1045 = arith.addi %1044, %c4_i32_382 : i32
    %1046 = arith.index_cast %1045 : i32 to index
    %1047 = memref.load %arg5[%1046] : memref<56xi32, #tpu.memory_space<smem>>
    %c7_i32_383 = arith.constant 7 : i32
    %1048 = arith.muli %arg1, %c7_i32_383 : i32
    %c4_i32_384 = arith.constant 4 : i32
    %1049 = arith.addi %1048, %c4_i32_384 : i32
    %1050 = arith.index_cast %1049 : i32 to index
    %1051 = memref.load %arg6[%1050] : memref<56xi32, #tpu.memory_space<smem>>
    %1052 = vector.broadcast %1047 : i32 to vector<1x16x32xi32>
    %1053 = arith.cmpi sge, %971, %1052 : vector<1x16x32xi32>
    %1054 = vector.broadcast %1051 : i32 to vector<1x16x32xi32>
    %1055 = arith.cmpi slt, %971, %1054 : vector<1x16x32xi32>
    %1056 = arith.andi %1053, %1055 : vector<1x16x32xi1>
    %cst_385 = arith.constant 0xFF800000 : f32
    %1057 = vector.shape_cast %1056 : vector<1x16x32xi1> to vector<1x16x32xi1>
    %1058 = vector.broadcast %1057 : vector<1x16x32xi1> to vector<7x16x32xi1>
    %1059 = vector.broadcast %cst_385 : f32 to vector<7x16x32xf32>
    %1060 = arith.select %1058, %969, %1059 : vector<7x16x32xi1>, vector<7x16x32xf32>
    %cst_386 = arith.constant dense<0xFF800000> : vector<7x32xf32>
    %1061 = vector.multi_reduction <maximumf>, %1060, %cst_386 [1] : vector<7x16x32xf32> to vector<7x32xf32>
    %c7_i32_387 = arith.constant 7 : i32
    %1062 = arith.muli %arg1, %c7_i32_387 : i32
    %c5_i32_388 = arith.constant 5 : i32
    %1063 = arith.addi %1062, %c5_i32_388 : i32
    %1064 = arith.index_cast %1063 : i32 to index
    %1065 = memref.load %arg5[%1064] : memref<56xi32, #tpu.memory_space<smem>>
    %c7_i32_389 = arith.constant 7 : i32
    %1066 = arith.muli %arg1, %c7_i32_389 : i32
    %c5_i32_390 = arith.constant 5 : i32
    %1067 = arith.addi %1066, %c5_i32_390 : i32
    %1068 = arith.index_cast %1067 : i32 to index
    %1069 = memref.load %arg6[%1068] : memref<56xi32, #tpu.memory_space<smem>>
    %1070 = vector.broadcast %1065 : i32 to vector<1x16x32xi32>
    %1071 = arith.cmpi sge, %971, %1070 : vector<1x16x32xi32>
    %1072 = vector.broadcast %1069 : i32 to vector<1x16x32xi32>
    %1073 = arith.cmpi slt, %971, %1072 : vector<1x16x32xi32>
    %1074 = arith.andi %1071, %1073 : vector<1x16x32xi1>
    %cst_391 = arith.constant 0xFF800000 : f32
    %1075 = vector.shape_cast %1074 : vector<1x16x32xi1> to vector<1x16x32xi1>
    %1076 = vector.broadcast %1075 : vector<1x16x32xi1> to vector<7x16x32xi1>
    %1077 = vector.broadcast %cst_391 : f32 to vector<7x16x32xf32>
    %1078 = arith.select %1076, %969, %1077 : vector<7x16x32xi1>, vector<7x16x32xf32>
    %cst_392 = arith.constant dense<0xFF800000> : vector<7x32xf32>
    %1079 = vector.multi_reduction <maximumf>, %1078, %cst_392 [1] : vector<7x16x32xf32> to vector<7x32xf32>
    %c7_i32_393 = arith.constant 7 : i32
    %1080 = arith.muli %arg1, %c7_i32_393 : i32
    %c6_i32_394 = arith.constant 6 : i32
    %1081 = arith.addi %1080, %c6_i32_394 : i32
    %1082 = arith.index_cast %1081 : i32 to index
    %1083 = memref.load %arg5[%1082] : memref<56xi32, #tpu.memory_space<smem>>
    %c7_i32_395 = arith.constant 7 : i32
    %1084 = arith.muli %arg1, %c7_i32_395 : i32
    %c6_i32_396 = arith.constant 6 : i32
    %1085 = arith.addi %1084, %c6_i32_396 : i32
    %1086 = arith.index_cast %1085 : i32 to index
    %1087 = memref.load %arg6[%1086] : memref<56xi32, #tpu.memory_space<smem>>
    %1088 = vector.broadcast %1083 : i32 to vector<1x16x32xi32>
    %1089 = arith.cmpi sge, %971, %1088 : vector<1x16x32xi32>
    %1090 = vector.broadcast %1087 : i32 to vector<1x16x32xi32>
    %1091 = arith.cmpi slt, %971, %1090 : vector<1x16x32xi32>
    %1092 = arith.andi %1089, %1091 : vector<1x16x32xi1>
    %cst_397 = arith.constant 0xFF800000 : f32
    %1093 = vector.shape_cast %1092 : vector<1x16x32xi1> to vector<1x16x32xi1>
    %1094 = vector.broadcast %1093 : vector<1x16x32xi1> to vector<7x16x32xi1>
    %1095 = vector.broadcast %cst_397 : f32 to vector<7x16x32xf32>
    %1096 = arith.select %1094, %969, %1095 : vector<7x16x32xi1>, vector<7x16x32xf32>
    %cst_398 = arith.constant dense<0xFF800000> : vector<7x32xf32>
    %1097 = vector.multi_reduction <maximumf>, %1096, %cst_398 [1] : vector<7x16x32xf32> to vector<7x32xf32>
    %1098 = vector.shape_cast %989 : vector<7x32xf32> to vector<1x7x32xf32>
    %1099 = vector.shape_cast %1007 : vector<7x32xf32> to vector<1x7x32xf32>
    %1100 = vector.shape_cast %1025 : vector<7x32xf32> to vector<1x7x32xf32>
    %1101 = vector.shape_cast %1043 : vector<7x32xf32> to vector<1x7x32xf32>
    %1102 = vector.shape_cast %1061 : vector<7x32xf32> to vector<1x7x32xf32>
    %1103 = vector.shape_cast %1079 : vector<7x32xf32> to vector<1x7x32xf32>
    %1104 = vector.shape_cast %1097 : vector<7x32xf32> to vector<1x7x32xf32>
    %1105 = tpu.concatenate %1098, %1099, %1100, %1101, %1102, %1103, %1104 in 0 : vector<1x7x32xf32>, vector<1x7x32xf32>, vector<1x7x32xf32>, vector<1x7x32xf32>, vector<1x7x32xf32>, vector<1x7x32xf32>, vector<1x7x32xf32> -> vector<7x7x32xf32>
    %cst_399 = arith.constant 0xFF800000 : f32
    %1106 = vector.broadcast %cst_399 : f32 to vector<7x7x32xf32>
    %1107 = arith.cmpf oeq, %1105, %1106 : vector<7x7x32xf32>
    %cst_400 = arith.constant 0.000000e+00 : f32
    %1108 = vector.broadcast %cst_400 : f32 to vector<7x7x32xf32>
    %1109 = arith.select %1107, %1108, %1105 : vector<7x7x32xi1>, vector<7x7x32xf32>
    %1110 = arith.truncf %1109 : vector<7x7x32xf32> to vector<7x7x32xbf16>
    %c0_401 = arith.constant 0 : index
    %c0_402 = arith.constant 0 : index
    %c0_403 = arith.constant 0 : index
    %c0_404 = arith.constant 0 : index
    %1111 = vector.load %arg8[%c0_401, %c0_402, %c0_403, %c0_404] : memref<1x7x7x32xbf16, #tpu.memory_space<vmem>>, vector<1x7x7x32xbf16>
    %1112 = vector.shape_cast %1111 : vector<1x7x7x32xbf16> to vector<7x7x32xbf16>
    %1113 = vector.shape_cast %1110 : vector<7x7x32xbf16> to vector<1x7x7x32xbf16>
    tpu.vector_store %arg8[%c0_401, %c0_402, %c0_403, %c0_404], %1113 {strides = array<i32>} : memref<1x7x7x32xbf16, #tpu.memory_space<vmem>>, vector<1x7x7x32xbf16>,
    return
  }
  func.func @transform_0(%arg0: i32, %arg1: i32, %arg2: memref<8xi32, #tpu.memory_space<smem>>, %arg3: memref<56xi32, #tpu.memory_space<smem>>, %arg4: memref<56xi32, #tpu.memory_space<smem>>, %arg5: memref<56xi32, #tpu.memory_space<smem>>, %arg6: memref<56xi32, #tpu.memory_space<smem>>) -> (i32, i32, i32, i32) {
    %0 = arith.index_cast %arg1 : i32 to index
    %1 = memref.load %arg2[%0] : memref<8xi32, #tpu.memory_space<smem>>
    %c0_i32 = arith.constant 0 : i32
    %c0_i32_0 = arith.constant 0 : i32
    %c0_i32_1 = arith.constant 0 : i32
    return %1, %c0_i32, %c0_i32_0, %arg0 : i32, i32, i32, i32
  }
  func.func @transform_1(%arg0: i32, %arg1: i32, %arg2: memref<8xi32, #tpu.memory_space<smem>>, %arg3: memref<56xi32, #tpu.memory_space<smem>>, %arg4: memref<56xi32, #tpu.memory_space<smem>>, %arg5: memref<56xi32, #tpu.memory_space<smem>>, %arg6: memref<56xi32, #tpu.memory_space<smem>>) -> (i32, i32, i32, i32) {
    %c0_i32 = arith.constant 0 : i32
    %c0_i32_0 = arith.constant 0 : i32
    %c0_i32_1 = arith.constant 0 : i32
    return %arg1, %c0_i32, %c0_i32_0, %arg0 : i32, i32, i32, i32
  }
}

</mosaic_0001>

<llo_original>
// kernel: resnet_head_forward.2
$region0: #{resnet_head_forward.2}
  #allocation0 [shape = 'u32[]', space=smem, size = 0x4, offset = 0x4, fixed_abs, tag = 'smem constant byte address 0x4 - core index']
  #allocation1 [shape = 'u32[144,128]{1,0:T(1,128)}', space=vmem, size = 0x12000, scoped, tag = 'internal scratch']
  #allocation2 [shape = 's32[1]{0}', space=sflag, size = 0x4, scoped, tag = 'scoped memory for resnet_head_forward.2']
  #allocation3 [shape = 'u8[512]{0}', space=smem, size = 0x200, scoped, tag = 'prefetched SMEM operand 0']
  #allocation4 [shape = 'u8[512]{0}', space=smem, size = 0x200, scoped, tag = 'prefetched SMEM operand 1']
  #allocation5 [shape = 'u8[512]{0}', space=smem, size = 0x200, scoped, tag = 'prefetched SMEM operand 2']
  #allocation6 [shape = 'u8[512]{0}', space=smem, size = 0x200, scoped, tag = 'prefetched SMEM operand 3']
  #allocation7 [shape = 'u8[512]{0}', space=smem, size = 0x200, scoped, tag = 'prefetched SMEM operand 4']
  %s0 = inlined_call_operand.hbm [shape: s32[8], index: 0, kind: input, shape index: {}]
  %s1 = inlined_call_operand.vmem [shape: s32[56], index: 1, kind: input, shape index: {}]
  %s2 = inlined_call_operand.vmem [shape: s32[56], index: 2, kind: input, shape index: {}]
  %s3 = inlined_call_operand.vmem [shape: s32[56], index: 3, kind: input, shape index: {}]
  %s4 = inlined_call_operand.vmem [shape: s32[56], index: 4, kind: input, shape index: {}]
  %s5 = inlined_call_operand.vmem [shape: bf16[2,16,16,32], index: 5, kind: input, shape index: {}]
  %s6 = inlined_call_operand.vmem [shape: bf16[8,7,7,32], index: 6, kind: output, shape index: {}]
  %s7 = sld [smem:[#allocation0]]
  $region37: #{resnet_head_forward.2} parent=0
    _
  %s9 = ssub.s32 1, %s7
  %s10 = scalar_select 0, %s9, %s7
  %12 = dma.hbm_to_smem %s0, 16, [#allocation3], [#allocation2]
  %s13 = sshll.u32 %s1, 4
  %s14 = int_to_ptr.vmem [resolvable:$true] %s13
  %16 = dma.vmem_to_smem %s14, 16, [#allocation4], [#allocation2]
  %s17 = sshll.u32 %s2, 4
  %s18 = int_to_ptr.vmem [resolvable:$true] %s17
  %20 = dma.vmem_to_smem %s18, 16, [#allocation5], [#allocation2]
  %s21 = sshll.u32 %s3, 4
  %s22 = int_to_ptr.vmem [resolvable:$true] %s21
  %24 = dma.vmem_to_smem %s22, 16, [#allocation6], [#allocation2]
  %s25 = sshll.u32 %s4, 4
  %s26 = int_to_ptr.vmem [resolvable:$true] %s25
  %28 = dma.vmem_to_smem %s26, 16, [#allocation7], [#allocation2]
  %29 = dma.done [#allocation2], 80
  %30 = sfence
  loop: start=0, step=1, limit=10
  $region2: #{resnet_head_forward.2} parent=0 // loop_pre_header
    _
  $region3: #{resnet_head_forward.2} parent=0 // loop_header
    %s32 = sphi 0, %s36
    %p33 = scmp.ge.s32.totalorder %s32, 10
    %s39 = sphi 0, %s51
    %s40 = sphi 0, %s47
    %s41 = sphi 0, %s39
    %s42 = sphi 0, %s40
    %s43 = sphi 0, %s41
    %s44 = sphi 0, %s42
    %s58 = sphi 0, %s60
    %s61 = sphi 0, %s58
    %s62 = sphi 0, %s61
    %s78 = sphi 0, %s62
    %s86 = sphi 0, %s88
    %s89 = sphi 0, %s86
    %s90 = sphi 0, %s89
    %s106 = sphi 0, %s90
  $region4: #{resnet_head_forward.2} parent=0 // loop_header_branch
    %35 = sbr.rel (%p33) target = $region8
  $region5: #{resnet_head_forward.2} parent=0 // loop_body
    %s37 = ssub.s32 %s32, 1
    %s38 = ssub.s32 %s32, 2
    %s45 = sadd.s32 1, %s40
    %p46 = scmp.ge.s32.totalorder %s45, 8
    %s47 = scalar_select %p46, 0, %s45
    %s48 = sadd.s32 1, %s39
    %s49 = scalar_select %p46, %s48, %s39
    %p50 = scmp.ge.s32.totalorder %s49, 1
    %s51 = scalar_select %p50, 0, %s49
    %s52 = sld [smem:[#allocation3 + %s40]]
    %s53 = sld [smem:[#allocation3 + %s47]]
    %s54 = ssub.s32 %s52, %s53
    %s55 = ssub.s32 %s39, %s51
    %s56 = sor.u32 %s54, %s55
    %p57 = scmp.eq.s32.totalorder %s56, 0
    %s59 = sadd.s32 %s58, 1
    %s60 = scalar_select %p57, %s58, %s59
    %p63 = pneg %p57
    %p64 = scmp.eq.s32.totalorder %s32, 7
    %p65 = por %p63, %p64
    %p66 = scmp.ne.s32.totalorder %s58, %s61
    %p67 = scmp.eq.s32.totalorder %s32, 0
    %p68 = por %p66, %p67
    %p69 = scmp.ne.s32.totalorder %s58, %s61
    %p70 = scmp.eq.s32.totalorder %s37, 7
    %p71 = por %p69, %p70
    %p72 = scmp.ne.s32.totalorder %s61, %s62
    %p73 = scmp.eq.s32.totalorder %s37, 0
    %p74 = por %p72, %p73
    %p75 = scmp.ne.s32.totalorder %s61, %s62
    %p76 = scmp.eq.s32.totalorder %s38, 7
    %p77 = por %p75, %p76
    %p79 = scmp.ne.s32.totalorder %s62, %s78
    %p80 = scmp.eq.s32.totalorder %s38, 0
    %p81 = por %p79, %p80
    %s82 = ssub.s32 %s40, %s47
    %s83 = ssub.s32 %s39, %s51
    %s84 = sor.u32 %s82, %s83
    %p85 = scmp.eq.s32.totalorder %s84, 0
    %s87 = sadd.s32 %s86, 1
    %s88 = scalar_select %p85, %s86, %s87
    %p91 = pneg %p85
    %p92 = scmp.eq.s32.totalorder %s32, 7
    %p93 = por %p91, %p92
    %p94 = scmp.ne.s32.totalorder %s86, %s89
    %p95 = scmp.eq.s32.totalorder %s32, 0
    %p96 = por %p94, %p95
    %p97 = scmp.ne.s32.totalorder %s86, %s89
    %p98 = scmp.eq.s32.totalorder %s37, 7
    %p99 = por %p97, %p98
    %p100 = scmp.ne.s32.totalorder %s89, %s90
    %p101 = scmp.eq.s32.totalorder %s37, 0
    %p102 = por %p100, %p101
    %p103 = scmp.ne.s32.totalorder %s89, %s90
    %p104 = scmp.eq.s32.totalorder %s38, 7
    %p105 = por %p103, %p104
    %p107 = scmp.ne.s32.totalorder %s90, %s106
    %p108 = scmp.eq.s32.totalorder %s38, 0
    %p109 = por %p107, %p108
    %p110 = scmp.le.s32.totalorder 1, %s32
    %p111 = scmp.lt.s32.totalorder %s32, 9
    %p112 = pnand %p110, %p111
    %p113 = pneg %p112
    // Predicated region
    $region9: #{resnet_head_forward.2} parent=5 // pred_check
      _
    $region10: #{resnet_head_forward.2} parent=5 // pred_check_branch
      %115 = sbr.rel (%p112) target = $region12
    $region11: #{resnet_head_forward.2} parent=5 // pred_region
      %s116 = ssub.s32 %s32, 1
    $region12: #{resnet_head_forward.2} parent=5 // pred_fallthru
      _
    %p117 = scmp.lt.s32.totalorder %s32, 8
    // Predicated region
    $region13: #{resnet_head_forward.2} parent=5 // pred_check
      %p118 = pneg %p117
    $region14: #{resnet_head_forward.2} parent=5 // pred_check_branch
      %120 = sbr.rel (%p118) target = $region16
    $region15: #{resnet_head_forward.2} parent=5 // pred_region
      // Predicated region
      $region17: #{resnet_head_forward.2} parent=15 // pred_check
        %p121 = pneg %p68
      $region18: #{resnet_head_forward.2} parent=15 // pred_check_branch
        %123 = sbr.rel (%p121) target = $region20
      $region19: #{resnet_head_forward.2} parent=15 // pred_region
        %s124 = sld [smem:[#allocation3 + %s40]]
        %p125 = scmp.lt.s32.totalorder %s124, 1
        %s126 = scalar_select %p125, %s124, 1
        %p127 = scmp.lt.s32.totalorder %s39, 0
        %s128 = scalar_select %p127, %s39, 0
        %s129 = smul.addr %s126, 32
        %s130 = sadd.s32 %s128, %s129
        %s131 = smul.addr %s130, 4
        %s132 = scalar_lea.vmem %s5, %s131
        %s133 = sld [smem:[#allocation3 + %s40]]
      $region20: #{resnet_head_forward.2} parent=15 // pred_fallthru
        _
    $region16: #{resnet_head_forward.2} parent=5 // pred_fallthru
      _
    %p134 = scmp.le.s32.totalorder 1, %s32
    %p135 = scmp.lt.s32.totalorder %s32, 9
    %p136 = pnand %p134, %p135
    %p137 = pneg %p136
    // Predicated region
    $region21: #{resnet_head_forward.2} parent=5 // pred_check
      _
    $region22: #{resnet_head_forward.2} parent=5 // pred_check_branch
      %139 = sbr.rel (%p136) target = $region24
    $region23: #{resnet_head_forward.2} parent=5 // pred_region
      %s140 = ssub.s32 %s32, 1
      %s141 = sld [smem:[#allocation3 + %s42]]
      %p142 = scmp.lt.s32.totalorder %s141, 1
      %s143 = scalar_select %p142, %s141, 1
      %p144 = scmp.lt.s32.totalorder %s41, 0
      %s145 = scalar_select %p144, %s41, 0
      %s146 = smul.addr %s143, 32
      %s147 = sadd.s32 %s145, %s146
      %s148 = smul.addr %s147, 4
      %s149 = scalar_lea.vmem %s5, %s148
      %p150 = pneg %p74
      %p151 = pneg %p71
      %p152 = pneg %p102
      %p153 = pneg %p99
      %p154 = scmp.lt.s32.totalorder %s42, 7
      %s155 = scalar_select %p154, %s42, 7
      %p156 = scmp.lt.s32.totalorder %s41, 0
      %s157 = scalar_select %p156, %s41, 0
      %s158 = smul.addr %s155, 7
      %s159 = sadd.s32 %s157, %s158
      %s160 = smul.addr %s159, 4
      %s161 = scalar_lea.vmem %s6, %s160
      %s162 = sld [smem:[#allocation3 + %s42]]
      %p163 = scmp.lt.s32.totalorder %s162, 1
      %s164 = scalar_select %p163, %s162, 1
      %p165 = scmp.lt.s32.totalorder %s41, 0
      %s166 = scalar_select %p165, %s41, 0
      %s167 = smul.addr %s164, 32
      %s168 = sadd.s32 %s166, %s167
      %s169 = smul.addr %s168, 4
      %s170 = scalar_lea.vmem %s5, %s169
      %s171 = sld [smem:[#allocation3 + %s42]]
      %p172 = scmp.lt.s32.totalorder %s42, 7
      %s173 = scalar_select %p172, %s42, 7
      %p174 = scmp.lt.s32.totalorder %s41, 0
      %s175 = scalar_select %p174, %s41, 0
      %s176 = smul.addr %s173, 7
      %s177 = sadd.s32 %s175, %s176
      %s178 = smul.addr %s177, 4
      %s179 = scalar_lea.vmem %s6, %s178
      %v180 = vld [vmem:[%s170] sm:$0xf]
      %v181 = vld [vmem:[%s170 + $0x4] sm:$0xf]
      %v182 = vld [vmem:[%s170 + $0x8] sm:$0xf]
      %v183 = vld [vmem:[%s170 + $0xc] sm:$0xf]
      %v184 = vld [vmem:[%s170 + $0x10] sm:$0xf]
      %v185 = vld [vmem:[%s170 + $0x14] sm:$0xf]
      %v186 = vld [vmem:[%s170 + $0x18] sm:$0xf]
      %v187 = vld [vmem:[%s170 + $0x1c] sm:$0xf]
      %v188 = vld [vmem:[%s170 + $0x20] sm:$0xf]
      %v189 = vld [vmem:[%s170 + $0x24] sm:$0xf]
      %v190 = vld [vmem:[%s170 + $0x28] sm:$0xf]
      %v191 = vld [vmem:[%s170 + $0x2c] sm:$0xf]
      %v192 = vld [vmem:[%s170 + $0x30] sm:$0xf]
      %v193 = vld [vmem:[%s170 + $0x34] sm:$0xf]
      %v194 = vld [vmem:[%s170 + $0x38] sm:$0xf]
      %v195 = vld [vmem:[%s170 + $0x3c] sm:$0xf]
      %v196 = vld [vmem:[%s170 + $0x40] sm:$0xf]
      %v197 = vld [vmem:[%s170 + $0x44] sm:$0xf]
      %v198 = vld [vmem:[%s170 + $0x48] sm:$0xf]
      %v199 = vld [vmem:[%s170 + $0x4c] sm:$0xf]
      %v200 = vld [vmem:[%s170 + $0x50] sm:$0xf]
      %v201 = vld [vmem:[%s170 + $0x54] sm:$0xf]
      %v202 = vld [vmem:[%s170 + $0x58] sm:$0xf]
      %v203 = vld [vmem:[%s170 + $0x5c] sm:$0xf]
      %v204 = vld [vmem:[%s170 + $0x60] sm:$0xf]
      %v205 = vld [vmem:[%s170 + $0x64] sm:$0xf]
      %v206 = vld [vmem:[%s170 + $0x68] sm:$0xf]
      %v207 = vld [vmem:[%s170 + $0x6c] sm:$0xf]
      %v208 = vld [vmem:[%s170 + $0x70] sm:$0xf]
      %v209 = vld [vmem:[%s170 + $0x74] sm:$0xf]
      %v210 = vld [vmem:[%s170 + $0x78] sm:$0xf]
      %v211 = vld [vmem:[%s170 + $0x7c] sm:$0xf]
      %v212 = vunpack.c.l.bf16 %v180
      %v213 = vunpack.c.l.bf16 %v181
      %v214 = vunpack.c.l.bf16 %v182
      %v215 = vunpack.c.l.bf16 %v183
      %v216 = vunpack.c.l.bf16 %v184
      %v217 = vunpack.c.l.bf16 %v185
      %v218 = vunpack.c.l.bf16 %v186
      %v219 = vunpack.c.l.bf16 %v187
      %v220 = vunpack.c.l.bf16 %v188
      %v221 = vunpack.c.l.bf16 %v189
      %v222 = vunpack.c.l.bf16 %v190
      %v223 = vunpack.c.l.bf16 %v191
      %v224 = vunpack.c.l.bf16 %v192
      %v225 = vunpack.c.l.bf16 %v193
      %v226 = vunpack.c.l.bf16 %v194
      %v227 = vunpack.c.l.bf16 %v195
      %v228 = vunpack.c.l.bf16 %v196
      %v229 = vunpack.c.l.bf16 %v197
      %v230 = vunpack.c.l.bf16 %v198
      %v231 = vunpack.c.l.bf16 %v199
      %v232 = vunpack.c.l.bf16 %v200
      %v233 = vunpack.c.l.bf16 %v201
      %v234 = vunpack.c.l.bf16 %v202
      %v235 = vunpack.c.l.bf16 %v203
      %v236 = vunpack.c.l.bf16 %v204
      %v237 = vunpack.c.l.bf16 %v205
      %v238 = vunpack.c.l.bf16 %v206
      %v239 = vunpack.c.l.bf16 %v207
      %v240 = vunpack.c.l.bf16 %v208
      %v241 = vunpack.c.l.bf16 %v209
      %v242 = vunpack.c.l.bf16 %v210
      %v243 = vunpack.c.l.bf16 %v211
      %s244 = smul.u32 %s42, 7
      %s245 = sld [smem:[#allocation4 + %s244]]
      %s246 = sld [smem:[#allocation5 + %s244]]
      %p247 = scmp.le.s32.totalorder %s245, 0
      %p248 = scmp.gt.s32.totalorder %s246, 0
      %p249 = pnand %p247, %p248
      %p250 = pneg %p249
      %s251 = scalar_select %p250, 1, 0
      %v252 = vstv %s251
      %vm253 = vcmp.eq.s32.totalorder %v252, 1
      %v254 = vsel %vm253, %v212, -inf
      %v255 = vsel %vm253, %v213, -inf
      %p256 = scmp.le.s32.totalorder %s245, 1
      %p257 = scmp.gt.s32.totalorder %s246, 1
      %p258 = pnand %p256, %p257
      %p259 = pneg %p258
      %s260 = scalar_select %p259, 1, 0
      %v261 = vstv %s260
      %vm262 = vcmp.eq.s32.totalorder %v261, 1
      %v263 = vsel %vm262, %v214, -inf
      %v264 = vsel %vm262, %v215, -inf
      %v265 = vmax.f32 %v254, %v263
      %v266 = vmax.f32 %v255, %v264
      %p267 = scmp.le.s32.totalorder %s245, 2
      %p268 = scmp.gt.s32.totalorder %s246, 2
      %p269 = pnand %p267, %p268
      %p270 = pneg %p269
      %s271 = scalar_select %p270, 1, 0
      %v272 = vstv %s271
      %vm273 = vcmp.eq.s32.totalorder %v272, 1
      %v274 = vsel %vm273, %v216, -inf
      %v275 = vsel %vm273, %v217, -inf
      %v276 = vmax.f32 %v265, %v274
      %v277 = vmax.f32 %v266, %v275
      %p278 = scmp.le.s32.totalorder %s245, 3
      %p279 = scmp.gt.s32.totalorder %s246, 3
      %p280 = pnand %p278, %p279
      %p281 = pneg %p280
      %s282 = scalar_select %p281, 1, 0
      %v283 = vstv %s282
      %vm284 = vcmp.eq.s32.totalorder %v283, 1
      %v285 = vsel %vm284, %v218, -inf
      %v286 = vsel %vm284, %v219, -inf
      %v287 = vmax.f32 %v276, %v285
      %v288 = vmax.f32 %v277, %v286
      %p289 = scmp.le.s32.totalorder %s245, 4
      %p290 = scmp.gt.s32.totalorder %s246, 4
      %p291 = pnand %p289, %p290
      %p292 = pneg %p291
      %s293 = scalar_select %p292, 1, 0
      %v294 = vstv %s293
      %vm295 = vcmp.eq.s32.totalorder %v294, 1
      %v296 = vsel %vm295, %v220, -inf
      %v297 = vsel %vm295, %v221, -inf
      %v298 = vmax.f32 %v287, %v296
      %v299 = vmax.f32 %v288, %v297
      %p300 = scmp.le.s32.totalorder %s245, 5
      %p301 = scmp.gt.s32.totalorder %s246, 5
      %p302 = pnand %p300, %p301
      %p303 = pneg %p302
      %s304 = scalar_select %p303, 1, 0
      %v305 = vstv %s304
      %vm306 = vcmp.eq.s32.totalorder %v305, 1
      %v307 = vsel %vm306, %v222, -inf
      %v308 = vsel %vm306, %v223, -inf
      %v309 = vmax.f32 %v298, %v307
      %v310 = vmax.f32 %v299, %v308
      %p311 = scmp.le.s32.totalorder %s245, 6
      %p312 = scmp.gt.s32.totalorder %s246, 6
      %p313 = pnand %p311, %p312
      %p314 = pneg %p313
      %s315 = scalar_select %p314, 1, 0
      %v316 = vstv %s315
      %vm317 = vcmp.eq.s32.totalorder %v316, 1
      %v318 = vsel %vm317, %v224, -inf
      %v319 = vsel %vm317, %v225, -inf
      %v320 = vmax.f32 %v309, %v318
      %v321 = vmax.f32 %v310, %v319
      %p322 = scmp.le.s32.totalorder %s245, 7
      %p323 = scmp.gt.s32.totalorder %s246, 7
      %p324 = pnand %p322, %p323
      %p325 = pneg %p324
      %s326 = scalar_select %p325, 1, 0
      %v327 = vstv %s326
      %vm328 = vcmp.eq.s32.totalorder %v327, 1
      %v329 = vsel %vm328, %v226, -inf
      %v330 = vsel %vm328, %v227, -inf
      %v331 = vmax.f32 %v320, %v329
      %v332 = vmax.f32 %v321, %v330
      %p333 = scmp.le.s32.totalorder %s245, 8
      %p334 = scmp.gt.s32.totalorder %s246, 8
      %p335 = pnand %p333, %p334
      %p336 = pneg %p335
      %s337 = scalar_select %p336, 1, 0
      %v338 = vstv %s337
      %vm339 = vcmp.eq.s32.totalorder %v338, 1
      %v340 = vsel %vm339, %v228, -inf
      %v341 = vsel %vm339, %v229, -inf
      %v342 = vmax.f32 %v331, %v340
      %v343 = vmax.f32 %v332, %v341
      %p344 = scmp.le.s32.totalorder %s245, 9
      %p345 = scmp.gt.s32.totalorder %s246, 9
      %p346 = pnand %p344, %p345
      %p347 = pneg %p346
      %s348 = scalar_select %p347, 1, 0
      %v349 = vstv %s348
      %vm350 = vcmp.eq.s32.totalorder %v349, 1
      %v351 = vsel %vm350, %v230, -inf
      %v352 = vsel %vm350, %v231, -inf
      %v353 = vmax.f32 %v342, %v351
      %v354 = vmax.f32 %v343, %v352
      %p355 = scmp.le.s32.totalorder %s245, 10
      %p356 = scmp.gt.s32.totalorder %s246, 10
      %p357 = pnand %p355, %p356
      %p358 = pneg %p357
      %s359 = scalar_select %p358, 1, 0
      %v360 = vstv %s359
      %vm361 = vcmp.eq.s32.totalorder %v360, 1
      %v362 = vsel %vm361, %v232, -inf
      %v363 = vsel %vm361, %v233, -inf
      %v364 = vmax.f32 %v353, %v362
      %v365 = vmax.f32 %v354, %v363
      %p366 = scmp.le.s32.totalorder %s245, 11
      %p367 = scmp.gt.s32.totalorder %s246, 11
      %p368 = pnand %p366, %p367
      %p369 = pneg %p368
      %s370 = scalar_select %p369, 1, 0
      %v371 = vstv %s370
      %vm372 = vcmp.eq.s32.totalorder %v371, 1
      %v373 = vsel %vm372, %v234, -inf
      %v374 = vsel %vm372, %v235, -inf
      %v375 = vmax.f32 %v364, %v373
      %v376 = vmax.f32 %v365, %v374
      %p377 = scmp.le.s32.totalorder %s245, 12
      %p378 = scmp.gt.s32.totalorder %s246, 12
      %p379 = pnand %p377, %p378
      %p380 = pneg %p379
      %s381 = scalar_select %p380, 1, 0
      %v382 = vstv %s381
      %vm383 = vcmp.eq.s32.totalorder %v382, 1
      %v384 = vsel %vm383, %v236, -inf
      %v385 = vsel %vm383, %v237, -inf
      %v386 = vmax.f32 %v375, %v384
      %v387 = vmax.f32 %v376, %v385
      %p388 = scmp.le.s32.totalorder %s245, 13
      %p389 = scmp.gt.s32.totalorder %s246, 13
      %p390 = pnand %p388, %p389
      %p391 = pneg %p390
      %s392 = scalar_select %p391, 1, 0
      %v393 = vstv %s392
      %vm394 = vcmp.eq.s32.totalorder %v393, 1
      %v395 = vsel %vm394, %v238, -inf
      %v396 = vsel %vm394, %v239, -inf
      %v397 = vmax.f32 %v386, %v395
      %v398 = vmax.f32 %v387, %v396
      %p399 = scmp.le.s32.totalorder %s245, 14
      %p400 = scmp.gt.s32.totalorder %s246, 14
      %p401 = pnand %p399, %p400
      %p402 = pneg %p401
      %s403 = scalar_select %p402, 1, 0
      %v404 = vstv %s403
      %vm405 = vcmp.eq.s32.totalorder %v404, 1
      %v406 = vsel %vm405, %v240, -inf
      %v407 = vsel %vm405, %v241, -inf
      %v408 = vmax.f32 %v397, %v406
      %v409 = vmax.f32 %v398, %v407
      %p410 = scmp.le.s32.totalorder %s245, 15
      %p411 = scmp.gt.s32.totalorder %s246, 15
      %p412 = pnand %p410, %p411
      %p413 = pneg %p412
      %s414 = scalar_select %p413, 1, 0
      %v415 = vstv %s414
      %vm416 = vcmp.eq.s32.totalorder %v415, 1
      %v417 = vsel %vm416, %v242, -inf
      %v418 = vsel %vm416, %v243, -inf
      %v419 = vmax.f32 %v408, %v417
      %v420 = vmax.f32 %v409, %v418
      %s421 = sadd.s32 %s244, 1
      %s422 = sld [smem:[#allocation4 + %s421]]
      %s423 = sld [smem:[#allocation5 + %s421]]
      %p424 = scmp.le.s32.totalorder %s422, 0
      %p425 = scmp.gt.s32.totalorder %s423, 0
      %p426 = pnand %p424, %p425
      %p427 = pneg %p426
      %s428 = scalar_select %p427, 1, 0
      %v429 = vstv %s428
      %vm430 = vcmp.eq.s32.totalorder %v429, 1
      %v431 = vsel %vm430, %v212, -inf
      %v432 = vsel %vm430, %v213, -inf
      %p433 = scmp.le.s32.totalorder %s422, 1
      %p434 = scmp.gt.s32.totalorder %s423, 1
      %p435 = pnand %p433, %p434
      %p436 = pneg %p435
      %s437 = scalar_select %p436, 1, 0
      %v438 = vstv %s437
      %vm439 = vcmp.eq.s32.totalorder %v438, 1
      %v440 = vsel %vm439, %v214, -inf
      %v441 = vsel %vm439, %v215, -inf
      %v442 = vmax.f32 %v431, %v440
      %v443 = vmax.f32 %v432, %v441
      %p444 = scmp.le.s32.totalorder %s422, 2
      %p445 = scmp.gt.s32.totalorder %s423, 2
      %p446 = pnand %p444, %p445
      %p447 = pneg %p446
      %s448 = scalar_select %p447, 1, 0
      %v449 = vstv %s448
      %vm450 = vcmp.eq.s32.totalorder %v449, 1
      %v451 = vsel %vm450, %v216, -inf
      %v452 = vsel %vm450, %v217, -inf
      %v453 = vmax.f32 %v442, %v451
      %v454 = vmax.f32 %v443, %v452
      %p455 = scmp.le.s32.totalorder %s422, 3
      %p456 = scmp.gt.s32.totalorder %s423, 3
      %p457 = pnand %p455, %p456
      %p458 = pneg %p457
      %s459 = scalar_select %p458, 1, 0
      %v460 = vstv %s459
      %vm461 = vcmp.eq.s32.totalorder %v460, 1
      %v462 = vsel %vm461, %v218, -inf
      %v463 = vsel %vm461, %v219, -inf
      %v464 = vmax.f32 %v453, %v462
      %v465 = vmax.f32 %v454, %v463
      %p466 = scmp.le.s32.totalorder %s422, 4
      %p467 = scmp.gt.s32.totalorder %s423, 4
      %p468 = pnand %p466, %p467
      %p469 = pneg %p468
      %s470 = scalar_select %p469, 1, 0
      %v471 = vstv %s470
      %vm472 = vcmp.eq.s32.totalorder %v471, 1
      %v473 = vsel %vm472, %v220, -inf
      %v474 = vsel %vm472, %v221, -inf
      %v475 = vmax.f32 %v464, %v473
      %v476 = vmax.f32 %v465, %v474
      %p477 = scmp.le.s32.totalorder %s422, 5
      %p478 = scmp.gt.s32.totalorder %s423, 5
      %p479 = pnand %p477, %p478
      %p480 = pneg %p479
      %s481 = scalar_select %p480, 1, 0
      %v482 = vstv %s481
      %vm483 = vcmp.eq.s32.totalorder %v482, 1
      %v484 = vsel %vm483, %v222, -inf
      %v485 = vsel %vm483, %v223, -inf
      %v486 = vmax.f32 %v475, %v484
      %v487 = vmax.f32 %v476, %v485
      %p488 = scmp.le.s32.totalorder %s422, 6
      %p489 = scmp.gt.s32.totalorder %s423, 6
      %p490 = pnand %p488, %p489
      %p491 = pneg %p490
      %s492 = scalar_select %p491, 1, 0
      %v493 = vstv %s492
      %vm494 = vcmp.eq.s32.totalorder %v493, 1
      %v495 = vsel %vm494, %v224, -inf
      %v496 = vsel %vm494, %v225, -inf
      %v497 = vmax.f32 %v486, %v495
      %v498 = vmax.f32 %v487, %v496
      %p499 = scmp.le.s32.totalorder %s422, 7
      %p500 = scmp.gt.s32.totalorder %s423, 7
      %p501 = pnand %p499, %p500
      %p502 = pneg %p501
      %s503 = scalar_select %p502, 1, 0
      %v504 = vstv %s503
      %vm505 = vcmp.eq.s32.totalorder %v504, 1
      %v506 = vsel %vm505, %v226, -inf
      %v507 = vsel %vm505, %v227, -inf
      %v508 = vmax.f32 %v497, %v506
      %v509 = vmax.f32 %v498, %v507
      %p510 = scmp.le.s32.totalorder %s422, 8
      %p511 = scmp.gt.s32.totalorder %s423, 8
      %p512 = pnand %p510, %p511
      %p513 = pneg %p512
      %s514 = scalar_select %p513, 1, 0
      %v515 = vstv %s514
      %vm516 = vcmp.eq.s32.totalorder %v515, 1
      %v517 = vsel %vm516, %v228, -inf
      %v518 = vsel %vm516, %v229, -inf
      %v519 = vmax.f32 %v508, %v517
      %v520 = vmax.f32 %v509, %v518
      %p521 = scmp.le.s32.totalorder %s422, 9
      %p522 = scmp.gt.s32.totalorder %s423, 9
      %p523 = pnand %p521, %p522
      %p524 = pneg %p523
      %s525 = scalar_select %p524, 1, 0
      %v526 = vstv %s525
      %vm527 = vcmp.eq.s32.totalorder %v526, 1
      %v528 = vsel %vm527, %v230, -inf
      %v529 = vsel %vm527, %v231, -inf
      %v530 = vmax.f32 %v519, %v528
      %v531 = vmax.f32 %v520, %v529
      %p532 = scmp.le.s32.totalorder %s422, 10
      %p533 = scmp.gt.s32.totalorder %s423, 10
      %p534 = pnand %p532, %p533
      %p535 = pneg %p534
      %s536 = scalar_select %p535, 1, 0
      %v537 = vstv %s536
      %vm538 = vcmp.eq.s32.totalorder %v537, 1
      %v539 = vsel %vm538, %v232, -inf
      %v540 = vsel %vm538, %v233, -inf
      %v541 = vmax.f32 %v530, %v539
      %v542 = vmax.f32 %v531, %v540
      %p543 = scmp.le.s32.totalorder %s422, 11
      %p544 = scmp.gt.s32.totalorder %s423, 11
      %p545 = pnand %p543, %p544
      %p546 = pneg %p545
      %s547 = scalar_select %p546, 1, 0
      %v548 = vstv %s547
      %vm549 = vcmp.eq.s32.totalorder %v548, 1
      %v550 = vsel %vm549, %v234, -inf
      %v551 = vsel %vm549, %v235, -inf
      %v552 = vmax.f32 %v541, %v550
      %v553 = vmax.f32 %v542, %v551
      %p554 = scmp.le.s32.totalorder %s422, 12
      %p555 = scmp.gt.s32.totalorder %s423, 12
      %p556 = pnand %p554, %p555
      %p557 = pneg %p556
      %s558 = scalar_select %p557, 1, 0
      %v559 = vstv %s558
      %vm560 = vcmp.eq.s32.totalorder %v559, 1
      %v561 = vsel %vm560, %v236, -inf
      %v562 = vsel %vm560, %v237, -inf
      %v563 = vmax.f32 %v552, %v561
      %v564 = vmax.f32 %v553, %v562
      %p565 = scmp.le.s32.totalorder %s422, 13
      %p566 = scmp.gt.s32.totalorder %s423, 13
      %p567 = pnand %p565, %p566
      %p568 = pneg %p567
      %s569 = scalar_select %p568, 1, 0
      %v570 = vstv %s569
      %vm571 = vcmp.eq.s32.totalorder %v570, 1
      %v572 = vsel %vm571, %v238, -inf
      %v573 = vsel %vm571, %v239, -inf
      %v574 = vmax.f32 %v563, %v572
      %v575 = vmax.f32 %v564, %v573
      %p576 = scmp.le.s32.totalorder %s422, 14
      %p577 = scmp.gt.s32.totalorder %s423, 14
      %p578 = pnand %p576, %p577
      %p579 = pneg %p578
      %s580 = scalar_select %p579, 1, 0
      %v581 = vstv %s580
      %vm582 = vcmp.eq.s32.totalorder %v581, 1
      %v583 = vsel %vm582, %v240, -inf
      %v584 = vsel %vm582, %v241, -inf
      %v585 = vmax.f32 %v574, %v583
      %v586 = vmax.f32 %v575, %v584
      %p587 = scmp.le.s32.totalorder %s422, 15
      %p588 = scmp.gt.s32.totalorder %s423, 15
      %p589 = pnand %p587, %p588
      %p590 = pneg %p589
      %s591 = scalar_select %p590, 1, 0
      %v592 = vstv %s591
      %vm593 = vcmp.eq.s32.totalorder %v592, 1
      %v594 = vsel %vm593, %v242, -inf
      %v595 = vsel %vm593, %v243, -inf
      %v596 = vmax.f32 %v585, %v594
      %v597 = vmax.f32 %v586, %v595
      %s598 = sadd.s32 %s244, 2
      %s599 = sld [smem:[#allocation4 + %s598]]
      %s600 = sld [smem:[#allocation5 + %s598]]
      %p601 = scmp.le.s32.totalorder %s599, 0
      %p602 = scmp.gt.s32.totalorder %s600, 0
      %p603 = pnand %p601, %p602
      %p604 = pneg %p603
      %s605 = scalar_select %p604, 1, 0
      %v606 = vstv %s605
      %vm607 = vcmp.eq.s32.totalorder %v606, 1
      %v608 = vsel %vm607, %v212, -inf
      %v609 = vsel %vm607, %v213, -inf
      %p610 = scmp.le.s32.totalorder %s599, 1
      %p611 = scmp.gt.s32.totalorder %s600, 1
      %p612 = pnand %p610, %p611
      %p613 = pneg %p612
      %s614 = scalar_select %p613, 1, 0
      %v615 = vstv %s614
      %vm616 = vcmp.eq.s32.totalorder %v615, 1
      %v617 = vsel %vm616, %v214, -inf
      %v618 = vsel %vm616, %v215, -inf
      %v619 = vmax.f32 %v608, %v617
      %v620 = vmax.f32 %v609, %v618
      %p621 = scmp.le.s32.totalorder %s599, 2
      %p622 = scmp.gt.s32.totalorder %s600, 2
      %p623 = pnand %p621, %p622
      %p624 = pneg %p623
      %s625 = scalar_select %p624, 1, 0
      %v626 = vstv %s625
      %vm627 = vcmp.eq.s32.totalorder %v626, 1
      %v628 = vsel %vm627, %v216, -inf
      %v629 = vsel %vm627, %v217, -inf
      %v630 = vmax.f32 %v619, %v628
      %v631 = vmax.f32 %v620, %v629
      %p632 = scmp.le.s32.totalorder %s599, 3
      %p633 = scmp.gt.s32.totalorder %s600, 3
      %p634 = pnand %p632, %p633
      %p635 = pneg %p634
      %s636 = scalar_select %p635, 1, 0
      %v637 = vstv %s636
      %vm638 = vcmp.eq.s32.totalorder %v637, 1
      %v639 = vsel %vm638, %v218, -inf
      %v640 = vsel %vm638, %v219, -inf
      %v641 = vmax.f32 %v630, %v639
      %v642 = vmax.f32 %v631, %v640
      %p643 = scmp.le.s32.totalorder %s599, 4
      %p644 = scmp.gt.s32.totalorder %s600, 4
      %p645 = pnand %p643, %p644
      %p646 = pneg %p645
      %s647 = scalar_select %p646, 1, 0
      %v648 = vstv %s647
      %vm649 = vcmp.eq.s32.totalorder %v648, 1
      %v650 = vsel %vm649, %v220, -inf
      %v651 = vsel %vm649, %v221, -inf
      %v652 = vmax.f32 %v641, %v650
      %v653 = vmax.f32 %v642, %v651
      %p654 = scmp.le.s32.totalorder %s599, 5
      %p655 = scmp.gt.s32.totalorder %s600, 5
      %p656 = pnand %p654, %p655
      %p657 = pneg %p656
      %s658 = scalar_select %p657, 1, 0
      %v659 = vstv %s658
      %vm660 = vcmp.eq.s32.totalorder %v659, 1
      %v661 = vsel %vm660, %v222, -inf
      %v662 = vsel %vm660, %v223, -inf
      %v663 = vmax.f32 %v652, %v661
      %v664 = vmax.f32 %v653, %v662
      %p665 = scmp.le.s32.totalorder %s599, 6
      %p666 = scmp.gt.s32.totalorder %s600, 6
      %p667 = pnand %p665, %p666
      %p668 = pneg %p667
      %s669 = scalar_select %p668, 1, 0
      %v670 = vstv %s669
      %vm671 = vcmp.eq.s32.totalorder %v670, 1
      %v672 = vsel %vm671, %v224, -inf
      %v673 = vsel %vm671, %v225, -inf
      %v674 = vmax.f32 %v663, %v672
      %v675 = vmax.f32 %v664, %v673
      %p676 = scmp.le.s32.totalorder %s599, 7
      %p677 = scmp.gt.s32.totalorder %s600, 7
      %p678 = pnand %p676, %p677
      %p679 = pneg %p678
      %s680 = scalar_select %p679, 1, 0
      %v681 = vstv %s680
      %vm682 = vcmp.eq.s32.totalorder %v681, 1
      %v683 = vsel %vm682, %v226, -inf
      %v684 = vsel %vm682, %v227, -inf
      %v685 = vmax.f32 %v674, %v683
      %v686 = vmax.f32 %v675, %v684
      %p687 = scmp.le.s32.totalorder %s599, 8
      %p688 = scmp.gt.s32.totalorder %s600, 8
      %p689 = pnand %p687, %p688
      %p690 = pneg %p689
      %s691 = scalar_select %p690, 1, 0
      %v692 = vstv %s691
      %vm693 = vcmp.eq.s32.totalorder %v692, 1
      %v694 = vsel %vm693, %v228, -inf
      %v695 = vsel %vm693, %v229, -inf
      %v696 = vmax.f32 %v685, %v694
      %v697 = vmax.f32 %v686, %v695
      %p698 = scmp.le.s32.totalorder %s599, 9
      %p699 = scmp.gt.s32.totalorder %s600, 9
      %p700 = pnand %p698, %p699
      %p701 = pneg %p700
      %s702 = scalar_select %p701, 1, 0
      %v703 = vstv %s702
      %vm704 = vcmp.eq.s32.totalorder %v703, 1
      %v705 = vsel %vm704, %v230, -inf
      %v706 = vsel %vm704, %v231, -inf
      %v707 = vmax.f32 %v696, %v705
      %v708 = vmax.f32 %v697, %v706
      %p709 = scmp.le.s32.totalorder %s599, 10
      %p710 = scmp.gt.s32.totalorder %s600, 10
      %p711 = pnand %p709, %p710
      %p712 = pneg %p711
      %s713 = scalar_select %p712, 1, 0
      %v714 = vstv %s713
      %vm715 = vcmp.eq.s32.totalorder %v714, 1
      %v716 = vsel %vm715, %v232, -inf
      %v717 = vsel %vm715, %v233, -inf
      %v718 = vmax.f32 %v707, %v716
      %v719 = vmax.f32 %v708, %v717
      %p720 = scmp.le.s32.totalorder %s599, 11
      %p721 = scmp.gt.s32.totalorder %s600, 11
      %p722 = pnand %p720, %p721
      %p723 = pneg %p722
      %s724 = scalar_select %p723, 1, 0
      %v725 = vstv %s724
      %vm726 = vcmp.eq.s32.totalorder %v725, 1
      %v727 = vsel %vm726, %v234, -inf
      %v728 = vsel %vm726, %v235, -inf
      %v729 = vmax.f32 %v718, %v727
      %v730 = vmax.f32 %v719, %v728
      %p731 = scmp.le.s32.totalorder %s599, 12
      %p732 = scmp.gt.s32.totalorder %s600, 12
      %p733 = pnand %p731, %p732
      %p734 = pneg %p733
      %s735 = scalar_select %p734, 1, 0
      %v736 = vstv %s735
      %vm737 = vcmp.eq.s32.totalorder %v736, 1
      %v738 = vsel %vm737, %v236, -inf
      %v739 = vsel %vm737, %v237, -inf
      %v740 = vmax.f32 %v729, %v738
      %v741 = vmax.f32 %v730, %v739
      %p742 = scmp.le.s32.totalorder %s599, 13
      %p743 = scmp.gt.s32.totalorder %s600, 13
      %p744 = pnand %p742, %p743
      %p745 = pneg %p744
      %s746 = scalar_select %p745, 1, 0
      %v747 = vstv %s746
      %vm748 = vcmp.eq.s32.totalorder %v747, 1
      %v749 = vsel %vm748, %v238, -inf
      %v750 = vsel %vm748, %v239, -inf
      %v751 = vmax.f32 %v740, %v749
      %v752 = vmax.f32 %v741, %v750
      %p753 = scmp.le.s32.totalorder %s599, 14
      %p754 = scmp.gt.s32.totalorder %s600, 14
      %p755 = pnand %p753, %p754
      %p756 = pneg %p755
      %s757 = scalar_select %p756, 1, 0
      %v758 = vstv %s757
      %vm759 = vcmp.eq.s32.totalorder %v758, 1
      %v760 = vsel %vm759, %v240, -inf
      %v761 = vsel %vm759, %v241, -inf
      %v762 = vmax.f32 %v751, %v760
      %v763 = vmax.f32 %v752, %v761
      %p764 = scmp.le.s32.totalorder %s599, 15
      %p765 = scmp.gt.s32.totalorder %s600, 15
      %p766 = pnand %p764, %p765
      %p767 = pneg %p766
      %s768 = scalar_select %p767, 1, 0
      %v769 = vstv %s768
      %vm770 = vcmp.eq.s32.totalorder %v769, 1
      %v771 = vsel %vm770, %v242, -inf
      %v772 = vsel %vm770, %v243, -inf
      %v773 = vmax.f32 %v762, %v771
      %v774 = vmax.f32 %v763, %v772
      %s775 = sadd.s32 %s244, 3
      %s776 = sld [smem:[#allocation4 + %s775]]
      %s777 = sld [smem:[#allocation5 + %s775]]
      %p778 = scmp.le.s32.totalorder %s776, 0
      %p779 = scmp.gt.s32.totalorder %s777, 0
      %p780 = pnand %p778, %p779
      %p781 = pneg %p780
      %s782 = scalar_select %p781, 1, 0
      %v783 = vstv %s782
      %vm784 = vcmp.eq.s32.totalorder %v783, 1
      %v785 = vsel %vm784, %v212, -inf
      %v786 = vsel %vm784, %v213, -inf
      %p787 = scmp.le.s32.totalorder %s776, 1
      %p788 = scmp.gt.s32.totalorder %s777, 1
      %p789 = pnand %p787, %p788
      %p790 = pneg %p789
      %s791 = scalar_select %p790, 1, 0
      %v792 = vstv %s791
      %vm793 = vcmp.eq.s32.totalorder %v792, 1
      %v794 = vsel %vm793, %v214, -inf
      %v795 = vsel %vm793, %v215, -inf
      %v796 = vmax.f32 %v785, %v794
      %v797 = vmax.f32 %v786, %v795
      %p798 = scmp.le.s32.totalorder %s776, 2
      %p799 = scmp.gt.s32.totalorder %s777, 2
      %p800 = pnand %p798, %p799
      %p801 = pneg %p800
      %s802 = scalar_select %p801, 1, 0
      %v803 = vstv %s802
      %vm804 = vcmp.eq.s32.totalorder %v803, 1
      %v805 = vsel %vm804, %v216, -inf
      %v806 = vsel %vm804, %v217, -inf
      %v807 = vmax.f32 %v796, %v805
      %v808 = vmax.f32 %v797, %v806
      %p809 = scmp.le.s32.totalorder %s776, 3
      %p810 = scmp.gt.s32.totalorder %s777, 3
      %p811 = pnand %p809, %p810
      %p812 = pneg %p811
      %s813 = scalar_select %p812, 1, 0
      %v814 = vstv %s813
      %vm815 = vcmp.eq.s32.totalorder %v814, 1
      %v816 = vsel %vm815, %v218, -inf
      %v817 = vsel %vm815, %v219, -inf
      %v818 = vmax.f32 %v807, %v816
      %v819 = vmax.f32 %v808, %v817
      %p820 = scmp.le.s32.totalorder %s776, 4
      %p821 = scmp.gt.s32.totalorder %s777, 4
      %p822 = pnand %p820, %p821
      %p823 = pneg %p822
      %s824 = scalar_select %p823, 1, 0
      %v825 = vstv %s824
      %vm826 = vcmp.eq.s32.totalorder %v825, 1
      %v827 = vsel %vm826, %v220, -inf
      %v828 = vsel %vm826, %v221, -inf
      %v829 = vmax.f32 %v818, %v827
      %v830 = vmax.f32 %v819, %v828
      %p831 = scmp.le.s32.totalorder %s776, 5
      %p832 = scmp.gt.s32.totalorder %s777, 5
      %p833 = pnand %p831, %p832
      %p834 = pneg %p833
      %s835 = scalar_select %p834, 1, 0
      %v836 = vstv %s835
      %vm837 = vcmp.eq.s32.totalorder %v836, 1
      %v838 = vsel %vm837, %v222, -inf
      %v839 = vsel %vm837, %v223, -inf
      %v840 = vmax.f32 %v829, %v838
      %v841 = vmax.f32 %v830, %v839
      %p842 = scmp.le.s32.totalorder %s776, 6
      %p843 = scmp.gt.s32.totalorder %s777, 6
      %p844 = pnand %p842, %p843
      %p845 = pneg %p844
      %s846 = scalar_select %p845, 1, 0
      %v847 = vstv %s846
      %vm848 = vcmp.eq.s32.totalorder %v847, 1
      %v849 = vsel %vm848, %v224, -inf
      %v850 = vsel %vm848, %v225, -inf
      %v851 = vmax.f32 %v840, %v849
      %v852 = vmax.f32 %v841, %v850
      %p853 = scmp.le.s32.totalorder %s776, 7
      %p854 = scmp.gt.s32.totalorder %s777, 7
      %p855 = pnand %p853, %p854
      %p856 = pneg %p855
      %s857 = scalar_select %p856, 1, 0
      %v858 = vstv %s857
      %vm859 = vcmp.eq.s32.totalorder %v858, 1
      %v860 = vsel %vm859, %v226, -inf
      %v861 = vsel %vm859, %v227, -inf
      %v862 = vmax.f32 %v851, %v860
      %v863 = vmax.f32 %v852, %v861
      %p864 = scmp.le.s32.totalorder %s776, 8
      %p865 = scmp.gt.s32.totalorder %s777, 8
      %p866 = pnand %p864, %p865
      %p867 = pneg %p866
      %s868 = scalar_select %p867, 1, 0
      %v869 = vstv %s868
      %vm870 = vcmp.eq.s32.totalorder %v869, 1
      %v871 = vsel %vm870, %v228, -inf
      %v872 = vsel %vm870, %v229, -inf
      %v873 = vmax.f32 %v862, %v871
      %v874 = vmax.f32 %v863, %v872
      %p875 = scmp.le.s32.totalorder %s776, 9
      %p876 = scmp.gt.s32.totalorder %s777, 9
      %p877 = pnand %p875, %p876
      %p878 = pneg %p877
      %s879 = scalar_select %p878, 1, 0
      %v880 = vstv %s879
      %vm881 = vcmp.eq.s32.totalorder %v880, 1
      %v882 = vsel %vm881, %v230, -inf
      %v883 = vsel %vm881, %v231, -inf
      %v884 = vmax.f32 %v873, %v882
      %v885 = vmax.f32 %v874, %v883
      %p886 = scmp.le.s32.totalorder %s776, 10
      %p887 = scmp.gt.s32.totalorder %s777, 10
      %p888 = pnand %p886, %p887
      %p889 = pneg %p888
      %s890 = scalar_select %p889, 1, 0
      %v891 = vstv %s890
      %vm892 = vcmp.eq.s32.totalorder %v891, 1
      %v893 = vsel %vm892, %v232, -inf
      %v894 = vsel %vm892, %v233, -inf
      %v895 = vmax.f32 %v884, %v893
      %v896 = vmax.f32 %v885, %v894
      %p897 = scmp.le.s32.totalorder %s776, 11
      %p898 = scmp.gt.s32.totalorder %s777, 11
      %p899 = pnand %p897, %p898
      %p900 = pneg %p899
      %s901 = scalar_select %p900, 1, 0
      %v902 = vstv %s901
      %vm903 = vcmp.eq.s32.totalorder %v902, 1
      %v904 = vsel %vm903, %v234, -inf
      %v905 = vsel %vm903, %v235, -inf
      %v906 = vmax.f32 %v895, %v904
      %v907 = vmax.f32 %v896, %v905
      %p908 = scmp.le.s32.totalorder %s776, 12
      %p909 = scmp.gt.s32.totalorder %s777, 12
      %p910 = pnand %p908, %p909
      %p911 = pneg %p910
      %s912 = scalar_select %p911, 1, 0
      %v913 = vstv %s912
      %vm914 = vcmp.eq.s32.totalorder %v913, 1
      %v915 = vsel %vm914, %v236, -inf
      %v916 = vsel %vm914, %v237, -inf
      %v917 = vmax.f32 %v906, %v915
      %v918 = vmax.f32 %v907, %v916
      %p919 = scmp.le.s32.totalorder %s776, 13
      %p920 = scmp.gt.s32.totalorder %s777, 13
      %p921 = pnand %p919, %p920
      %p922 = pneg %p921
      %s923 = scalar_select %p922, 1, 0
      %v924 = vstv %s923
      %vm925 = vcmp.eq.s32.totalorder %v924, 1
      %v926 = vsel %vm925, %v238, -inf
      %v927 = vsel %vm925, %v239, -inf
      %v928 = vmax.f32 %v917, %v926
      %v929 = vmax.f32 %v918, %v927
      %p930 = scmp.le.s32.totalorder %s776, 14
      %p931 = scmp.gt.s32.totalorder %s777, 14
      %p932 = pnand %p930, %p931
      %p933 = pneg %p932
      %s934 = scalar_select %p933, 1, 0
      %v935 = vstv %s934
      %vm936 = vcmp.eq.s32.totalorder %v935, 1
      %v937 = vsel %vm936, %v240, -inf
      %v938 = vsel %vm936, %v241, -inf
      %v939 = vmax.f32 %v928, %v937
      %v940 = vmax.f32 %v929, %v938
      %p941 = scmp.le.s32.totalorder %s776, 15
      %p942 = scmp.gt.s32.totalorder %s777, 15
      %p943 = pnand %p941, %p942
      %p944 = pneg %p943
      %s945 = scalar_select %p944, 1, 0
      %v946 = vstv %s945
      %vm947 = vcmp.eq.s32.totalorder %v946, 1
      %v948 = vsel %vm947, %v242, -inf
      %v949 = vsel %vm947, %v243, -inf
      %v950 = vmax.f32 %v939, %v948
      %v951 = vmax.f32 %v940, %v949
      %s952 = sadd.s32 %s244, 4
      %s953 = sld [smem:[#allocation4 + %s952]]
      %s954 = sld [smem:[#allocation5 + %s952]]
      %p955 = scmp.le.s32.totalorder %s953, 0
      %p956 = scmp.gt.s32.totalorder %s954, 0
      %p957 = pnand %p955, %p956
      %p958 = pneg %p957
      %s959 = scalar_select %p958, 1, 0
      %v960 = vstv %s959
      %vm961 = vcmp.eq.s32.totalorder %v960, 1
      %v962 = vsel %vm961, %v212, -inf
      %v963 = vsel %vm961, %v213, -inf
      %p964 = scmp.le.s32.totalorder %s953, 1
      %p965 = scmp.gt.s32.totalorder %s954, 1
      %p966 = pnand %p964, %p965
      %p967 = pneg %p966
      %s968 = scalar_select %p967, 1, 0
      %v969 = vstv %s968
      %vm970 = vcmp.eq.s32.totalorder %v969, 1
      %v971 = vsel %vm970, %v214, -inf
      %v972 = vsel %vm970, %v215, -inf
      %v973 = vmax.f32 %v962, %v971
      %v974 = vmax.f32 %v963, %v972
      %p975 = scmp.le.s32.totalorder %s953, 2
      %p976 = scmp.gt.s32.totalorder %s954, 2
      %p977 = pnand %p975, %p976
      %p978 = pneg %p977
      %s979 = scalar_select %p978, 1, 0
      %v980 = vstv %s979
      %vm981 = vcmp.eq.s32.totalorder %v980, 1
      %v982 = vsel %vm981, %v216, -inf
      %v983 = vsel %vm981, %v217, -inf
      %v984 = vmax.f32 %v973, %v982
      %v985 = vmax.f32 %v974, %v983
      %p986 = scmp.le.s32.totalorder %s953, 3
      %p987 = scmp.gt.s32.totalorder %s954, 3
      %p988 = pnand %p986, %p987
      %p989 = pneg %p988
      %s990 = scalar_select %p989, 1, 0
      %v991 = vstv %s990
      %vm992 = vcmp.eq.s32.totalorder %v991, 1
      %v993 = vsel %vm992, %v218, -inf
      %v994 = vsel %vm992, %v219, -inf
      %v995 = vmax.f32 %v984, %v993
      %v996 = vmax.f32 %v985, %v994
      %p997 = scmp.le.s32.totalorder %s953, 4
      %p998 = scmp.gt.s32.totalorder %s954, 4
      %p999 = pnand %p997, %p998
      %p1000 = pneg %p999
      %s1001 = scalar_select %p1000, 1, 0
      %v1002 = vstv %s1001
      %vm1003 = vcmp.eq.s32.totalorder %v1002, 1
      %v1004 = vsel %vm1003, %v220, -inf
      %v1005 = vsel %vm1003, %v221, -inf
      %v1006 = vmax.f32 %v995, %v1004
      %v1007 = vmax.f32 %v996, %v1005
      %p1008 = scmp.le.s32.totalorder %s953, 5
      %p1009 = scmp.gt.s32.totalorder %s954, 5
      %p1010 = pnand %p1008, %p1009
      %p1011 = pneg %p1010
      %s1012 = scalar_select %p1011, 1, 0
      %v1013 = vstv %s1012
      %vm1014 = vcmp.eq.s32.totalorder %v1013, 1
      %v1015 = vsel %vm1014, %v222, -inf
      %v1016 = vsel %vm1014, %v223, -inf
      %v1017 = vmax.f32 %v1006, %v1015
      %v1018 = vmax.f32 %v1007, %v1016
      %p1019 = scmp.le.s32.totalorder %s953, 6
      %p1020 = scmp.gt.s32.totalorder %s954, 6
      %p1021 = pnand %p1019, %p1020
      %p1022 = pneg %p1021
      %s1023 = scalar_select %p1022, 1, 0
      %v1024 = vstv %s1023
      %vm1025 = vcmp.eq.s32.totalorder %v1024, 1
      %v1026 = vsel %vm1025, %v224, -inf
      %v1027 = vsel %vm1025, %v225, -inf
      %v1028 = vmax.f32 %v1017, %v1026
      %v1029 = vmax.f32 %v1018, %v1027
      %p1030 = scmp.le.s32.totalorder %s953, 7
      %p1031 = scmp.gt.s32.totalorder %s954, 7
      %p1032 = pnand %p1030, %p1031
      %p1033 = pneg %p1032
      %s1034 = scalar_select %p1033, 1, 0
      %v1035 = vstv %s1034
      %vm1036 = vcmp.eq.s32.totalorder %v1035, 1
      %v1037 = vsel %vm1036, %v226, -inf
      %v1038 = vsel %vm1036, %v227, -inf
      %v1039 = vmax.f32 %v1028, %v1037
      %v1040 = vmax.f32 %v1029, %v1038
      %p1041 = scmp.le.s32.totalorder %s953, 8
      %p1042 = scmp.gt.s32.totalorder %s954, 8
      %p1043 = pnand %p1041, %p1042
      %p1044 = pneg %p1043
      %s1045 = scalar_select %p1044, 1, 0
      %v1046 = vstv %s1045
      %vm1047 = vcmp.eq.s32.totalorder %v1046, 1
      %v1048 = vsel %vm1047, %v228, -inf
      %v1049 = vsel %vm1047, %v229, -inf
      %v1050 = vmax.f32 %v1039, %v1048
      %v1051 = vmax.f32 %v1040, %v1049
      %p1052 = scmp.le.s32.totalorder %s953, 9
      %p1053 = scmp.gt.s32.totalorder %s954, 9
      %p1054 = pnand %p1052, %p1053
      %p1055 = pneg %p1054
      %s1056 = scalar_select %p1055, 1, 0
      %v1057 = vstv %s1056
      %vm1058 = vcmp.eq.s32.totalorder %v1057, 1
      %v1059 = vsel %vm1058, %v230, -inf
      %v1060 = vsel %vm1058, %v231, -inf
      %v1061 = vmax.f32 %v1050, %v1059
      %v1062 = vmax.f32 %v1051, %v1060
      %p1063 = scmp.le.s32.totalorder %s953, 10
      %p1064 = scmp.gt.s32.totalorder %s954, 10
      %p1065 = pnand %p1063, %p1064
      %p1066 = pneg %p1065
      %s1067 = scalar_select %p1066, 1, 0
      %v1068 = vstv %s1067
      %vm1069 = vcmp.eq.s32.totalorder %v1068, 1
      %v1070 = vsel %vm1069, %v232, -inf
      %v1071 = vsel %vm1069, %v233, -inf
      %v1072 = vmax.f32 %v1061, %v1070
      %v1073 = vmax.f32 %v1062, %v1071
      %p1074 = scmp.le.s32.totalorder %s953, 11
      %p1075 = scmp.gt.s32.totalorder %s954, 11
      %p1076 = pnand %p1074, %p1075
      %p1077 = pneg %p1076
      %s1078 = scalar_select %p1077, 1, 0
      %v1079 = vstv %s1078
      %vm1080 = vcmp.eq.s32.totalorder %v1079, 1
      %v1081 = vsel %vm1080, %v234, -inf
      %v1082 = vsel %vm1080, %v235, -inf
      %v1083 = vmax.f32 %v1072, %v1081
      %v1084 = vmax.f32 %v1073, %v1082
      %p1085 = scmp.le.s32.totalorder %s953, 12
      %p1086 = scmp.gt.s32.totalorder %s954, 12
      %p1087 = pnand %p1085, %p1086
      %p1088 = pneg %p1087
      %s1089 = scalar_select %p1088, 1, 0
      %v1090 = vstv %s1089
      %vm1091 = vcmp.eq.s32.totalorder %v1090, 1
      %v1092 = vsel %vm1091, %v236, -inf
      %v1093 = vsel %vm1091, %v237, -inf
      %v1094 = vmax.f32 %v1083, %v1092
      %v1095 = vmax.f32 %v1084, %v1093
      %p1096 = scmp.le.s32.totalorder %s953, 13
      %p1097 = scmp.gt.s32.totalorder %s954, 13
      %p1098 = pnand %p1096, %p1097
      %p1099 = pneg %p1098
      %s1100 = scalar_select %p1099, 1, 0
      %v1101 = vstv %s1100
      %vm1102 = vcmp.eq.s32.totalorder %v1101, 1
      %v1103 = vsel %vm1102, %v238, -inf
      %v1104 = vsel %vm1102, %v239, -inf
      %v1105 = vmax.f32 %v1094, %v1103
      %v1106 = vmax.f32 %v1095, %v1104
      %p1107 = scmp.le.s32.totalorder %s953, 14
      %p1108 = scmp.gt.s32.totalorder %s954, 14
      %p1109 = pnand %p1107, %p1108
      %p1110 = pneg %p1109
      %s1111 = scalar_select %p1110, 1, 0
      %v1112 = vstv %s1111
      %vm1113 = vcmp.eq.s32.totalorder %v1112, 1
      %v1114 = vsel %vm1113, %v240, -inf
      %v1115 = vsel %vm1113, %v241, -inf
      %v1116 = vmax.f32 %v1105, %v1114
      %v1117 = vmax.f32 %v1106, %v1115
      %p1118 = scmp.le.s32.totalorder %s953, 15
      %p1119 = scmp.gt.s32.totalorder %s954, 15
      %p1120 = pnand %p1118, %p1119
      %p1121 = pneg %p1120
      %s1122 = scalar_select %p1121, 1, 0
      %v1123 = vstv %s1122
      %vm1124 = vcmp.eq.s32.totalorder %v1123, 1
      %v1125 = vsel %vm1124, %v242, -inf
      %v1126 = vsel %vm1124, %v243, -inf
      %v1127 = vmax.f32 %v1116, %v1125
      %v1128 = vmax.f32 %v1117, %v1126
      %s1129 = sadd.s32 %s244, 5
      %s1130 = sld [smem:[#allocation4 + %s1129]]
      %s1131 = sld [smem:[#allocation5 + %s1129]]
      %p1132 = scmp.le.s32.totalorder %s1130, 0
      %p1133 = scmp.gt.s32.totalorder %s1131, 0
      %p1134 = pnand %p1132, %p1133
      %p1135 = pneg %p1134
      %s1136 = scalar_select %p1135, 1, 0
      %v1137 = vstv %s1136
      %vm1138 = vcmp.eq.s32.totalorder %v1137, 1
      %v1139 = vsel %vm1138, %v212, -inf
      %v1140 = vsel %vm1138, %v213, -inf
      %p1141 = scmp.le.s32.totalorder %s1130, 1
      %p1142 = scmp.gt.s32.totalorder %s1131, 1
      %p1143 = pnand %p1141, %p1142
      %p1144 = pneg %p1143
      %s1145 = scalar_select %p1144, 1, 0
      %v1146 = vstv %s1145
      %vm1147 = vcmp.eq.s32.totalorder %v1146, 1
      %v1148 = vsel %vm1147, %v214, -inf
      %v1149 = vsel %vm1147, %v215, -inf
      %v1150 = vmax.f32 %v1139, %v1148
      %v1151 = vmax.f32 %v1140, %v1149
      %p1152 = scmp.le.s32.totalorder %s1130, 2
      %p1153 = scmp.gt.s32.totalorder %s1131, 2
      %p1154 = pnand %p1152, %p1153
      %p1155 = pneg %p1154
      %s1156 = scalar_select %p1155, 1, 0
      %v1157 = vstv %s1156
      %vm1158 = vcmp.eq.s32.totalorder %v1157, 1
      %v1159 = vsel %vm1158, %v216, -inf
      %v1160 = vsel %vm1158, %v217, -inf
      %v1161 = vmax.f32 %v1150, %v1159
      %v1162 = vmax.f32 %v1151, %v1160
      %p1163 = scmp.le.s32.totalorder %s1130, 3
      %p1164 = scmp.gt.s32.totalorder %s1131, 3
      %p1165 = pnand %p1163, %p1164
      %p1166 = pneg %p1165
      %s1167 = scalar_select %p1166, 1, 0
      %v1168 = vstv %s1167
      %vm1169 = vcmp.eq.s32.totalorder %v1168, 1
      %v1170 = vsel %vm1169, %v218, -inf
      %v1171 = vsel %vm1169, %v219, -inf
      %v1172 = vmax.f32 %v1161, %v1170
      %v1173 = vmax.f32 %v1162, %v1171
      %p1174 = scmp.le.s32.totalorder %s1130, 4
      %p1175 = scmp.gt.s32.totalorder %s1131, 4
      %p1176 = pnand %p1174, %p1175
      %p1177 = pneg %p1176
      %s1178 = scalar_select %p1177, 1, 0
      %v1179 = vstv %s1178
      %vm1180 = vcmp.eq.s32.totalorder %v1179, 1
      %v1181 = vsel %vm1180, %v220, -inf
      %v1182 = vsel %vm1180, %v221, -inf
      %v1183 = vmax.f32 %v1172, %v1181
      %v1184 = vmax.f32 %v1173, %v1182
      %p1185 = scmp.le.s32.totalorder %s1130, 5
      %p1186 = scmp.gt.s32.totalorder %s1131, 5
      %p1187 = pnand %p1185, %p1186
      %p1188 = pneg %p1187
      %s1189 = scalar_select %p1188, 1, 0
      %v1190 = vstv %s1189
      %vm1191 = vcmp.eq.s32.totalorder %v1190, 1
      %v1192 = vsel %vm1191, %v222, -inf
      %v1193 = vsel %vm1191, %v223, -inf
      %v1194 = vmax.f32 %v1183, %v1192
      %v1195 = vmax.f32 %v1184, %v1193
      %p1196 = scmp.le.s32.totalorder %s1130, 6
      %p1197 = scmp.gt.s32.totalorder %s1131, 6
      %p1198 = pnand %p1196, %p1197
      %p1199 = pneg %p1198
      %s1200 = scalar_select %p1199, 1, 0
      %v1201 = vstv %s1200
      %vm1202 = vcmp.eq.s32.totalorder %v1201, 1
      %v1203 = vsel %vm1202, %v224, -inf
      %v1204 = vsel %vm1202, %v225, -inf
      %v1205 = vmax.f32 %v1194, %v1203
      %v1206 = vmax.f32 %v1195, %v1204
      %p1207 = scmp.le.s32.totalorder %s1130, 7
      %p1208 = scmp.gt.s32.totalorder %s1131, 7
      %p1209 = pnand %p1207, %p1208
      %p1210 = pneg %p1209
      %s1211 = scalar_select %p1210, 1, 0
      %v1212 = vstv %s1211
      %vm1213 = vcmp.eq.s32.totalorder %v1212, 1
      %v1214 = vsel %vm1213, %v226, -inf
      %v1215 = vsel %vm1213, %v227, -inf
      %v1216 = vmax.f32 %v1205, %v1214
      %v1217 = vmax.f32 %v1206, %v1215
      %p1218 = scmp.le.s32.totalorder %s1130, 8
      %p1219 = scmp.gt.s32.totalorder %s1131, 8
      %p1220 = pnand %p1218, %p1219
      %p1221 = pneg %p1220
      %s1222 = scalar_select %p1221, 1, 0
      %v1223 = vstv %s1222
      %vm1224 = vcmp.eq.s32.totalorder %v1223, 1
      %v1225 = vsel %vm1224, %v228, -inf
      %v1226 = vsel %vm1224, %v229, -inf
      %v1227 = vmax.f32 %v1216, %v1225
      %v1228 = vmax.f32 %v1217, %v1226
      %p1229 = scmp.le.s32.totalorder %s1130, 9
      %p1230 = scmp.gt.s32.totalorder %s1131, 9
      %p1231 = pnand %p1229, %p1230
      %p1232 = pneg %p1231
      %s1233 = scalar_select %p1232, 1, 0
      %v1234 = vstv %s1233
      %vm1235 = vcmp.eq.s32.totalorder %v1234, 1
      %v1236 = vsel %vm1235, %v230, -inf
      %v1237 = vsel %vm1235, %v231, -inf
      %v1238 = vmax.f32 %v1227, %v1236
      %v1239 = vmax.f32 %v1228, %v1237
      %p1240 = scmp.le.s32.totalorder %s1130, 10
      %p1241 = scmp.gt.s32.totalorder %s1131, 10
      %p1242 = pnand %p1240, %p1241
      %p1243 = pneg %p1242
      %s1244 = scalar_select %p1243, 1, 0
      %v1245 = vstv %s1244
      %vm1246 = vcmp.eq.s32.totalorder %v1245, 1
      %v1247 = vsel %vm1246, %v232, -inf
      %v1248 = vsel %vm1246, %v233, -inf
      %v1249 = vmax.f32 %v1238, %v1247
      %v1250 = vmax.f32 %v1239, %v1248
      %p1251 = scmp.le.s32.totalorder %s1130, 11
      %p1252 = scmp.gt.s32.totalorder %s1131, 11
      %p1253 = pnand %p1251, %p1252
      %p1254 = pneg %p1253
      %s1255 = scalar_select %p1254, 1, 0
      %v1256 = vstv %s1255
      %vm1257 = vcmp.eq.s32.totalorder %v1256, 1
      %v1258 = vsel %vm1257, %v234, -inf
      %v1259 = vsel %vm1257, %v235, -inf
      %v1260 = vmax.f32 %v1249, %v1258
      %v1261 = vmax.f32 %v1250, %v1259
      %p1262 = scmp.le.s32.totalorder %s1130, 12
      %p1263 = scmp.gt.s32.totalorder %s1131, 12
      %p1264 = pnand %p1262, %p1263
      %p1265 = pneg %p1264
      %s1266 = scalar_select %p1265, 1, 0
      %v1267 = vstv %s1266
      %vm1268 = vcmp.eq.s32.totalorder %v1267, 1
      %v1269 = vsel %vm1268, %v236, -inf
      %v1270 = vsel %vm1268, %v237, -inf
      %v1271 = vmax.f32 %v1260, %v1269
      %v1272 = vmax.f32 %v1261, %v1270
      %p1273 = scmp.le.s32.totalorder %s1130, 13
      %p1274 = scmp.gt.s32.totalorder %s1131, 13
      %p1275 = pnand %p1273, %p1274
      %p1276 = pneg %p1275
      %s1277 = scalar_select %p1276, 1, 0
      %v1278 = vstv %s1277
      %vm1279 = vcmp.eq.s32.totalorder %v1278, 1
      %v1280 = vsel %vm1279, %v238, -inf
      %v1281 = vsel %vm1279, %v239, -inf
      %v1282 = vmax.f32 %v1271, %v1280
      %v1283 = vmax.f32 %v1272, %v1281
      %p1284 = scmp.le.s32.totalorder %s1130, 14
      %p1285 = scmp.gt.s32.totalorder %s1131, 14
      %p1286 = pnand %p1284, %p1285
      %p1287 = pneg %p1286
      %s1288 = scalar_select %p1287, 1, 0
      %v1289 = vstv %s1288
      %vm1290 = vcmp.eq.s32.totalorder %v1289, 1
      %v1291 = vsel %vm1290, %v240, -inf
      %v1292 = vsel %vm1290, %v241, -inf
      %v1293 = vmax.f32 %v1282, %v1291
      %v1294 = vmax.f32 %v1283, %v1292
      %p1295 = scmp.le.s32.totalorder %s1130, 15
      %p1296 = scmp.gt.s32.totalorder %s1131, 15
      %p1297 = pnand %p1295, %p1296
      %p1298 = pneg %p1297
      %s1299 = scalar_select %p1298, 1, 0
      %v1300 = vstv %s1299
      %vm1301 = vcmp.eq.s32.totalorder %v1300, 1
      %v1302 = vsel %vm1301, %v242, -inf
      %v1303 = vsel %vm1301, %v243, -inf
      %v1304 = vmax.f32 %v1293, %v1302
      %v1305 = vmax.f32 %v1294, %v1303
      %s1306 = sadd.s32 %s244, 6
      %s1307 = sld [smem:[#allocation4 + %s1306]]
      %s1308 = sld [smem:[#allocation5 + %s1306]]
      %p1309 = scmp.le.s32.totalorder %s1307, 0
      %p1310 = scmp.gt.s32.totalorder %s1308, 0
      %p1311 = pnand %p1309, %p1310
      %p1312 = pneg %p1311
      %s1313 = scalar_select %p1312, 1, 0
      %v1314 = vstv %s1313
      %vm1315 = vcmp.eq.s32.totalorder %v1314, 1
      %v1316 = vsel %vm1315, %v212, -inf
      %v1317 = vsel %vm1315, %v213, -inf
      %p1318 = scmp.le.s32.totalorder %s1307, 1
      %p1319 = scmp.gt.s32.totalorder %s1308, 1
      %p1320 = pnand %p1318, %p1319
      %p1321 = pneg %p1320
      %s1322 = scalar_select %p1321, 1, 0
      %v1323 = vstv %s1322
      %vm1324 = vcmp.eq.s32.totalorder %v1323, 1
      %v1325 = vsel %vm1324, %v214, -inf
      %v1326 = vsel %vm1324, %v215, -inf
      %v1327 = vmax.f32 %v1316, %v1325
      %v1328 = vmax.f32 %v1317, %v1326
      %p1329 = scmp.le.s32.totalorder %s1307, 2
      %p1330 = scmp.gt.s32.totalorder %s1308, 2
      %p1331 = pnand %p1329, %p1330
      %p1332 = pneg %p1331
      %s1333 = scalar_select %p1332, 1, 0
      %v1334 = vstv %s1333
      %vm1335 = vcmp.eq.s32.totalorder %v1334, 1
      %v1336 = vsel %vm1335, %v216, -inf
      %v1337 = vsel %vm1335, %v217, -inf
      %v1338 = vmax.f32 %v1327, %v1336
      %v1339 = vmax.f32 %v1328, %v1337
      %p1340 = scmp.le.s32.totalorder %s1307, 3
      %p1341 = scmp.gt.s32.totalorder %s1308, 3
      %p1342 = pnand %p1340, %p1341
      %p1343 = pneg %p1342
      %s1344 = scalar_select %p1343, 1, 0
      %v1345 = vstv %s1344
      %vm1346 = vcmp.eq.s32.totalorder %v1345, 1
      %v1347 = vsel %vm1346, %v218, -inf
      %v1348 = vsel %vm1346, %v219, -inf
      %v1349 = vmax.f32 %v1338, %v1347
      %v1350 = vmax.f32 %v1339, %v1348
      %p1351 = scmp.le.s32.totalorder %s1307, 4
      %p1352 = scmp.gt.s32.totalorder %s1308, 4
      %p1353 = pnand %p1351, %p1352
      %p1354 = pneg %p1353
      %s1355 = scalar_select %p1354, 1, 0
      %v1356 = vstv %s1355
      %vm1357 = vcmp.eq.s32.totalorder %v1356, 1
      %v1358 = vsel %vm1357, %v220, -inf
      %v1359 = vsel %vm1357, %v221, -inf
      %v1360 = vmax.f32 %v1349, %v1358
      %v1361 = vmax.f32 %v1350, %v1359
      %p1362 = scmp.le.s32.totalorder %s1307, 5
      %p1363 = scmp.gt.s32.totalorder %s1308, 5
      %p1364 = pnand %p1362, %p1363
      %p1365 = pneg %p1364
      %s1366 = scalar_select %p1365, 1, 0
      %v1367 = vstv %s1366
      %vm1368 = vcmp.eq.s32.totalorder %v1367, 1
      %v1369 = vsel %vm1368, %v222, -inf
      %v1370 = vsel %vm1368, %v223, -inf
      %v1371 = vmax.f32 %v1360, %v1369
      %v1372 = vmax.f32 %v1361, %v1370
      %p1373 = scmp.le.s32.totalorder %s1307, 6
      %p1374 = scmp.gt.s32.totalorder %s1308, 6
      %p1375 = pnand %p1373, %p1374
      %p1376 = pneg %p1375
      %s1377 = scalar_select %p1376, 1, 0
      %v1378 = vstv %s1377
      %vm1379 = vcmp.eq.s32.totalorder %v1378, 1
      %v1380 = vsel %vm1379, %v224, -inf
      %v1381 = vsel %vm1379, %v225, -inf
      %v1382 = vmax.f32 %v1371, %v1380
      %v1383 = vmax.f32 %v1372, %v1381
      %p1384 = scmp.le.s32.totalorder %s1307, 7
      %p1385 = scmp.gt.s32.totalorder %s1308, 7
      %p1386 = pnand %p1384, %p1385
      %p1387 = pneg %p1386
      %s1388 = scalar_select %p1387, 1, 0
      %v1389 = vstv %s1388
      %vm1390 = vcmp.eq.s32.totalorder %v1389, 1
      %v1391 = vsel %vm1390, %v226, -inf
      %v1392 = vsel %vm1390, %v227, -inf
      %v1393 = vmax.f32 %v1382, %v1391
      %v1394 = vmax.f32 %v1383, %v1392
      %p1395 = scmp.le.s32.totalorder %s1307, 8
      %p1396 = scmp.gt.s32.totalorder %s1308, 8
      %p1397 = pnand %p1395, %p1396
      %p1398 = pneg %p1397
      %s1399 = scalar_select %p1398, 1, 0
      %v1400 = vstv %s1399
      %vm1401 = vcmp.eq.s32.totalorder %v1400, 1
      %v1402 = vsel %vm1401, %v228, -inf
      %v1403 = vsel %vm1401, %v229, -inf
      %v1404 = vmax.f32 %v1393, %v1402
      %v1405 = vmax.f32 %v1394, %v1403
      %p1406 = scmp.le.s32.totalorder %s1307, 9
      %p1407 = scmp.gt.s32.totalorder %s1308, 9
      %p1408 = pnand %p1406, %p1407
      %p1409 = pneg %p1408
      %s1410 = scalar_select %p1409, 1, 0
      %v1411 = vstv %s1410
      %vm1412 = vcmp.eq.s32.totalorder %v1411, 1
      %v1413 = vsel %vm1412, %v230, -inf
      %v1414 = vsel %vm1412, %v231, -inf
      %v1415 = vmax.f32 %v1404, %v1413
      %v1416 = vmax.f32 %v1405, %v1414
      %p1417 = scmp.le.s32.totalorder %s1307, 10
      %p1418 = scmp.gt.s32.totalorder %s1308, 10
      %p1419 = pnand %p1417, %p1418
      %p1420 = pneg %p1419
      %s1421 = scalar_select %p1420, 1, 0
      %v1422 = vstv %s1421
      %vm1423 = vcmp.eq.s32.totalorder %v1422, 1
      %v1424 = vsel %vm1423, %v232, -inf
      %v1425 = vsel %vm1423, %v233, -inf
      %v1426 = vmax.f32 %v1415, %v1424
      %v1427 = vmax.f32 %v1416, %v1425
      %p1428 = scmp.le.s32.totalorder %s1307, 11
      %p1429 = scmp.gt.s32.totalorder %s1308, 11
      %p1430 = pnand %p1428, %p1429
      %p1431 = pneg %p1430
      %s1432 = scalar_select %p1431, 1, 0
      %v1433 = vstv %s1432
      %vm1434 = vcmp.eq.s32.totalorder %v1433, 1
      %v1435 = vsel %vm1434, %v234, -inf
      %v1436 = vsel %vm1434, %v235, -inf
      %v1437 = vmax.f32 %v1426, %v1435
      %v1438 = vmax.f32 %v1427, %v1436
      %p1439 = scmp.le.s32.totalorder %s1307, 12
      %p1440 = scmp.gt.s32.totalorder %s1308, 12
      %p1441 = pnand %p1439, %p1440
      %p1442 = pneg %p1441
      %s1443 = scalar_select %p1442, 1, 0
      %v1444 = vstv %s1443
      %vm1445 = vcmp.eq.s32.totalorder %v1444, 1
      %v1446 = vsel %vm1445, %v236, -inf
      %v1447 = vsel %vm1445, %v237, -inf
      %v1448 = vmax.f32 %v1437, %v1446
      %v1449 = vmax.f32 %v1438, %v1447
      %p1450 = scmp.le.s32.totalorder %s1307, 13
      %p1451 = scmp.gt.s32.totalorder %s1308, 13
      %p1452 = pnand %p1450, %p1451
      %p1453 = pneg %p1452
      %s1454 = scalar_select %p1453, 1, 0
      %v1455 = vstv %s1454
      %vm1456 = vcmp.eq.s32.totalorder %v1455, 1
      %v1457 = vsel %vm1456, %v238, -inf
      %v1458 = vsel %vm1456, %v239, -inf
      %v1459 = vmax.f32 %v1448, %v1457
      %v1460 = vmax.f32 %v1449, %v1458
      %p1461 = scmp.le.s32.totalorder %s1307, 14
      %p1462 = scmp.gt.s32.totalorder %s1308, 14
      %p1463 = pnand %p1461, %p1462
      %p1464 = pneg %p1463
      %s1465 = scalar_select %p1464, 1, 0
      %v1466 = vstv %s1465
      %vm1467 = vcmp.eq.s32.totalorder %v1466, 1
      %v1468 = vsel %vm1467, %v240, -inf
      %v1469 = vsel %vm1467, %v241, -inf
      %v1470 = vmax.f32 %v1459, %v1468
      %v1471 = vmax.f32 %v1460, %v1469
      %p1472 = scmp.le.s32.totalorder %s1307, 15
      %p1473 = scmp.gt.s32.totalorder %s1308, 15
      %p1474 = pnand %p1472, %p1473
      %p1475 = pneg %p1474
      %s1476 = scalar_select %p1475, 1, 0
      %v1477 = vstv %s1476
      %vm1478 = vcmp.eq.s32.totalorder %v1477, 1
      %v1479 = vsel %vm1478, %v242, -inf
      %v1480 = vsel %vm1478, %v243, -inf
      %v1481 = vmax.f32 %v1470, %v1479
      %v1482 = vmax.f32 %v1471, %v1480
      %v1483 = vlaneseq
      %v1484 = vshrl.u32 %v1483, 7
      %v1485 = vadd.s32 %v1484, 8
      %s1486 = sld [smem:[#allocation6 + %s244]]
      %s1487 = sld [smem:[#allocation7 + %s244]]
      %v1488 = vstv %s1486
      %vm1489 = vcmp.ge.s32.totalorder %v1484, %v1488
      %vm1490 = vcmp.ge.s32.totalorder %v1485, %v1488
      %v1491 = vstv %s1487
      %vm1492 = vcmp.lt.s32.totalorder %v1484, %v1491
      %vm1493 = vcmp.lt.s32.totalorder %v1485, %v1491
      %vm1494 = vmand %vm1489, %vm1492
      %vm1495 = vmand %vm1490, %vm1493
      %v1496 = vsel %vm1494, 1, 0
      %v1497 = vsel %vm1495, 1, 0
      %vm1498 = vcmp.eq.s32.totalorder %v1496, 1
      %vm1499 = vcmp.eq.s32.totalorder %v1497, 1
      %v1500 = vsel %vm1498, %v419, -inf
      %v1501 = vsel %vm1499, %v420, -inf
      %v1502 = vsel %vm1498, %v596, -inf
      %v1503 = vsel %vm1499, %v597, -inf
      %v1504 = vsel %vm1498, %v773, -inf
      %v1505 = vsel %vm1499, %v774, -inf
      %v1506 = vsel %vm1498, %v950, -inf
      %v1507 = vsel %vm1499, %v951, -inf
      %v1508 = vsel %vm1498, %v1127, -inf
      %v1509 = vsel %vm1499, %v1128, -inf
      %v1510 = vsel %vm1498, %v1304, -inf
      %v1511 = vsel %vm1499, %v1305, -inf
      %v1512 = vsel %vm1498, %v1481, -inf
      %v1513 = vsel %vm1499, %v1482, -inf
      %vm1514 = vcmask 261120
      %v1515 = vsel %vm1514, %v1500, -inf
      %v1516 = vsel %vm1514, %v1501, -inf
      %v1517 = vmax.f32 %v1515, %v1516
      %v1518 = vrot.slane %v1517, 4
      %v1519 = vmax.f32 %v1517, %v1518
      %v1520 = vrot.slane %v1519, 2
      %v1521 = vmax.f32 %v1519, %v1520
      %v1522 = vrot.slane %v1521, 1
      %v1523 = vmax.f32 %v1521, %v1522
      %v1524 = vsel %vm1514, %v1502, -inf
      %v1525 = vsel %vm1514, %v1503, -inf
      %v1526 = vmax.f32 %v1524, %v1525
      %v1527 = vrot.slane %v1526, 4
      %v1528 = vmax.f32 %v1526, %v1527
      %v1529 = vrot.slane %v1528, 2
      %v1530 = vmax.f32 %v1528, %v1529
      %v1531 = vrot.slane %v1530, 1
      %v1532 = vmax.f32 %v1530, %v1531
      %v1533 = vsel %vm1514, %v1504, -inf
      %v1534 = vsel %vm1514, %v1505, -inf
      %v1535 = vmax.f32 %v1533, %v1534
      %v1536 = vrot.slane %v1535, 4
      %v1537 = vmax.f32 %v1535, %v1536
      %v1538 = vrot.slane %v1537, 2
      %v1539 = vmax.f32 %v1537, %v1538
      %v1540 = vrot.slane %v1539, 1
      %v1541 = vmax.f32 %v1539, %v1540
      %v1542 = vsel %vm1514, %v1506, -inf
      %v1543 = vsel %vm1514, %v1507, -inf
      %v1544 = vmax.f32 %v1542, %v1543
      %v1545 = vrot.slane %v1544, 4
      %v1546 = vmax.f32 %v1544, %v1545
      %v1547 = vrot.slane %v1546, 2
      %v1548 = vmax.f32 %v1546, %v1547
      %v1549 = vrot.slane %v1548, 1
      %v1550 = vmax.f32 %v1548, %v1549
      %v1551 = vsel %vm1514, %v1508, -inf
      %v1552 = vsel %vm1514, %v1509, -inf
      %v1553 = vmax.f32 %v1551, %v1552
      %v1554 = vrot.slane %v1553, 4
      %v1555 = vmax.f32 %v1553, %v1554
      %v1556 = vrot.slane %v1555, 2
      %v1557 = vmax.f32 %v1555, %v1556
      %v1558 = vrot.slane %v1557, 1
      %v1559 = vmax.f32 %v1557, %v1558
      %v1560 = vsel %vm1514, %v1510, -inf
      %v1561 = vsel %vm1514, %v1511, -inf
      %v1562 = vmax.f32 %v1560, %v1561
      %v1563 = vrot.slane %v1562, 4
      %v1564 = vmax.f32 %v1562, %v1563
      %v1565 = vrot.slane %v1564, 2
      %v1566 = vmax.f32 %v1564, %v1565
      %v1567 = vrot.slane %v1566, 1
      %v1568 = vmax.f32 %v1566, %v1567
      %v1569 = vsel %vm1514, %v1512, -inf
      %v1570 = vsel %vm1514, %v1513, -inf
      %v1571 = vmax.f32 %v1569, %v1570
      %v1572 = vrot.slane %v1571, 4
      %v1573 = vmax.f32 %v1571, %v1572
      %v1574 = vrot.slane %v1573, 2
      %v1575 = vmax.f32 %v1573, %v1574
      %v1576 = vrot.slane %v1575, 1
      %v1577 = vmax.f32 %v1575, %v1576
      %s1578 = sld [smem:[#allocation6 + %s421]]
      %s1579 = sld [smem:[#allocation7 + %s421]]
      %v1580 = vstv %s1578
      %vm1581 = vcmp.ge.s32.totalorder %v1484, %v1580
      %vm1582 = vcmp.ge.s32.totalorder %v1485, %v1580
      %v1583 = vstv %s1579
      %vm1584 = vcmp.lt.s32.totalorder %v1484, %v1583
      %vm1585 = vcmp.lt.s32.totalorder %v1485, %v1583
      %vm1586 = vmand %vm1581, %vm1584
      %vm1587 = vmand %vm1582, %vm1585
      %v1588 = vsel %vm1586, 1, 0
      %v1589 = vsel %vm1587, 1, 0
      %vm1590 = vcmp.eq.s32.totalorder %v1588, 1
      %vm1591 = vcmp.eq.s32.totalorder %v1589, 1
      %v1592 = vsel %vm1590, %v419, -inf
      %v1593 = vsel %vm1591, %v420, -inf
      %v1594 = vsel %vm1590, %v596, -inf
      %v1595 = vsel %vm1591, %v597, -inf
      %v1596 = vsel %vm1590, %v773, -inf
      %v1597 = vsel %vm1591, %v774, -inf
      %v1598 = vsel %vm1590, %v950, -inf
      %v1599 = vsel %vm1591, %v951, -inf
      %v1600 = vsel %vm1590, %v1127, -inf
      %v1601 = vsel %vm1591, %v1128, -inf
      %v1602 = vsel %vm1590, %v1304, -inf
      %v1603 = vsel %vm1591, %v1305, -inf
      %v1604 = vsel %vm1590, %v1481, -inf
      %v1605 = vsel %vm1591, %v1482, -inf
      %v1606 = vsel %vm1514, %v1592, -inf
      %v1607 = vsel %vm1514, %v1593, -inf
      %v1608 = vmax.f32 %v1606, %v1607
      %v1609 = vrot.slane %v1608, 4
      %v1610 = vmax.f32 %v1608, %v1609
      %v1611 = vrot.slane %v1610, 2
      %v1612 = vmax.f32 %v1610, %v1611
      %v1613 = vrot.slane %v1612, 1
      %v1614 = vmax.f32 %v1612, %v1613
      %v1615 = vsel %vm1514, %v1594, -inf
      %v1616 = vsel %vm1514, %v1595, -inf
      %v1617 = vmax.f32 %v1615, %v1616
      %v1618 = vrot.slane %v1617, 4
      %v1619 = vmax.f32 %v1617, %v1618
      %v1620 = vrot.slane %v1619, 2
      %v1621 = vmax.f32 %v1619, %v1620
      %v1622 = vrot.slane %v1621, 1
      %v1623 = vmax.f32 %v1621, %v1622
      %v1624 = vsel %vm1514, %v1596, -inf
      %v1625 = vsel %vm1514, %v1597, -inf
      %v1626 = vmax.f32 %v1624, %v1625
      %v1627 = vrot.slane %v1626, 4
      %v1628 = vmax.f32 %v1626, %v1627
      %v1629 = vrot.slane %v1628, 2
      %v1630 = vmax.f32 %v1628, %v1629
      %v1631 = vrot.slane %v1630, 1
      %v1632 = vmax.f32 %v1630, %v1631
      %v1633 = vsel %vm1514, %v1598, -inf
      %v1634 = vsel %vm1514, %v1599, -inf
      %v1635 = vmax.f32 %v1633, %v1634
      %v1636 = vrot.slane %v1635, 4
      %v1637 = vmax.f32 %v1635, %v1636
      %v1638 = vrot.slane %v1637, 2
      %v1639 = vmax.f32 %v1637, %v1638
      %v1640 = vrot.slane %v1639, 1
      %v1641 = vmax.f32 %v1639, %v1640
      %v1642 = vsel %vm1514, %v1600, -inf
      %v1643 = vsel %vm1514, %v1601, -inf
      %v1644 = vmax.f32 %v1642, %v1643
      %v1645 = vrot.slane %v1644, 4
      %v1646 = vmax.f32 %v1644, %v1645
      %v1647 = vrot.slane %v1646, 2
      %v1648 = vmax.f32 %v1646, %v1647
      %v1649 = vrot.slane %v1648, 1
      %v1650 = vmax.f32 %v1648, %v1649
      %v1651 = vsel %vm1514, %v1602, -inf
      %v1652 = vsel %vm1514, %v1603, -inf
      %v1653 = vmax.f32 %v1651, %v1652
      %v1654 = vrot.slane %v1653, 4
      %v1655 = vmax.f32 %v1653, %v1654
      %v1656 = vrot.slane %v1655, 2
      %v1657 = vmax.f32 %v1655, %v1656
      %v1658 = vrot.slane %v1657, 1
      %v1659 = vmax.f32 %v1657, %v1658
      %v1660 = vsel %vm1514, %v1604, -inf
      %v1661 = vsel %vm1514, %v1605, -inf
      %v1662 = vmax.f32 %v1660, %v1661
      %v1663 = vrot.slane %v1662, 4
      %v1664 = vmax.f32 %v1662, %v1663
      %v1665 = vrot.slane %v1664, 2
      %v1666 = vmax.f32 %v1664, %v1665
      %v1667 = vrot.slane %v1666, 1
      %v1668 = vmax.f32 %v1666, %v1667
      %s1669 = sld [smem:[#allocation6 + %s598]]
      %s1670 = sld [smem:[#allocation7 + %s598]]
      %v1671 = vstv %s1669
      %vm1672 = vcmp.ge.s32.totalorder %v1484, %v1671
      %vm1673 = vcmp.ge.s32.totalorder %v1485, %v1671
      %v1674 = vstv %s1670
      %vm1675 = vcmp.lt.s32.totalorder %v1484, %v1674
      %vm1676 = vcmp.lt.s32.totalorder %v1485, %v1674
      %vm1677 = vmand %vm1672, %vm1675
      %vm1678 = vmand %vm1673, %vm1676
      %v1679 = vsel %vm1677, 1, 0
      %v1680 = vsel %vm1678, 1, 0
      %vm1681 = vcmp.eq.s32.totalorder %v1679, 1
      %vm1682 = vcmp.eq.s32.totalorder %v1680, 1
      %v1683 = vsel %vm1681, %v419, -inf
      %v1684 = vsel %vm1682, %v420, -inf
      %v1685 = vsel %vm1681, %v596, -inf
      %v1686 = vsel %vm1682, %v597, -inf
      %v1687 = vsel %vm1681, %v773, -inf
      %v1688 = vsel %vm1682, %v774, -inf
      %v1689 = vsel %vm1681, %v950, -inf
      %v1690 = vsel %vm1682, %v951, -inf
      %v1691 = vsel %vm1681, %v1127, -inf
      %v1692 = vsel %vm1682, %v1128, -inf
      %v1693 = vsel %vm1681, %v1304, -inf
      %v1694 = vsel %vm1682, %v1305, -inf
      %v1695 = vsel %vm1681, %v1481, -inf
      %v1696 = vsel %vm1682, %v1482, -inf
      %v1697 = vsel %vm1514, %v1683, -inf
      %v1698 = vsel %vm1514, %v1684, -inf
      %v1699 = vmax.f32 %v1697, %v1698
      %v1700 = vrot.slane %v1699, 4
      %v1701 = vmax.f32 %v1699, %v1700
      %v1702 = vrot.slane %v1701, 2
      %v1703 = vmax.f32 %v1701, %v1702
      %v1704 = vrot.slane %v1703, 1
      %v1705 = vmax.f32 %v1703, %v1704
      %v1706 = vsel %vm1514, %v1685, -inf
      %v1707 = vsel %vm1514, %v1686, -inf
      %v1708 = vmax.f32 %v1706, %v1707
      %v1709 = vrot.slane %v1708, 4
      %v1710 = vmax.f32 %v1708, %v1709
      %v1711 = vrot.slane %v1710, 2
      %v1712 = vmax.f32 %v1710, %v1711
      %v1713 = vrot.slane %v1712, 1
      %v1714 = vmax.f32 %v1712, %v1713
      %v1715 = vsel %vm1514, %v1687, -inf
      %v1716 = vsel %vm1514, %v1688, -inf
      %v1717 = vmax.f32 %v1715, %v1716
      %v1718 = vrot.slane %v1717, 4
      %v1719 = vmax.f32 %v1717, %v1718
      %v1720 = vrot.slane %v1719, 2
      %v1721 = vmax.f32 %v1719, %v1720
      %v1722 = vrot.slane %v1721, 1
      %v1723 = vmax.f32 %v1721, %v1722
      %v1724 = vsel %vm1514, %v1689, -inf
      %v1725 = vsel %vm1514, %v1690, -inf
      %v1726 = vmax.f32 %v1724, %v1725
      %v1727 = vrot.slane %v1726, 4
      %v1728 = vmax.f32 %v1726, %v1727
      %v1729 = vrot.slane %v1728, 2
      %v1730 = vmax.f32 %v1728, %v1729
      %v1731 = vrot.slane %v1730, 1
      %v1732 = vmax.f32 %v1730, %v1731
      %v1733 = vsel %vm1514, %v1691, -inf
      %v1734 = vsel %vm1514, %v1692, -inf
      %v1735 = vmax.f32 %v1733, %v1734
      %v1736 = vrot.slane %v1735, 4
      %v1737 = vmax.f32 %v1735, %v1736
      %v1738 = vrot.slane %v1737, 2
      %v1739 = vmax.f32 %v1737, %v1738
      %v1740 = vrot.slane %v1739, 1
      %v1741 = vmax.f32 %v1739, %v1740
      %v1742 = vsel %vm1514, %v1693, -inf
      %v1743 = vsel %vm1514, %v1694, -inf
      %v1744 = vmax.f32 %v1742, %v1743
      %v1745 = vrot.slane %v1744, 4
      %v1746 = vmax.f32 %v1744, %v1745
      %v1747 = vrot.slane %v1746, 2
      %v1748 = vmax.f32 %v1746, %v1747
      %v1749 = vrot.slane %v1748, 1
      %v1750 = vmax.f32 %v1748, %v1749
      %v1751 = vsel %vm1514, %v1695, -inf
      %v1752 = vsel %vm1514, %v1696, -inf
      %v1753 = vmax.f32 %v1751, %v1752
      %v1754 = vrot.slane %v1753, 4
      %v1755 = vmax.f32 %v1753, %v1754
      %v1756 = vrot.slane %v1755, 2
      %v1757 = vmax.f32 %v1755, %v1756
      %v1758 = vrot.slane %v1757, 1
      %v1759 = vmax.f32 %v1757, %v1758
      %s1760 = sld [smem:[#allocation6 + %s775]]
      %s1761 = sld [smem:[#allocation7 + %s775]]
      %v1762 = vstv %s1760
      %vm1763 = vcmp.ge.s32.totalorder %v1484, %v1762
      %vm1764 = vcmp.ge.s32.totalorder %v1485, %v1762
      %v1765 = vstv %s1761
      %vm1766 = vcmp.lt.s32.totalorder %v1484, %v1765
      %vm1767 = vcmp.lt.s32.totalorder %v1485, %v1765
      %vm1768 = vmand %vm1763, %vm1766
      %vm1769 = vmand %vm1764, %vm1767
      %v1770 = vsel %vm1768, 1, 0
      %v1771 = vsel %vm1769, 1, 0
      %vm1772 = vcmp.eq.s32.totalorder %v1770, 1
      %vm1773 = vcmp.eq.s32.totalorder %v1771, 1
      %v1774 = vsel %vm1772, %v419, -inf
      %v1775 = vsel %vm1773, %v420, -inf
      %v1776 = vsel %vm1772, %v596, -inf
      %v1777 = vsel %vm1773, %v597, -inf
      %v1778 = vsel %vm1772, %v773, -inf
      %v1779 = vsel %vm1773, %v774, -inf
      %v1780 = vsel %vm1772, %v950, -inf
      %v1781 = vsel %vm1773, %v951, -inf
      %v1782 = vsel %vm1772, %v1127, -inf
      %v1783 = vsel %vm1773, %v1128, -inf
      %v1784 = vsel %vm1772, %v1304, -inf
      %v1785 = vsel %vm1773, %v1305, -inf
      %v1786 = vsel %vm1772, %v1481, -inf
      %v1787 = vsel %vm1773, %v1482, -inf
      %v1788 = vsel %vm1514, %v1774, -inf
      %v1789 = vsel %vm1514, %v1775, -inf
      %v1790 = vmax.f32 %v1788, %v1789
      %v1791 = vrot.slane %v1790, 4
      %v1792 = vmax.f32 %v1790, %v1791
      %v1793 = vrot.slane %v1792, 2
      %v1794 = vmax.f32 %v1792, %v1793
      %v1795 = vrot.slane %v1794, 1
      %v1796 = vmax.f32 %v1794, %v1795
      %v1797 = vsel %vm1514, %v1776, -inf
      %v1798 = vsel %vm1514, %v1777, -inf
      %v1799 = vmax.f32 %v1797, %v1798
      %v1800 = vrot.slane %v1799, 4
      %v1801 = vmax.f32 %v1799, %v1800
      %v1802 = vrot.slane %v1801, 2
      %v1803 = vmax.f32 %v1801, %v1802
      %v1804 = vrot.slane %v1803, 1
      %v1805 = vmax.f32 %v1803, %v1804
      %v1806 = vsel %vm1514, %v1778, -inf
      %v1807 = vsel %vm1514, %v1779, -inf
      %v1808 = vmax.f32 %v1806, %v1807
      %v1809 = vrot.slane %v1808, 4
      %v1810 = vmax.f32 %v1808, %v1809
      %v1811 = vrot.slane %v1810, 2
      %v1812 = vmax.f32 %v1810, %v1811
      %v1813 = vrot.slane %v1812, 1
      %v1814 = vmax.f32 %v1812, %v1813
      %v1815 = vsel %vm1514, %v1780, -inf
      %v1816 = vsel %vm1514, %v1781, -inf
      %v1817 = vmax.f32 %v1815, %v1816
      %v1818 = vrot.slane %v1817, 4
      %v1819 = vmax.f32 %v1817, %v1818
      %v1820 = vrot.slane %v1819, 2
      %v1821 = vmax.f32 %v1819, %v1820
      %v1822 = vrot.slane %v1821, 1
      %v1823 = vmax.f32 %v1821, %v1822
      %v1824 = vsel %vm1514, %v1782, -inf
      %v1825 = vsel %vm1514, %v1783, -inf
      %v1826 = vmax.f32 %v1824, %v1825
      %v1827 = vrot.slane %v1826, 4
      %v1828 = vmax.f32 %v1826, %v1827
      %v1829 = vrot.slane %v1828, 2
      %v1830 = vmax.f32 %v1828, %v1829
      %v1831 = vrot.slane %v1830, 1
      %v1832 = vmax.f32 %v1830, %v1831
      %v1833 = vsel %vm1514, %v1784, -inf
      %v1834 = vsel %vm1514, %v1785, -inf
      %v1835 = vmax.f32 %v1833, %v1834
      %v1836 = vrot.slane %v1835, 4
      %v1837 = vmax.f32 %v1835, %v1836
      %v1838 = vrot.slane %v1837, 2
      %v1839 = vmax.f32 %v1837, %v1838
      %v1840 = vrot.slane %v1839, 1
      %v1841 = vmax.f32 %v1839, %v1840
      %v1842 = vsel %vm1514, %v1786, -inf
      %v1843 = vsel %vm1514, %v1787, -inf
      %v1844 = vmax.f32 %v1842, %v1843
      %v1845 = vrot.slane %v1844, 4
      %v1846 = vmax.f32 %v1844, %v1845
      %v1847 = vrot.slane %v1846, 2
      %v1848 = vmax.f32 %v1846, %v1847
      %v1849 = vrot.slane %v1848, 1
      %v1850 = vmax.f32 %v1848, %v1849
      %s1851 = sld [smem:[#allocation6 + %s952]]
      %s1852 = sld [smem:[#allocation7 + %s952]]
      %v1853 = vstv %s1851
      %vm1854 = vcmp.ge.s32.totalorder %v1484, %v1853
      %vm1855 = vcmp.ge.s32.totalorder %v1485, %v1853
      %v1856 = vstv %s1852
      %vm1857 = vcmp.lt.s32.totalorder %v1484, %v1856
      %vm1858 = vcmp.lt.s32.totalorder %v1485, %v1856
      %vm1859 = vmand %vm1854, %vm1857
      %vm1860 = vmand %vm1855, %vm1858
      %v1861 = vsel %vm1859, 1, 0
      %v1862 = vsel %vm1860, 1, 0
      %vm1863 = vcmp.eq.s32.totalorder %v1861, 1
      %vm1864 = vcmp.eq.s32.totalorder %v1862, 1
      %v1865 = vsel %vm1863, %v419, -inf
      %v1866 = vsel %vm1864, %v420, -inf
      %v1867 = vsel %vm1863, %v596, -inf
      %v1868 = vsel %vm1864, %v597, -inf
      %v1869 = vsel %vm1863, %v773, -inf
      %v1870 = vsel %vm1864, %v774, -inf
      %v1871 = vsel %vm1863, %v950, -inf
      %v1872 = vsel %vm1864, %v951, -inf
      %v1873 = vsel %vm1863, %v1127, -inf
      %v1874 = vsel %vm1864, %v1128, -inf
      %v1875 = vsel %vm1863, %v1304, -inf
      %v1876 = vsel %vm1864, %v1305, -inf
      %v1877 = vsel %vm1863, %v1481, -inf
      %v1878 = vsel %vm1864, %v1482, -inf
      %v1879 = vsel %vm1514, %v1865, -inf
      %v1880 = vsel %vm1514, %v1866, -inf
      %v1881 = vmax.f32 %v1879, %v1880
      %v1882 = vrot.slane %v1881, 4
      %v1883 = vmax.f32 %v1881, %v1882
      %v1884 = vrot.slane %v1883, 2
      %v1885 = vmax.f32 %v1883, %v1884
      %v1886 = vrot.slane %v1885, 1
      %v1887 = vmax.f32 %v1885, %v1886
      %v1888 = vsel %vm1514, %v1867, -inf
      %v1889 = vsel %vm1514, %v1868, -inf
      %v1890 = vmax.f32 %v1888, %v1889
      %v1891 = vrot.slane %v1890, 4
      %v1892 = vmax.f32 %v1890, %v1891
      %v1893 = vrot.slane %v1892, 2
      %v1894 = vmax.f32 %v1892, %v1893
      %v1895 = vrot.slane %v1894, 1
      %v1896 = vmax.f32 %v1894, %v1895
      %v1897 = vsel %vm1514, %v1869, -inf
      %v1898 = vsel %vm1514, %v1870, -inf
      %v1899 = vmax.f32 %v1897, %v1898
      %v1900 = vrot.slane %v1899, 4
      %v1901 = vmax.f32 %v1899, %v1900
      %v1902 = vrot.slane %v1901, 2
      %v1903 = vmax.f32 %v1901, %v1902
      %v1904 = vrot.slane %v1903, 1
      %v1905 = vmax.f32 %v1903, %v1904
      %v1906 = vsel %vm1514, %v1871, -inf
      %v1907 = vsel %vm1514, %v1872, -inf
      %v1908 = vmax.f32 %v1906, %v1907
      %v1909 = vrot.slane %v1908, 4
      %v1910 = vmax.f32 %v1908, %v1909
      %v1911 = vrot.slane %v1910, 2
      %v1912 = vmax.f32 %v1910, %v1911
      %v1913 = vrot.slane %v1912, 1
      %v1914 = vmax.f32 %v1912, %v1913
      %v1915 = vsel %vm1514, %v1873, -inf
      %v1916 = vsel %vm1514, %v1874, -inf
      %v1917 = vmax.f32 %v1915, %v1916
      %v1918 = vrot.slane %v1917, 4
      %v1919 = vmax.f32 %v1917, %v1918
      %v1920 = vrot.slane %v1919, 2
      %v1921 = vmax.f32 %v1919, %v1920
      %v1922 = vrot.slane %v1921, 1
      %v1923 = vmax.f32 %v1921, %v1922
      %v1924 = vsel %vm1514, %v1875, -inf
      %v1925 = vsel %vm1514, %v1876, -inf
      %v1926 = vmax.f32 %v1924, %v1925
      %v1927 = vrot.slane %v1926, 4
      %v1928 = vmax.f32 %v1926, %v1927
      %v1929 = vrot.slane %v1928, 2
      %v1930 = vmax.f32 %v1928, %v1929
      %v1931 = vrot.slane %v1930, 1
      %v1932 = vmax.f32 %v1930, %v1931
      %v1933 = vsel %vm1514, %v1877, -inf
      %v1934 = vsel %vm1514, %v1878, -inf
      %v1935 = vmax.f32 %v1933, %v1934
      %v1936 = vrot.slane %v1935, 4
      %v1937 = vmax.f32 %v1935, %v1936
      %v1938 = vrot.slane %v1937, 2
      %v1939 = vmax.f32 %v1937, %v1938
      %v1940 = vrot.slane %v1939, 1
      %v1941 = vmax.f32 %v1939, %v1940
      %s1942 = sld [smem:[#allocation6 + %s1129]]
      %s1943 = sld [smem:[#allocation7 + %s1129]]
      %v1944 = vstv %s1942
      %vm1945 = vcmp.ge.s32.totalorder %v1484, %v1944
      %vm1946 = vcmp.ge.s32.totalorder %v1485, %v1944
      %v1947 = vstv %s1943
      %vm1948 = vcmp.lt.s32.totalorder %v1484, %v1947
      %vm1949 = vcmp.lt.s32.totalorder %v1485, %v1947
      %vm1950 = vmand %vm1945, %vm1948
      %vm1951 = vmand %vm1946, %vm1949
      %v1952 = vsel %vm1950, 1, 0
      %v1953 = vsel %vm1951, 1, 0
      %vm1954 = vcmp.eq.s32.totalorder %v1952, 1
      %vm1955 = vcmp.eq.s32.totalorder %v1953, 1
      %v1956 = vsel %vm1954, %v419, -inf
      %v1957 = vsel %vm1955, %v420, -inf
      %v1958 = vsel %vm1954, %v596, -inf
      %v1959 = vsel %vm1955, %v597, -inf
      %v1960 = vsel %vm1954, %v773, -inf
      %v1961 = vsel %vm1955, %v774, -inf
      %v1962 = vsel %vm1954, %v950, -inf
      %v1963 = vsel %vm1955, %v951, -inf
      %v1964 = vsel %vm1954, %v1127, -inf
      %v1965 = vsel %vm1955, %v1128, -inf
      %v1966 = vsel %vm1954, %v1304, -inf
      %v1967 = vsel %vm1955, %v1305, -inf
      %v1968 = vsel %vm1954, %v1481, -inf
      %v1969 = vsel %vm1955, %v1482, -inf
      %v1970 = vsel %vm1514, %v1956, -inf
      %v1971 = vsel %vm1514, %v1957, -inf
      %v1972 = vmax.f32 %v1970, %v1971
      %v1973 = vrot.slane %v1972, 4
      %v1974 = vmax.f32 %v1972, %v1973
      %v1975 = vrot.slane %v1974, 2
      %v1976 = vmax.f32 %v1974, %v1975
      %v1977 = vrot.slane %v1976, 1
      %v1978 = vmax.f32 %v1976, %v1977
      %v1979 = vsel %vm1514, %v1958, -inf
      %v1980 = vsel %vm1514, %v1959, -inf
      %v1981 = vmax.f32 %v1979, %v1980
      %v1982 = vrot.slane %v1981, 4
      %v1983 = vmax.f32 %v1981, %v1982
      %v1984 = vrot.slane %v1983, 2
      %v1985 = vmax.f32 %v1983, %v1984
      %v1986 = vrot.slane %v1985, 1
      %v1987 = vmax.f32 %v1985, %v1986
      %v1988 = vsel %vm1514, %v1960, -inf
      %v1989 = vsel %vm1514, %v1961, -inf
      %v1990 = vmax.f32 %v1988, %v1989
      %v1991 = vrot.slane %v1990, 4
      %v1992 = vmax.f32 %v1990, %v1991
      %v1993 = vrot.slane %v1992, 2
      %v1994 = vmax.f32 %v1992, %v1993
      %v1995 = vrot.slane %v1994, 1
      %v1996 = vmax.f32 %v1994, %v1995
      %v1997 = vsel %vm1514, %v1962, -inf
      %v1998 = vsel %vm1514, %v1963, -inf
      %v1999 = vmax.f32 %v1997, %v1998
      %v2000 = vrot.slane %v1999, 4
      %v2001 = vmax.f32 %v1999, %v2000
      %v2002 = vrot.slane %v2001, 2
      %v2003 = vmax.f32 %v2001, %v2002
      %v2004 = vrot.slane %v2003, 1
      %v2005 = vmax.f32 %v2003, %v2004
      %v2006 = vsel %vm1514, %v1964, -inf
      %v2007 = vsel %vm1514, %v1965, -inf
      %v2008 = vmax.f32 %v2006, %v2007
      %v2009 = vrot.slane %v2008, 4
      %v2010 = vmax.f32 %v2008, %v2009
      %v2011 = vrot.slane %v2010, 2
      %v2012 = vmax.f32 %v2010, %v2011
      %v2013 = vrot.slane %v2012, 1
      %v2014 = vmax.f32 %v2012, %v2013
      %v2015 = vsel %vm1514, %v1966, -inf
      %v2016 = vsel %vm1514, %v1967, -inf
      %v2017 = vmax.f32 %v2015, %v2016
      %v2018 = vrot.slane %v2017, 4
      %v2019 = vmax.f32 %v2017, %v2018
      %v2020 = vrot.slane %v2019, 2
      %v2021 = vmax.f32 %v2019, %v2020
      %v2022 = vrot.slane %v2021, 1
      %v2023 = vmax.f32 %v2021, %v2022
      %v2024 = vsel %vm1514, %v1968, -inf
      %v2025 = vsel %vm1514, %v1969, -inf
      %v2026 = vmax.f32 %v2024, %v2025
      %v2027 = vrot.slane %v2026, 4
      %v2028 = vmax.f32 %v2026, %v2027
      %v2029 = vrot.slane %v2028, 2
      %v2030 = vmax.f32 %v2028, %v2029
      %v2031 = vrot.slane %v2030, 1
      %v2032 = vmax.f32 %v2030, %v2031
      %s2033 = sld [smem:[#allocation6 + %s1306]]
      %s2034 = sld [smem:[#allocation7 + %s1306]]
      %v2035 = vstv %s2033
      %vm2036 = vcmp.ge.s32.totalorder %v1484, %v2035
      %vm2037 = vcmp.ge.s32.totalorder %v1485, %v2035
      %v2038 = vstv %s2034
      %vm2039 = vcmp.lt.s32.totalorder %v1484, %v2038
      %vm2040 = vcmp.lt.s32.totalorder %v1485, %v2038
      %vm2041 = vmand %vm2036, %vm2039
      %vm2042 = vmand %vm2037, %vm2040
      %v2043 = vsel %vm2041, 1, 0
      %v2044 = vsel %vm2042, 1, 0
      %vm2045 = vcmp.eq.s32.totalorder %v2043, 1
      %vm2046 = vcmp.eq.s32.totalorder %v2044, 1
      %v2047 = vsel %vm2045, %v419, -inf
      %v2048 = vsel %vm2046, %v420, -inf
      %v2049 = vsel %vm2045, %v596, -inf
      %v2050 = vsel %vm2046, %v597, -inf
      %v2051 = vsel %vm2045, %v773, -inf
      %v2052 = vsel %vm2046, %v774, -inf
      %v2053 = vsel %vm2045, %v950, -inf
      %v2054 = vsel %vm2046, %v951, -inf
      %v2055 = vsel %vm2045, %v1127, -inf
      %v2056 = vsel %vm2046, %v1128, -inf
      %v2057 = vsel %vm2045, %v1304, -inf
      %v2058 = vsel %vm2046, %v1305, -inf
      %v2059 = vsel %vm2045, %v1481, -inf
      %v2060 = vsel %vm2046, %v1482, -inf
      %v2061 = vsel %vm1514, %v2047, -inf
      %v2062 = vsel %vm1514, %v2048, -inf
      %v2063 = vmax.f32 %v2061, %v2062
      %v2064 = vrot.slane %v2063, 4
      %v2065 = vmax.f32 %v2063, %v2064
      %v2066 = vrot.slane %v2065, 2
      %v2067 = vmax.f32 %v2065, %v2066
      %v2068 = vrot.slane %v2067, 1
      %v2069 = vmax.f32 %v2067, %v2068
      %v2070 = vsel %vm1514, %v2049, -inf
      %v2071 = vsel %vm1514, %v2050, -inf
      %v2072 = vmax.f32 %v2070, %v2071
      %v2073 = vrot.slane %v2072, 4
      %v2074 = vmax.f32 %v2072, %v2073
      %v2075 = vrot.slane %v2074, 2
      %v2076 = vmax.f32 %v2074, %v2075
      %v2077 = vrot.slane %v2076, 1
      %v2078 = vmax.f32 %v2076, %v2077
      %v2079 = vsel %vm1514, %v2051, -inf
      %v2080 = vsel %vm1514, %v2052, -inf
      %v2081 = vmax.f32 %v2079, %v2080
      %v2082 = vrot.slane %v2081, 4
      %v2083 = vmax.f32 %v2081, %v2082
      %v2084 = vrot.slane %v2083, 2
      %v2085 = vmax.f32 %v2083, %v2084
      %v2086 = vrot.slane %v2085, 1
      %v2087 = vmax.f32 %v2085, %v2086
      %v2088 = vsel %vm1514, %v2053, -inf
      %v2089 = vsel %vm1514, %v2054, -inf
      %v2090 = vmax.f32 %v2088, %v2089
      %v2091 = vrot.slane %v2090, 4
      %v2092 = vmax.f32 %v2090, %v2091
      %v2093 = vrot.slane %v2092, 2
      %v2094 = vmax.f32 %v2092, %v2093
      %v2095 = vrot.slane %v2094, 1
      %v2096 = vmax.f32 %v2094, %v2095
      %v2097 = vsel %vm1514, %v2055, -inf
      %v2098 = vsel %vm1514, %v2056, -inf
      %v2099 = vmax.f32 %v2097, %v2098
      %v2100 = vrot.slane %v2099, 4
      %v2101 = vmax.f32 %v2099, %v2100
      %v2102 = vrot.slane %v2101, 2
      %v2103 = vmax.f32 %v2101, %v2102
      %v2104 = vrot.slane %v2103, 1
      %v2105 = vmax.f32 %v2103, %v2104
      %v2106 = vsel %vm1514, %v2057, -inf
      %v2107 = vsel %vm1514, %v2058, -inf
      %v2108 = vmax.f32 %v2106, %v2107
      %v2109 = vrot.slane %v2108, 4
      %v2110 = vmax.f32 %v2108, %v2109
      %v2111 = vrot.slane %v2110, 2
      %v2112 = vmax.f32 %v2110, %v2111
      %v2113 = vrot.slane %v2112, 1
      %v2114 = vmax.f32 %v2112, %v2113
      %v2115 = vsel %vm1514, %v2059, -inf
      %v2116 = vsel %vm1514, %v2060, -inf
      %v2117 = vmax.f32 %v2115, %v2116
      %v2118 = vrot.slane %v2117, 4
      %v2119 = vmax.f32 %v2117, %v2118
      %v2120 = vrot.slane %v2119, 2
      %v2121 = vmax.f32 %v2119, %v2120
      %v2122 = vrot.slane %v2121, 1
      %v2123 = vmax.f32 %v2121, %v2122
      %vm2124 = vcmp.eq.f32.partialorder %v1523, -inf
      %vm2125 = vcmp.eq.f32.partialorder %v1532, -inf
      %vm2126 = vcmp.eq.f32.partialorder %v1541, -inf
      %vm2127 = vcmp.eq.f32.partialorder %v1550, -inf
      %vm2128 = vcmp.eq.f32.partialorder %v1559, -inf
      %vm2129 = vcmp.eq.f32.partialorder %v1568, -inf
      %vm2130 = vcmp.eq.f32.partialorder %v1577, -inf
      %vm2131 = vcmp.eq.f32.partialorder %v1614, -inf
      %vm2132 = vcmp.eq.f32.partialorder %v1623, -inf
      %vm2133 = vcmp.eq.f32.partialorder %v1632, -inf
      %vm2134 = vcmp.eq.f32.partialorder %v1641, -inf
      %vm2135 = vcmp.eq.f32.partialorder %v1650, -inf
      %vm2136 = vcmp.eq.f32.partialorder %v1659, -inf
      %vm2137 = vcmp.eq.f32.partialorder %v1668, -inf
      %vm2138 = vcmp.eq.f32.partialorder %v1705, -inf
      %vm2139 = vcmp.eq.f32.partialorder %v1714, -inf
      %vm2140 = vcmp.eq.f32.partialorder %v1723, -inf
      %vm2141 = vcmp.eq.f32.partialorder %v1732, -inf
      %vm2142 = vcmp.eq.f32.partialorder %v1741, -inf
      %vm2143 = vcmp.eq.f32.partialorder %v1750, -inf
      %vm2144 = vcmp.eq.f32.partialorder %v1759, -inf
      %vm2145 = vcmp.eq.f32.partialorder %v1796, -inf
      %vm2146 = vcmp.eq.f32.partialorder %v1805, -inf
      %vm2147 = vcmp.eq.f32.partialorder %v1814, -inf
      %vm2148 = vcmp.eq.f32.partialorder %v1823, -inf
      %vm2149 = vcmp.eq.f32.partialorder %v1832, -inf
      %vm2150 = vcmp.eq.f32.partialorder %v1841, -inf
      %vm2151 = vcmp.eq.f32.partialorder %v1850, -inf
      %vm2152 = vcmp.eq.f32.partialorder %v1887, -inf
      %vm2153 = vcmp.eq.f32.partialorder %v1896, -inf
      %vm2154 = vcmp.eq.f32.partialorder %v1905, -inf
      %vm2155 = vcmp.eq.f32.partialorder %v1914, -inf
      %vm2156 = vcmp.eq.f32.partialorder %v1923, -inf
      %vm2157 = vcmp.eq.f32.partialorder %v1932, -inf
      %vm2158 = vcmp.eq.f32.partialorder %v1941, -inf
      %vm2159 = vcmp.eq.f32.partialorder %v1978, -inf
      %vm2160 = vcmp.eq.f32.partialorder %v1987, -inf
      %vm2161 = vcmp.eq.f32.partialorder %v1996, -inf
      %vm2162 = vcmp.eq.f32.partialorder %v2005, -inf
      %vm2163 = vcmp.eq.f32.partialorder %v2014, -inf
      %vm2164 = vcmp.eq.f32.partialorder %v2023, -inf
      %vm2165 = vcmp.eq.f32.partialorder %v2032, -inf
      %vm2166 = vcmp.eq.f32.partialorder %v2069, -inf
      %vm2167 = vcmp.eq.f32.partialorder %v2078, -inf
      %vm2168 = vcmp.eq.f32.partialorder %v2087, -inf
      %vm2169 = vcmp.eq.f32.partialorder %v2096, -inf
      %vm2170 = vcmp.eq.f32.partialorder %v2105, -inf
      %vm2171 = vcmp.eq.f32.partialorder %v2114, -inf
      %vm2172 = vcmp.eq.f32.partialorder %v2123, -inf
      %v2173 = vsel %vm2124, 0.0, %v1523
      %v2174 = vsel %vm2125, 0.0, %v1532
      %v2175 = vsel %vm2126, 0.0, %v1541
      %v2176 = vsel %vm2127, 0.0, %v1550
      %v2177 = vsel %vm2128, 0.0, %v1559
      %v2178 = vsel %vm2129, 0.0, %v1568
      %v2179 = vsel %vm2130, 0.0, %v1577
      %v2180 = vsel %vm2131, 0.0, %v1614
      %v2181 = vsel %vm2132, 0.0, %v1623
      %v2182 = vsel %vm2133, 0.0, %v1632
      %v2183 = vsel %vm2134, 0.0, %v1641
      %v2184 = vsel %vm2135, 0.0, %v1650
      %v2185 = vsel %vm2136, 0.0, %v1659
      %v2186 = vsel %vm2137, 0.0, %v1668
      %v2187 = vsel %vm2138, 0.0, %v1705
      %v2188 = vsel %vm2139, 0.0, %v1714
      %v2189 = vsel %vm2140, 0.0, %v1723
      %v2190 = vsel %vm2141, 0.0, %v1732
      %v2191 = vsel %vm2142, 0.0, %v1741
      %v2192 = vsel %vm2143, 0.0, %v1750
      %v2193 = vsel %vm2144, 0.0, %v1759
      %v2194 = vsel %vm2145, 0.0, %v1796
      %v2195 = vsel %vm2146, 0.0, %v1805
      %v2196 = vsel %vm2147, 0.0, %v1814
      %v2197 = vsel %vm2148, 0.0, %v1823
      %v2198 = vsel %vm2149, 0.0, %v1832
      %v2199 = vsel %vm2150, 0.0, %v1841
      %v2200 = vsel %vm2151, 0.0, %v1850
      %v2201 = vsel %vm2152, 0.0, %v1887
      %v2202 = vsel %vm2153, 0.0, %v1896
      %v2203 = vsel %vm2154, 0.0, %v1905
      %v2204 = vsel %vm2155, 0.0, %v1914
      %v2205 = vsel %vm2156, 0.0, %v1923
      %v2206 = vsel %vm2157, 0.0, %v1932
      %v2207 = vsel %vm2158, 0.0, %v1941
      %v2208 = vsel %vm2159, 0.0, %v1978
      %v2209 = vsel %vm2160, 0.0, %v1987
      %v2210 = vsel %vm2161, 0.0, %v1996
      %v2211 = vsel %vm2162, 0.0, %v2005
      %v2212 = vsel %vm2163, 0.0, %v2014
      %v2213 = vsel %vm2164, 0.0, %v2023
      %v2214 = vsel %vm2165, 0.0, %v2032
      %v2215 = vsel %vm2166, 0.0, %v2069
      %v2216 = vsel %vm2167, 0.0, %v2078
      %v2217 = vsel %vm2168, 0.0, %v2087
      %v2218 = vsel %vm2169, 0.0, %v2096
      %v2219 = vsel %vm2170, 0.0, %v2105
      %v2220 = vsel %vm2171, 0.0, %v2114
      %v2221 = vsel %vm2172, 0.0, %v2123
      %v2222 = vpack.c.bf16 %v2173, %v2173
      %v2223 = vpack.c.bf16 %v2174, %v2174
      %v2224 = vpack.c.bf16 %v2175, %v2175
      %v2225 = vpack.c.bf16 %v2176, %v2176
      %v2226 = vpack.c.bf16 %v2177, %v2177
      %v2227 = vpack.c.bf16 %v2178, %v2178
      %v2228 = vpack.c.bf16 %v2179, %v2179
      %v2229 = vpack.c.bf16 %v2180, %v2180
      %v2230 = vpack.c.bf16 %v2181, %v2181
      %v2231 = vpack.c.bf16 %v2182, %v2182
      %v2232 = vpack.c.bf16 %v2183, %v2183
      %v2233 = vpack.c.bf16 %v2184, %v2184
      %v2234 = vpack.c.bf16 %v2185, %v2185
      %v2235 = vpack.c.bf16 %v2186, %v2186
      %v2236 = vpack.c.bf16 %v2187, %v2187
      %v2237 = vpack.c.bf16 %v2188, %v2188
      %v2238 = vpack.c.bf16 %v2189, %v2189
      %v2239 = vpack.c.bf16 %v2190, %v2190
      %v2240 = vpack.c.bf16 %v2191, %v2191
      %v2241 = vpack.c.bf16 %v2192, %v2192
      %v2242 = vpack.c.bf16 %v2193, %v2193
      %v2243 = vpack.c.bf16 %v2194, %v2194
      %v2244 = vpack.c.bf16 %v2195, %v2195
      %v2245 = vpack.c.bf16 %v2196, %v2196
      %v2246 = vpack.c.bf16 %v2197, %v2197
      %v2247 = vpack.c.bf16 %v2198, %v2198
      %v2248 = vpack.c.bf16 %v2199, %v2199
      %v2249 = vpack.c.bf16 %v2200, %v2200
      %v2250 = vpack.c.bf16 %v2201, %v2201
      %v2251 = vpack.c.bf16 %v2202, %v2202
      %v2252 = vpack.c.bf16 %v2203, %v2203
      %v2253 = vpack.c.bf16 %v2204, %v2204
      %v2254 = vpack.c.bf16 %v2205, %v2205
      %v2255 = vpack.c.bf16 %v2206, %v2206
      %v2256 = vpack.c.bf16 %v2207, %v2207
      %v2257 = vpack.c.bf16 %v2208, %v2208
      %v2258 = vpack.c.bf16 %v2209, %v2209
      %v2259 = vpack.c.bf16 %v2210, %v2210
      %v2260 = vpack.c.bf16 %v2211, %v2211
      %v2261 = vpack.c.bf16 %v2212, %v2212
      %v2262 = vpack.c.bf16 %v2213, %v2213
      %v2263 = vpack.c.bf16 %v2214, %v2214
      %v2264 = vpack.c.bf16 %v2215, %v2215
      %v2265 = vpack.c.bf16 %v2216, %v2216
      %v2266 = vpack.c.bf16 %v2217, %v2217
      %v2267 = vpack.c.bf16 %v2218, %v2218
      %v2268 = vpack.c.bf16 %v2219, %v2219
      %v2269 = vpack.c.bf16 %v2220, %v2220
      %v2270 = vpack.c.bf16 %v2221, %v2221
      %v2320 = vunpack.c.l.b16 %v2222
      %v2321 = vunpack.c.l.b16 %v2223
      %v2322 = vunpack.c.l.b16 %v2224
      %v2323 = vunpack.c.l.b16 %v2225
      %v2324 = vunpack.c.l.b16 %v2226
      %v2325 = vunpack.c.l.b16 %v2227
      %v2326 = vunpack.c.l.b16 %v2228
      %v2327 = vunpack.c.l.b16 %v2229
      %v2328 = vunpack.c.l.b16 %v2230
      %v2329 = vunpack.c.l.b16 %v2231
      %v2330 = vunpack.c.l.b16 %v2232
      %v2331 = vunpack.c.l.b16 %v2233
      %v2332 = vunpack.c.l.b16 %v2234
      %v2333 = vunpack.c.l.b16 %v2235
      %v2334 = vunpack.c.l.b16 %v2236
      %v2335 = vunpack.c.l.b16 %v2237
      %v2336 = vunpack.c.l.b16 %v2238
      %v2337 = vunpack.c.l.b16 %v2239
      %v2338 = vunpack.c.l.b16 %v2240
      %v2339 = vunpack.c.l.b16 %v2241
      %v2340 = vunpack.c.l.b16 %v2242
      %v2341 = vunpack.c.l.b16 %v2243
      %v2342 = vunpack.c.l.b16 %v2244
      %v2343 = vunpack.c.l.b16 %v2245
      %v2344 = vunpack.c.l.b16 %v2246
      %v2345 = vunpack.c.l.b16 %v2247
      %v2346 = vunpack.c.l.b16 %v2248
      %v2347 = vunpack.c.l.b16 %v2249
      %v2348 = vunpack.c.l.b16 %v2250
      %v2349 = vunpack.c.l.b16 %v2251
      %v2350 = vunpack.c.l.b16 %v2252
      %v2351 = vunpack.c.l.b16 %v2253
      %v2352 = vunpack.c.l.b16 %v2254
      %v2353 = vunpack.c.l.b16 %v2255
      %v2354 = vunpack.c.l.b16 %v2256
      %v2355 = vunpack.c.l.b16 %v2257
      %v2356 = vunpack.c.l.b16 %v2258
      %v2357 = vunpack.c.l.b16 %v2259
      %v2358 = vunpack.c.l.b16 %v2260
      %v2359 = vunpack.c.l.b16 %v2261
      %v2360 = vunpack.c.l.b16 %v2262
      %v2361 = vunpack.c.l.b16 %v2263
      %v2362 = vunpack.c.l.b16 %v2264
      %v2363 = vunpack.c.l.b16 %v2265
      %v2364 = vunpack.c.l.b16 %v2266
      %v2365 = vunpack.c.l.b16 %v2267
      %v2366 = vunpack.c.l.b16 %v2268
      %v2367 = vunpack.c.l.b16 %v2269
      %v2368 = vunpack.c.l.b16 %v2270
      %v2369 = vpack.c.b16 %v2320, %v2320
      %v2370 = vpack.c.b16 %v2321, %v2321
      %v2371 = vpack.c.b16 %v2322, %v2322
      %v2372 = vpack.c.b16 %v2323, %v2323
      %v2373 = vpack.c.b16 %v2324, %v2324
      %v2374 = vpack.c.b16 %v2325, %v2325
      %v2375 = vpack.c.b16 %v2326, %v2326
      %v2376 = vpack.c.b16 %v2327, %v2327
      %v2377 = vpack.c.b16 %v2328, %v2328
      %v2378 = vpack.c.b16 %v2329, %v2329
      %v2379 = vpack.c.b16 %v2330, %v2330
      %v2380 = vpack.c.b16 %v2331, %v2331
      %v2381 = vpack.c.b16 %v2332, %v2332
      %v2382 = vpack.c.b16 %v2333, %v2333
      %v2383 = vpack.c.b16 %v2334, %v2334
      %v2384 = vpack.c.b16 %v2335, %v2335
      %v2385 = vpack.c.b16 %v2336, %v2336
      %v2386 = vpack.c.b16 %v2337, %v2337
      %v2387 = vpack.c.b16 %v2338, %v2338
      %v2388 = vpack.c.b16 %v2339, %v2339
      %v2389 = vpack.c.b16 %v2340, %v2340
      %v2390 = vpack.c.b16 %v2341, %v2341
      %v2391 = vpack.c.b16 %v2342, %v2342
      %v2392 = vpack.c.b16 %v2343, %v2343
      %v2393 = vpack.c.b16 %v2344, %v2344
      %v2394 = vpack.c.b16 %v2345, %v2345
      %v2395 = vpack.c.b16 %v2346, %v2346
      %v2396 = vpack.c.b16 %v2347, %v2347
      %v2397 = vpack.c.b16 %v2348, %v2348
      %v2398 = vpack.c.b16 %v2349, %v2349
      %v2399 = vpack.c.b16 %v2350, %v2350
      %v2400 = vpack.c.b16 %v2351, %v2351
      %v2401 = vpack.c.b16 %v2352, %v2352
      %v2402 = vpack.c.b16 %v2353, %v2353
      %v2403 = vpack.c.b16 %v2354, %v2354
      %v2404 = vpack.c.b16 %v2355, %v2355
      %v2405 = vpack.c.b16 %v2356, %v2356
      %v2406 = vpack.c.b16 %v2357, %v2357
      %v2407 = vpack.c.b16 %v2358, %v2358
      %v2408 = vpack.c.b16 %v2359, %v2359
      %v2409 = vpack.c.b16 %v2360, %v2360
      %v2410 = vpack.c.b16 %v2361, %v2361
      %v2411 = vpack.c.b16 %v2362, %v2362
      %v2412 = vpack.c.b16 %v2363, %v2363
      %v2413 = vpack.c.b16 %v2364, %v2364
      %v2414 = vpack.c.b16 %v2365, %v2365
      %v2415 = vpack.c.b16 %v2366, %v2366
      %v2416 = vpack.c.b16 %v2367, %v2367
      %v2417 = vpack.c.b16 %v2368, %v2368
      %v2418 = vunpack.c.l.b16 %v2369
      %v2419 = vunpack.c.l.b16 %v2370
      %v2420 = vunpack.c.l.b16 %v2371
      %v2421 = vunpack.c.l.b16 %v2372
      %v2422 = vunpack.c.l.b16 %v2373
      %v2423 = vunpack.c.l.b16 %v2374
      %v2424 = vunpack.c.l.b16 %v2375
      %v2425 = vunpack.c.l.b16 %v2376
      %v2426 = vunpack.c.l.b16 %v2377
      %v2427 = vunpack.c.l.b16 %v2378
      %v2428 = vunpack.c.l.b16 %v2379
      %v2429 = vunpack.c.l.b16 %v2380
      %v2430 = vunpack.c.l.b16 %v2381
      %v2431 = vunpack.c.l.b16 %v2382
      %v2432 = vunpack.c.l.b16 %v2383
      %v2433 = vunpack.c.l.b16 %v2384
      %v2434 = vunpack.c.l.b16 %v2385
      %v2435 = vunpack.c.l.b16 %v2386
      %v2436 = vunpack.c.l.b16 %v2387
      %v2437 = vunpack.c.l.b16 %v2388
      %v2438 = vunpack.c.l.b16 %v2389
      %v2439 = vunpack.c.l.b16 %v2390
      %v2440 = vunpack.c.l.b16 %v2391
      %v2441 = vunpack.c.l.b16 %v2392
      %v2442 = vunpack.c.l.b16 %v2393
      %v2443 = vunpack.c.l.b16 %v2394
      %v2444 = vunpack.c.l.b16 %v2395
      %v2445 = vunpack.c.l.b16 %v2396
      %v2446 = vunpack.c.l.b16 %v2397
      %v2447 = vunpack.c.l.b16 %v2398
      %v2448 = vunpack.c.l.b16 %v2399
      %v2449 = vunpack.c.l.b16 %v2400
      %v2450 = vunpack.c.l.b16 %v2401
      %v2451 = vunpack.c.l.b16 %v2402
      %v2452 = vunpack.c.l.b16 %v2403
      %v2453 = vunpack.c.l.b16 %v2404
      %v2454 = vunpack.c.l.b16 %v2405
      %v2455 = vunpack.c.l.b16 %v2406
      %v2456 = vunpack.c.l.b16 %v2407
      %v2457 = vunpack.c.l.b16 %v2408
      %v2458 = vunpack.c.l.b16 %v2409
      %v2459 = vunpack.c.l.b16 %v2410
      %v2460 = vunpack.c.l.b16 %v2411
      %v2461 = vunpack.c.l.b16 %v2412
      %v2462 = vunpack.c.l.b16 %v2413
      %v2463 = vunpack.c.l.b16 %v2414
      %v2464 = vunpack.c.l.b16 %v2415
      %v2465 = vunpack.c.l.b16 %v2416
      %v2466 = vunpack.c.l.b16 %v2417
      %v2467 = vrot.slane %v2419, 7
      %vm2468 = vcmask 1041409
      %v2469 = vsel %vm2468, %v2467, %v2418
      %v2470 = vrot.slane %v2420, 6
      %vm2471 = vcmask 1042434
      %v2472 = vsel %vm2471, %v2470, %v2469
      %v2473 = vrot.slane %v2421, 5
      %vm2474 = vcmask 1043459
      %v2475 = vsel %vm2474, %v2473, %v2472
      %v2476 = vrot.slane %v2422, 4
      %vm2477 = vcmask 1044484
      %v2478 = vsel %vm2477, %v2476, %v2475
      %v2479 = vrot.slane %v2423, 3
      %vm2480 = vcmask 1045509
      %v2481 = vsel %vm2480, %v2479, %v2478
      %v2482 = vrot.slane %v2424, 2
      %vm2483 = vcmask 1046534
      %v2484 = vsel %vm2483, %v2482, %v2481
      %v2485 = vrot.slane %v2426, 7
      %v2486 = vsel %vm2468, %v2485, %v2425
      %v2487 = vrot.slane %v2427, 6
      %v2488 = vsel %vm2471, %v2487, %v2486
      %v2489 = vrot.slane %v2428, 5
      %v2490 = vsel %vm2474, %v2489, %v2488
      %v2491 = vrot.slane %v2429, 4
      %v2492 = vsel %vm2477, %v2491, %v2490
      %v2493 = vrot.slane %v2430, 3
      %v2494 = vsel %vm2480, %v2493, %v2492
      %v2495 = vrot.slane %v2431, 2
      %v2496 = vsel %vm2483, %v2495, %v2494
      %v2497 = vrot.slane %v2433, 7
      %v2498 = vsel %vm2468, %v2497, %v2432
      %v2499 = vrot.slane %v2434, 6
      %v2500 = vsel %vm2471, %v2499, %v2498
      %v2501 = vrot.slane %v2435, 5
      %v2502 = vsel %vm2474, %v2501, %v2500
      %v2503 = vrot.slane %v2436, 4
      %v2504 = vsel %vm2477, %v2503, %v2502
      %v2505 = vrot.slane %v2437, 3
      %v2506 = vsel %vm2480, %v2505, %v2504
      %v2507 = vrot.slane %v2438, 2
      %v2508 = vsel %vm2483, %v2507, %v2506
      %v2509 = vrot.slane %v2440, 7
      %v2510 = vsel %vm2468, %v2509, %v2439
      %v2511 = vrot.slane %v2441, 6
      %v2512 = vsel %vm2471, %v2511, %v2510
      %v2513 = vrot.slane %v2442, 5
      %v2514 = vsel %vm2474, %v2513, %v2512
      %v2515 = vrot.slane %v2443, 4
      %v2516 = vsel %vm2477, %v2515, %v2514
      %v2517 = vrot.slane %v2444, 3
      %v2518 = vsel %vm2480, %v2517, %v2516
      %v2519 = vrot.slane %v2445, 2
      %v2520 = vsel %vm2483, %v2519, %v2518
      %v2521 = vrot.slane %v2447, 7
      %v2522 = vsel %vm2468, %v2521, %v2446
      %v2523 = vrot.slane %v2448, 6
      %v2524 = vsel %vm2471, %v2523, %v2522
      %v2525 = vrot.slane %v2449, 5
      %v2526 = vsel %vm2474, %v2525, %v2524
      %v2527 = vrot.slane %v2450, 4
      %v2528 = vsel %vm2477, %v2527, %v2526
      %v2529 = vrot.slane %v2451, 3
      %v2530 = vsel %vm2480, %v2529, %v2528
      %v2531 = vrot.slane %v2452, 2
      %v2532 = vsel %vm2483, %v2531, %v2530
      %v2533 = vrot.slane %v2454, 7
      %v2534 = vsel %vm2468, %v2533, %v2453
      %v2535 = vrot.slane %v2455, 6
      %v2536 = vsel %vm2471, %v2535, %v2534
      %v2537 = vrot.slane %v2456, 5
      %v2538 = vsel %vm2474, %v2537, %v2536
      %v2539 = vrot.slane %v2457, 4
      %v2540 = vsel %vm2477, %v2539, %v2538
      %v2541 = vrot.slane %v2458, 3
      %v2542 = vsel %vm2480, %v2541, %v2540
      %v2543 = vrot.slane %v2459, 2
      %v2544 = vsel %vm2483, %v2543, %v2542
      %v2545 = vrot.slane %v2461, 7
      %v2546 = vsel %vm2468, %v2545, %v2460
      %v2547 = vrot.slane %v2462, 6
      %v2548 = vsel %vm2471, %v2547, %v2546
      %v2549 = vrot.slane %v2463, 5
      %v2550 = vsel %vm2474, %v2549, %v2548
      %v2551 = vrot.slane %v2464, 4
      %v2552 = vsel %vm2477, %v2551, %v2550
      %v2553 = vrot.slane %v2465, 3
      %v2554 = vsel %vm2480, %v2553, %v2552
      %v2555 = vrot.slane %v2466, 2
      %v2556 = vsel %vm2483, %v2555, %v2554
      %v2557 = vpack.c.b16 %v2484, %v2484
      %v2558 = vpack.c.b16 %v2496, %v2496
      %v2559 = vpack.c.b16 %v2508, %v2508
      %v2560 = vpack.c.b16 %v2520, %v2520
      %v2561 = vpack.c.b16 %v2532, %v2532
      %v2562 = vpack.c.b16 %v2544, %v2544
      %v2563 = vpack.c.b16 %v2556, %v2556
      %vm2571 = vcmask 257024
      %vm2572 = vsmask.f32 3328
      %vm2573 = vmand %vm2571, %vm2572
      %v2574 = vld [vmem:[%s179] sm:$0xf]
      %v2575 = vsel %vm2573, %v2557, %v2574
      %2576 = vst [vmem:[%s179] sm:$0xf] %v2575
      %v2577 = vld [vmem:[%s179 + $0x4] sm:$0xf]
      %v2578 = vsel %vm2573, %v2558, %v2577
      %2579 = vst [vmem:[%s179 + $0x4] sm:$0xf] %v2578
      %v2580 = vld [vmem:[%s179 + $0x8] sm:$0xf]
      %v2581 = vsel %vm2573, %v2559, %v2580
      %2582 = vst [vmem:[%s179 + $0x8] sm:$0xf] %v2581
      %v2583 = vld [vmem:[%s179 + $0xc] sm:$0xf]
      %v2584 = vsel %vm2573, %v2560, %v2583
      %2585 = vst [vmem:[%s179 + $0xc] sm:$0xf] %v2584
      %v2586 = vld [vmem:[%s179 + $0x10] sm:$0xf]
      %v2587 = vsel %vm2573, %v2561, %v2586
      %2588 = vst [vmem:[%s179 + $0x10] sm:$0xf] %v2587
      %v2589 = vld [vmem:[%s179 + $0x14] sm:$0xf]
      %v2590 = vsel %vm2573, %v2562, %v2589
      %2591 = vst [vmem:[%s179 + $0x14] sm:$0xf] %v2590
      %v2592 = vld [vmem:[%s179 + $0x18] sm:$0xf]
      %v2593 = vsel %vm2573, %v2563, %v2592
      %2594 = vst [vmem:[%s179 + $0x18] sm:$0xf] %v2593
      %p2595 = scmp.lt.s32.totalorder %s42, 7
      %s2596 = scalar_select %p2595, %s42, 7
      %p2597 = scmp.lt.s32.totalorder %s41, 0
      %s2598 = scalar_select %p2597, %s41, 0
      %s2599 = smul.addr %s2596, 7
      %s2600 = sadd.s32 %s2598, %s2599
      %s2601 = smul.addr %s2600, 4
      %s2602 = scalar_lea.vmem %s6, %s2601
      // Predicated region
      $region25: #{resnet_head_forward.2} parent=23 // pred_check
        %p2603 = pneg %p99
      $region26: #{resnet_head_forward.2} parent=23 // pred_check_branch
        %2605 = sbr.rel (%p2603) target = $region28
      $region27: #{resnet_head_forward.2} parent=23 // pred_region
        _
      $region28: #{resnet_head_forward.2} parent=23 // pred_fallthru
        _
    $region24: #{resnet_head_forward.2} parent=5 // pred_fallthru
      _
    %p2606 = scmp.le.s32.totalorder 2, %s32
    // Predicated region
    $region29: #{resnet_head_forward.2} parent=5 // pred_check
      %p2607 = pneg %p2606
    $region30: #{resnet_head_forward.2} parent=5 // pred_check_branch
      %2609 = sbr.rel (%p2607) target = $region32
    $region31: #{resnet_head_forward.2} parent=5 // pred_region
      %s2610 = ssub.s32 %s32, 2
      // Predicated region
      $region33: #{resnet_head_forward.2} parent=31 // pred_check
        %p2611 = pneg %p105
      $region34: #{resnet_head_forward.2} parent=31 // pred_check_branch
        %2613 = sbr.rel (%p2611) target = $region36
      $region35: #{resnet_head_forward.2} parent=31 // pred_region
        %p2614 = scmp.lt.s32.totalorder %s44, 7
        %s2615 = scalar_select %p2614, %s44, 7
        %p2616 = scmp.lt.s32.totalorder %s43, 0
        %s2617 = scalar_select %p2616, %s43, 0
        %s2618 = smul.addr %s2615, 7
        %s2619 = sadd.s32 %s2617, %s2618
        %s2620 = smul.addr %s2619, 4
        %s2621 = scalar_lea.vmem %s6, %s2620
      $region36: #{resnet_head_forward.2} parent=31 // pred_fallthru
        _
    $region32: #{resnet_head_forward.2} parent=5 // pred_fallthru
      _
  $region6: #{resnet_head_forward.2} parent=0 // loop_footer
    %s36 = sadd.s32 1, %s32
  $region7: #{resnet_head_forward.2} parent=0 // loop_footer_branch
    %31 = sbr.rel target = $region3
  $region8: #{resnet_head_forward.2} parent=0 // loop_exit
    _

// kernel: resnet_head_forward.3
$region0: #{resnet_head_forward.3}
  #allocation0 [shape = 'u32[]', space=smem, size = 0x4, offset = 0x4, fixed_abs, tag = 'smem constant byte address 0x4 - core index']
  #allocation1 [shape = 'u32[144,128]{1,0:T(1,128)}', space=vmem, size = 0x12000, scoped, tag = 'internal scratch']
  #allocation2 [shape = 'f32[8,512]{1,0:T(8,128)}', space=vmem, size = 0x4000, scoped, tag = 'scratch operand']
  %s0 = inlined_call_operand.vmem [shape: bf16[8,1568], index: 0, kind: input, shape index: {}]
  %s1 = inlined_call_operand.hbm [shape: bf16[1568,512], index: 1, kind: input, shape index: {}]
  %s2 = inlined_call_operand.hbm [shape: f32[1,512], index: 2, kind: input, shape index: {}]
  %s3 = inlined_call_operand.hbm [shape: bf16[512,128], index: 3, kind: input, shape index: {}]
  %s4 = inlined_call_operand.hbm [shape: f32[1,128], index: 4, kind: input, shape index: {}]
  %s5 = inlined_call_operand.vmem [shape: f32[8,128], index: 5, kind: output, shape index: {}]
  %s6 = sld [smem:[#allocation0]]
  $region54: #{resnet_head_forward.3} parent=0
    _
  %s8 = ssub.s32 1, %s6
  %s9 = scalar_select 0, %s8, %s6
  $region1: #{resnet_head_forward.3} parent=0
    #allocation3 [shape = 'u8[1605632]{0}', space=vmem, size = 0x188000, scoped, tag = 'input window, operand 1, single buffered']
    #allocation4 [shape = 's32[1]{0}', space=sflag, size = 0x4, scoped, tag = 'scoped memory for resnet_head_forward.3']
    #allocation5 [shape = 'u8[2048]{0}', space=vmem, size = 0x800, scoped, tag = 'input window, operand 2, single buffered']
    #allocation6 [shape = 's32[1]{0}', space=sflag, size = 0x4, scoped, tag = 'scoped memory for resnet_head_forward.3']
    #allocation7 [shape = 'u8[131072]{0}', space=vmem, size = 0x20000, scoped, tag = 'input window, operand 3, single buffered']
    #allocation8 [shape = 'u8[512]{0}', space=vmem, size = 0x400, scoped, tag = 'input window, operand 4, single buffered']
    #allocation9 [shape = 's32[1]{0}', space=sflag, size = 0x4, scoped, tag = 'scoped memory for resnet_head_forward.3']
    %10 = vsyncpa [#allocation4], 0
    %11 = vsyncpa [#allocation6], 0
    %12 = vsyncpa [#allocation9], 0
    // Predicated region
    $region2: #{resnet_head_forward.3} parent=1 // pred_check
      _
    $region3: #{resnet_head_forward.3} parent=1 // pred_check_branch
      %14 = sbr.rel (0) target = $region5
    $region4: #{resnet_head_forward.3} parent=1 // pred_region
      _
    $region5: #{resnet_head_forward.3} parent=1 // pred_fallthru
      _
    // Predicated region
    $region6: #{resnet_head_forward.3} parent=1 // pred_check
      _
    $region7: #{resnet_head_forward.3} parent=1 // pred_check_branch
      %16 = sbr.rel (0) target = $region9
    $region8: #{resnet_head_forward.3} parent=1 // pred_region
      %s18 = ssub.s32 50176, 50176
      %19 = vsyncadd [#allocation4], %s18
      %s20 = sshll.u32 [#allocation3], 4
      %s21 = int_to_ptr.vmem [resolvable:$true] %s20
      %26 = dma.hbm_to_vmem [thread:$0]  %s1, 50176, %s21, [#allocation4], 256, 256, 16
    $region9: #{resnet_head_forward.3} parent=1 // pred_fallthru
      _
    // Predicated region
    $region10: #{resnet_head_forward.3} parent=1 // pred_check
      _
    $region11: #{resnet_head_forward.3} parent=1 // pred_check_branch
      %28 = sbr.rel (0) target = $region13
    $region12: #{resnet_head_forward.3} parent=1 // pred_region
      %s30 = ssub.s32 64, 64
      %31 = vsyncadd [#allocation6], %s30
      %s33 = sshll.u32 [#allocation5], 4
      %s34 = int_to_ptr.vmem [resolvable:$true] %s33
      %36 = dma.hbm_to_vmem [thread:$0]  %s2, 64, %s34, [#allocation6]
    $region13: #{resnet_head_forward.3} parent=1 // pred_fallthru
      _
    // Predicated region
    $region14: #{resnet_head_forward.3} parent=1 // pred_check
      _
    $region15: #{resnet_head_forward.3} parent=1 // pred_check_branch
      %38 = sbr.rel (0) target = $region17
    $region16: #{resnet_head_forward.3} parent=1 // pred_region
      %s40 = ssub.s32 4096, 4096
      %41 = vsyncadd [#allocation6], %s40
      %s42 = sshll.u32 [#allocation7], 4
      %s43 = int_to_ptr.vmem [resolvable:$true] %s42
      %48 = dma.hbm_to_vmem [thread:$0]  %s3, 4096, %s43, [#allocation6], 64, 64, 4
    $region17: #{resnet_head_forward.3} parent=1 // pred_fallthru
      _
    // Predicated region
    $region18: #{resnet_head_forward.3} parent=1 // pred_check
      _
    $region19: #{resnet_head_forward.3} parent=1 // pred_check_branch
      %50 = sbr.rel (0) target = $region21
    $region20: #{resnet_head_forward.3} parent=1 // pred_region
      %s52 = ssub.s32 16, 16
      %53 = vsyncadd [#allocation9], %s52
      %s55 = sshll.u32 [#allocation8], 4
      %s56 = int_to_ptr.vmem [resolvable:$true] %s55
      %58 = dma.hbm_to_vmem [thread:$0]  %s4, 16, %s56, [#allocation9]
    $region21: #{resnet_head_forward.3} parent=1 // pred_fallthru
      _
    // Predicated region
    $region22: #{resnet_head_forward.3} parent=1 // pred_check
      _
    $region23: #{resnet_head_forward.3} parent=1 // pred_check_branch
      %60 = sbr.rel (0) target = $region25
    $region24: #{resnet_head_forward.3} parent=1 // pred_region
      %61 = dma.done [#allocation4], 50176
    $region25: #{resnet_head_forward.3} parent=1 // pred_fallthru
      _
    // Predicated region
    $region26: #{resnet_head_forward.3} parent=1 // pred_check
      _
    $region27: #{resnet_head_forward.3} parent=1 // pred_check_branch
      %63 = sbr.rel (0) target = $region29
    $region28: #{resnet_head_forward.3} parent=1 // pred_region
      %64 = dma.done [#allocation6], 64
    $region29: #{resnet_head_forward.3} parent=1 // pred_fallthru
      _
    // Predicated region
    $region30: #{resnet_head_forward.3} parent=1 // pred_check
      _
    $region31: #{resnet_head_forward.3} parent=1 // pred_check_branch
      %66 = sbr.rel (0) target = $region33
    $region32: #{resnet_head_forward.3} parent=1 // pred_region
      %67 = dma.done [#allocation6], 4096
    $region33: #{resnet_head_forward.3} parent=1 // pred_fallthru
      _
    // Predicated region
    $region34: #{resnet_head_forward.3} parent=1 // pred_check
      _
    $region35: #{resnet_head_forward.3} parent=1 // pred_check_branch
      %69 = sbr.rel (0) target = $region37
    $region36: #{resnet_head_forward.3} parent=1 // pred_region
      %70 = dma.done [#allocation9], 16
    $region37: #{resnet_head_forward.3} parent=1 // pred_fallthru
      _
    %p72 = scmp.eq.s32.totalorder 0, 0
    // Predicated region
    $region38: #{resnet_head_forward.3} parent=1 // pred_check
      %p73 = pneg %p72
    $region39: #{resnet_head_forward.3} parent=1 // pred_check_branch
      %75 = sbr.rel (%p73) target = $region41
    $region40: #{resnet_head_forward.3} parent=1 // pred_region
      %76 = vst [vmem:[#allocation2] sm:$0xff] 0.0
      %77 = vst [vmem:[#allocation2 + $0x8] sm:$0xff] 0.0
      %78 = vst [vmem:[#allocation2 + $0x10] sm:$0xff] 0.0
      %79 = vst [vmem:[#allocation2 + $0x18] sm:$0xff] 0.0
    $region41: #{resnet_head_forward.3} parent=1 // pred_fallthru
      _
    %v80 = vld [vmem:[#allocation2] sm:$0xff]
    %v81 = vld [vmem:[#allocation2 + $0x8] sm:$0xff]
    %v82 = vld [vmem:[#allocation2 + $0x10] sm:$0xff]
    %v83 = vld [vmem:[#allocation2 + $0x18] sm:$0xff]
    %v84 = vld [vmem:[%s0] sm:$0xff]
    %v85 = vld [vmem:[%s0 + $0x8] sm:$0xff]
    %v86 = vld [vmem:[%s0 + $0x10] sm:$0xff]
    %v87 = vld [vmem:[%s0 + $0x18] sm:$0xff]
    %v88 = vld [vmem:[%s0 + $0x20] sm:$0xff]
    %v89 = vld [vmem:[%s0 + $0x28] sm:$0xff]
    %v90 = vld [vmem:[%s0 + $0x30] sm:$0xf]
    %v91 = vld [vmem:[#allocation3] sm:$0xff]
    %v92 = vld [vmem:[#allocation3 + $0x8] sm:$0xff]
    %v93 = vld [vmem:[#allocation3 + $0x10] sm:$0xff]
    %v94 = vld [vmem:[#allocation3 + $0x18] sm:$0xff]
    %v95 = vld [vmem:[#allocation3 + $0x20] sm:$0xff]
    %v96 = vld [vmem:[#allocation3 + $0x28] sm:$0xff]
    %v97 = vld [vmem:[#allocation3 + $0x30] sm:$0xff]
    %v98 = vld [vmem:[#allocation3 + $0x38] sm:$0xff]
    %v99 = vld [vmem:[#allocation3 + $0x40] sm:$0xff]
    %v100 = vld [vmem:[#allocation3 + $0x48] sm:$0xff]
    %v101 = vld [vmem:[#allocation3 + $0x50] sm:$0xff]
    %v102 = vld [vmem:[#allocation3 + $0x58] sm:$0xff]
    %v103 = vld [vmem:[#allocation3 + $0x60] sm:$0xff]
    %v104 = vld [vmem:[#allocation3 + $0x68] sm:$0xff]
    %v105 = vld [vmem:[#allocation3 + $0x70] sm:$0xff]
    %v106 = vld [vmem:[#allocation3 + $0x78] sm:$0xff]
    %v107 = vld [vmem:[#allocation3 + $0x80] sm:$0xff]
    %v108 = vld [vmem:[#allocation3 + $0x88] sm:$0xff]
    %v109 = vld [vmem:[#allocation3 + $0x90] sm:$0xff]
    %v110 = vld [vmem:[#allocation3 + $0x98] sm:$0xff]
    %v111 = vld [vmem:[#allocation3 + $0xa0] sm:$0xff]
    %v112 = vld [vmem:[#allocation3 + $0xa8] sm:$0xff]
    %v113 = vld [vmem:[#allocation3 + $0xb0] sm:$0xff]
    %v114 = vld [vmem:[#allocation3 + $0xb8] sm:$0xff]
    %v115 = vld [vmem:[#allocation3 + $0xc0] sm:$0xff]
    %v116 = vld [vmem:[#allocation3 + $0xc8] sm:$0xff]
    %v117 = vld [vmem:[#allocation3 + $0xd0] sm:$0xff]
    %v118 = vld [vmem:[#allocation3 + $0xd8] sm:$0xff]
    %v119 = vld [vmem:[#allocation3 + $0xe0] sm:$0xff]
    %v120 = vld [vmem:[#allocation3 + $0xe8] sm:$0xff]
    %v121 = vld [vmem:[#allocation3 + $0xf0] sm:$0xff]
    %v122 = vld [vmem:[#allocation3 + $0xf8] sm:$0xff]
    %v123 = vld [vmem:[#allocation3 + $0x100] sm:$0xff]
    %v124 = vld [vmem:[#allocation3 + $0x108] sm:$0xff]
    %v125 = vld [vmem:[#allocation3 + $0x110] sm:$0xff]
    %v126 = vld [vmem:[#allocation3 + $0x118] sm:$0xff]
    %v127 = vld [vmem:[#allocation3 + $0x120] sm:$0xff]
    %v128 = vld [vmem:[#allocation3 + $0x128] sm:$0xff]
    %v129 = vld [vmem:[#allocation3 + $0x130] sm:$0xff]
    %v130 = vld [vmem:[#allocation3 + $0x138] sm:$0xff]
    %v131 = vld [vmem:[#allocation3 + $0x140] sm:$0xff]
    %v132 = vld [vmem:[#allocation3 + $0x148] sm:$0xff]
    %v133 = vld [vmem:[#allocation3 + $0x150] sm:$0xff]
    %v134 = vld [vmem:[#allocation3 + $0x158] sm:$0xff]
    %v135 = vld [vmem:[#allocation3 + $0x160] sm:$0xff]
    %v136 = vld [vmem:[#allocation3 + $0x168] sm:$0xff]
    %v137 = vld [vmem:[#allocation3 + $0x170] sm:$0xff]
    %v138 = vld [vmem:[#allocation3 + $0x178] sm:$0xff]
    %v139 = vld [vmem:[#allocation3 + $0x180] sm:$0xff]
    %v140 = vld [vmem:[#allocation3 + $0x188] sm:$0xff]
    %v141 = vld [vmem:[#allocation3 + $0x190] sm:$0xff]
    %v142 = vld [vmem:[#allocation3 + $0x198] sm:$0xff]
    %v143 = vld [vmem:[#allocation3 + $0x1a0] sm:$0xff]
    %v144 = vld [vmem:[#allocation3 + $0x1a8] sm:$0xff]
    %v145 = vld [vmem:[#allocation3 + $0x1b0] sm:$0xff]
    %v146 = vld [vmem:[#allocation3 + $0x1b8] sm:$0xff]
    %v147 = vld [vmem:[#allocation3 + $0x1c0] sm:$0xff]
    %v148 = vld [vmem:[#allocation3 + $0x1c8] sm:$0xff]
    %v149 = vld [vmem:[#allocation3 + $0x1d0] sm:$0xff]
    %v150 = vld [vmem:[#allocation3 + $0x1d8] sm:$0xff]
    %v151 = vld [vmem:[#allocation3 + $0x1e0] sm:$0xff]
    %v152 = vld [vmem:[#allocation3 + $0x1e8] sm:$0xff]
    %v153 = vld [vmem:[#allocation3 + $0x1f0] sm:$0xff]
    %v154 = vld [vmem:[#allocation3 + $0x1f8] sm:$0xff]
    %v155 = vld [vmem:[#allocation3 + $0x200] sm:$0xff]
    %v156 = vld [vmem:[#allocation3 + $0x208] sm:$0xff]
    %v157 = vld [vmem:[#allocation3 + $0x210] sm:$0xff]
    %v158 = vld [vmem:[#allocation3 + $0x218] sm:$0xff]
    %v159 = vld [vmem:[#allocation3 + $0x220] sm:$0xff]
    %v160 = vld [vmem:[#allocation3 + $0x228] sm:$0xff]
    %v161 = vld [vmem:[#allocation3 + $0x230] sm:$0xff]
    %v162 = vld [vmem:[#allocation3 + $0x238] sm:$0xff]
    %v163 = vld [vmem:[#allocation3 + $0x240] sm:$0xff]
    %v164 = vld [vmem:[#allocation3 + $0x248] sm:$0xff]
    %v165 = vld [vmem:[#allocation3 + $0x250] sm:$0xff]
    %v166 = vld [vmem:[#allocation3 + $0x258] sm:$0xff]
    %v167 = vld [vmem:[#allocation3 + $0x260] sm:$0xff]
    %v168 = vld [vmem:[#allocation3 + $0x268] sm:$0xff]
    %v169 = vld [vmem:[#allocation3 + $0x270] sm:$0xff]
    %v170 = vld [vmem:[#allocation3 + $0x278] sm:$0xff]
    %v171 = vld [vmem:[#allocation3 + $0x280] sm:$0xff]
    %v172 = vld [vmem:[#allocation3 + $0x288] sm:$0xff]
    %v173 = vld [vmem:[#allocation3 + $0x290] sm:$0xff]
    %v174 = vld [vmem:[#allocation3 + $0x298] sm:$0xff]
    %v175 = vld [vmem:[#allocation3 + $0x2a0] sm:$0xff]
    %v176 = vld [vmem:[#allocation3 + $0x2a8] sm:$0xff]
    %v177 = vld [vmem:[#allocation3 + $0x2b0] sm:$0xff]
    %v178 = vld [vmem:[#allocation3 + $0x2b8] sm:$0xff]
    %v179 = vld [vmem:[#allocation3 + $0x2c0] sm:$0xff]
    %v180 = vld [vmem:[#allocation3 + $0x2c8] sm:$0xff]
    %v181 = vld [vmem:[#allocation3 + $0x2d0] sm:$0xff]
    %v182 = vld [vmem:[#allocation3 + $0x2d8] sm:$0xff]
    %v183 = vld [vmem:[#allocation3 + $0x2e0] sm:$0xff]
    %v184 = vld [vmem:[#allocation3 + $0x2e8] sm:$0xff]
    %v185 = vld [vmem:[#allocation3 + $0x2f0] sm:$0xff]
    %v186 = vld [vmem:[#allocation3 + $0x2f8] sm:$0xff]
    %v187 = vld [vmem:[#allocation3 + $0x300] sm:$0xff]
    %v188 = vld [vmem:[#allocation3 + $0x308] sm:$0xff]
    %v189 = vld [vmem:[#allocation3 + $0x310] sm:$0xff]
    %v190 = vld [vmem:[#allocation3 + $0x318] sm:$0xff]
    %v191 = vld [vmem:[#allocation3 + $0x320] sm:$0xff]
    %v192 = vld [vmem:[#allocation3 + $0x328] sm:$0xff]
    %v193 = vld [vmem:[#allocation3 + $0x330] sm:$0xff]
    %v194 = vld [vmem:[#allocation3 + $0x338] sm:$0xff]
    %v195 = vld [vmem:[#allocation3 + $0x340] sm:$0xff]
    %v196 = vld [vmem:[#allocation3 + $0x348] sm:$0xff]
    %v197 = vld [vmem:[#allocation3 + $0x350] sm:$0xff]
    %v198 = vld [vmem:[#allocation3 + $0x358] sm:$0xff]
    %v199 = vld [vmem:[#allocation3 + $0x360] sm:$0xff]
    %v200 = vld [vmem:[#allocation3 + $0x368] sm:$0xff]
    %v201 = vld [vmem:[#allocation3 + $0x370] sm:$0xff]
    %v202 = vld [vmem:[#allocation3 + $0x378] sm:$0xff]
    %v203 = vld [vmem:[#allocation3 + $0x380] sm:$0xff]
    %v204 = vld [vmem:[#allocation3 + $0x388] sm:$0xff]
    %v205 = vld [vmem:[#allocation3 + $0x390] sm:$0xff]
    %v206 = vld [vmem:[#allocation3 + $0x398] sm:$0xff]
    %v207 = vld [vmem:[#allocation3 + $0x3a0] sm:$0xff]
    %v208 = vld [vmem:[#allocation3 + $0x3a8] sm:$0xff]
    %v209 = vld [vmem:[#allocation3 + $0x3b0] sm:$0xff]
    %v210 = vld [vmem:[#allocation3 + $0x3b8] sm:$0xff]
    %v211 = vld [vmem:[#allocation3 + $0x3c0] sm:$0xff]
    %v212 = vld [vmem:[#allocation3 + $0x3c8] sm:$0xff]
    %v213 = vld [vmem:[#allocation3 + $0x3d0] sm:$0xff]
    %v214 = vld [vmem:[#allocation3 + $0x3d8] sm:$0xff]
    %v215 = vld [vmem:[#allocation3 + $0x3e0] sm:$0xff]
    %v216 = vld [vmem:[#allocation3 + $0x3e8] sm:$0xff]
    %v217 = vld [vmem:[#allocation3 + $0x3f0] sm:$0xff]
    %v218 = vld [vmem:[#allocation3 + $0x3f8] sm:$0xff]
    %v219 = vld [vmem:[#allocation3 + $0x400] sm:$0xff]
    %v220 = vld [vmem:[#allocation3 + $0x408] sm:$0xff]
    %v221 = vld [vmem:[#allocation3 + $0x410] sm:$0xff]
    %v222 = vld [vmem:[#allocation3 + $0x418] sm:$0xff]
    %v223 = vld [vmem:[#allocation3 + $0x420] sm:$0xff]
    %v224 = vld [vmem:[#allocation3 + $0x428] sm:$0xff]
    %v225 = vld [vmem:[#allocation3 + $0x430] sm:$0xff]
    %v226 = vld [vmem:[#allocation3 + $0x438] sm:$0xff]
    %v227 = vld [vmem:[#allocation3 + $0x440] sm:$0xff]
    %v228 = vld [vmem:[#allocation3 + $0x448] sm:$0xff]
    %v229 = vld [vmem:[#allocation3 + $0x450] sm:$0xff]
    %v230 = vld [vmem:[#allocation3 + $0x458] sm:$0xff]
    %v231 = vld [vmem:[#allocation3 + $0x460] sm:$0xff]
    %v232 = vld [vmem:[#allocation3 + $0x468] sm:$0xff]
    %v233 = vld [vmem:[#allocation3 + $0x470] sm:$0xff]
    %v234 = vld [vmem:[#allocation3 + $0x478] sm:$0xff]
    %v235 = vld [vmem:[#allocation3 + $0x480] sm:$0xff]
    %v236 = vld [vmem:[#allocation3 + $0x488] sm:$0xff]
    %v237 = vld [vmem:[#allocation3 + $0x490] sm:$0xff]
    %v238 = vld [vmem:[#allocation3 + $0x498] sm:$0xff]
    %v239 = vld [vmem:[#allocation3 + $0x4a0] sm:$0xff]
    %v240 = vld [vmem:[#allocation3 + $0x4a8] sm:$0xff]
    %v241 = vld [vmem:[#allocation3 + $0x4b0] sm:$0xff]
    %v242 = vld [vmem:[#allocation3 + $0x4b8] sm:$0xff]
    %v243 = vld [vmem:[#allocation3 + $0x4c0] sm:$0xff]
    %v244 = vld [vmem:[#allocation3 + $0x4c8] sm:$0xff]
    %v245 = vld [vmem:[#allocation3 + $0x4d0] sm:$0xff]
    %v246 = vld [vmem:[#allocation3 + $0x4d8] sm:$0xff]
    %v247 = vld [vmem:[#allocation3 + $0x4e0] sm:$0xff]
    %v248 = vld [vmem:[#allocation3 + $0x4e8] sm:$0xff]
    %v249 = vld [vmem:[#allocation3 + $0x4f0] sm:$0xff]
    %v250 = vld [vmem:[#allocation3 + $0x4f8] sm:$0xff]
    %v251 = vld [vmem:[#allocation3 + $0x500] sm:$0xff]
    %v252 = vld [vmem:[#allocation3 + $0x508] sm:$0xff]
    %v253 = vld [vmem:[#allocation3 + $0x510] sm:$0xff]
    %v254 = vld [vmem:[#allocation3 + $0x518] sm:$0xff]
    %v255 = vld [vmem:[#allocation3 + $0x520] sm:$0xff]
    %v256 = vld [vmem:[#allocation3 + $0x528] sm:$0xff]
    %v257 = vld [vmem:[#allocation3 + $0x530] sm:$0xff]
    %v258 = vld [vmem:[#allocation3 + $0x538] sm:$0xff]
    %v259 = vld [vmem:[#allocation3 + $0x540] sm:$0xff]
    %v260 = vld [vmem:[#allocation3 + $0x548] sm:$0xff]
    %v261 = vld [vmem:[#allocation3 + $0x550] sm:$0xff]
    %v262 = vld [vmem:[#allocation3 + $0x558] sm:$0xff]
    %v263 = vld [vmem:[#allocation3 + $0x560] sm:$0xff]
    %v264 = vld [vmem:[#allocation3 + $0x568] sm:$0xff]
    %v265 = vld [vmem:[#allocation3 + $0x570] sm:$0xff]
    %v266 = vld [vmem:[#allocation3 + $0x578] sm:$0xff]
    %v267 = vld [vmem:[#allocation3 + $0x580] sm:$0xff]
    %v268 = vld [vmem:[#allocation3 + $0x588] sm:$0xff]
    %v269 = vld [vmem:[#allocation3 + $0x590] sm:$0xff]
    %v270 = vld [vmem:[#allocation3 + $0x598] sm:$0xff]
    %v271 = vld [vmem:[#allocation3 + $0x5a0] sm:$0xff]
    %v272 = vld [vmem:[#allocation3 + $0x5a8] sm:$0xff]
    %v273 = vld [vmem:[#allocation3 + $0x5b0] sm:$0xff]
    %v274 = vld [vmem:[#allocation3 + $0x5b8] sm:$0xff]
    %v275 = vld [vmem:[#allocation3 + $0x5c0] sm:$0xff]
    %v276 = vld [vmem:[#allocation3 + $0x5c8] sm:$0xff]
    %v277 = vld [vmem:[#allocation3 + $0x5d0] sm:$0xff]
    %v278 = vld [vmem:[#allocation3 + $0x5d8] sm:$0xff]
    %v279 = vld [vmem:[#allocation3 + $0x5e0] sm:$0xff]
    %v280 = vld [vmem:[#allocation3 + $0x5e8] sm:$0xff]
    %v281 = vld [vmem:[#allocation3 + $0x5f0] sm:$0xff]
    %v282 = vld [vmem:[#allocation3 + $0x5f8] sm:$0xff]
    %v283 = vld [vmem:[#allocation3 + $0x600] sm:$0xff]
    %v284 = vld [vmem:[#allocation3 + $0x608] sm:$0xff]
    %v285 = vld [vmem:[#allocation3 + $0x610] sm:$0xff]
    %v286 = vld [vmem:[#allocation3 + $0x618] sm:$0xff]
    %v287 = vld [vmem:[#allocation3 + $0x620] sm:$0xff]
    %v288 = vld [vmem:[#allocation3 + $0x628] sm:$0xff]
    %v289 = vld [vmem:[#allocation3 + $0x630] sm:$0xff]
    %v290 = vld [vmem:[#allocation3 + $0x638] sm:$0xff]
    %v291 = vld [vmem:[#allocation3 + $0x640] sm:$0xff]
    %v292 = vld [vmem:[#allocation3 + $0x648] sm:$0xff]
    %v293 = vld [vmem:[#allocation3 + $0x650] sm:$0xff]
    %v294 = vld [vmem:[#allocation3 + $0x658] sm:$0xff]
    %v295 = vld [vmem:[#allocation3 + $0x660] sm:$0xff]
    %v296 = vld [vmem:[#allocation3 + $0x668] sm:$0xff]
    %v297 = vld [vmem:[#allocation3 + $0x670] sm:$0xff]
    %v298 = vld [vmem:[#allocation3 + $0x678] sm:$0xff]
    %v299 = vld [vmem:[#allocation3 + $0x680] sm:$0xff]
    %v300 = vld [vmem:[#allocation3 + $0x688] sm:$0xff]
    %v301 = vld [vmem:[#allocation3 + $0x690] sm:$0xff]
    %v302 = vld [vmem:[#allocation3 + $0x698] sm:$0xff]
    %v303 = vld [vmem:[#allocation3 + $0x6a0] sm:$0xff]
    %v304 = vld [vmem:[#allocation3 + $0x6a8] sm:$0xff]
    %v305 = vld [vmem:[#allocation3 + $0x6b0] sm:$0xff]
    %v306 = vld [vmem:[#allocation3 + $0x6b8] sm:$0xff]
    %v307 = vld [vmem:[#allocation3 + $0x6c0] sm:$0xff]
    %v308 = vld [vmem:[#allocation3 + $0x6c8] sm:$0xff]
    %v309 = vld [vmem:[#allocation3 + $0x6d0] sm:$0xff]
    %v310 = vld [vmem:[#allocation3 + $0x6d8] sm:$0xff]
    %v311 = vld [vmem:[#allocation3 + $0x6e0] sm:$0xff]
    %v312 = vld [vmem:[#allocation3 + $0x6e8] sm:$0xff]
    %v313 = vld [vmem:[#allocation3 + $0x6f0] sm:$0xff]
    %v314 = vld [vmem:[#allocation3 + $0x6f8] sm:$0xff]
    %v315 = vld [vmem:[#allocation3 + $0x700] sm:$0xff]
    %v316 = vld [vmem:[#allocation3 + $0x708] sm:$0xff]
    %v317 = vld [vmem:[#allocation3 + $0x710] sm:$0xff]
    %v318 = vld [vmem:[#allocation3 + $0x718] sm:$0xff]
    %v319 = vld [vmem:[#allocation3 + $0x720] sm:$0xff]
    %v320 = vld [vmem:[#allocation3 + $0x728] sm:$0xff]
    %v321 = vld [vmem:[#allocation3 + $0x730] sm:$0xff]
    %v322 = vld [vmem:[#allocation3 + $0x738] sm:$0xff]
    %v323 = vld [vmem:[#allocation3 + $0x740] sm:$0xff]
    %v324 = vld [vmem:[#allocation3 + $0x748] sm:$0xff]
    %v325 = vld [vmem:[#allocation3 + $0x750] sm:$0xff]
    %v326 = vld [vmem:[#allocation3 + $0x758] sm:$0xff]
    %v327 = vld [vmem:[#allocation3 + $0x760] sm:$0xff]
    %v328 = vld [vmem:[#allocation3 + $0x768] sm:$0xff]
    %v329 = vld [vmem:[#allocation3 + $0x770] sm:$0xff]
    %v330 = vld [vmem:[#allocation3 + $0x778] sm:$0xff]
    %v331 = vld [vmem:[#allocation3 + $0x780] sm:$0xff]
    %v332 = vld [vmem:[#allocation3 + $0x788] sm:$0xff]
    %v333 = vld [vmem:[#allocation3 + $0x790] sm:$0xff]
    %v334 = vld [vmem:[#allocation3 + $0x798] sm:$0xff]
    %v335 = vld [vmem:[#allocation3 + $0x7a0] sm:$0xff]
    %v336 = vld [vmem:[#allocation3 + $0x7a8] sm:$0xff]
    %v337 = vld [vmem:[#allocation3 + $0x7b0] sm:$0xff]
    %v338 = vld [vmem:[#allocation3 + $0x7b8] sm:$0xff]
    %v339 = vld [vmem:[#allocation3 + $0x7c0] sm:$0xff]
    %v340 = vld [vmem:[#allocation3 + $0x7c8] sm:$0xff]
    %v341 = vld [vmem:[#allocation3 + $0x7d0] sm:$0xff]
    %v342 = vld [vmem:[#allocation3 + $0x7d8] sm:$0xff]
    %v343 = vld [vmem:[#allocation3 + $0x7e0] sm:$0xff]
    %v344 = vld [vmem:[#allocation3 + $0x7e8] sm:$0xff]
    %v345 = vld [vmem:[#allocation3 + $0x7f0] sm:$0xff]
    %v346 = vld [vmem:[#allocation3 + $0x7f8] sm:$0xff]
    %v347 = vld [vmem:[#allocation3 + $0x800] sm:$0xff]
    %v348 = vld [vmem:[#allocation3 + $0x808] sm:$0xff]
    %v349 = vld [vmem:[#allocation3 + $0x810] sm:$0xff]
    %v350 = vld [vmem:[#allocation3 + $0x818] sm:$0xff]
    %v351 = vld [vmem:[#allocation3 + $0x820] sm:$0xff]
    %v352 = vld [vmem:[#allocation3 + $0x828] sm:$0xff]
    %v353 = vld [vmem:[#allocation3 + $0x830] sm:$0xff]
    %v354 = vld [vmem:[#allocation3 + $0x838] sm:$0xff]
    %v355 = vld [vmem:[#allocation3 + $0x840] sm:$0xff]
    %v356 = vld [vmem:[#allocation3 + $0x848] sm:$0xff]
    %v357 = vld [vmem:[#allocation3 + $0x850] sm:$0xff]
    %v358 = vld [vmem:[#allocation3 + $0x858] sm:$0xff]
    %v359 = vld [vmem:[#allocation3 + $0x860] sm:$0xff]
    %v360 = vld [vmem:[#allocation3 + $0x868] sm:$0xff]
    %v361 = vld [vmem:[#allocation3 + $0x870] sm:$0xff]
    %v362 = vld [vmem:[#allocation3 + $0x878] sm:$0xff]
    %v363 = vld [vmem:[#allocation3 + $0x880] sm:$0xff]
    %v364 = vld [vmem:[#allocation3 + $0x888] sm:$0xff]
    %v365 = vld [vmem:[#allocation3 + $0x890] sm:$0xff]
    %v366 = vld [vmem:[#allocation3 + $0x898] sm:$0xff]
    %v367 = vld [vmem:[#allocation3 + $0x8a0] sm:$0xff]
    %v368 = vld [vmem:[#allocation3 + $0x8a8] sm:$0xff]
    %v369 = vld [vmem:[#allocation3 + $0x8b0] sm:$0xff]
    %v370 = vld [vmem:[#allocation3 + $0x8b8] sm:$0xff]
    %v371 = vld [vmem:[#allocation3 + $0x8c0] sm:$0xff]
    %v372 = vld [vmem:[#allocation3 + $0x8c8] sm:$0xff]
    %v373 = vld [vmem:[#allocation3 + $0x8d0] sm:$0xff]
    %v374 = vld [vmem:[#allocation3 + $0x8d8] sm:$0xff]
    %v375 = vld [vmem:[#allocation3 + $0x8e0] sm:$0xff]
    %v376 = vld [vmem:[#allocation3 + $0x8e8] sm:$0xff]
    %v377 = vld [vmem:[#allocation3 + $0x8f0] sm:$0xff]
    %v378 = vld [vmem:[#allocation3 + $0x8f8] sm:$0xff]
    %v379 = vld [vmem:[#allocation3 + $0x900] sm:$0xff]
    %v380 = vld [vmem:[#allocation3 + $0x908] sm:$0xff]
    %v381 = vld [vmem:[#allocation3 + $0x910] sm:$0xff]
    %v382 = vld [vmem:[#allocation3 + $0x918] sm:$0xff]
    %v383 = vld [vmem:[#allocation3 + $0x920] sm:$0xff]
    %v384 = vld [vmem:[#allocation3 + $0x928] sm:$0xff]
    %v385 = vld [vmem:[#allocation3 + $0x930] sm:$0xff]
    %v386 = vld [vmem:[#allocation3 + $0x938] sm:$0xff]
    %v387 = vld [vmem:[#allocation3 + $0x940] sm:$0xff]
    %v388 = vld [vmem:[#allocation3 + $0x948] sm:$0xff]
    %v389 = vld [vmem:[#allocation3 + $0x950] sm:$0xff]
    %v390 = vld [vmem:[#allocation3 + $0x958] sm:$0xff]
    %v391 = vld [vmem:[#allocation3 + $0x960] sm:$0xff]
    %v392 = vld [vmem:[#allocation3 + $0x968] sm:$0xff]
    %v393 = vld [vmem:[#allocation3 + $0x970] sm:$0xff]
    %v394 = vld [vmem:[#allocation3 + $0x978] sm:$0xff]
    %v395 = vld [vmem:[#allocation3 + $0x980] sm:$0xff]
    %v396 = vld [vmem:[#allocation3 + $0x988] sm:$0xff]
    %v397 = vld [vmem:[#allocation3 + $0x990] sm:$0xff]
    %v398 = vld [vmem:[#allocation3 + $0x998] sm:$0xff]
    %v399 = vld [vmem:[#allocation3 + $0x9a0] sm:$0xff]
    %v400 = vld [vmem:[#allocation3 + $0x9a8] sm:$0xff]
    %v401 = vld [vmem:[#allocation3 + $0x9b0] sm:$0xff]
    %v402 = vld [vmem:[#allocation3 + $0x9b8] sm:$0xff]
    %v403 = vld [vmem:[#allocation3 + $0x9c0] sm:$0xff]
    %v404 = vld [vmem:[#allocation3 + $0x9c8] sm:$0xff]
    %v405 = vld [vmem:[#allocation3 + $0x9d0] sm:$0xff]
    %v406 = vld [vmem:[#allocation3 + $0x9d8] sm:$0xff]
    %v407 = vld [vmem:[#allocation3 + $0x9e0] sm:$0xff]
    %v408 = vld [vmem:[#allocation3 + $0x9e8] sm:$0xff]
    %v409 = vld [vmem:[#allocation3 + $0x9f0] sm:$0xff]
    %v410 = vld [vmem:[#allocation3 + $0x9f8] sm:$0xff]
    %v411 = vld [vmem:[#allocation3 + $0xa00] sm:$0xff]
    %v412 = vld [vmem:[#allocation3 + $0xa08] sm:$0xff]
    %v413 = vld [vmem:[#allocation3 + $0xa10] sm:$0xff]
    %v414 = vld [vmem:[#allocation3 + $0xa18] sm:$0xff]
    %v415 = vld [vmem:[#allocation3 + $0xa20] sm:$0xff]
    %v416 = vld [vmem:[#allocation3 + $0xa28] sm:$0xff]
    %v417 = vld [vmem:[#allocation3 + $0xa30] sm:$0xff]
    %v418 = vld [vmem:[#allocation3 + $0xa38] sm:$0xff]
    %v419 = vld [vmem:[#allocation3 + $0xa40] sm:$0xff]
    %v420 = vld [vmem:[#allocation3 + $0xa48] sm:$0xff]
    %v421 = vld [vmem:[#allocation3 + $0xa50] sm:$0xff]
    %v422 = vld [vmem:[#allocation3 + $0xa58] sm:$0xff]
    %v423 = vld [vmem:[#allocation3 + $0xa60] sm:$0xff]
    %v424 = vld [vmem:[#allocation3 + $0xa68] sm:$0xff]
    %v425 = vld [vmem:[#allocation3 + $0xa70] sm:$0xff]
    %v426 = vld [vmem:[#allocation3 + $0xa78] sm:$0xff]
    %v427 = vld [vmem:[#allocation3 + $0xa80] sm:$0xff]
    %v428 = vld [vmem:[#allocation3 + $0xa88] sm:$0xff]
    %v429 = vld [vmem:[#allocation3 + $0xa90] sm:$0xff]
    %v430 = vld [vmem:[#allocation3 + $0xa98] sm:$0xff]
    %v431 = vld [vmem:[#allocation3 + $0xaa0] sm:$0xff]
    %v432 = vld [vmem:[#allocation3 + $0xaa8] sm:$0xff]
    %v433 = vld [vmem:[#allocation3 + $0xab0] sm:$0xff]
    %v434 = vld [vmem:[#allocation3 + $0xab8] sm:$0xff]
    %v435 = vld [vmem:[#allocation3 + $0xac0] sm:$0xff]
    %v436 = vld [vmem:[#allocation3 + $0xac8] sm:$0xff]
    %v437 = vld [vmem:[#allocation3 + $0xad0] sm:$0xff]
    %v438 = vld [vmem:[#allocation3 + $0xad8] sm:$0xff]
    %v439 = vld [vmem:[#allocation3 + $0xae0] sm:$0xff]
    %v440 = vld [vmem:[#allocation3 + $0xae8] sm:$0xff]
    %v441 = vld [vmem:[#allocation3 + $0xaf0] sm:$0xff]
    %v442 = vld [vmem:[#allocation3 + $0xaf8] sm:$0xff]
    %v443 = vld [vmem:[#allocation3 + $0xb00] sm:$0xff]
    %v444 = vld [vmem:[#allocation3 + $0xb08] sm:$0xff]
    %v445 = vld [vmem:[#allocation3 + $0xb10] sm:$0xff]
    %v446 = vld [vmem:[#allocation3 + $0xb18] sm:$0xff]
    %v447 = vld [vmem:[#allocation3 + $0xb20] sm:$0xff]
    %v448 = vld [vmem:[#allocation3 + $0xb28] sm:$0xff]
    %v449 = vld [vmem:[#allocation3 + $0xb30] sm:$0xff]
    %v450 = vld [vmem:[#allocation3 + $0xb38] sm:$0xff]
    %v451 = vld [vmem:[#allocation3 + $0xb40] sm:$0xff]
    %v452 = vld [vmem:[#allocation3 + $0xb48] sm:$0xff]
    %v453 = vld [vmem:[#allocation3 + $0xb50] sm:$0xff]
    %v454 = vld [vmem:[#allocation3 + $0xb58] sm:$0xff]
    %v455 = vld [vmem:[#allocation3 + $0xb60] sm:$0xff]
    %v456 = vld [vmem:[#allocation3 + $0xb68] sm:$0xff]
    %v457 = vld [vmem:[#allocation3 + $0xb70] sm:$0xff]
    %v458 = vld [vmem:[#allocation3 + $0xb78] sm:$0xff]
    %v459 = vld [vmem:[#allocation3 + $0xb80] sm:$0xff]
    %v460 = vld [vmem:[#allocation3 + $0xb88] sm:$0xff]
    %v461 = vld [vmem:[#allocation3 + $0xb90] sm:$0xff]
    %v462 = vld [vmem:[#allocation3 + $0xb98] sm:$0xff]
    %v463 = vld [vmem:[#allocation3 + $0xba0] sm:$0xff]
    %v464 = vld [vmem:[#allocation3 + $0xba8] sm:$0xff]
    %v465 = vld [vmem:[#allocation3 + $0xbb0] sm:$0xff]
    %v466 = vld [vmem:[#allocation3 + $0xbb8] sm:$0xff]
    %v467 = vld [vmem:[#allocation3 + $0xbc0] sm:$0xff]
    %v468 = vld [vmem:[#allocation3 + $0xbc8] sm:$0xff]
    %v469 = vld [vmem:[#allocation3 + $0xbd0] sm:$0xff]
    %v470 = vld [vmem:[#allocation3 + $0xbd8] sm:$0xff]
    %v471 = vld [vmem:[#allocation3 + $0xbe0] sm:$0xff]
    %v472 = vld [vmem:[#allocation3 + $0xbe8] sm:$0xff]
    %v473 = vld [vmem:[#allocation3 + $0xbf0] sm:$0xff]
    %v474 = vld [vmem:[#allocation3 + $0xbf8] sm:$0xff]
    %v475 = vld [vmem:[#allocation3 + $0xc00] sm:$0xff]
    %v476 = vld [vmem:[#allocation3 + $0xc08] sm:$0xff]
    %v477 = vld [vmem:[#allocation3 + $0xc10] sm:$0xff]
    %v478 = vld [vmem:[#allocation3 + $0xc18] sm:$0xff]
    %v479 = vld [vmem:[#allocation3 + $0xc20] sm:$0xff]
    %v480 = vld [vmem:[#allocation3 + $0xc28] sm:$0xff]
    %v481 = vld [vmem:[#allocation3 + $0xc30] sm:$0xff]
    %v482 = vld [vmem:[#allocation3 + $0xc38] sm:$0xff]
    %v490 = vunpack.c.l.b16 %v84
    %v491 = vunpack.c.h.b16 %v84
    %v492 = vunpack.c.l.b16 %v85
    %v493 = vunpack.c.h.b16 %v85
    %v494 = vunpack.c.l.b16 %v86
    %v495 = vunpack.c.h.b16 %v86
    %v496 = vunpack.c.l.b16 %v87
    %v497 = vunpack.c.h.b16 %v87
    %v498 = vunpack.c.l.b16 %v88
    %v499 = vunpack.c.h.b16 %v88
    %v500 = vunpack.c.l.b16 %v89
    %v501 = vunpack.c.h.b16 %v89
    %v502 = vunpack.c.l.b16 %v90
    %v503 = vpack.c.b16 %v490, %v490
    %v504 = vpack.c.b16 %v491, %v491
    %v505 = vpack.c.b16 %v492, %v492
    %v506 = vpack.c.b16 %v493, %v493
    %v507 = vpack.c.b16 %v494, %v494
    %v508 = vpack.c.b16 %v495, %v495
    %v509 = vpack.c.b16 %v496, %v496
    %v510 = vpack.c.b16 %v497, %v497
    %v511 = vpack.c.b16 %v498, %v498
    %v512 = vpack.c.b16 %v499, %v499
    %v513 = vpack.c.b16 %v500, %v500
    %v514 = vpack.c.b16 %v501, %v501
    %v515 = vpack.c.b16 %v502, %v502
    %v920 = vunpack.c.l.b16 %v91
    %v921 = vunpack.c.h.b16 %v91
    %v922 = vunpack.c.l.b16 %v92
    %v923 = vunpack.c.h.b16 %v92
    %v924 = vunpack.c.l.b16 %v93
    %v925 = vunpack.c.h.b16 %v93
    %v926 = vunpack.c.l.b16 %v94
    %v927 = vunpack.c.h.b16 %v94
    %v928 = vunpack.c.l.b16 %v95
    %v929 = vunpack.c.h.b16 %v95
    %v930 = vunpack.c.l.b16 %v96
    %v931 = vunpack.c.h.b16 %v96
    %v932 = vunpack.c.l.b16 %v97
    %v933 = vunpack.c.h.b16 %v97
    %v934 = vunpack.c.l.b16 %v98
    %v935 = vunpack.c.h.b16 %v98
    %v936 = vunpack.c.l.b16 %v99
    %v937 = vunpack.c.h.b16 %v99
    %v938 = vunpack.c.l.b16 %v100
    %v939 = vunpack.c.h.b16 %v100
    %v940 = vunpack.c.l.b16 %v101
    %v941 = vunpack.c.h.b16 %v101
    %v942 = vunpack.c.l.b16 %v102
    %v943 = vunpack.c.h.b16 %v102
    %v944 = vunpack.c.l.b16 %v103
    %v945 = vunpack.c.h.b16 %v103
    %v946 = vunpack.c.l.b16 %v104
    %v947 = vunpack.c.h.b16 %v104
    %v948 = vunpack.c.l.b16 %v105
    %v949 = vunpack.c.h.b16 %v105
    %v950 = vunpack.c.l.b16 %v106
    %v951 = vunpack.c.h.b16 %v106
    %v952 = vunpack.c.l.b16 %v107
    %v953 = vunpack.c.h.b16 %v107
    %v954 = vunpack.c.l.b16 %v108
    %v955 = vunpack.c.h.b16 %v108
    %v956 = vunpack.c.l.b16 %v109
    %v957 = vunpack.c.h.b16 %v109
    %v958 = vunpack.c.l.b16 %v110
    %v959 = vunpack.c.h.b16 %v110
    %v960 = vunpack.c.l.b16 %v111
    %v961 = vunpack.c.h.b16 %v111
    %v962 = vunpack.c.l.b16 %v112
    %v963 = vunpack.c.h.b16 %v112
    %v964 = vunpack.c.l.b16 %v113
    %v965 = vunpack.c.h.b16 %v113
    %v966 = vunpack.c.l.b16 %v114
    %v967 = vunpack.c.h.b16 %v114
    %v968 = vunpack.c.l.b16 %v115
    %v969 = vunpack.c.h.b16 %v115
    %v970 = vunpack.c.l.b16 %v116
    %v971 = vunpack.c.h.b16 %v116
    %v972 = vunpack.c.l.b16 %v117
    %v973 = vunpack.c.h.b16 %v117
    %v974 = vunpack.c.l.b16 %v118
    %v975 = vunpack.c.h.b16 %v118
    %v976 = vunpack.c.l.b16 %v119
    %v977 = vunpack.c.h.b16 %v119
    %v978 = vunpack.c.l.b16 %v120
    %v979 = vunpack.c.h.b16 %v120
    %v980 = vunpack.c.l.b16 %v121
    %v981 = vunpack.c.h.b16 %v121
    %v982 = vunpack.c.l.b16 %v122
    %v983 = vunpack.c.h.b16 %v122
    %v984 = vunpack.c.l.b16 %v123
    %v985 = vunpack.c.h.b16 %v123
    %v986 = vunpack.c.l.b16 %v124
    %v987 = vunpack.c.h.b16 %v124
    %v988 = vunpack.c.l.b16 %v125
    %v989 = vunpack.c.h.b16 %v125
    %v990 = vunpack.c.l.b16 %v126
    %v991 = vunpack.c.h.b16 %v126
    %v992 = vunpack.c.l.b16 %v127
    %v993 = vunpack.c.h.b16 %v127
    %v994 = vunpack.c.l.b16 %v128
    %v995 = vunpack.c.h.b16 %v128
    %v996 = vunpack.c.l.b16 %v129
    %v997 = vunpack.c.h.b16 %v129
    %v998 = vunpack.c.l.b16 %v130
    %v999 = vunpack.c.h.b16 %v130
    %v1000 = vunpack.c.l.b16 %v131
    %v1001 = vunpack.c.h.b16 %v131
    %v1002 = vunpack.c.l.b16 %v132
    %v1003 = vunpack.c.h.b16 %v132
    %v1004 = vunpack.c.l.b16 %v133
    %v1005 = vunpack.c.h.b16 %v133
    %v1006 = vunpack.c.l.b16 %v134
    %v1007 = vunpack.c.h.b16 %v134
    %v1008 = vunpack.c.l.b16 %v135
    %v1009 = vunpack.c.h.b16 %v135
    %v1010 = vunpack.c.l.b16 %v136
    %v1011 = vunpack.c.h.b16 %v136
    %v1012 = vunpack.c.l.b16 %v137
    %v1013 = vunpack.c.h.b16 %v137
    %v1014 = vunpack.c.l.b16 %v138
    %v1015 = vunpack.c.h.b16 %v138
    %v1016 = vunpack.c.l.b16 %v139
    %v1017 = vunpack.c.h.b16 %v139
    %v1018 = vunpack.c.l.b16 %v140
    %v1019 = vunpack.c.h.b16 %v140
    %v1020 = vunpack.c.l.b16 %v141
    %v1021 = vunpack.c.h.b16 %v141
    %v1022 = vunpack.c.l.b16 %v142
    %v1023 = vunpack.c.h.b16 %v142
    %v1024 = vunpack.c.l.b16 %v143
    %v1025 = vunpack.c.h.b16 %v143
    %v1026 = vunpack.c.l.b16 %v144
    %v1027 = vunpack.c.h.b16 %v144
    %v1028 = vunpack.c.l.b16 %v145
    %v1029 = vunpack.c.h.b16 %v145
    %v1030 = vunpack.c.l.b16 %v146
    %v1031 = vunpack.c.h.b16 %v146
    %v1032 = vunpack.c.l.b16 %v147
    %v1033 = vunpack.c.h.b16 %v147
    %v1034 = vunpack.c.l.b16 %v148
    %v1035 = vunpack.c.h.b16 %v148
    %v1036 = vunpack.c.l.b16 %v149
    %v1037 = vunpack.c.h.b16 %v149
    %v1038 = vunpack.c.l.b16 %v150
    %v1039 = vunpack.c.h.b16 %v150
    %v1040 = vunpack.c.l.b16 %v151
    %v1041 = vunpack.c.h.b16 %v151
    %v1042 = vunpack.c.l.b16 %v152
    %v1043 = vunpack.c.h.b16 %v152
    %v1044 = vunpack.c.l.b16 %v153
    %v1045 = vunpack.c.h.b16 %v153
    %v1046 = vunpack.c.l.b16 %v154
    %v1047 = vunpack.c.h.b16 %v154
    %v1048 = vunpack.c.l.b16 %v155
    %v1049 = vunpack.c.h.b16 %v155
    %v1050 = vunpack.c.l.b16 %v156
    %v1051 = vunpack.c.h.b16 %v156
    %v1052 = vunpack.c.l.b16 %v157
    %v1053 = vunpack.c.h.b16 %v157
    %v1054 = vunpack.c.l.b16 %v158
    %v1055 = vunpack.c.h.b16 %v158
    %v1056 = vunpack.c.l.b16 %v159
    %v1057 = vunpack.c.h.b16 %v159
    %v1058 = vunpack.c.l.b16 %v160
    %v1059 = vunpack.c.h.b16 %v160
    %v1060 = vunpack.c.l.b16 %v161
    %v1061 = vunpack.c.h.b16 %v161
    %v1062 = vunpack.c.l.b16 %v162
    %v1063 = vunpack.c.h.b16 %v162
    %v1064 = vunpack.c.l.b16 %v163
    %v1065 = vunpack.c.h.b16 %v163
    %v1066 = vunpack.c.l.b16 %v164
    %v1067 = vunpack.c.h.b16 %v164
    %v1068 = vunpack.c.l.b16 %v165
    %v1069 = vunpack.c.h.b16 %v165
    %v1070 = vunpack.c.l.b16 %v166
    %v1071 = vunpack.c.h.b16 %v166
    %v1072 = vunpack.c.l.b16 %v167
    %v1073 = vunpack.c.h.b16 %v167
    %v1074 = vunpack.c.l.b16 %v168
    %v1075 = vunpack.c.h.b16 %v168
    %v1076 = vunpack.c.l.b16 %v169
    %v1077 = vunpack.c.h.b16 %v169
    %v1078 = vunpack.c.l.b16 %v170
    %v1079 = vunpack.c.h.b16 %v170
    %v1080 = vunpack.c.l.b16 %v171
    %v1081 = vunpack.c.h.b16 %v171
    %v1082 = vunpack.c.l.b16 %v172
    %v1083 = vunpack.c.h.b16 %v172
    %v1084 = vunpack.c.l.b16 %v173
    %v1085 = vunpack.c.h.b16 %v173
    %v1086 = vunpack.c.l.b16 %v174
    %v1087 = vunpack.c.h.b16 %v174
    %v1088 = vunpack.c.l.b16 %v175
    %v1089 = vunpack.c.h.b16 %v175
    %v1090 = vunpack.c.l.b16 %v176
    %v1091 = vunpack.c.h.b16 %v176
    %v1092 = vunpack.c.l.b16 %v177
    %v1093 = vunpack.c.h.b16 %v177
    %v1094 = vunpack.c.l.b16 %v178
    %v1095 = vunpack.c.h.b16 %v178
    %v1096 = vunpack.c.l.b16 %v179
    %v1097 = vunpack.c.h.b16 %v179
    %v1098 = vunpack.c.l.b16 %v180
    %v1099 = vunpack.c.h.b16 %v180
    %v1100 = vunpack.c.l.b16 %v181
    %v1101 = vunpack.c.h.b16 %v181
    %v1102 = vunpack.c.l.b16 %v182
    %v1103 = vunpack.c.h.b16 %v182
    %v1104 = vunpack.c.l.b16 %v183
    %v1105 = vunpack.c.h.b16 %v183
    %v1106 = vunpack.c.l.b16 %v184
    %v1107 = vunpack.c.h.b16 %v184
    %v1108 = vunpack.c.l.b16 %v185
    %v1109 = vunpack.c.h.b16 %v185
    %v1110 = vunpack.c.l.b16 %v186
    %v1111 = vunpack.c.h.b16 %v186
    %v1112 = vunpack.c.l.b16 %v187
    %v1113 = vunpack.c.h.b16 %v187
    %v1114 = vunpack.c.l.b16 %v188
    %v1115 = vunpack.c.h.b16 %v188
    %v1116 = vunpack.c.l.b16 %v189
    %v1117 = vunpack.c.h.b16 %v189
    %v1118 = vunpack.c.l.b16 %v190
    %v1119 = vunpack.c.h.b16 %v190
    %v1120 = vunpack.c.l.b16 %v191
    %v1121 = vunpack.c.h.b16 %v191
    %v1122 = vunpack.c.l.b16 %v192
    %v1123 = vunpack.c.h.b16 %v192
    %v1124 = vunpack.c.l.b16 %v193
    %v1125 = vunpack.c.h.b16 %v193
    %v1126 = vunpack.c.l.b16 %v194
    %v1127 = vunpack.c.h.b16 %v194
    %v1128 = vunpack.c.l.b16 %v195
    %v1129 = vunpack.c.h.b16 %v195
    %v1130 = vunpack.c.l.b16 %v196
    %v1131 = vunpack.c.h.b16 %v196
    %v1132 = vunpack.c.l.b16 %v197
    %v1133 = vunpack.c.h.b16 %v197
    %v1134 = vunpack.c.l.b16 %v198
    %v1135 = vunpack.c.h.b16 %v198
    %v1136 = vunpack.c.l.b16 %v199
    %v1137 = vunpack.c.h.b16 %v199
    %v1138 = vunpack.c.l.b16 %v200
    %v1139 = vunpack.c.h.b16 %v200
    %v1140 = vunpack.c.l.b16 %v201
    %v1141 = vunpack.c.h.b16 %v201
    %v1142 = vunpack.c.l.b16 %v202
    %v1143 = vunpack.c.h.b16 %v202
    %v1144 = vunpack.c.l.b16 %v203
    %v1145 = vunpack.c.h.b16 %v203
    %v1146 = vunpack.c.l.b16 %v204
    %v1147 = vunpack.c.h.b16 %v204
    %v1148 = vunpack.c.l.b16 %v205
    %v1149 = vunpack.c.h.b16 %v205
    %v1150 = vunpack.c.l.b16 %v206
    %v1151 = vunpack.c.h.b16 %v206
    %v1152 = vunpack.c.l.b16 %v207
    %v1153 = vunpack.c.h.b16 %v207
    %v1154 = vunpack.c.l.b16 %v208
    %v1155 = vunpack.c.h.b16 %v208
    %v1156 = vunpack.c.l.b16 %v209
    %v1157 = vunpack.c.h.b16 %v209
    %v1158 = vunpack.c.l.b16 %v210
    %v1159 = vunpack.c.h.b16 %v210
    %v1160 = vunpack.c.l.b16 %v211
    %v1161 = vunpack.c.h.b16 %v211
    %v1162 = vunpack.c.l.b16 %v212
    %v1163 = vunpack.c.h.b16 %v212
    %v1164 = vunpack.c.l.b16 %v213
    %v1165 = vunpack.c.h.b16 %v213
    %v1166 = vunpack.c.l.b16 %v214
    %v1167 = vunpack.c.h.b16 %v214
    %v1168 = vunpack.c.l.b16 %v215
    %v1169 = vunpack.c.h.b16 %v215
    %v1170 = vunpack.c.l.b16 %v216
    %v1171 = vunpack.c.h.b16 %v216
    %v1172 = vunpack.c.l.b16 %v217
    %v1173 = vunpack.c.h.b16 %v217
    %v1174 = vunpack.c.l.b16 %v218
    %v1175 = vunpack.c.h.b16 %v218
    %v1176 = vunpack.c.l.b16 %v219
    %v1177 = vunpack.c.h.b16 %v219
    %v1178 = vunpack.c.l.b16 %v220
    %v1179 = vunpack.c.h.b16 %v220
    %v1180 = vunpack.c.l.b16 %v221
    %v1181 = vunpack.c.h.b16 %v221
    %v1182 = vunpack.c.l.b16 %v222
    %v1183 = vunpack.c.h.b16 %v222
    %v1184 = vunpack.c.l.b16 %v223
    %v1185 = vunpack.c.h.b16 %v223
    %v1186 = vunpack.c.l.b16 %v224
    %v1187 = vunpack.c.h.b16 %v224
    %v1188 = vunpack.c.l.b16 %v225
    %v1189 = vunpack.c.h.b16 %v225
    %v1190 = vunpack.c.l.b16 %v226
    %v1191 = vunpack.c.h.b16 %v226
    %v1192 = vunpack.c.l.b16 %v227
    %v1193 = vunpack.c.h.b16 %v227
    %v1194 = vunpack.c.l.b16 %v228
    %v1195 = vunpack.c.h.b16 %v228
    %v1196 = vunpack.c.l.b16 %v229
    %v1197 = vunpack.c.h.b16 %v229
    %v1198 = vunpack.c.l.b16 %v230
    %v1199 = vunpack.c.h.b16 %v230
    %v1200 = vunpack.c.l.b16 %v231
    %v1201 = vunpack.c.h.b16 %v231
    %v1202 = vunpack.c.l.b16 %v232
    %v1203 = vunpack.c.h.b16 %v232
    %v1204 = vunpack.c.l.b16 %v233
    %v1205 = vunpack.c.h.b16 %v233
    %v1206 = vunpack.c.l.b16 %v234
    %v1207 = vunpack.c.h.b16 %v234
    %v1208 = vunpack.c.l.b16 %v235
    %v1209 = vunpack.c.h.b16 %v235
    %v1210 = vunpack.c.l.b16 %v236
    %v1211 = vunpack.c.h.b16 %v236
    %v1212 = vunpack.c.l.b16 %v237
    %v1213 = vunpack.c.h.b16 %v237
    %v1214 = vunpack.c.l.b16 %v238
    %v1215 = vunpack.c.h.b16 %v238
    %v1216 = vunpack.c.l.b16 %v239
    %v1217 = vunpack.c.h.b16 %v239
    %v1218 = vunpack.c.l.b16 %v240
    %v1219 = vunpack.c.h.b16 %v240
    %v1220 = vunpack.c.l.b16 %v241
    %v1221 = vunpack.c.h.b16 %v241
    %v1222 = vunpack.c.l.b16 %v242
    %v1223 = vunpack.c.h.b16 %v242
    %v1224 = vunpack.c.l.b16 %v243
    %v1225 = vunpack.c.h.b16 %v243
    %v1226 = vunpack.c.l.b16 %v244
    %v1227 = vunpack.c.h.b16 %v244
    %v1228 = vunpack.c.l.b16 %v245
    %v1229 = vunpack.c.h.b16 %v245
    %v1230 = vunpack.c.l.b16 %v246
    %v1231 = vunpack.c.h.b16 %v246
    %v1232 = vunpack.c.l.b16 %v247
    %v1233 = vunpack.c.h.b16 %v247
    %v1234 = vunpack.c.l.b16 %v248
    %v1235 = vunpack.c.h.b16 %v248
    %v1236 = vunpack.c.l.b16 %v249
    %v1237 = vunpack.c.h.b16 %v249
    %v1238 = vunpack.c.l.b16 %v250
    %v1239 = vunpack.c.h.b16 %v250
    %v1240 = vunpack.c.l.b16 %v251
    %v1241 = vunpack.c.h.b16 %v251
    %v1242 = vunpack.c.l.b16 %v252
    %v1243 = vunpack.c.h.b16 %v252
    %v1244 = vunpack.c.l.b16 %v253
    %v1245 = vunpack.c.h.b16 %v253
    %v1246 = vunpack.c.l.b16 %v254
    %v1247 = vunpack.c.h.b16 %v254
    %v1248 = vunpack.c.l.b16 %v255
    %v1249 = vunpack.c.h.b16 %v255
    %v1250 = vunpack.c.l.b16 %v256
    %v1251 = vunpack.c.h.b16 %v256
    %v1252 = vunpack.c.l.b16 %v257
    %v1253 = vunpack.c.h.b16 %v257
    %v1254 = vunpack.c.l.b16 %v258
    %v1255 = vunpack.c.h.b16 %v258
    %v1256 = vunpack.c.l.b16 %v259
    %v1257 = vunpack.c.h.b16 %v259
    %v1258 = vunpack.c.l.b16 %v260
    %v1259 = vunpack.c.h.b16 %v260
    %v1260 = vunpack.c.l.b16 %v261
    %v1261 = vunpack.c.h.b16 %v261
    %v1262 = vunpack.c.l.b16 %v262
    %v1263 = vunpack.c.h.b16 %v262
    %v1264 = vunpack.c.l.b16 %v263
    %v1265 = vunpack.c.h.b16 %v263
    %v1266 = vunpack.c.l.b16 %v264
    %v1267 = vunpack.c.h.b16 %v264
    %v1268 = vunpack.c.l.b16 %v265
    %v1269 = vunpack.c.h.b16 %v265
    %v1270 = vunpack.c.l.b16 %v266
    %v1271 = vunpack.c.h.b16 %v266
    %v1272 = vunpack.c.l.b16 %v267
    %v1273 = vunpack.c.h.b16 %v267
    %v1274 = vunpack.c.l.b16 %v268
    %v1275 = vunpack.c.h.b16 %v268
    %v1276 = vunpack.c.l.b16 %v269
    %v1277 = vunpack.c.h.b16 %v269
    %v1278 = vunpack.c.l.b16 %v270
    %v1279 = vunpack.c.h.b16 %v270
    %v1280 = vunpack.c.l.b16 %v271
    %v1281 = vunpack.c.h.b16 %v271
    %v1282 = vunpack.c.l.b16 %v272
    %v1283 = vunpack.c.h.b16 %v272
    %v1284 = vunpack.c.l.b16 %v273
    %v1285 = vunpack.c.h.b16 %v273
    %v1286 = vunpack.c.l.b16 %v274
    %v1287 = vunpack.c.h.b16 %v274
    %v1288 = vunpack.c.l.b16 %v275
    %v1289 = vunpack.c.h.b16 %v275
    %v1290 = vunpack.c.l.b16 %v276
    %v1291 = vunpack.c.h.b16 %v276
    %v1292 = vunpack.c.l.b16 %v277
    %v1293 = vunpack.c.h.b16 %v277
    %v1294 = vunpack.c.l.b16 %v278
    %v1295 = vunpack.c.h.b16 %v278
    %v1296 = vunpack.c.l.b16 %v279
    %v1297 = vunpack.c.h.b16 %v279
    %v1298 = vunpack.c.l.b16 %v280
    %v1299 = vunpack.c.h.b16 %v280
    %v1300 = vunpack.c.l.b16 %v281
    %v1301 = vunpack.c.h.b16 %v281
    %v1302 = vunpack.c.l.b16 %v282
    %v1303 = vunpack.c.h.b16 %v282
    %v1304 = vunpack.c.l.b16 %v283
    %v1305 = vunpack.c.h.b16 %v283
    %v1306 = vunpack.c.l.b16 %v284
    %v1307 = vunpack.c.h.b16 %v284
    %v1308 = vunpack.c.l.b16 %v285
    %v1309 = vunpack.c.h.b16 %v285
    %v1310 = vunpack.c.l.b16 %v286
    %v1311 = vunpack.c.h.b16 %v286
    %v1312 = vunpack.c.l.b16 %v287
    %v1313 = vunpack.c.h.b16 %v287
    %v1314 = vunpack.c.l.b16 %v288
    %v1315 = vunpack.c.h.b16 %v288
    %v1316 = vunpack.c.l.b16 %v289
    %v1317 = vunpack.c.h.b16 %v289
    %v1318 = vunpack.c.l.b16 %v290
    %v1319 = vunpack.c.h.b16 %v290
    %v1320 = vunpack.c.l.b16 %v291
    %v1321 = vunpack.c.h.b16 %v291
    %v1322 = vunpack.c.l.b16 %v292
    %v1323 = vunpack.c.h.b16 %v292
    %v1324 = vunpack.c.l.b16 %v293
    %v1325 = vunpack.c.h.b16 %v293
    %v1326 = vunpack.c.l.b16 %v294
    %v1327 = vunpack.c.h.b16 %v294
    %v1328 = vunpack.c.l.b16 %v295
    %v1329 = vunpack.c.h.b16 %v295
    %v1330 = vunpack.c.l.b16 %v296
    %v1331 = vunpack.c.h.b16 %v296
    %v1332 = vunpack.c.l.b16 %v297
    %v1333 = vunpack.c.h.b16 %v297
    %v1334 = vunpack.c.l.b16 %v298
    %v1335 = vunpack.c.h.b16 %v298
    %v1336 = vunpack.c.l.b16 %v299
    %v1337 = vunpack.c.h.b16 %v299
    %v1338 = vunpack.c.l.b16 %v300
    %v1339 = vunpack.c.h.b16 %v300
    %v1340 = vunpack.c.l.b16 %v301
    %v1341 = vunpack.c.h.b16 %v301
    %v1342 = vunpack.c.l.b16 %v302
    %v1343 = vunpack.c.h.b16 %v302
    %v1344 = vunpack.c.l.b16 %v303
    %v1345 = vunpack.c.h.b16 %v303
    %v1346 = vunpack.c.l.b16 %v304
    %v1347 = vunpack.c.h.b16 %v304
    %v1348 = vunpack.c.l.b16 %v305
    %v1349 = vunpack.c.h.b16 %v305
    %v1350 = vunpack.c.l.b16 %v306
    %v1351 = vunpack.c.h.b16 %v306
    %v1352 = vunpack.c.l.b16 %v307
    %v1353 = vunpack.c.h.b16 %v307
    %v1354 = vunpack.c.l.b16 %v308
    %v1355 = vunpack.c.h.b16 %v308
    %v1356 = vunpack.c.l.b16 %v309
    %v1357 = vunpack.c.h.b16 %v309
    %v1358 = vunpack.c.l.b16 %v310
    %v1359 = vunpack.c.h.b16 %v310
    %v1360 = vunpack.c.l.b16 %v311
    %v1361 = vunpack.c.h.b16 %v311
    %v1362 = vunpack.c.l.b16 %v312
    %v1363 = vunpack.c.h.b16 %v312
    %v1364 = vunpack.c.l.b16 %v313
    %v1365 = vunpack.c.h.b16 %v313
    %v1366 = vunpack.c.l.b16 %v314
    %v1367 = vunpack.c.h.b16 %v314
    %v1368 = vunpack.c.l.b16 %v315
    %v1369 = vunpack.c.h.b16 %v315
    %v1370 = vunpack.c.l.b16 %v316
    %v1371 = vunpack.c.h.b16 %v316
    %v1372 = vunpack.c.l.b16 %v317
    %v1373 = vunpack.c.h.b16 %v317
    %v1374 = vunpack.c.l.b16 %v318
    %v1375 = vunpack.c.h.b16 %v318
    %v1376 = vunpack.c.l.b16 %v319
    %v1377 = vunpack.c.h.b16 %v319
    %v1378 = vunpack.c.l.b16 %v320
    %v1379 = vunpack.c.h.b16 %v320
    %v1380 = vunpack.c.l.b16 %v321
    %v1381 = vunpack.c.h.b16 %v321
    %v1382 = vunpack.c.l.b16 %v322
    %v1383 = vunpack.c.h.b16 %v322
    %v1384 = vunpack.c.l.b16 %v323
    %v1385 = vunpack.c.h.b16 %v323
    %v1386 = vunpack.c.l.b16 %v324
    %v1387 = vunpack.c.h.b16 %v324
    %v1388 = vunpack.c.l.b16 %v325
    %v1389 = vunpack.c.h.b16 %v325
    %v1390 = vunpack.c.l.b16 %v326
    %v1391 = vunpack.c.h.b16 %v326
    %v1392 = vunpack.c.l.b16 %v327
    %v1393 = vunpack.c.h.b16 %v327
    %v1394 = vunpack.c.l.b16 %v328
    %v1395 = vunpack.c.h.b16 %v328
    %v1396 = vunpack.c.l.b16 %v329
    %v1397 = vunpack.c.h.b16 %v329
    %v1398 = vunpack.c.l.b16 %v330
    %v1399 = vunpack.c.h.b16 %v330
    %v1400 = vunpack.c.l.b16 %v331
    %v1401 = vunpack.c.h.b16 %v331
    %v1402 = vunpack.c.l.b16 %v332
    %v1403 = vunpack.c.h.b16 %v332
    %v1404 = vunpack.c.l.b16 %v333
    %v1405 = vunpack.c.h.b16 %v333
    %v1406 = vunpack.c.l.b16 %v334
    %v1407 = vunpack.c.h.b16 %v334
    %v1408 = vunpack.c.l.b16 %v335
    %v1409 = vunpack.c.h.b16 %v335
    %v1410 = vunpack.c.l.b16 %v336
    %v1411 = vunpack.c.h.b16 %v336
    %v1412 = vunpack.c.l.b16 %v337
    %v1413 = vunpack.c.h.b16 %v337
    %v1414 = vunpack.c.l.b16 %v338
    %v1415 = vunpack.c.h.b16 %v338
    %v1416 = vunpack.c.l.b16 %v339
    %v1417 = vunpack.c.h.b16 %v339
    %v1418 = vunpack.c.l.b16 %v340
    %v1419 = vunpack.c.h.b16 %v340
    %v1420 = vunpack.c.l.b16 %v341
    %v1421 = vunpack.c.h.b16 %v341
    %v1422 = vunpack.c.l.b16 %v342
    %v1423 = vunpack.c.h.b16 %v342
    %v1424 = vunpack.c.l.b16 %v343
    %v1425 = vunpack.c.h.b16 %v343
    %v1426 = vunpack.c.l.b16 %v344
    %v1427 = vunpack.c.h.b16 %v344
    %v1428 = vunpack.c.l.b16 %v345
    %v1429 = vunpack.c.h.b16 %v345
    %v1430 = vunpack.c.l.b16 %v346
    %v1431 = vunpack.c.h.b16 %v346
    %v1432 = vunpack.c.l.b16 %v347
    %v1433 = vunpack.c.h.b16 %v347
    %v1434 = vunpack.c.l.b16 %v348
    %v1435 = vunpack.c.h.b16 %v348
    %v1436 = vunpack.c.l.b16 %v349
    %v1437 = vunpack.c.h.b16 %v349
    %v1438 = vunpack.c.l.b16 %v350
    %v1439 = vunpack.c.h.b16 %v350
    %v1440 = vunpack.c.l.b16 %v351
    %v1441 = vunpack.c.h.b16 %v351
    %v1442 = vunpack.c.l.b16 %v352
    %v1443 = vunpack.c.h.b16 %v352
    %v1444 = vunpack.c.l.b16 %v353
    %v1445 = vunpack.c.h.b16 %v353
    %v1446 = vunpack.c.l.b16 %v354
    %v1447 = vunpack.c.h.b16 %v354
    %v1448 = vunpack.c.l.b16 %v355
    %v1449 = vunpack.c.h.b16 %v355
    %v1450 = vunpack.c.l.b16 %v356
    %v1451 = vunpack.c.h.b16 %v356
    %v1452 = vunpack.c.l.b16 %v357
    %v1453 = vunpack.c.h.b16 %v357
    %v1454 = vunpack.c.l.b16 %v358
    %v1455 = vunpack.c.h.b16 %v358
    %v1456 = vunpack.c.l.b16 %v359
    %v1457 = vunpack.c.h.b16 %v359
    %v1458 = vunpack.c.l.b16 %v360
    %v1459 = vunpack.c.h.b16 %v360
    %v1460 = vunpack.c.l.b16 %v361
    %v1461 = vunpack.c.h.b16 %v361
    %v1462 = vunpack.c.l.b16 %v362
    %v1463 = vunpack.c.h.b16 %v362
    %v1464 = vunpack.c.l.b16 %v363
    %v1465 = vunpack.c.h.b16 %v363
    %v1466 = vunpack.c.l.b16 %v364
    %v1467 = vunpack.c.h.b16 %v364
    %v1468 = vunpack.c.l.b16 %v365
    %v1469 = vunpack.c.h.b16 %v365
    %v1470 = vunpack.c.l.b16 %v366
    %v1471 = vunpack.c.h.b16 %v366
    %v1472 = vunpack.c.l.b16 %v367
    %v1473 = vunpack.c.h.b16 %v367
    %v1474 = vunpack.c.l.b16 %v368
    %v1475 = vunpack.c.h.b16 %v368
    %v1476 = vunpack.c.l.b16 %v369
    %v1477 = vunpack.c.h.b16 %v369
    %v1478 = vunpack.c.l.b16 %v370
    %v1479 = vunpack.c.h.b16 %v370
    %v1480 = vunpack.c.l.b16 %v371
    %v1481 = vunpack.c.h.b16 %v371
    %v1482 = vunpack.c.l.b16 %v372
    %v1483 = vunpack.c.h.b16 %v372
    %v1484 = vunpack.c.l.b16 %v373
    %v1485 = vunpack.c.h.b16 %v373
    %v1486 = vunpack.c.l.b16 %v374
    %v1487 = vunpack.c.h.b16 %v374
    %v1488 = vunpack.c.l.b16 %v375
    %v1489 = vunpack.c.h.b16 %v375
    %v1490 = vunpack.c.l.b16 %v376
    %v1491 = vunpack.c.h.b16 %v376
    %v1492 = vunpack.c.l.b16 %v377
    %v1493 = vunpack.c.h.b16 %v377
    %v1494 = vunpack.c.l.b16 %v378
    %v1495 = vunpack.c.h.b16 %v378
    %v1496 = vunpack.c.l.b16 %v379
    %v1497 = vunpack.c.h.b16 %v379
    %v1498 = vunpack.c.l.b16 %v380
    %v1499 = vunpack.c.h.b16 %v380
    %v1500 = vunpack.c.l.b16 %v381
    %v1501 = vunpack.c.h.b16 %v381
    %v1502 = vunpack.c.l.b16 %v382
    %v1503 = vunpack.c.h.b16 %v382
    %v1504 = vunpack.c.l.b16 %v383
    %v1505 = vunpack.c.h.b16 %v383
    %v1506 = vunpack.c.l.b16 %v384
    %v1507 = vunpack.c.h.b16 %v384
    %v1508 = vunpack.c.l.b16 %v385
    %v1509 = vunpack.c.h.b16 %v385
    %v1510 = vunpack.c.l.b16 %v386
    %v1511 = vunpack.c.h.b16 %v386
    %v1512 = vunpack.c.l.b16 %v387
    %v1513 = vunpack.c.h.b16 %v387
    %v1514 = vunpack.c.l.b16 %v388
    %v1515 = vunpack.c.h.b16 %v388
    %v1516 = vunpack.c.l.b16 %v389
    %v1517 = vunpack.c.h.b16 %v389
    %v1518 = vunpack.c.l.b16 %v390
    %v1519 = vunpack.c.h.b16 %v390
    %v1520 = vunpack.c.l.b16 %v391
    %v1521 = vunpack.c.h.b16 %v391
    %v1522 = vunpack.c.l.b16 %v392
    %v1523 = vunpack.c.h.b16 %v392
    %v1524 = vunpack.c.l.b16 %v393
    %v1525 = vunpack.c.h.b16 %v393
    %v1526 = vunpack.c.l.b16 %v394
    %v1527 = vunpack.c.h.b16 %v394
    %v1528 = vunpack.c.l.b16 %v395
    %v1529 = vunpack.c.h.b16 %v395
    %v1530 = vunpack.c.l.b16 %v396
    %v1531 = vunpack.c.h.b16 %v396
    %v1532 = vunpack.c.l.b16 %v397
    %v1533 = vunpack.c.h.b16 %v397
    %v1534 = vunpack.c.l.b16 %v398
    %v1535 = vunpack.c.h.b16 %v398
    %v1536 = vunpack.c.l.b16 %v399
    %v1537 = vunpack.c.h.b16 %v399
    %v1538 = vunpack.c.l.b16 %v400
    %v1539 = vunpack.c.h.b16 %v400
    %v1540 = vunpack.c.l.b16 %v401
    %v1541 = vunpack.c.h.b16 %v401
    %v1542 = vunpack.c.l.b16 %v402
    %v1543 = vunpack.c.h.b16 %v402
    %v1544 = vunpack.c.l.b16 %v403
    %v1545 = vunpack.c.h.b16 %v403
    %v1546 = vunpack.c.l.b16 %v404
    %v1547 = vunpack.c.h.b16 %v404
    %v1548 = vunpack.c.l.b16 %v405
    %v1549 = vunpack.c.h.b16 %v405
    %v1550 = vunpack.c.l.b16 %v406
    %v1551 = vunpack.c.h.b16 %v406
    %v1552 = vunpack.c.l.b16 %v407
    %v1553 = vunpack.c.h.b16 %v407
    %v1554 = vunpack.c.l.b16 %v408
    %v1555 = vunpack.c.h.b16 %v408
    %v1556 = vunpack.c.l.b16 %v409
    %v1557 = vunpack.c.h.b16 %v409
    %v1558 = vunpack.c.l.b16 %v410
    %v1559 = vunpack.c.h.b16 %v410
    %v1560 = vunpack.c.l.b16 %v411
    %v1561 = vunpack.c.h.b16 %v411
    %v1562 = vunpack.c.l.b16 %v412
    %v1563 = vunpack.c.h.b16 %v412
    %v1564 = vunpack.c.l.b16 %v413
    %v1565 = vunpack.c.h.b16 %v413
    %v1566 = vunpack.c.l.b16 %v414
    %v1567 = vunpack.c.h.b16 %v414
    %v1568 = vunpack.c.l.b16 %v415
    %v1569 = vunpack.c.h.b16 %v415
    %v1570 = vunpack.c.l.b16 %v416
    %v1571 = vunpack.c.h.b16 %v416
    %v1572 = vunpack.c.l.b16 %v417
    %v1573 = vunpack.c.h.b16 %v417
    %v1574 = vunpack.c.l.b16 %v418
    %v1575 = vunpack.c.h.b16 %v418
    %v1576 = vunpack.c.l.b16 %v419
    %v1577 = vunpack.c.h.b16 %v419
    %v1578 = vunpack.c.l.b16 %v420
    %v1579 = vunpack.c.h.b16 %v420
    %v1580 = vunpack.c.l.b16 %v421
    %v1581 = vunpack.c.h.b16 %v421
    %v1582 = vunpack.c.l.b16 %v422
    %v1583 = vunpack.c.h.b16 %v422
    %v1584 = vunpack.c.l.b16 %v423
    %v1585 = vunpack.c.h.b16 %v423
    %v1586 = vunpack.c.l.b16 %v424
    %v1587 = vunpack.c.h.b16 %v424
    %v1588 = vunpack.c.l.b16 %v425
    %v1589 = vunpack.c.h.b16 %v425
    %v1590 = vunpack.c.l.b16 %v426
    %v1591 = vunpack.c.h.b16 %v426
    %v1592 = vunpack.c.l.b16 %v427
    %v1593 = vunpack.c.h.b16 %v427
    %v1594 = vunpack.c.l.b16 %v428
    %v1595 = vunpack.c.h.b16 %v428
    %v1596 = vunpack.c.l.b16 %v429
    %v1597 = vunpack.c.h.b16 %v429
    %v1598 = vunpack.c.l.b16 %v430
    %v1599 = vunpack.c.h.b16 %v430
    %v1600 = vunpack.c.l.b16 %v431
    %v1601 = vunpack.c.h.b16 %v431
    %v1602 = vunpack.c.l.b16 %v432
    %v1603 = vunpack.c.h.b16 %v432
    %v1604 = vunpack.c.l.b16 %v433
    %v1605 = vunpack.c.h.b16 %v433
    %v1606 = vunpack.c.l.b16 %v434
    %v1607 = vunpack.c.h.b16 %v434
    %v1608 = vunpack.c.l.b16 %v435
    %v1609 = vunpack.c.h.b16 %v435
    %v1610 = vunpack.c.l.b16 %v436
    %v1611 = vunpack.c.h.b16 %v436
    %v1612 = vunpack.c.l.b16 %v437
    %v1613 = vunpack.c.h.b16 %v437
    %v1614 = vunpack.c.l.b16 %v438
    %v1615 = vunpack.c.h.b16 %v438
    %v1616 = vunpack.c.l.b16 %v439
    %v1617 = vunpack.c.h.b16 %v439
    %v1618 = vunpack.c.l.b16 %v440
    %v1619 = vunpack.c.h.b16 %v440
    %v1620 = vunpack.c.l.b16 %v441
    %v1621 = vunpack.c.h.b16 %v441
    %v1622 = vunpack.c.l.b16 %v442
    %v1623 = vunpack.c.h.b16 %v442
    %v1624 = vunpack.c.l.b16 %v443
    %v1625 = vunpack.c.h.b16 %v443
    %v1626 = vunpack.c.l.b16 %v444
    %v1627 = vunpack.c.h.b16 %v444
    %v1628 = vunpack.c.l.b16 %v445
    %v1629 = vunpack.c.h.b16 %v445
    %v1630 = vunpack.c.l.b16 %v446
    %v1631 = vunpack.c.h.b16 %v446
    %v1632 = vunpack.c.l.b16 %v447
    %v1633 = vunpack.c.h.b16 %v447
    %v1634 = vunpack.c.l.b16 %v448
    %v1635 = vunpack.c.h.b16 %v448
    %v1636 = vunpack.c.l.b16 %v449
    %v1637 = vunpack.c.h.b16 %v449
    %v1638 = vunpack.c.l.b16 %v450
    %v1639 = vunpack.c.h.b16 %v450
    %v1640 = vunpack.c.l.b16 %v451
    %v1641 = vunpack.c.h.b16 %v451
    %v1642 = vunpack.c.l.b16 %v452
    %v1643 = vunpack.c.h.b16 %v452
    %v1644 = vunpack.c.l.b16 %v453
    %v1645 = vunpack.c.h.b16 %v453
    %v1646 = vunpack.c.l.b16 %v454
    %v1647 = vunpack.c.h.b16 %v454
    %v1648 = vunpack.c.l.b16 %v455
    %v1649 = vunpack.c.h.b16 %v455
    %v1650 = vunpack.c.l.b16 %v456
    %v1651 = vunpack.c.h.b16 %v456
    %v1652 = vunpack.c.l.b16 %v457
    %v1653 = vunpack.c.h.b16 %v457
    %v1654 = vunpack.c.l.b16 %v458
    %v1655 = vunpack.c.h.b16 %v458
    %v1656 = vunpack.c.l.b16 %v459
    %v1657 = vunpack.c.h.b16 %v459
    %v1658 = vunpack.c.l.b16 %v460
    %v1659 = vunpack.c.h.b16 %v460
    %v1660 = vunpack.c.l.b16 %v461
    %v1661 = vunpack.c.h.b16 %v461
    %v1662 = vunpack.c.l.b16 %v462
    %v1663 = vunpack.c.h.b16 %v462
    %v1664 = vunpack.c.l.b16 %v463
    %v1665 = vunpack.c.h.b16 %v463
    %v1666 = vunpack.c.l.b16 %v464
    %v1667 = vunpack.c.h.b16 %v464
    %v1668 = vunpack.c.l.b16 %v465
    %v1669 = vunpack.c.h.b16 %v465
    %v1670 = vunpack.c.l.b16 %v466
    %v1671 = vunpack.c.h.b16 %v466
    %v1672 = vunpack.c.l.b16 %v467
    %v1673 = vunpack.c.h.b16 %v467
    %v1674 = vunpack.c.l.b16 %v468
    %v1675 = vunpack.c.h.b16 %v468
    %v1676 = vunpack.c.l.b16 %v469
    %v1677 = vunpack.c.h.b16 %v469
    %v1678 = vunpack.c.l.b16 %v470
    %v1679 = vunpack.c.h.b16 %v470
    %v1680 = vunpack.c.l.b16 %v471
    %v1681 = vunpack.c.h.b16 %v471
    %v1682 = vunpack.c.l.b16 %v472
    %v1683 = vunpack.c.h.b16 %v472
    %v1684 = vunpack.c.l.b16 %v473
    %v1685 = vunpack.c.h.b16 %v473
    %v1686 = vunpack.c.l.b16 %v474
    %v1687 = vunpack.c.h.b16 %v474
    %v1688 = vunpack.c.l.b16 %v475
    %v1689 = vunpack.c.h.b16 %v475
    %v1690 = vunpack.c.l.b16 %v476
    %v1691 = vunpack.c.h.b16 %v476
    %v1692 = vunpack.c.l.b16 %v477
    %v1693 = vunpack.c.h.b16 %v477
    %v1694 = vunpack.c.l.b16 %v478
    %v1695 = vunpack.c.h.b16 %v478
    %v1696 = vunpack.c.l.b16 %v479
    %v1697 = vunpack.c.h.b16 %v479
    %v1698 = vunpack.c.l.b16 %v480
    %v1699 = vunpack.c.h.b16 %v480
    %v1700 = vunpack.c.l.b16 %v481
    %v1701 = vunpack.c.h.b16 %v481
    %v1702 = vunpack.c.l.b16 %v482
    %v1703 = vunpack.c.h.b16 %v482
    %v1704 = vpack.c.b16 %v924, %v920
    %v1705 = vpack.c.b16 %v925, %v921
    %v1706 = vpack.c.b16 %v926, %v922
    %v1707 = vpack.c.b16 %v927, %v923
    %v1708 = vpack.c.b16 %v932, %v928
    %v1709 = vpack.c.b16 %v933, %v929
    %v1710 = vpack.c.b16 %v934, %v930
    %v1711 = vpack.c.b16 %v935, %v931
    %v1712 = vpack.c.b16 %v940, %v936
    %v1713 = vpack.c.b16 %v941, %v937
    %v1714 = vpack.c.b16 %v942, %v938
    %v1715 = vpack.c.b16 %v943, %v939
    %v1716 = vpack.c.b16 %v948, %v944
    %v1717 = vpack.c.b16 %v949, %v945
    %v1718 = vpack.c.b16 %v950, %v946
    %v1719 = vpack.c.b16 %v951, %v947
    %v1720 = vpack.c.b16 %v956, %v952
    %v1721 = vpack.c.b16 %v957, %v953
    %v1722 = vpack.c.b16 %v958, %v954
    %v1723 = vpack.c.b16 %v959, %v955
    %v1724 = vpack.c.b16 %v964, %v960
    %v1725 = vpack.c.b16 %v965, %v961
    %v1726 = vpack.c.b16 %v966, %v962
    %v1727 = vpack.c.b16 %v967, %v963
    %v1728 = vpack.c.b16 %v972, %v968
    %v1729 = vpack.c.b16 %v973, %v969
    %v1730 = vpack.c.b16 %v974, %v970
    %v1731 = vpack.c.b16 %v975, %v971
    %v1732 = vpack.c.b16 %v980, %v976
    %v1733 = vpack.c.b16 %v981, %v977
    %v1734 = vpack.c.b16 %v982, %v978
    %v1735 = vpack.c.b16 %v983, %v979
    %v1736 = vpack.c.b16 %v988, %v984
    %v1737 = vpack.c.b16 %v989, %v985
    %v1738 = vpack.c.b16 %v990, %v986
    %v1739 = vpack.c.b16 %v991, %v987
    %v1740 = vpack.c.b16 %v996, %v992
    %v1741 = vpack.c.b16 %v997, %v993
    %v1742 = vpack.c.b16 %v998, %v994
    %v1743 = vpack.c.b16 %v999, %v995
    %v1744 = vpack.c.b16 %v1004, %v1000
    %v1745 = vpack.c.b16 %v1005, %v1001
    %v1746 = vpack.c.b16 %v1006, %v1002
    %v1747 = vpack.c.b16 %v1007, %v1003
    %v1748 = vpack.c.b16 %v1012, %v1008
    %v1749 = vpack.c.b16 %v1013, %v1009
    %v1750 = vpack.c.b16 %v1014, %v1010
    %v1751 = vpack.c.b16 %v1015, %v1011
    %v1752 = vpack.c.b16 %v1020, %v1016
    %v1753 = vpack.c.b16 %v1021, %v1017
    %v1754 = vpack.c.b16 %v1022, %v1018
    %v1755 = vpack.c.b16 %v1023, %v1019
    %v1756 = vpack.c.b16 %v1028, %v1024
    %v1757 = vpack.c.b16 %v1029, %v1025
    %v1758 = vpack.c.b16 %v1030, %v1026
    %v1759 = vpack.c.b16 %v1031, %v1027
    %v1760 = vpack.c.b16 %v1036, %v1032
    %v1761 = vpack.c.b16 %v1037, %v1033
    %v1762 = vpack.c.b16 %v1038, %v1034
    %v1763 = vpack.c.b16 %v1039, %v1035
    %v1764 = vpack.c.b16 %v1044, %v1040
    %v1765 = vpack.c.b16 %v1045, %v1041
    %v1766 = vpack.c.b16 %v1046, %v1042
    %v1767 = vpack.c.b16 %v1047, %v1043
    %v1768 = vpack.c.b16 %v1052, %v1048
    %v1769 = vpack.c.b16 %v1053, %v1049
    %v1770 = vpack.c.b16 %v1054, %v1050
    %v1771 = vpack.c.b16 %v1055, %v1051
    %v1772 = vpack.c.b16 %v1060, %v1056
    %v1773 = vpack.c.b16 %v1061, %v1057
    %v1774 = vpack.c.b16 %v1062, %v1058
    %v1775 = vpack.c.b16 %v1063, %v1059
    %v1776 = vpack.c.b16 %v1068, %v1064
    %v1777 = vpack.c.b16 %v1069, %v1065
    %v1778 = vpack.c.b16 %v1070, %v1066
    %v1779 = vpack.c.b16 %v1071, %v1067
    %v1780 = vpack.c.b16 %v1076, %v1072
    %v1781 = vpack.c.b16 %v1077, %v1073
    %v1782 = vpack.c.b16 %v1078, %v1074
    %v1783 = vpack.c.b16 %v1079, %v1075
    %v1784 = vpack.c.b16 %v1084, %v1080
    %v1785 = vpack.c.b16 %v1085, %v1081
    %v1786 = vpack.c.b16 %v1086, %v1082
    %v1787 = vpack.c.b16 %v1087, %v1083
    %v1788 = vpack.c.b16 %v1092, %v1088
    %v1789 = vpack.c.b16 %v1093, %v1089
    %v1790 = vpack.c.b16 %v1094, %v1090
    %v1791 = vpack.c.b16 %v1095, %v1091
    %v1792 = vpack.c.b16 %v1100, %v1096
    %v1793 = vpack.c.b16 %v1101, %v1097
    %v1794 = vpack.c.b16 %v1102, %v1098
    %v1795 = vpack.c.b16 %v1103, %v1099
    %v1796 = vpack.c.b16 %v1108, %v1104
    %v1797 = vpack.c.b16 %v1109, %v1105
    %v1798 = vpack.c.b16 %v1110, %v1106
    %v1799 = vpack.c.b16 %v1111, %v1107
    %v1800 = vpack.c.b16 %v1116, %v1112
    %v1801 = vpack.c.b16 %v1117, %v1113
    %v1802 = vpack.c.b16 %v1118, %v1114
    %v1803 = vpack.c.b16 %v1119, %v1115
    %v1804 = vpack.c.b16 %v1124, %v1120
    %v1805 = vpack.c.b16 %v1125, %v1121
    %v1806 = vpack.c.b16 %v1126, %v1122
    %v1807 = vpack.c.b16 %v1127, %v1123
    %v1808 = vpack.c.b16 %v1132, %v1128
    %v1809 = vpack.c.b16 %v1133, %v1129
    %v1810 = vpack.c.b16 %v1134, %v1130
    %v1811 = vpack.c.b16 %v1135, %v1131
    %v1812 = vpack.c.b16 %v1140, %v1136
    %v1813 = vpack.c.b16 %v1141, %v1137
    %v1814 = vpack.c.b16 %v1142, %v1138
    %v1815 = vpack.c.b16 %v1143, %v1139
    %v1816 = vpack.c.b16 %v1148, %v1144
    %v1817 = vpack.c.b16 %v1149, %v1145
    %v1818 = vpack.c.b16 %v1150, %v1146
    %v1819 = vpack.c.b16 %v1151, %v1147
    %v1820 = vpack.c.b16 %v1156, %v1152
    %v1821 = vpack.c.b16 %v1157, %v1153
    %v1822 = vpack.c.b16 %v1158, %v1154
    %v1823 = vpack.c.b16 %v1159, %v1155
    %v1824 = vpack.c.b16 %v1164, %v1160
    %v1825 = vpack.c.b16 %v1165, %v1161
    %v1826 = vpack.c.b16 %v1166, %v1162
    %v1827 = vpack.c.b16 %v1167, %v1163
    %v1828 = vpack.c.b16 %v1172, %v1168
    %v1829 = vpack.c.b16 %v1173, %v1169
    %v1830 = vpack.c.b16 %v1174, %v1170
    %v1831 = vpack.c.b16 %v1175, %v1171
    %v1832 = vpack.c.b16 %v1180, %v1176
    %v1833 = vpack.c.b16 %v1181, %v1177
    %v1834 = vpack.c.b16 %v1182, %v1178
    %v1835 = vpack.c.b16 %v1183, %v1179
    %v1836 = vpack.c.b16 %v1188, %v1184
    %v1837 = vpack.c.b16 %v1189, %v1185
    %v1838 = vpack.c.b16 %v1190, %v1186
    %v1839 = vpack.c.b16 %v1191, %v1187
    %v1840 = vpack.c.b16 %v1196, %v1192
    %v1841 = vpack.c.b16 %v1197, %v1193
    %v1842 = vpack.c.b16 %v1198, %v1194
    %v1843 = vpack.c.b16 %v1199, %v1195
    %v1844 = vpack.c.b16 %v1204, %v1200
    %v1845 = vpack.c.b16 %v1205, %v1201
    %v1846 = vpack.c.b16 %v1206, %v1202
    %v1847 = vpack.c.b16 %v1207, %v1203
    %v1848 = vpack.c.b16 %v1212, %v1208
    %v1849 = vpack.c.b16 %v1213, %v1209
    %v1850 = vpack.c.b16 %v1214, %v1210
    %v1851 = vpack.c.b16 %v1215, %v1211
    %v1852 = vpack.c.b16 %v1220, %v1216
    %v1853 = vpack.c.b16 %v1221, %v1217
    %v1854 = vpack.c.b16 %v1222, %v1218
    %v1855 = vpack.c.b16 %v1223, %v1219
    %v1856 = vpack.c.b16 %v1228, %v1224
    %v1857 = vpack.c.b16 %v1229, %v1225
    %v1858 = vpack.c.b16 %v1230, %v1226
    %v1859 = vpack.c.b16 %v1231, %v1227
    %v1860 = vpack.c.b16 %v1236, %v1232
    %v1861 = vpack.c.b16 %v1237, %v1233
    %v1862 = vpack.c.b16 %v1238, %v1234
    %v1863 = vpack.c.b16 %v1239, %v1235
    %v1864 = vpack.c.b16 %v1244, %v1240
    %v1865 = vpack.c.b16 %v1245, %v1241
    %v1866 = vpack.c.b16 %v1246, %v1242
    %v1867 = vpack.c.b16 %v1247, %v1243
    %v1868 = vpack.c.b16 %v1252, %v1248
    %v1869 = vpack.c.b16 %v1253, %v1249
    %v1870 = vpack.c.b16 %v1254, %v1250
    %v1871 = vpack.c.b16 %v1255, %v1251
    %v1872 = vpack.c.b16 %v1260, %v1256
    %v1873 = vpack.c.b16 %v1261, %v1257
    %v1874 = vpack.c.b16 %v1262, %v1258
    %v1875 = vpack.c.b16 %v1263, %v1259
    %v1876 = vpack.c.b16 %v1268, %v1264
    %v1877 = vpack.c.b16 %v1269, %v1265
    %v1878 = vpack.c.b16 %v1270, %v1266
    %v1879 = vpack.c.b16 %v1271, %v1267
    %v1880 = vpack.c.b16 %v1276, %v1272
    %v1881 = vpack.c.b16 %v1277, %v1273
    %v1882 = vpack.c.b16 %v1278, %v1274
    %v1883 = vpack.c.b16 %v1279, %v1275
    %v1884 = vpack.c.b16 %v1284, %v1280
    %v1885 = vpack.c.b16 %v1285, %v1281
    %v1886 = vpack.c.b16 %v1286, %v1282
    %v1887 = vpack.c.b16 %v1287, %v1283
    %v1888 = vpack.c.b16 %v1292, %v1288
    %v1889 = vpack.c.b16 %v1293, %v1289
    %v1890 = vpack.c.b16 %v1294, %v1290
    %v1891 = vpack.c.b16 %v1295, %v1291
    %v1892 = vpack.c.b16 %v1300, %v1296
    %v1893 = vpack.c.b16 %v1301, %v1297
    %v1894 = vpack.c.b16 %v1302, %v1298
    %v1895 = vpack.c.b16 %v1303, %v1299
    %v1896 = vpack.c.b16 %v1308, %v1304
    %v1897 = vpack.c.b16 %v1309, %v1305
    %v1898 = vpack.c.b16 %v1310, %v1306
    %v1899 = vpack.c.b16 %v1311, %v1307
    %v1900 = vpack.c.b16 %v1316, %v1312
    %v1901 = vpack.c.b16 %v1317, %v1313
    %v1902 = vpack.c.b16 %v1318, %v1314
    %v1903 = vpack.c.b16 %v1319, %v1315
    %v1904 = vpack.c.b16 %v1324, %v1320
    %v1905 = vpack.c.b16 %v1325, %v1321
    %v1906 = vpack.c.b16 %v1326, %v1322
    %v1907 = vpack.c.b16 %v1327, %v1323
    %v1908 = vpack.c.b16 %v1332, %v1328
    %v1909 = vpack.c.b16 %v1333, %v1329
    %v1910 = vpack.c.b16 %v1334, %v1330
    %v1911 = vpack.c.b16 %v1335, %v1331
    %v1912 = vpack.c.b16 %v1340, %v1336
    %v1913 = vpack.c.b16 %v1341, %v1337
    %v1914 = vpack.c.b16 %v1342, %v1338
    %v1915 = vpack.c.b16 %v1343, %v1339
    %v1916 = vpack.c.b16 %v1348, %v1344
    %v1917 = vpack.c.b16 %v1349, %v1345
    %v1918 = vpack.c.b16 %v1350, %v1346
    %v1919 = vpack.c.b16 %v1351, %v1347
    %v1920 = vpack.c.b16 %v1356, %v1352
    %v1921 = vpack.c.b16 %v1357, %v1353
    %v1922 = vpack.c.b16 %v1358, %v1354
    %v1923 = vpack.c.b16 %v1359, %v1355
    %v1924 = vpack.c.b16 %v1364, %v1360
    %v1925 = vpack.c.b16 %v1365, %v1361
    %v1926 = vpack.c.b16 %v1366, %v1362
    %v1927 = vpack.c.b16 %v1367, %v1363
    %v1928 = vpack.c.b16 %v1372, %v1368
    %v1929 = vpack.c.b16 %v1373, %v1369
    %v1930 = vpack.c.b16 %v1374, %v1370
    %v1931 = vpack.c.b16 %v1375, %v1371
    %v1932 = vpack.c.b16 %v1380, %v1376
    %v1933 = vpack.c.b16 %v1381, %v1377
    %v1934 = vpack.c.b16 %v1382, %v1378
    %v1935 = vpack.c.b16 %v1383, %v1379
    %v1936 = vpack.c.b16 %v1388, %v1384
    %v1937 = vpack.c.b16 %v1389, %v1385
    %v1938 = vpack.c.b16 %v1390, %v1386
    %v1939 = vpack.c.b16 %v1391, %v1387
    %v1940 = vpack.c.b16 %v1396, %v1392
    %v1941 = vpack.c.b16 %v1397, %v1393
    %v1942 = vpack.c.b16 %v1398, %v1394
    %v1943 = vpack.c.b16 %v1399, %v1395
    %v1944 = vpack.c.b16 %v1404, %v1400
    %v1945 = vpack.c.b16 %v1405, %v1401
    %v1946 = vpack.c.b16 %v1406, %v1402
    %v1947 = vpack.c.b16 %v1407, %v1403
    %v1948 = vpack.c.b16 %v1412, %v1408
    %v1949 = vpack.c.b16 %v1413, %v1409
    %v1950 = vpack.c.b16 %v1414, %v1410
    %v1951 = vpack.c.b16 %v1415, %v1411
    %v1952 = vpack.c.b16 %v1420, %v1416
    %v1953 = vpack.c.b16 %v1421, %v1417
    %v1954 = vpack.c.b16 %v1422, %v1418
    %v1955 = vpack.c.b16 %v1423, %v1419
    %v1956 = vpack.c.b16 %v1428, %v1424
    %v1957 = vpack.c.b16 %v1429, %v1425
    %v1958 = vpack.c.b16 %v1430, %v1426
    %v1959 = vpack.c.b16 %v1431, %v1427
    %v1960 = vpack.c.b16 %v1436, %v1432
    %v1961 = vpack.c.b16 %v1437, %v1433
    %v1962 = vpack.c.b16 %v1438, %v1434
    %v1963 = vpack.c.b16 %v1439, %v1435
    %v1964 = vpack.c.b16 %v1444, %v1440
    %v1965 = vpack.c.b16 %v1445, %v1441
    %v1966 = vpack.c.b16 %v1446, %v1442
    %v1967 = vpack.c.b16 %v1447, %v1443
    %v1968 = vpack.c.b16 %v1452, %v1448
    %v1969 = vpack.c.b16 %v1453, %v1449
    %v1970 = vpack.c.b16 %v1454, %v1450
    %v1971 = vpack.c.b16 %v1455, %v1451
    %v1972 = vpack.c.b16 %v1460, %v1456
    %v1973 = vpack.c.b16 %v1461, %v1457
    %v1974 = vpack.c.b16 %v1462, %v1458
    %v1975 = vpack.c.b16 %v1463, %v1459
    %v1976 = vpack.c.b16 %v1468, %v1464
    %v1977 = vpack.c.b16 %v1469, %v1465
    %v1978 = vpack.c.b16 %v1470, %v1466
    %v1979 = vpack.c.b16 %v1471, %v1467
    %v1980 = vpack.c.b16 %v1476, %v1472
    %v1981 = vpack.c.b16 %v1477, %v1473
    %v1982 = vpack.c.b16 %v1478, %v1474
    %v1983 = vpack.c.b16 %v1479, %v1475
    %v1984 = vpack.c.b16 %v1484, %v1480
    %v1985 = vpack.c.b16 %v1485, %v1481
    %v1986 = vpack.c.b16 %v1486, %v1482
    %v1987 = vpack.c.b16 %v1487, %v1483
    %v1988 = vpack.c.b16 %v1492, %v1488
    %v1989 = vpack.c.b16 %v1493, %v1489
    %v1990 = vpack.c.b16 %v1494, %v1490
    %v1991 = vpack.c.b16 %v1495, %v1491
    %v1992 = vpack.c.b16 %v1500, %v1496
    %v1993 = vpack.c.b16 %v1501, %v1497
    %v1994 = vpack.c.b16 %v1502, %v1498
    %v1995 = vpack.c.b16 %v1503, %v1499
    %v1996 = vpack.c.b16 %v1508, %v1504
    %v1997 = vpack.c.b16 %v1509, %v1505
    %v1998 = vpack.c.b16 %v1510, %v1506
    %v1999 = vpack.c.b16 %v1511, %v1507
    %v2000 = vpack.c.b16 %v1516, %v1512
    %v2001 = vpack.c.b16 %v1517, %v1513
    %v2002 = vpack.c.b16 %v1518, %v1514
    %v2003 = vpack.c.b16 %v1519, %v1515
    %v2004 = vpack.c.b16 %v1524, %v1520
    %v2005 = vpack.c.b16 %v1525, %v1521
    %v2006 = vpack.c.b16 %v1526, %v1522
    %v2007 = vpack.c.b16 %v1527, %v1523
    %v2008 = vpack.c.b16 %v1532, %v1528
    %v2009 = vpack.c.b16 %v1533, %v1529
    %v2010 = vpack.c.b16 %v1534, %v1530
    %v2011 = vpack.c.b16 %v1535, %v1531
    %v2012 = vpack.c.b16 %v1540, %v1536
    %v2013 = vpack.c.b16 %v1541, %v1537
    %v2014 = vpack.c.b16 %v1542, %v1538
    %v2015 = vpack.c.b16 %v1543, %v1539
    %v2016 = vpack.c.b16 %v1548, %v1544
    %v2017 = vpack.c.b16 %v1549, %v1545
    %v2018 = vpack.c.b16 %v1550, %v1546
    %v2019 = vpack.c.b16 %v1551, %v1547
    %v2020 = vpack.c.b16 %v1556, %v1552
    %v2021 = vpack.c.b16 %v1557, %v1553
    %v2022 = vpack.c.b16 %v1558, %v1554
    %v2023 = vpack.c.b16 %v1559, %v1555
    %v2024 = vpack.c.b16 %v1564, %v1560
    %v2025 = vpack.c.b16 %v1565, %v1561
    %v2026 = vpack.c.b16 %v1566, %v1562
    %v2027 = vpack.c.b16 %v1567, %v1563
    %v2028 = vpack.c.b16 %v1572, %v1568
    %v2029 = vpack.c.b16 %v1573, %v1569
    %v2030 = vpack.c.b16 %v1574, %v1570
    %v2031 = vpack.c.b16 %v1575, %v1571
    %v2032 = vpack.c.b16 %v1580, %v1576
    %v2033 = vpack.c.b16 %v1581, %v1577
    %v2034 = vpack.c.b16 %v1582, %v1578
    %v2035 = vpack.c.b16 %v1583, %v1579
    %v2036 = vpack.c.b16 %v1588, %v1584
    %v2037 = vpack.c.b16 %v1589, %v1585
    %v2038 = vpack.c.b16 %v1590, %v1586
    %v2039 = vpack.c.b16 %v1591, %v1587
    %v2040 = vpack.c.b16 %v1596, %v1592
    %v2041 = vpack.c.b16 %v1597, %v1593
    %v2042 = vpack.c.b16 %v1598, %v1594
    %v2043 = vpack.c.b16 %v1599, %v1595
    %v2044 = vpack.c.b16 %v1604, %v1600
    %v2045 = vpack.c.b16 %v1605, %v1601
    %v2046 = vpack.c.b16 %v1606, %v1602
    %v2047 = vpack.c.b16 %v1607, %v1603
    %v2048 = vpack.c.b16 %v1612, %v1608
    %v2049 = vpack.c.b16 %v1613, %v1609
    %v2050 = vpack.c.b16 %v1614, %v1610
    %v2051 = vpack.c.b16 %v1615, %v1611
    %v2052 = vpack.c.b16 %v1620, %v1616
    %v2053 = vpack.c.b16 %v1621, %v1617
    %v2054 = vpack.c.b16 %v1622, %v1618
    %v2055 = vpack.c.b16 %v1623, %v1619
    %v2056 = vpack.c.b16 %v1628, %v1624
    %v2057 = vpack.c.b16 %v1629, %v1625
    %v2058 = vpack.c.b16 %v1630, %v1626
    %v2059 = vpack.c.b16 %v1631, %v1627
    %v2060 = vpack.c.b16 %v1636, %v1632
    %v2061 = vpack.c.b16 %v1637, %v1633
    %v2062 = vpack.c.b16 %v1638, %v1634
    %v2063 = vpack.c.b16 %v1639, %v1635
    %v2064 = vpack.c.b16 %v1644, %v1640
    %v2065 = vpack.c.b16 %v1645, %v1641
    %v2066 = vpack.c.b16 %v1646, %v1642
    %v2067 = vpack.c.b16 %v1647, %v1643
    %v2068 = vpack.c.b16 %v1652, %v1648
    %v2069 = vpack.c.b16 %v1653, %v1649
    %v2070 = vpack.c.b16 %v1654, %v1650
    %v2071 = vpack.c.b16 %v1655, %v1651
    %v2072 = vpack.c.b16 %v1660, %v1656
    %v2073 = vpack.c.b16 %v1661, %v1657
    %v2074 = vpack.c.b16 %v1662, %v1658
    %v2075 = vpack.c.b16 %v1663, %v1659
    %v2076 = vpack.c.b16 %v1668, %v1664
    %v2077 = vpack.c.b16 %v1669, %v1665
    %v2078 = vpack.c.b16 %v1670, %v1666
    %v2079 = vpack.c.b16 %v1671, %v1667
    %v2080 = vpack.c.b16 %v1676, %v1672
    %v2081 = vpack.c.b16 %v1677, %v1673
    %v2082 = vpack.c.b16 %v1678, %v1674
    %v2083 = vpack.c.b16 %v1679, %v1675
    %v2084 = vpack.c.b16 %v1684, %v1680
    %v2085 = vpack.c.b16 %v1685, %v1681
    %v2086 = vpack.c.b16 %v1686, %v1682
    %v2087 = vpack.c.b16 %v1687, %v1683
    %v2088 = vpack.c.b16 %v1692, %v1688
    %v2089 = vpack.c.b16 %v1693, %v1689
    %v2090 = vpack.c.b16 %v1694, %v1690
    %v2091 = vpack.c.b16 %v1695, %v1691
    %v2092 = vpack.c.b16 %v1700, %v1696
    %v2093 = vpack.c.b16 %v1701, %v1697
    %v2094 = vpack.c.b16 %v1702, %v1698
    %v2095 = vpack.c.b16 %v1703, %v1699
    %vm2488 = vcmask 261120
    %v2490 = vsel %vm2488, %v515, 0
    %2492 = vmatprep.subr.bf16.mxu0 %v1705
    %2493 = vmatpush1.bf16.msra.mxu0 %v1704
    %2494 = vmatprep.subr.bf16.mxu0 %v1709
    %2495 = vmatpush1.bf16.msra.mxu0 %v1708
    %2496 = vmatprep.subr.bf16.mxu0 %v1713
    %2497 = vmatpush1.bf16.msra.mxu0 %v1712
    %2498 = vmatprep.subr.bf16.mxu0 %v1717
    %2499 = vmatpush1.bf16.msra.mxu0 %v1716
    %2500 = vmatprep.subr.bf16.mxu0 %v1721
    %2501 = vmatpush1.bf16.msra.mxu0 %v1720
    %2502 = vmatprep.subr.bf16.mxu0 %v1725
    %2503 = vmatpush1.bf16.msra.mxu0 %v1724
    %2504 = vmatprep.subr.bf16.mxu0 %v1729
    %2505 = vmatpush1.bf16.msra.mxu0 %v1728
    %2506 = vmatprep.subr.bf16.mxu0 %v1733
    %2507 = vmatpush1.bf16.msra.mxu0 %v1732
    %2508 = vmatprep.subr.bf16.mxu0 %v1737
    %2509 = vmatpush1.bf16.msra.mxu0 %v1736
    %2510 = vmatprep.subr.bf16.mxu0 %v1741
    %2511 = vmatpush1.bf16.msra.mxu0 %v1740
    %2512 = vmatprep.subr.bf16.mxu0 %v1745
    %2513 = vmatpush1.bf16.msra.mxu0 %v1744
    %2514 = vmatprep.subr.bf16.mxu0 %v1749
    %2515 = vmatpush1.bf16.msra.mxu0 %v1748
    %2516 = vmatprep.subr.bf16.mxu0 %v1753
    %2517 = vmatpush1.bf16.msra.mxu0 %v1752
    %2518 = vmatprep.subr.bf16.mxu0 %v1757
    %2519 = vmatpush1.bf16.msra.mxu0 %v1756
    %2520 = vmatprep.subr.bf16.mxu0 %v1761
    %2521 = vmatpush1.bf16.msra.mxu0 %v1760
    %2522 = vmatprep.subr.bf16.mxu0 %v1765
    %2523 = vmatpush1.bf16.msra.mxu0 %v1764
    %2524 = vmatprep.mubr.bf16.mxu0 %v504
    %2525 = vmatmul.mubr.bf16.gmra.mrb[0].mxu0 %v503
    %v2526 = vpop.f32.mrb[0].mxu0
    %v2527 = vadd.f32 0.0, %v2526
    %v2528 = vpop.f32.mrb[0].mxu0
    %v2529 = vadd.f32 0.0, %v2528
    %v2530 = vpop.f32.mrb[0].mxu0
    %v2531 = vpop.f32.mrb[0].mxu0
    %2532 = vdwg.mxu0
    %2533 = vmatprep.subr.bf16.mxu0 %v1769
    %2534 = vmatpush1.bf16.msra.mxu0 %v1768
    %2535 = vmatprep.subr.bf16.mxu0 %v1773
    %2536 = vmatpush1.bf16.msra.mxu0 %v1772
    %2537 = vmatprep.subr.bf16.mxu0 %v1777
    %2538 = vmatpush1.bf16.msra.mxu0 %v1776
    %2539 = vmatprep.subr.bf16.mxu0 %v1781
    %2540 = vmatpush1.bf16.msra.mxu0 %v1780
    %2541 = vmatprep.subr.bf16.mxu0 %v1785
    %2542 = vmatpush1.bf16.msra.mxu0 %v1784
    %2543 = vmatprep.subr.bf16.mxu0 %v1789
    %2544 = vmatpush1.bf16.msra.mxu0 %v1788
    %2545 = vmatprep.subr.bf16.mxu0 %v1793
    %2546 = vmatpush1.bf16.msra.mxu0 %v1792
    %2547 = vmatprep.subr.bf16.mxu0 %v1797
    %2548 = vmatpush1.bf16.msra.mxu0 %v1796
    %2549 = vmatprep.subr.bf16.mxu0 %v1801
    %2550 = vmatpush1.bf16.msra.mxu0 %v1800
    %2551 = vmatprep.subr.bf16.mxu0 %v1805
    %2552 = vmatpush1.bf16.msra.mxu0 %v1804
    %2553 = vmatprep.subr.bf16.mxu0 %v1809
    %2554 = vmatpush1.bf16.msra.mxu0 %v1808
    %2555 = vmatprep.subr.bf16.mxu0 %v1813
    %2556 = vmatpush1.bf16.msra.mxu0 %v1812
    %2557 = vmatprep.subr.bf16.mxu0 %v1817
    %2558 = vmatpush1.bf16.msra.mxu0 %v1816
    %2559 = vmatprep.subr.bf16.mxu0 %v1821
    %2560 = vmatpush1.bf16.msra.mxu0 %v1820
    %2561 = vmatprep.subr.bf16.mxu0 %v1825
    %2562 = vmatpush1.bf16.msra.mxu0 %v1824
    %2563 = vmatprep.subr.bf16.mxu0 %v1829
    %2564 = vmatpush1.bf16.msra.mxu0 %v1828
    %2565 = vmatprep.mubr.bf16.mxu0 %v506
    %2566 = vmatmul.mubr.bf16.gmra.mrb[0].mxu0 %v505
    %v2567 = vpop.f32.mrb[0].mxu0
    %v2568 = vadd.f32 %v2527, %v2567
    %v2569 = vpop.f32.mrb[0].mxu0
    %v2570 = vadd.f32 %v2529, %v2569
    %v2571 = vpop.f32.mrb[0].mxu0
    %v2572 = vpop.f32.mrb[0].mxu0
    %2573 = vdwg.mxu0
    %2574 = vmatprep.subr.bf16.mxu0 %v1833
    %2575 = vmatpush1.bf16.msra.mxu0 %v1832
    %2576 = vmatprep.subr.bf16.mxu0 %v1837
    %2577 = vmatpush1.bf16.msra.mxu0 %v1836
    %2578 = vmatprep.subr.bf16.mxu0 %v1841
    %2579 = vmatpush1.bf16.msra.mxu0 %v1840
    %2580 = vmatprep.subr.bf16.mxu0 %v1845
    %2581 = vmatpush1.bf16.msra.mxu0 %v1844
    %2582 = vmatprep.subr.bf16.mxu0 %v1849
    %2583 = vmatpush1.bf16.msra.mxu0 %v1848
    %2584 = vmatprep.subr.bf16.mxu0 %v1853
    %2585 = vmatpush1.bf16.msra.mxu0 %v1852
    %2586 = vmatprep.subr.bf16.mxu0 %v1857
    %2587 = vmatpush1.bf16.msra.mxu0 %v1856
    %2588 = vmatprep.subr.bf16.mxu0 %v1861
    %2589 = vmatpush1.bf16.msra.mxu0 %v1860
    %2590 = vmatprep.subr.bf16.mxu0 %v1865
    %2591 = vmatpush1.bf16.msra.mxu0 %v1864
    %2592 = vmatprep.subr.bf16.mxu0 %v1869
    %2593 = vmatpush1.bf16.msra.mxu0 %v1868
    %2594 = vmatprep.subr.bf16.mxu0 %v1873
    %2595 = vmatpush1.bf16.msra.mxu0 %v1872
    %2596 = vmatprep.subr.bf16.mxu0 %v1877
    %2597 = vmatpush1.bf16.msra.mxu0 %v1876
    %2598 = vmatprep.subr.bf16.mxu0 %v1881
    %2599 = vmatpush1.bf16.msra.mxu0 %v1880
    %2600 = vmatprep.subr.bf16.mxu0 %v1885
    %2601 = vmatpush1.bf16.msra.mxu0 %v1884
    %2602 = vmatprep.subr.bf16.mxu0 %v1889
    %2603 = vmatpush1.bf16.msra.mxu0 %v1888
    %2604 = vmatprep.subr.bf16.mxu0 %v1893
    %2605 = vmatpush1.bf16.msra.mxu0 %v1892
    %2606 = vmatprep.mubr.bf16.mxu0 %v508
    %2607 = vmatmul.mubr.bf16.gmra.mrb[0].mxu0 %v507
    %v2608 = vpop.f32.mrb[0].mxu0
    %v2609 = vadd.f32 %v2568, %v2608
    %v2610 = vpop.f32.mrb[0].mxu0
    %v2611 = vadd.f32 %v2570, %v2610
    %v2612 = vpop.f32.mrb[0].mxu0
    %v2613 = vpop.f32.mrb[0].mxu0
    %2614 = vdwg.mxu0
    %2615 = vmatprep.subr.bf16.mxu0 %v1897
    %2616 = vmatpush1.bf16.msra.mxu0 %v1896
    %2617 = vmatprep.subr.bf16.mxu0 %v1901
    %2618 = vmatpush1.bf16.msra.mxu0 %v1900
    %2619 = vmatprep.subr.bf16.mxu0 %v1905
    %2620 = vmatpush1.bf16.msra.mxu0 %v1904
    %2621 = vmatprep.subr.bf16.mxu0 %v1909
    %2622 = vmatpush1.bf16.msra.mxu0 %v1908
    %2623 = vmatprep.subr.bf16.mxu0 %v1913
    %2624 = vmatpush1.bf16.msra.mxu0 %v1912
    %2625 = vmatprep.subr.bf16.mxu0 %v1917
    %2626 = vmatpush1.bf16.msra.mxu0 %v1916
    %2627 = vmatprep.subr.bf16.mxu0 %v1921
    %2628 = vmatpush1.bf16.msra.mxu0 %v1920
    %2629 = vmatprep.subr.bf16.mxu0 %v1925
    %2630 = vmatpush1.bf16.msra.mxu0 %v1924
    %2631 = vmatprep.subr.bf16.mxu0 %v1929
    %2632 = vmatpush1.bf16.msra.mxu0 %v1928
    %2633 = vmatprep.subr.bf16.mxu0 %v1933
    %2634 = vmatpush1.bf16.msra.mxu0 %v1932
    %2635 = vmatprep.subr.bf16.mxu0 %v1937
    %2636 = vmatpush1.bf16.msra.mxu0 %v1936
    %2637 = vmatprep.subr.bf16.mxu0 %v1941
    %2638 = vmatpush1.bf16.msra.mxu0 %v1940
    %2639 = vmatprep.subr.bf16.mxu0 %v1945
    %2640 = vmatpush1.bf16.msra.mxu0 %v1944
    %2641 = vmatprep.subr.bf16.mxu0 %v1949
    %2642 = vmatpush1.bf16.msra.mxu0 %v1948
    %2643 = vmatprep.subr.bf16.mxu0 %v1953
    %2644 = vmatpush1.bf16.msra.mxu0 %v1952
    %2645 = vmatprep.subr.bf16.mxu0 %v1957
    %2646 = vmatpush1.bf16.msra.mxu0 %v1956
    %2647 = vmatprep.mubr.bf16.mxu0 %v510
    %2648 = vmatmul.mubr.bf16.gmra.mrb[0].mxu0 %v509
    %v2649 = vpop.f32.mrb[0].mxu0
    %v2650 = vadd.f32 %v2609, %v2649
    %v2651 = vpop.f32.mrb[0].mxu0
    %v2652 = vadd.f32 %v2611, %v2651
    %v2653 = vpop.f32.mrb[0].mxu0
    %v2654 = vpop.f32.mrb[0].mxu0
    %2655 = vdwg.mxu0
    %2656 = vmatprep.subr.bf16.mxu0 %v1961
    %2657 = vmatpush1.bf16.msra.mxu0 %v1960
    %2658 = vmatprep.subr.bf16.mxu0 %v1965
    %2659 = vmatpush1.bf16.msra.mxu0 %v1964
    %2660 = vmatprep.subr.bf16.mxu0 %v1969
    %2661 = vmatpush1.bf16.msra.mxu0 %v1968
    %2662 = vmatprep.subr.bf16.mxu0 %v1973
    %2663 = vmatpush1.bf16.msra.mxu0 %v1972
    %2664 = vmatprep.subr.bf16.mxu0 %v1977
    %2665 = vmatpush1.bf16.msra.mxu0 %v1976
    %2666 = vmatprep.subr.bf16.mxu0 %v1981
    %2667 = vmatpush1.bf16.msra.mxu0 %v1980
    %2668 = vmatprep.subr.bf16.mxu0 %v1985
    %2669 = vmatpush1.bf16.msra.mxu0 %v1984
    %2670 = vmatprep.subr.bf16.mxu0 %v1989
    %2671 = vmatpush1.bf16.msra.mxu0 %v1988
    %2672 = vmatprep.subr.bf16.mxu0 %v1993
    %2673 = vmatpush1.bf16.msra.mxu0 %v1992
    %2674 = vmatprep.subr.bf16.mxu0 %v1997
    %2675 = vmatpush1.bf16.msra.mxu0 %v1996
    %2676 = vmatprep.subr.bf16.mxu0 %v2001
    %2677 = vmatpush1.bf16.msra.mxu0 %v2000
    %2678 = vmatprep.subr.bf16.mxu0 %v2005
    %2679 = vmatpush1.bf16.msra.mxu0 %v2004
    %2680 = vmatprep.subr.bf16.mxu0 %v2009
    %2681 = vmatpush1.bf16.msra.mxu0 %v2008
    %2682 = vmatprep.subr.bf16.mxu0 %v2013
    %2683 = vmatpush1.bf16.msra.mxu0 %v2012
    %2684 = vmatprep.subr.bf16.mxu0 %v2017
    %2685 = vmatpush1.bf16.msra.mxu0 %v2016
    %2686 = vmatprep.subr.bf16.mxu0 %v2021
    %2687 = vmatpush1.bf16.msra.mxu0 %v2020
    %2688 = vmatprep.mubr.bf16.mxu0 %v512
    %2689 = vmatmul.mubr.bf16.gmra.mrb[0].mxu0 %v511
    %v2690 = vpop.f32.mrb[0].mxu0
    %v2691 = vadd.f32 %v2650, %v2690
    %v2692 = vpop.f32.mrb[0].mxu0
    %v2693 = vadd.f32 %v2652, %v2692
    %v2694 = vpop.f32.mrb[0].mxu0
    %v2695 = vpop.f32.mrb[0].mxu0
    %2696 = vdwg.mxu0
    %2697 = vmatprep.subr.bf16.mxu0 %v2025
    %2698 = vmatpush1.bf16.msra.mxu0 %v2024
    %2699 = vmatprep.subr.bf16.mxu0 %v2029
    %2700 = vmatpush1.bf16.msra.mxu0 %v2028
    %2701 = vmatprep.subr.bf16.mxu0 %v2033
    %2702 = vmatpush1.bf16.msra.mxu0 %v2032
    %2703 = vmatprep.subr.bf16.mxu0 %v2037
    %2704 = vmatpush1.bf16.msra.mxu0 %v2036
    %2705 = vmatprep.subr.bf16.mxu0 %v2041
    %2706 = vmatpush1.bf16.msra.mxu0 %v2040
    %2707 = vmatprep.subr.bf16.mxu0 %v2045
    %2708 = vmatpush1.bf16.msra.mxu0 %v2044
    %2709 = vmatprep.subr.bf16.mxu0 %v2049
    %2710 = vmatpush1.bf16.msra.mxu0 %v2048
    %2711 = vmatprep.subr.bf16.mxu0 %v2053
    %2712 = vmatpush1.bf16.msra.mxu0 %v2052
    %2713 = vmatprep.subr.bf16.mxu0 %v2057
    %2714 = vmatpush1.bf16.msra.mxu0 %v2056
    %2715 = vmatprep.subr.bf16.mxu0 %v2061
    %2716 = vmatpush1.bf16.msra.mxu0 %v2060
    %2717 = vmatprep.subr.bf16.mxu0 %v2065
    %2718 = vmatpush1.bf16.msra.mxu0 %v2064
    %2719 = vmatprep.subr.bf16.mxu0 %v2069
    %2720 = vmatpush1.bf16.msra.mxu0 %v2068
    %2721 = vmatprep.subr.bf16.mxu0 %v2073
    %2722 = vmatpush1.bf16.msra.mxu0 %v2072
    %2723 = vmatprep.subr.bf16.mxu0 %v2077
    %2724 = vmatpush1.bf16.msra.mxu0 %v2076
    %2725 = vmatprep.subr.bf16.mxu0 %v2081
    %2726 = vmatpush1.bf16.msra.mxu0 %v2080
    %2727 = vmatprep.subr.bf16.mxu0 %v2085
    %2728 = vmatpush1.bf16.msra.mxu0 %v2084
    %2729 = vmatprep.mubr.bf16.mxu0 %v514
    %2730 = vmatmul.mubr.bf16.gmra.mrb[0].mxu0 %v513
    %v2731 = vpop.f32.mrb[0].mxu0
    %v2732 = vadd.f32 %v2691, %v2731
    %v2733 = vpop.f32.mrb[0].mxu0
    %v2734 = vadd.f32 %v2693, %v2733
    %v2735 = vpop.f32.mrb[0].mxu0
    %v2736 = vpop.f32.mrb[0].mxu0
    %2737 = vdwg.mxu0
    %2738 = vmatprep.subr.bf16.mxu0 %v2089
    %2739 = vmatpush1.bf16.msra.mxu0 %v2088
    %2740 = vmatprep.subr.bf16.mxu0 %v2093
    %2741 = vmatpush1.bf16.msra.mxu0 %v2092
    %2742 = vmatprep.subr.bf16.mxu0 0
    %2743 = vmatpush1.bf16.msra.mxu0 0
    %2744 = vmatprep.subr.bf16.mxu0 0
    %2745 = vmatpush1.bf16.msra.mxu0 0
    %2746 = vmatprep.subr.bf16.mxu0 0
    %2747 = vmatpush1.bf16.msra.mxu0 0
    %2748 = vmatprep.subr.bf16.mxu0 0
    %2749 = vmatpush1.bf16.msra.mxu0 0
    %2750 = vmatprep.subr.bf16.mxu0 0
    %2751 = vmatpush1.bf16.msra.mxu0 0
    %2752 = vmatprep.subr.bf16.mxu0 0
    %2753 = vmatpush1.bf16.msra.mxu0 0
    %2754 = vmatprep.subr.bf16.mxu0 0
    %2755 = vmatpush1.bf16.msra.mxu0 0
    %2756 = vmatprep.subr.bf16.mxu0 0
    %2757 = vmatpush1.bf16.msra.mxu0 0
    %2758 = vmatprep.subr.bf16.mxu0 0
    %2759 = vmatpush1.bf16.msra.mxu0 0
    %2760 = vmatprep.subr.bf16.mxu0 0
    %2761 = vmatpush1.bf16.msra.mxu0 0
    %2762 = vmatprep.subr.bf16.mxu0 0
    %2763 = vmatpush1.bf16.msra.mxu0 0
    %2764 = vmatprep.subr.bf16.mxu0 0
    %2765 = vmatpush1.bf16.msra.mxu0 0
    %2766 = vmatprep.subr.bf16.mxu0 0
    %2767 = vmatpush1.bf16.msra.mxu0 0
    %2768 = vmatprep.subr.bf16.mxu0 0
    %2769 = vmatpush1.bf16.msra.mxu0 0
    %2770 = vmatprep.mubr.bf16.mxu0 0
    %2771 = vmatmul.mubr.bf16.gmra.mrb[0].mxu0 %v2490
    %v2772 = vpop.f32.mrb[0].mxu0
    %v2773 = vadd.f32 %v2732, %v2772
    %v2774 = vpop.f32.mrb[0].mxu0
    %v2775 = vadd.f32 %v2734, %v2774
    %v2776 = vpop.f32.mrb[0].mxu0
    %v2777 = vpop.f32.mrb[0].mxu0
    %2778 = vdwg.mxu0
    %2779 = vmatprep.subr.bf16.mxu0 %v1707
    %2780 = vmatpush1.bf16.msra.mxu0 %v1706
    %2781 = vmatprep.subr.bf16.mxu0 %v1711
    %2782 = vmatpush1.bf16.msra.mxu0 %v1710
    %2783 = vmatprep.subr.bf16.mxu0 %v1715
    %2784 = vmatpush1.bf16.msra.mxu0 %v1714
    %2785 = vmatprep.subr.bf16.mxu0 %v1719
    %2786 = vmatpush1.bf16.msra.mxu0 %v1718
    %2787 = vmatprep.subr.bf16.mxu0 %v1723
    %2788 = vmatpush1.bf16.msra.mxu0 %v1722
    %2789 = vmatprep.subr.bf16.mxu0 %v1727
    %2790 = vmatpush1.bf16.msra.mxu0 %v1726
    %2791 = vmatprep.subr.bf16.mxu0 %v1731
    %2792 = vmatpush1.bf16.msra.mxu0 %v1730
    %2793 = vmatprep.subr.bf16.mxu0 %v1735
    %2794 = vmatpush1.bf16.msra.mxu0 %v1734
    %2795 = vmatprep.subr.bf16.mxu0 %v1739
    %2796 = vmatpush1.bf16.msra.mxu0 %v1738
    %2797 = vmatprep.subr.bf16.mxu0 %v1743
    %2798 = vmatpush1.bf16.msra.mxu0 %v1742
    %2799 = vmatprep.subr.bf16.mxu0 %v1747
    %2800 = vmatpush1.bf16.msra.mxu0 %v1746
    %2801 = vmatprep.subr.bf16.mxu0 %v1751
    %2802 = vmatpush1.bf16.msra.mxu0 %v1750
    %2803 = vmatprep.subr.bf16.mxu0 %v1755
    %2804 = vmatpush1.bf16.msra.mxu0 %v1754
    %2805 = vmatprep.subr.bf16.mxu0 %v1759
    %2806 = vmatpush1.bf16.msra.mxu0 %v1758
    %2807 = vmatprep.subr.bf16.mxu0 %v1763
    %2808 = vmatpush1.bf16.msra.mxu0 %v1762
    %2809 = vmatprep.subr.bf16.mxu0 %v1767
    %2810 = vmatpush1.bf16.msra.mxu0 %v1766
    %2811 = vmatprep.mubr.bf16.mxu0 %v504
    %2812 = vmatmul.mubr.bf16.gmra.mrb[0].mxu0 %v503
    %v2813 = vpop.f32.mrb[0].mxu0
    %v2814 = vadd.f32 0.0, %v2813
    %v2815 = vpop.f32.mrb[0].mxu0
    %v2816 = vadd.f32 0.0, %v2815
    %v2817 = vpop.f32.mrb[0].mxu0
    %v2818 = vpop.f32.mrb[0].mxu0
    %2819 = vdwg.mxu0
    %2820 = vmatprep.subr.bf16.mxu0 %v1771
    %2821 = vmatpush1.bf16.msra.mxu0 %v1770
    %2822 = vmatprep.subr.bf16.mxu0 %v1775
    %2823 = vmatpush1.bf16.msra.mxu0 %v1774
    %2824 = vmatprep.subr.bf16.mxu0 %v1779
    %2825 = vmatpush1.bf16.msra.mxu0 %v1778
    %2826 = vmatprep.subr.bf16.mxu0 %v1783
    %2827 = vmatpush1.bf16.msra.mxu0 %v1782
    %2828 = vmatprep.subr.bf16.mxu0 %v1787
    %2829 = vmatpush1.bf16.msra.mxu0 %v1786
    %2830 = vmatprep.subr.bf16.mxu0 %v1791
    %2831 = vmatpush1.bf16.msra.mxu0 %v1790
    %2832 = vmatprep.subr.bf16.mxu0 %v1795
    %2833 = vmatpush1.bf16.msra.mxu0 %v1794
    %2834 = vmatprep.subr.bf16.mxu0 %v1799
    %2835 = vmatpush1.bf16.msra.mxu0 %v1798
    %2836 = vmatprep.subr.bf16.mxu0 %v1803
    %2837 = vmatpush1.bf16.msra.mxu0 %v1802
    %2838 = vmatprep.subr.bf16.mxu0 %v1807
    %2839 = vmatpush1.bf16.msra.mxu0 %v1806
    %2840 = vmatprep.subr.bf16.mxu0 %v1811
    %2841 = vmatpush1.bf16.msra.mxu0 %v1810
    %2842 = vmatprep.subr.bf16.mxu0 %v1815
    %2843 = vmatpush1.bf16.msra.mxu0 %v1814
    %2844 = vmatprep.subr.bf16.mxu0 %v1819
    %2845 = vmatpush1.bf16.msra.mxu0 %v1818
    %2846 = vmatprep.subr.bf16.mxu0 %v1823
    %2847 = vmatpush1.bf16.msra.mxu0 %v1822
    %2848 = vmatprep.subr.bf16.mxu0 %v1827
    %2849 = vmatpush1.bf16.msra.mxu0 %v1826
    %2850 = vmatprep.subr.bf16.mxu0 %v1831
    %2851 = vmatpush1.bf16.msra.mxu0 %v1830
    %2852 = vmatprep.mubr.bf16.mxu0 %v506
    %2853 = vmatmul.mubr.bf16.gmra.mrb[0].mxu0 %v505
    %v2854 = vpop.f32.mrb[0].mxu0
    %v2855 = vadd.f32 %v2814, %v2854
    %v2856 = vpop.f32.mrb[0].mxu0
    %v2857 = vadd.f32 %v2816, %v2856
    %v2858 = vpop.f32.mrb[0].mxu0
    %v2859 = vpop.f32.mrb[0].mxu0
    %2860 = vdwg.mxu0
    %2861 = vmatprep.subr.bf16.mxu0 %v1835
    %2862 = vmatpush1.bf16.msra.mxu0 %v1834
    %2863 = vmatprep.subr.bf16.mxu0 %v1839
    %2864 = vmatpush1.bf16.msra.mxu0 %v1838
    %2865 = vmatprep.subr.bf16.mxu0 %v1843
    %2866 = vmatpush1.bf16.msra.mxu0 %v1842
    %2867 = vmatprep.subr.bf16.mxu0 %v1847
    %2868 = vmatpush1.bf16.msra.mxu0 %v1846
    %2869 = vmatprep.subr.bf16.mxu0 %v1851
    %2870 = vmatpush1.bf16.msra.mxu0 %v1850
    %2871 = vmatprep.subr.bf16.mxu0 %v1855
    %2872 = vmatpush1.bf16.msra.mxu0 %v1854
    %2873 = vmatprep.subr.bf16.mxu0 %v1859
    %2874 = vmatpush1.bf16.msra.mxu0 %v1858
    %2875 = vmatprep.subr.bf16.mxu0 %v1863
    %2876 = vmatpush1.bf16.msra.mxu0 %v1862
    %2877 = vmatprep.subr.bf16.mxu0 %v1867
    %2878 = vmatpush1.bf16.msra.mxu0 %v1866
    %2879 = vmatprep.subr.bf16.mxu0 %v1871
    %2880 = vmatpush1.bf16.msra.mxu0 %v1870
    %2881 = vmatprep.subr.bf16.mxu0 %v1875
    %2882 = vmatpush1.bf16.msra.mxu0 %v1874
    %2883 = vmatprep.subr.bf16.mxu0 %v1879
    %2884 = vmatpush1.bf16.msra.mxu0 %v1878
    %2885 = vmatprep.subr.bf16.mxu0 %v1883
    %2886 = vmatpush1.bf16.msra.mxu0 %v1882
    %2887 = vmatprep.subr.bf16.mxu0 %v1887
    %2888 = vmatpush1.bf16.msra.mxu0 %v1886
    %2889 = vmatprep.subr.bf16.mxu0 %v1891
    %2890 = vmatpush1.bf16.msra.mxu0 %v1890
    %2891 = vmatprep.subr.bf16.mxu0 %v1895
    %2892 = vmatpush1.bf16.msra.mxu0 %v1894
    %2893 = vmatprep.mubr.bf16.mxu0 %v508
    %2894 = vmatmul.mubr.bf16.gmra.mrb[0].mxu0 %v507
    %v2895 = vpop.f32.mrb[0].mxu0
    %v2896 = vadd.f32 %v2855, %v2895
    %v2897 = vpop.f32.mrb[0].mxu0
    %v2898 = vadd.f32 %v2857, %v2897
    %v2899 = vpop.f32.mrb[0].mxu0
    %v2900 = vpop.f32.mrb[0].mxu0
    %2901 = vdwg.mxu0
    %2902 = vmatprep.subr.bf16.mxu0 %v1899
    %2903 = vmatpush1.bf16.msra.mxu0 %v1898
    %2904 = vmatprep.subr.bf16.mxu0 %v1903
    %2905 = vmatpush1.bf16.msra.mxu0 %v1902
    %2906 = vmatprep.subr.bf16.mxu0 %v1907
    %2907 = vmatpush1.bf16.msra.mxu0 %v1906
    %2908 = vmatprep.subr.bf16.mxu0 %v1911
    %2909 = vmatpush1.bf16.msra.mxu0 %v1910
    %2910 = vmatprep.subr.bf16.mxu0 %v1915
    %2911 = vmatpush1.bf16.msra.mxu0 %v1914
    %2912 = vmatprep.subr.bf16.mxu0 %v1919
    %2913 = vmatpush1.bf16.msra.mxu0 %v1918
    %2914 = vmatprep.subr.bf16.mxu0 %v1923
    %2915 = vmatpush1.bf16.msra.mxu0 %v1922
    %2916 = vmatprep.subr.bf16.mxu0 %v1927
    %2917 = vmatpush1.bf16.msra.mxu0 %v1926
    %2918 = vmatprep.subr.bf16.mxu0 %v1931
    %2919 = vmatpush1.bf16.msra.mxu0 %v1930
    %2920 = vmatprep.subr.bf16.mxu0 %v1935
    %2921 = vmatpush1.bf16.msra.mxu0 %v1934
    %2922 = vmatprep.subr.bf16.mxu0 %v1939
    %2923 = vmatpush1.bf16.msra.mxu0 %v1938
    %2924 = vmatprep.subr.bf16.mxu0 %v1943
    %2925 = vmatpush1.bf16.msra.mxu0 %v1942
    %2926 = vmatprep.subr.bf16.mxu0 %v1947
    %2927 = vmatpush1.bf16.msra.mxu0 %v1946
    %2928 = vmatprep.subr.bf16.mxu0 %v1951
    %2929 = vmatpush1.bf16.msra.mxu0 %v1950
    %2930 = vmatprep.subr.bf16.mxu0 %v1955
    %2931 = vmatpush1.bf16.msra.mxu0 %v1954
    %2932 = vmatprep.subr.bf16.mxu0 %v1959
    %2933 = vmatpush1.bf16.msra.mxu0 %v1958
    %2934 = vmatprep.mubr.bf16.mxu0 %v510
    %2935 = vmatmul.mubr.bf16.gmra.mrb[0].mxu0 %v509
    %v2936 = vpop.f32.mrb[0].mxu0
    %v2937 = vadd.f32 %v2896, %v2936
    %v2938 = vpop.f32.mrb[0].mxu0
    %v2939 = vadd.f32 %v2898, %v2938
    %v2940 = vpop.f32.mrb[0].mxu0
    %v2941 = vpop.f32.mrb[0].mxu0
    %2942 = vdwg.mxu0
    %2943 = vmatprep.subr.bf16.mxu0 %v1963
    %2944 = vmatpush1.bf16.msra.mxu0 %v1962
    %2945 = vmatprep.subr.bf16.mxu0 %v1967
    %2946 = vmatpush1.bf16.msra.mxu0 %v1966
    %2947 = vmatprep.subr.bf16.mxu0 %v1971
    %2948 = vmatpush1.bf16.msra.mxu0 %v1970
    %2949 = vmatprep.subr.bf16.mxu0 %v1975
    %2950 = vmatpush1.bf16.msra.mxu0 %v1974
    %2951 = vmatprep.subr.bf16.mxu0 %v1979
    %2952 = vmatpush1.bf16.msra.mxu0 %v1978
    %2953 = vmatprep.subr.bf16.mxu0 %v1983
    %2954 = vmatpush1.bf16.msra.mxu0 %v1982
    %2955 = vmatprep.subr.bf16.mxu0 %v1987
    %2956 = vmatpush1.bf16.msra.mxu0 %v1986
    %2957 = vmatprep.subr.bf16.mxu0 %v1991
    %2958 = vmatpush1.bf16.msra.mxu0 %v1990
    %2959 = vmatprep.subr.bf16.mxu0 %v1995
    %2960 = vmatpush1.bf16.msra.mxu0 %v1994
    %2961 = vmatprep.subr.bf16.mxu0 %v1999
    %2962 = vmatpush1.bf16.msra.mxu0 %v1998
    %2963 = vmatprep.subr.bf16.mxu0 %v2003
    %2964 = vmatpush1.bf16.msra.mxu0 %v2002
    %2965 = vmatprep.subr.bf16.mxu0 %v2007
    %2966 = vmatpush1.bf16.msra.mxu0 %v2006
    %2967 = vmatprep.subr.bf16.mxu0 %v2011
    %2968 = vmatpush1.bf16.msra.mxu0 %v2010
    %2969 = vmatprep.subr.bf16.mxu0 %v2015
    %2970 = vmatpush1.bf16.msra.mxu0 %v2014
    %2971 = vmatprep.subr.bf16.mxu0 %v2019
    %2972 = vmatpush1.bf16.msra.mxu0 %v2018
    %2973 = vmatprep.subr.bf16.mxu0 %v2023
    %2974 = vmatpush1.bf16.msra.mxu0 %v2022
    %2975 = vmatprep.mubr.bf16.mxu0 %v512
    %2976 = vmatmul.mubr.bf16.gmra.mrb[0].mxu0 %v511
    %v2977 = vpop.f32.mrb[0].mxu0
    %v2978 = vadd.f32 %v2937, %v2977
    %v2979 = vpop.f32.mrb[0].mxu0
    %v2980 = vadd.f32 %v2939, %v2979
    %v2981 = vpop.f32.mrb[0].mxu0
    %v2982 = vpop.f32.mrb[0].mxu0
    %2983 = vdwg.mxu0
    %2984 = vmatprep.subr.bf16.mxu0 %v2027
    %2985 = vmatpush1.bf16.msra.mxu0 %v2026
    %2986 = vmatprep.subr.bf16.mxu0 %v2031
    %2987 = vmatpush1.bf16.msra.mxu0 %v2030
    %2988 = vmatprep.subr.bf16.mxu0 %v2035
    %2989 = vmatpush1.bf16.msra.mxu0 %v2034
    %2990 = vmatprep.subr.bf16.mxu0 %v2039
    %2991 = vmatpush1.bf16.msra.mxu0 %v2038
    %2992 = vmatprep.subr.bf16.mxu0 %v2043
    %2993 = vmatpush1.bf16.msra.mxu0 %v2042
    %2994 = vmatprep.subr.bf16.mxu0 %v2047
    %2995 = vmatpush1.bf16.msra.mxu0 %v2046
    %2996 = vmatprep.subr.bf16.mxu0 %v2051
    %2997 = vmatpush1.bf16.msra.mxu0 %v2050
    %2998 = vmatprep.subr.bf16.mxu0 %v2055
    %2999 = vmatpush1.bf16.msra.mxu0 %v2054
    %3000 = vmatprep.subr.bf16.mxu0 %v2059
    %3001 = vmatpush1.bf16.msra.mxu0 %v2058
    %3002 = vmatprep.subr.bf16.mxu0 %v2063
    %3003 = vmatpush1.bf16.msra.mxu0 %v2062
    %3004 = vmatprep.subr.bf16.mxu0 %v2067
    %3005 = vmatpush1.bf16.msra.mxu0 %v2066
    %3006 = vmatprep.subr.bf16.mxu0 %v2071
    %3007 = vmatpush1.bf16.msra.mxu0 %v2070
    %3008 = vmatprep.subr.bf16.mxu0 %v2075
    %3009 = vmatpush1.bf16.msra.mxu0 %v2074
    %3010 = vmatprep.subr.bf16.mxu0 %v2079
    %3011 = vmatpush1.bf16.msra.mxu0 %v2078
    %3012 = vmatprep.subr.bf16.mxu0 %v2083
    %3013 = vmatpush1.bf16.msra.mxu0 %v2082
    %3014 = vmatprep.subr.bf16.mxu0 %v2087
    %3015 = vmatpush1.bf16.msra.mxu0 %v2086
    %3016 = vmatprep.mubr.bf16.mxu0 %v514
    %3017 = vmatmul.mubr.bf16.gmra.mrb[0].mxu0 %v513
    %v3018 = vpop.f32.mrb[0].mxu0
    %v3019 = vadd.f32 %v2978, %v3018
    %v3020 = vpop.f32.mrb[0].mxu0
    %v3021 = vadd.f32 %v2980, %v3020
    %v3022 = vpop.f32.mrb[0].mxu0
    %v3023 = vpop.f32.mrb[0].mxu0
    %3024 = vdwg.mxu0
    %3025 = vmatprep.subr.bf16.mxu0 %v2091
    %3026 = vmatpush1.bf16.msra.mxu0 %v2090
    %3027 = vmatprep.subr.bf16.mxu0 %v2095
    %3028 = vmatpush1.bf16.msra.mxu0 %v2094
    %3029 = vmatprep.subr.bf16.mxu0 0
    %3030 = vmatpush1.bf16.msra.mxu0 0
    %3031 = vmatprep.subr.bf16.mxu0 0
    %3032 = vmatpush1.bf16.msra.mxu0 0
    %3033 = vmatprep.subr.bf16.mxu0 0
    %3034 = vmatpush1.bf16.msra.mxu0 0
    %3035 = vmatprep.subr.bf16.mxu0 0
    %3036 = vmatpush1.bf16.msra.mxu0 0
    %3037 = vmatprep.subr.bf16.mxu0 0
    %3038 = vmatpush1.bf16.msra.mxu0 0
    %3039 = vmatprep.subr.bf16.mxu0 0
    %3040 = vmatpush1.bf16.msra.mxu0 0
    %3041 = vmatprep.subr.bf16.mxu0 0
    %3042 = vmatpush1.bf16.msra.mxu0 0
    %3043 = vmatprep.subr.bf16.mxu0 0
    %3044 = vmatpush1.bf16.msra.mxu0 0
    %3045 = vmatprep.subr.bf16.mxu0 0
    %3046 = vmatpush1.bf16.msra.mxu0 0
    %3047 = vmatprep.subr.bf16.mxu0 0
    %3048 = vmatpush1.bf16.msra.mxu0 0
    %3049 = vmatprep.subr.bf16.mxu0 0
    %3050 = vmatpush1.bf16.msra.mxu0 0
    %3051 = vmatprep.subr.bf16.mxu0 0
    %3052 = vmatpush1.bf16.msra.mxu0 0
    %3053 = vmatprep.subr.bf16.mxu0 0
    %3054 = vmatpush1.bf16.msra.mxu0 0
    %3055 = vmatprep.subr.bf16.mxu0 0
    %3056 = vmatpush1.bf16.msra.mxu0 0
    %3057 = vmatprep.mubr.bf16.mxu0 0
    %3058 = vmatmul.mubr.bf16.gmra.mrb[0].mxu0 %v2490
    %v3059 = vpop.f32.mrb[0].mxu0
    %v3060 = vadd.f32 %v3019, %v3059
    %v3061 = vpop.f32.mrb[0].mxu0
    %v3062 = vadd.f32 %v3021, %v3061
    %v3063 = vpop.f32.mrb[0].mxu0
    %v3064 = vpop.f32.mrb[0].mxu0
    %3065 = vdwg.mxu0
    %v3066 = vadd.f32 %v80, %v2773
    %v3067 = vadd.f32 %v81, %v2775
    %v3068 = vadd.f32 %v82, %v3060
    %v3069 = vadd.f32 %v83, %v3062
    %3070 = vst [vmem:[#allocation2] sm:$0xff] %v3066
    %3071 = vst [vmem:[#allocation2 + $0x8] sm:$0xff] %v3067
    %3072 = vst [vmem:[#allocation2 + $0x10] sm:$0xff] %v3068
    %3073 = vst [vmem:[#allocation2 + $0x18] sm:$0xff] %v3069
    // Predicated region
    $region42: #{resnet_head_forward.3} parent=1 // pred_check
      %p3074 = pneg %p72
    $region43: #{resnet_head_forward.3} parent=1 // pred_check_branch
      %3076 = sbr.rel (%p3074) target = $region45
    $region44: #{resnet_head_forward.3} parent=1 // pred_region
      %v3077 = vld [vmem:[#allocation2] sm:$0xff]
      %v3078 = vld [vmem:[#allocation2 + $0x8] sm:$0xff]
      %v3079 = vld [vmem:[#allocation2 + $0x10] sm:$0xff]
      %v3080 = vld [vmem:[#allocation2 + $0x18] sm:$0xff]
      %v3081 = vld [vmem:[#allocation5] sm:$0xf]
      %v3083 = vlaneseq
      %v3084 = vshrl.u32 %v3083, 7
      %v3085 = vsub.s32 0, %v3084
      %v3086 = vrot.slane %v3081, %v3085
      %v3087 = vlaneseq
      %v3088 = vshrl.u32 %v3087, 7
      %v3089 = vsub.s32 1, %v3088
      %v3090 = vrot.slane %v3081, %v3089
      %v3091 = vlaneseq
      %v3092 = vshrl.u32 %v3091, 7
      %v3093 = vsub.s32 2, %v3092
      %v3094 = vrot.slane %v3081, %v3093
      %v3095 = vlaneseq
      %v3096 = vshrl.u32 %v3095, 7
      %v3097 = vsub.s32 3, %v3096
      %v3098 = vrot.slane %v3081, %v3097
      %v3103 = vadd.f32 %v3077, %v3086
      %v3104 = vadd.f32 %v3078, %v3090
      %v3105 = vadd.f32 %v3079, %v3094
      %v3106 = vadd.f32 %v3080, %v3098
      %v3107 = vmax.f32 %v3103, 0.0
      %v3108 = vmax.f32 %v3104, 0.0
      %v3109 = vmax.f32 %v3105, 0.0
      %v3110 = vmax.f32 %v3106, 0.0
      %v3111 = vpack.c.bf16 %v3107, %v3107
      %v3112 = vpack.c.bf16 %v3108, %v3108
      %v3113 = vpack.c.bf16 %v3109, %v3109
      %v3114 = vpack.c.bf16 %v3110, %v3110
      %v3115 = vld [vmem:[#allocation7] sm:$0xf]
      %v3116 = vld [vmem:[#allocation7 + $0x4] sm:$0xf]
      %v3117 = vld [vmem:[#allocation7 + $0x8] sm:$0xf]
      %v3118 = vld [vmem:[#allocation7 + $0xc] sm:$0xf]
      %v3119 = vld [vmem:[#allocation7 + $0x10] sm:$0xf]
      %v3120 = vld [vmem:[#allocation7 + $0x14] sm:$0xf]
      %v3121 = vld [vmem:[#allocation7 + $0x18] sm:$0xf]
      %v3122 = vld [vmem:[#allocation7 + $0x1c] sm:$0xf]
      %v3123 = vld [vmem:[#allocation7 + $0x20] sm:$0xf]
      %v3124 = vld [vmem:[#allocation7 + $0x24] sm:$0xf]
      %v3125 = vld [vmem:[#allocation7 + $0x28] sm:$0xf]
      %v3126 = vld [vmem:[#allocation7 + $0x2c] sm:$0xf]
      %v3127 = vld [vmem:[#allocation7 + $0x30] sm:$0xf]
      %v3128 = vld [vmem:[#allocation7 + $0x34] sm:$0xf]
      %v3129 = vld [vmem:[#allocation7 + $0x38] sm:$0xf]
      %v3130 = vld [vmem:[#allocation7 + $0x3c] sm:$0xf]
      %v3131 = vld [vmem:[#allocation7 + $0x40] sm:$0xf]
      %v3132 = vld [vmem:[#allocation7 + $0x44] sm:$0xf]
      %v3133 = vld [vmem:[#allocation7 + $0x48] sm:$0xf]
      %v3134 = vld [vmem:[#allocation7 + $0x4c] sm:$0xf]
      %v3135 = vld [vmem:[#allocation7 + $0x50] sm:$0xf]
      %v3136 = vld [vmem:[#allocation7 + $0x54] sm:$0xf]
      %v3137 = vld [vmem:[#allocation7 + $0x58] sm:$0xf]
      %v3138 = vld [vmem:[#allocation7 + $0x5c] sm:$0xf]
      %v3139 = vld [vmem:[#allocation7 + $0x60] sm:$0xf]
      %v3140 = vld [vmem:[#allocation7 + $0x64] sm:$0xf]
      %v3141 = vld [vmem:[#allocation7 + $0x68] sm:$0xf]
      %v3142 = vld [vmem:[#allocation7 + $0x6c] sm:$0xf]
      %v3143 = vld [vmem:[#allocation7 + $0x70] sm:$0xf]
      %v3144 = vld [vmem:[#allocation7 + $0x74] sm:$0xf]
      %v3145 = vld [vmem:[#allocation7 + $0x78] sm:$0xf]
      %v3146 = vld [vmem:[#allocation7 + $0x7c] sm:$0xf]
      %v3147 = vld [vmem:[#allocation7 + $0x80] sm:$0xf]
      %v3148 = vld [vmem:[#allocation7 + $0x84] sm:$0xf]
      %v3149 = vld [vmem:[#allocation7 + $0x88] sm:$0xf]
      %v3150 = vld [vmem:[#allocation7 + $0x8c] sm:$0xf]
      %v3151 = vld [vmem:[#allocation7 + $0x90] sm:$0xf]
      %v3152 = vld [vmem:[#allocation7 + $0x94] sm:$0xf]
      %v3153 = vld [vmem:[#allocation7 + $0x98] sm:$0xf]
      %v3154 = vld [vmem:[#allocation7 + $0x9c] sm:$0xf]
      %v3155 = vld [vmem:[#allocation7 + $0xa0] sm:$0xf]
      %v3156 = vld [vmem:[#allocation7 + $0xa4] sm:$0xf]
      %v3157 = vld [vmem:[#allocation7 + $0xa8] sm:$0xf]
      %v3158 = vld [vmem:[#allocation7 + $0xac] sm:$0xf]
      %v3159 = vld [vmem:[#allocation7 + $0xb0] sm:$0xf]
      %v3160 = vld [vmem:[#allocation7 + $0xb4] sm:$0xf]
      %v3161 = vld [vmem:[#allocation7 + $0xb8] sm:$0xf]
      %v3162 = vld [vmem:[#allocation7 + $0xbc] sm:$0xf]
      %v3163 = vld [vmem:[#allocation7 + $0xc0] sm:$0xf]
      %v3164 = vld [vmem:[#allocation7 + $0xc4] sm:$0xf]
      %v3165 = vld [vmem:[#allocation7 + $0xc8] sm:$0xf]
      %v3166 = vld [vmem:[#allocation7 + $0xcc] sm:$0xf]
      %v3167 = vld [vmem:[#allocation7 + $0xd0] sm:$0xf]
      %v3168 = vld [vmem:[#allocation7 + $0xd4] sm:$0xf]
      %v3169 = vld [vmem:[#allocation7 + $0xd8] sm:$0xf]
      %v3170 = vld [vmem:[#allocation7 + $0xdc] sm:$0xf]
      %v3171 = vld [vmem:[#allocation7 + $0xe0] sm:$0xf]
      %v3172 = vld [vmem:[#allocation7 + $0xe4] sm:$0xf]
      %v3173 = vld [vmem:[#allocation7 + $0xe8] sm:$0xf]
      %v3174 = vld [vmem:[#allocation7 + $0xec] sm:$0xf]
      %v3175 = vld [vmem:[#allocation7 + $0xf0] sm:$0xf]
      %v3176 = vld [vmem:[#allocation7 + $0xf4] sm:$0xf]
      %v3177 = vld [vmem:[#allocation7 + $0xf8] sm:$0xf]
      %v3178 = vld [vmem:[#allocation7 + $0xfc] sm:$0xf]
      %v3179 = vld [vmem:[#allocation8] sm:$0x1]
      %v3181 = vlaneseq
      %v3182 = vshrl.u32 %v3181, 7
      %v3183 = vsub.s32 0, %v3182
      %v3184 = vrot.slane %v3179, %v3183
      %v3250 = vunpack.c.l.b16 %v3115
      %v3251 = vunpack.c.l.b16 %v3116
      %v3252 = vunpack.c.l.b16 %v3117
      %v3253 = vunpack.c.l.b16 %v3118
      %v3254 = vunpack.c.l.b16 %v3119
      %v3255 = vunpack.c.l.b16 %v3120
      %v3256 = vunpack.c.l.b16 %v3121
      %v3257 = vunpack.c.l.b16 %v3122
      %v3258 = vunpack.c.l.b16 %v3123
      %v3259 = vunpack.c.l.b16 %v3124
      %v3260 = vunpack.c.l.b16 %v3125
      %v3261 = vunpack.c.l.b16 %v3126
      %v3262 = vunpack.c.l.b16 %v3127
      %v3263 = vunpack.c.l.b16 %v3128
      %v3264 = vunpack.c.l.b16 %v3129
      %v3265 = vunpack.c.l.b16 %v3130
      %v3266 = vunpack.c.l.b16 %v3131
      %v3267 = vunpack.c.l.b16 %v3132
      %v3268 = vunpack.c.l.b16 %v3133
      %v3269 = vunpack.c.l.b16 %v3134
      %v3270 = vunpack.c.l.b16 %v3135
      %v3271 = vunpack.c.l.b16 %v3136
      %v3272 = vunpack.c.l.b16 %v3137
      %v3273 = vunpack.c.l.b16 %v3138
      %v3274 = vunpack.c.l.b16 %v3139
      %v3275 = vunpack.c.l.b16 %v3140
      %v3276 = vunpack.c.l.b16 %v3141
      %v3277 = vunpack.c.l.b16 %v3142
      %v3278 = vunpack.c.l.b16 %v3143
      %v3279 = vunpack.c.l.b16 %v3144
      %v3280 = vunpack.c.l.b16 %v3145
      %v3281 = vunpack.c.l.b16 %v3146
      %v3282 = vunpack.c.l.b16 %v3147
      %v3283 = vunpack.c.l.b16 %v3148
      %v3284 = vunpack.c.l.b16 %v3149
      %v3285 = vunpack.c.l.b16 %v3150
      %v3286 = vunpack.c.l.b16 %v3151
      %v3287 = vunpack.c.l.b16 %v3152
      %v3288 = vunpack.c.l.b16 %v3153
      %v3289 = vunpack.c.l.b16 %v3154
      %v3290 = vunpack.c.l.b16 %v3155
      %v3291 = vunpack.c.l.b16 %v3156
      %v3292 = vunpack.c.l.b16 %v3157
      %v3293 = vunpack.c.l.b16 %v3158
      %v3294 = vunpack.c.l.b16 %v3159
      %v3295 = vunpack.c.l.b16 %v3160
      %v3296 = vunpack.c.l.b16 %v3161
      %v3297 = vunpack.c.l.b16 %v3162
      %v3298 = vunpack.c.l.b16 %v3163
      %v3299 = vunpack.c.l.b16 %v3164
      %v3300 = vunpack.c.l.b16 %v3165
      %v3301 = vunpack.c.l.b16 %v3166
      %v3302 = vunpack.c.l.b16 %v3167
      %v3303 = vunpack.c.l.b16 %v3168
      %v3304 = vunpack.c.l.b16 %v3169
      %v3305 = vunpack.c.l.b16 %v3170
      %v3306 = vunpack.c.l.b16 %v3171
      %v3307 = vunpack.c.l.b16 %v3172
      %v3308 = vunpack.c.l.b16 %v3173
      %v3309 = vunpack.c.l.b16 %v3174
      %v3310 = vunpack.c.l.b16 %v3175
      %v3311 = vunpack.c.l.b16 %v3176
      %v3312 = vunpack.c.l.b16 %v3177
      %v3313 = vunpack.c.l.b16 %v3178
      %v3314 = vpack.c.b16 %v3251, %v3250
      %v3315 = vpack.c.b16 %v3253, %v3252
      %v3316 = vpack.c.b16 %v3255, %v3254
      %v3317 = vpack.c.b16 %v3257, %v3256
      %v3318 = vpack.c.b16 %v3259, %v3258
      %v3319 = vpack.c.b16 %v3261, %v3260
      %v3320 = vpack.c.b16 %v3263, %v3262
      %v3321 = vpack.c.b16 %v3265, %v3264
      %v3322 = vpack.c.b16 %v3267, %v3266
      %v3323 = vpack.c.b16 %v3269, %v3268
      %v3324 = vpack.c.b16 %v3271, %v3270
      %v3325 = vpack.c.b16 %v3273, %v3272
      %v3326 = vpack.c.b16 %v3275, %v3274
      %v3327 = vpack.c.b16 %v3277, %v3276
      %v3328 = vpack.c.b16 %v3279, %v3278
      %v3329 = vpack.c.b16 %v3281, %v3280
      %v3330 = vpack.c.b16 %v3283, %v3282
      %v3331 = vpack.c.b16 %v3285, %v3284
      %v3332 = vpack.c.b16 %v3287, %v3286
      %v3333 = vpack.c.b16 %v3289, %v3288
      %v3334 = vpack.c.b16 %v3291, %v3290
      %v3335 = vpack.c.b16 %v3293, %v3292
      %v3336 = vpack.c.b16 %v3295, %v3294
      %v3337 = vpack.c.b16 %v3297, %v3296
      %v3338 = vpack.c.b16 %v3299, %v3298
      %v3339 = vpack.c.b16 %v3301, %v3300
      %v3340 = vpack.c.b16 %v3303, %v3302
      %v3341 = vpack.c.b16 %v3305, %v3304
      %v3342 = vpack.c.b16 %v3307, %v3306
      %v3343 = vpack.c.b16 %v3309, %v3308
      %v3344 = vpack.c.b16 %v3311, %v3310
      %v3345 = vpack.c.b16 %v3313, %v3312
      %3378 = vmatprep.subr.bf16.mxu0 0
      %3379 = vmatpush1.bf16.msra.mxu0 %v3314
      %3380 = vmatprep.subr.bf16.mxu0 0
      %3381 = vmatpush1.bf16.msra.mxu0 %v3315
      %3382 = vmatprep.subr.bf16.mxu0 0
      %3383 = vmatpush1.bf16.msra.mxu0 %v3316
      %3384 = vmatprep.subr.bf16.mxu0 0
      %3385 = vmatpush1.bf16.msra.mxu0 %v3317
      %3386 = vmatprep.subr.bf16.mxu0 0
      %3387 = vmatpush1.bf16.msra.mxu0 %v3318
      %3388 = vmatprep.subr.bf16.mxu0 0
      %3389 = vmatpush1.bf16.msra.mxu0 %v3319
      %3390 = vmatprep.subr.bf16.mxu0 0
      %3391 = vmatpush1.bf16.msra.mxu0 %v3320
      %3392 = vmatprep.subr.bf16.mxu0 0
      %3393 = vmatpush1.bf16.msra.mxu0 %v3321
      %3394 = vmatprep.subr.bf16.mxu0 0
      %3395 = vmatpush1.bf16.msra.mxu0 %v3322
      %3396 = vmatprep.subr.bf16.mxu0 0
      %3397 = vmatpush1.bf16.msra.mxu0 %v3323
      %3398 = vmatprep.subr.bf16.mxu0 0
      %3399 = vmatpush1.bf16.msra.mxu0 %v3324
      %3400 = vmatprep.subr.bf16.mxu0 0
      %3401 = vmatpush1.bf16.msra.mxu0 %v3325
      %3402 = vmatprep.subr.bf16.mxu0 0
      %3403 = vmatpush1.bf16.msra.mxu0 %v3326
      %3404 = vmatprep.subr.bf16.mxu0 0
      %3405 = vmatpush1.bf16.msra.mxu0 %v3327
      %3406 = vmatprep.subr.bf16.mxu0 0
      %3407 = vmatpush1.bf16.msra.mxu0 %v3328
      %3408 = vmatprep.subr.bf16.mxu0 0
      %3409 = vmatpush1.bf16.msra.mxu0 %v3329
      %3410 = vmatprep.mubr.bf16.mxu0 %v3112
      %3411 = vmatmul.mubr.bf16.gmra.mrb[0].mxu0 %v3111
      %v3412 = vpop.f32.mrb[0].mxu0
      %v3413 = vadd.f32 %v3184, %v3412
      %v3414 = vpop.f32.mrb[0].mxu0
      %v3415 = vpop.f32.mrb[0].mxu0
      %v3416 = vpop.f32.mrb[0].mxu0
      %3417 = vdwg.mxu0
      %3418 = vmatprep.subr.bf16.mxu0 0
      %3419 = vmatpush1.bf16.msra.mxu0 %v3330
      %3420 = vmatprep.subr.bf16.mxu0 0
      %3421 = vmatpush1.bf16.msra.mxu0 %v3331
      %3422 = vmatprep.subr.bf16.mxu0 0
      %3423 = vmatpush1.bf16.msra.mxu0 %v3332
      %3424 = vmatprep.subr.bf16.mxu0 0
      %3425 = vmatpush1.bf16.msra.mxu0 %v3333
      %3426 = vmatprep.subr.bf16.mxu0 0
      %3427 = vmatpush1.bf16.msra.mxu0 %v3334
      %3428 = vmatprep.subr.bf16.mxu0 0
      %3429 = vmatpush1.bf16.msra.mxu0 %v3335
      %3430 = vmatprep.subr.bf16.mxu0 0
      %3431 = vmatpush1.bf16.msra.mxu0 %v3336
      %3432 = vmatprep.subr.bf16.mxu0 0
      %3433 = vmatpush1.bf16.msra.mxu0 %v3337
      %3434 = vmatprep.subr.bf16.mxu0 0
      %3435 = vmatpush1.bf16.msra.mxu0 %v3338
      %3436 = vmatprep.subr.bf16.mxu0 0
      %3437 = vmatpush1.bf16.msra.mxu0 %v3339
      %3438 = vmatprep.subr.bf16.mxu0 0
      %3439 = vmatpush1.bf16.msra.mxu0 %v3340
      %3440 = vmatprep.subr.bf16.mxu0 0
      %3441 = vmatpush1.bf16.msra.mxu0 %v3341
      %3442 = vmatprep.subr.bf16.mxu0 0
      %3443 = vmatpush1.bf16.msra.mxu0 %v3342
      %3444 = vmatprep.subr.bf16.mxu0 0
      %3445 = vmatpush1.bf16.msra.mxu0 %v3343
      %3446 = vmatprep.subr.bf16.mxu0 0
      %3447 = vmatpush1.bf16.msra.mxu0 %v3344
      %3448 = vmatprep.subr.bf16.mxu0 0
      %3449 = vmatpush1.bf16.msra.mxu0 %v3345
      %3450 = vmatprep.mubr.bf16.mxu0 %v3114
      %3451 = vmatmul.mubr.bf16.gmra.mrb[0].mxu0 %v3113
      %v3452 = vpop.f32.mrb[0].mxu0
      %v3453 = vadd.f32 %v3413, %v3452
      %v3454 = vpop.f32.mrb[0].mxu0
      %v3455 = vpop.f32.mrb[0].mxu0
      %v3456 = vpop.f32.mrb[0].mxu0
      %3457 = vdwg.mxu0
      %3458 = vst [vmem:[%s5] sm:$0xff] %v3453
    $region45: #{resnet_head_forward.3} parent=1 // pred_fallthru
      _
    // Predicated region
    $region46: #{resnet_head_forward.3} parent=1 // pred_check
      _
    $region47: #{resnet_head_forward.3} parent=1 // pred_check_branch
      %3460 = sbr.rel (0) target = $region49
    $region48: #{resnet_head_forward.3} parent=1 // pred_region
      _
    $region49: #{resnet_head_forward.3} parent=1 // pred_fallthru
      _
    // Predicated region
    $region50: #{resnet_head_forward.3} parent=1 // pred_check
      _
    $region51: #{resnet_head_forward.3} parent=1 // pred_check_branch
      %3462 = sbr.rel (0) target = $region53
    $region52: #{resnet_head_forward.3} parent=1 // pred_region
      _
    $region53: #{resnet_head_forward.3} parent=1 // pred_fallthru
      _
    %3463 = vsyncpa [#allocation4], 1
    %3464 = vsyncpa [#allocation6], 1
    %3465 = vsyncpa [#allocation9], 1

</llo_original>
